<compile_context>
chip_gen: v7x
topology: tpu7x:2x2x1
jax: 0.10.0
libtpu: 0.0.40
codegen_flags: <defaults>
</compile_context>

<pallas_src>
import functools

import jax
import jax.numpy as jnp
from jax.experimental import pallas as pl
from jax.experimental.pallas import tpu as pltpu


def _conv_block_kernel(x_ref, w1_ref, w2_ref, o_ref, y1_ref, *, H, W, eps, slope):
    """Fused ConvBlock forward for one batch element.

    x_ref : (1, H, W, Cin)    NHWC input tile (unpadded; halo built in VMEM)
    w1_ref: (9, Cin, Cmid)    conv1 weights, taps flattened row-major (kh, kw)
    w2_ref: (9, Cmid, Cout)   conv2 weights
    o_ref : (1, H, W, Cout)   output tile
    y1_ref: (H, W, Cmid) f32  VMEM scratch for the inter-stage activation
    """

    def conv3x3(xhwc, w9):
        """3x3 SAME conv: (H, W, Cin) x (9, Cin, Cout) -> (H*W, Cout) f32."""
        Cin = xhwc.shape[-1]
        Cout = w9.shape[-1]
        # Zero halo built with VMEM concatenates on the spatial axes
        # (no HBM-side padded copy of the activation).
        zw = jnp.zeros((H, 1, Cin), jnp.float32)
        xw = jnp.concatenate([zw, xhwc, zw], axis=1)            # (H, W+2, Cin)
        zh = jnp.zeros((1, W + 2, Cin), jnp.float32)
        xp = jnp.concatenate([zh, xw, zh], axis=0)              # (H+2, W+2, Cin)

        # 9 shifted-window matmuls accumulated in f32 on the MXU.
        # DEFAULT precision: single-pass MXU, f32 accumulation.
        acc = jnp.zeros((H * W, Cout), jnp.float32)
        for kh in range(3):
            for kw in range(3):
                win = xp[kh:kh + H, kw:kw + W, :].reshape(H * W, Cin)
                acc = acc + jnp.dot(win, w9[kh * 3 + kw],
                                    preferred_element_type=jnp.float32)
        return acc

    def instnorm_lrelu(acc):
        """InstanceNorm2d (no affine, biased var, eps) + LeakyReLU(slope)."""
        mean = jnp.mean(acc, axis=0, keepdims=True)             # (1, C)
        cent = acc - mean
        var = jnp.mean(cent * cent, axis=0, keepdims=True)
        y = cent * jax.lax.rsqrt(var + eps)
        return jnp.where(y >= 0, y, slope * y)

    x = x_ref[0].astype(jnp.float32)
    w1 = w1_ref[...].astype(jnp.float32)    # cast hoisted out of the tap loop
    w2 = w2_ref[...].astype(jnp.float32)

    # Stage 1: conv -> InstanceNorm -> LeakyReLU (Dropout2d = identity in eval mode).
    y1 = instnorm_lrelu(conv3x3(x, w1))                         # (H*W, Cmid)
    # Keep the intermediate resident in VMEM (fused: no HBM round trip, no re-pad).
    y1_ref[...] = y1.reshape(H, W, w1.shape[-1])

    # Stage 2: conv -> InstanceNorm -> LeakyReLU (Dropout2d identity again).
    y2 = instnorm_lrelu(conv3x3(y1_ref[...], w2))               # (H*W, Cout)
    o_ref[0] = y2.reshape(H, W, w2.shape[-1]).astype(o_ref.dtype)


def conv_block_forward(image_nchw, w1_oihw, w2_oihw, drop_prob=0.0, *,
                       eps=1e-5, slope=0.2):
    """ConvBlock.forward (eval mode). image: (N, Cin, H, W) -> (N, Cout, H, W)."""
    del drop_prob  # Dropout2d is identity in eval/inference mode.
    N, Cin, H, W = image_nchw.shape
    Cmid = w1_oihw.shape[0]
    Cout = w2_oihw.shape[0]

    # Layout glue stays in plain XLA: NCHW -> NHWC, OIHW -> (9, Cin, Cout) taps
    # ordered row-major in (kh, kw).
    x = jnp.transpose(image_nchw, (0, 2, 3, 1))
    w1 = jnp.transpose(w1_oihw, (2, 3, 1, 0)).reshape(9, Cin, Cmid)
    w2 = jnp.transpose(w2_oihw, (2, 3, 1, 0)).reshape(9, Cmid, Cout)

    kernel = functools.partial(_conv_block_kernel, H=H, W=W, eps=eps, slope=slope)
    y = pl.pallas_call(
        kernel,
        out_shape=jax.ShapeDtypeStruct((N, H, W, Cout), image_nchw.dtype),
        grid=(N,),
        in_specs=[
            pl.BlockSpec((1, H, W, Cin), lambda n: (n, 0, 0, 0)),
            pl.BlockSpec((9, Cin, Cmid), lambda n: (0, 0, 0)),
            pl.BlockSpec((9, Cmid, Cout), lambda n: (0, 0, 0)),
        ],
        out_specs=pl.BlockSpec((1, H, W, Cout), lambda n: (n, 0, 0, 0)),
        scratch_shapes=[pltpu.VMEM((H, W, Cmid), jnp.float32)],
        compiler_params=pltpu.CompilerParams(
            dimension_semantics=("parallel",)),
    )(x, w1, w2)
    return jnp.transpose(y, (0, 3, 1, 2))                       # NHWC -> NCHW


def _reference_forward(x_nchw, w1_oihw, w2_oihw, eps=1e-5, slope=0.2):
    """Pure-JAX/XLA reference mirroring the PyTorch ConvBlock (eval mode)."""
    def block(x, w):
        y = jax.lax.conv_general_dilated(
            x, w, window_strides=(1, 1), padding="SAME",
            dimension_numbers=("NCHW", "OIHW", "NCHW"),
            precision=jax.lax.Precision.HIGHEST,
        )
        mean = y.mean(axis=(2, 3), keepdims=True)
        var = ((y - mean) ** 2).mean(axis=(2, 3), keepdims=True)
        y = (y - mean) / jnp.sqrt(var + eps)
        return jnp.where(y >= 0, y, slope * y)

    return block(block(x_nchw, w1_oihw), w2_oihw)


if __name__ == "__main__":
    key = jax.random.PRNGKey(0)
    k_x, k_w1, k_w2 = jax.random.split(key, 3)

    N, in_chans, out_chans, H, W = 2, 4, 8, 16, 16
    drop_prob = 0.1  # eval mode -> identity

    x = jax.random.normal(k_x, (N, in_chans, H, W), jnp.float32)

    # Deterministic synthetic Conv2d weights (PyTorch OIHW layout), no bias.
    w1_oihw = jax.random.normal(k_w1, (out_chans, in_chans, 3, 3), jnp.float32) / jnp.sqrt(in_chans * 9.0)
    w2_oihw = jax.random.normal(k_w2, (out_chans, out_chans, 3, 3), jnp.float32) / jnp.sqrt(out_chans * 9.0)

    out = conv_block_forward(x, w1_oihw, w2_oihw, drop_prob)
    out = jax.block_until_ready(out)
    assert out.shape == (N, out_chans, H, W), out.shape

    ref = _reference_forward(x, w1_oihw, w2_oihw)
    # DEFAULT-precision MXU rounds f32 operands to bf16 mantissas (f32 accumulate),
    # so tolerances are bf16-level; InstanceNorm keeps outputs O(1).
    max_err = float(jnp.max(jnp.abs(out - ref)))
    rel_l2 = float(jnp.linalg.norm(out - ref) / jnp.linalg.norm(ref))
    assert rel_l2 < 2e-2, f"relative L2 error {rel_l2} (max abs err {max_err})"
    assert jnp.allclose(out, ref, atol=5e-2, rtol=5e-2), f"max abs err {max_err}"

    print("KERNEL_OK")
</pallas_src>

<mosaic_0001>
module attributes {stable_mosaic.version = 11 : i64} {
  func.func @_conv_block_kernel(%arg0: i32, %arg1: memref<1x16x16x4xf32, #tpu.memory_space<vmem>>, %arg2: memref<9x4x8xf32, #tpu.memory_space<vmem>>, %arg3: memref<9x8x8xf32, #tpu.memory_space<vmem>>, %arg4: memref<1x16x16x8xf32, #tpu.memory_space<vmem>>, %arg5: memref<16x16x8xf32, #tpu.memory_space<vmem>>) attributes {dimension_semantics = [#tpu.dimension_semantics<parallel>], iteration_bounds = array<i64: 2>, scalar_prefetch = 0 : i64, scratch_operands = 1 : i64, tpu.core_type = #tpu.core_type<tc>, window_params = [{transform_indices = @transform_0, window_bounds = array<i64: 1, 16, 16, 4>}, {pipeline_mode = #tpu.pipeline_mode<synchronous>, transform_indices = @transform_1, window_bounds = array<i64: 9, 4, 8>}, {pipeline_mode = #tpu.pipeline_mode<synchronous>, transform_indices = @transform_2, window_bounds = array<i64: 9, 8, 8>}, {transform_indices = @transform_3, window_bounds = array<i64: 1, 16, 16, 8>}]} {
    %c0 = arith.constant 0 : index
    %c0_0 = arith.constant 0 : index
    %c0_1 = arith.constant 0 : index
    %c0_2 = arith.constant 0 : index
    %0 = vector.load %arg1[%c0, %c0_0, %c0_1, %c0_2] : memref<1x16x16x4xf32, #tpu.memory_space<vmem>>, vector<1x16x16x4xf32>
    %1 = vector.shape_cast %0 : vector<1x16x16x4xf32> to vector<16x16x4xf32>
    %c0_3 = arith.constant 0 : index
    %c0_4 = arith.constant 0 : index
    %c0_5 = arith.constant 0 : index
    %2 = vector.load %arg2[%c0_3, %c0_4, %c0_5] : memref<9x4x8xf32, #tpu.memory_space<vmem>>, vector<9x4x8xf32>
    %c0_6 = arith.constant 0 : index
    %c0_7 = arith.constant 0 : index
    %c0_8 = arith.constant 0 : index
    %3 = vector.load %arg3[%c0_6, %c0_7, %c0_8] : memref<9x8x8xf32, #tpu.memory_space<vmem>>, vector<9x8x8xf32>
    %cst = arith.constant 0.000000e+00 : f32
    %4 = vector.broadcast %cst : f32 to vector<16x1x4xf32>
    %5 = tpu.concatenate %4, %1, %4 in 1 : vector<16x1x4xf32>, vector<16x16x4xf32>, vector<16x1x4xf32> -> vector<16x18x4xf32>
    %cst_9 = arith.constant 0.000000e+00 : f32
    %6 = vector.broadcast %cst_9 : f32 to vector<1x18x4xf32>
    %7 = tpu.concatenate %6, %5, %6 in 0 : vector<1x18x4xf32>, vector<16x18x4xf32>, vector<1x18x4xf32> -> vector<18x18x4xf32>
    %cst_10 = arith.constant 0.000000e+00 : f32
    %8 = vector.broadcast %cst_10 : f32 to vector<256x8xf32>
    %9 = vector.extract_strided_slice %7 {offsets = [0, 0, 0], sizes = [16, 16, 4], strides = [1, 1, 1]} : vector<18x18x4xf32> to vector<16x16x4xf32>
    %10 = vector.shape_cast %9 : vector<16x16x4xf32> to vector<256x4xf32>
    %11 = vector.extract_strided_slice %2 {offsets = [0, 0, 0], sizes = [1, 4, 8], strides = [1, 1, 1]} : vector<9x4x8xf32> to vector<1x4x8xf32>
    %12 = vector.shape_cast %11 : vector<1x4x8xf32> to vector<4x8xf32>
    %cst_11 = arith.constant dense<0.000000e+00> : vector<256x8xf32>
    %13 = tpu.matmul %10, %12, %cst_11 {dimension_numbers = #tpu.dot_dimension_numbers<[1], [0], [0], [1], [0, 0, 1, 1], [], []>} : vector<256x4xf32>, vector<4x8xf32>, vector<256x8xf32> -> vector<256x8xf32>
    %14 = arith.addf %8, %13 : vector<256x8xf32>
    %15 = vector.extract_strided_slice %7 {offsets = [0, 1, 0], sizes = [16, 16, 4], strides = [1, 1, 1]} : vector<18x18x4xf32> to vector<16x16x4xf32>
    %16 = vector.shape_cast %15 : vector<16x16x4xf32> to vector<256x4xf32>
    %17 = vector.extract_strided_slice %2 {offsets = [1, 0, 0], sizes = [1, 4, 8], strides = [1, 1, 1]} : vector<9x4x8xf32> to vector<1x4x8xf32>
    %18 = vector.shape_cast %17 : vector<1x4x8xf32> to vector<4x8xf32>
    %cst_12 = arith.constant dense<0.000000e+00> : vector<256x8xf32>
    %19 = tpu.matmul %16, %18, %cst_12 {dimension_numbers = #tpu.dot_dimension_numbers<[1], [0], [0], [1], [0, 0, 1, 1], [], []>} : vector<256x4xf32>, vector<4x8xf32>, vector<256x8xf32> -> vector<256x8xf32>
    %20 = arith.addf %14, %19 : vector<256x8xf32>
    %21 = vector.extract_strided_slice %7 {offsets = [0, 2, 0], sizes = [16, 16, 4], strides = [1, 1, 1]} : vector<18x18x4xf32> to vector<16x16x4xf32>
    %22 = vector.shape_cast %21 : vector<16x16x4xf32> to vector<256x4xf32>
    %23 = vector.extract_strided_slice %2 {offsets = [2, 0, 0], sizes = [1, 4, 8], strides = [1, 1, 1]} : vector<9x4x8xf32> to vector<1x4x8xf32>
    %24 = vector.shape_cast %23 : vector<1x4x8xf32> to vector<4x8xf32>
    %cst_13 = arith.constant dense<0.000000e+00> : vector<256x8xf32>
    %25 = tpu.matmul %22, %24, %cst_13 {dimension_numbers = #tpu.dot_dimension_numbers<[1], [0], [0], [1], [0, 0, 1, 1], [], []>} : vector<256x4xf32>, vector<4x8xf32>, vector<256x8xf32> -> vector<256x8xf32>
    %26 = arith.addf %20, %25 : vector<256x8xf32>
    %27 = vector.extract_strided_slice %7 {offsets = [1, 0, 0], sizes = [16, 16, 4], strides = [1, 1, 1]} : vector<18x18x4xf32> to vector<16x16x4xf32>
    %28 = vector.shape_cast %27 : vector<16x16x4xf32> to vector<256x4xf32>
    %29 = vector.extract_strided_slice %2 {offsets = [3, 0, 0], sizes = [1, 4, 8], strides = [1, 1, 1]} : vector<9x4x8xf32> to vector<1x4x8xf32>
    %30 = vector.shape_cast %29 : vector<1x4x8xf32> to vector<4x8xf32>
    %cst_14 = arith.constant dense<0.000000e+00> : vector<256x8xf32>
    %31 = tpu.matmul %28, %30, %cst_14 {dimension_numbers = #tpu.dot_dimension_numbers<[1], [0], [0], [1], [0, 0, 1, 1], [], []>} : vector<256x4xf32>, vector<4x8xf32>, vector<256x8xf32> -> vector<256x8xf32>
    %32 = arith.addf %26, %31 : vector<256x8xf32>
    %33 = vector.extract_strided_slice %7 {offsets = [1, 1, 0], sizes = [16, 16, 4], strides = [1, 1, 1]} : vector<18x18x4xf32> to vector<16x16x4xf32>
    %34 = vector.shape_cast %33 : vector<16x16x4xf32> to vector<256x4xf32>
    %35 = vector.extract_strided_slice %2 {offsets = [4, 0, 0], sizes = [1, 4, 8], strides = [1, 1, 1]} : vector<9x4x8xf32> to vector<1x4x8xf32>
    %36 = vector.shape_cast %35 : vector<1x4x8xf32> to vector<4x8xf32>
    %cst_15 = arith.constant dense<0.000000e+00> : vector<256x8xf32>
    %37 = tpu.matmul %34, %36, %cst_15 {dimension_numbers = #tpu.dot_dimension_numbers<[1], [0], [0], [1], [0, 0, 1, 1], [], []>} : vector<256x4xf32>, vector<4x8xf32>, vector<256x8xf32> -> vector<256x8xf32>
    %38 = arith.addf %32, %37 : vector<256x8xf32>
    %39 = vector.extract_strided_slice %7 {offsets = [1, 2, 0], sizes = [16, 16, 4], strides = [1, 1, 1]} : vector<18x18x4xf32> to vector<16x16x4xf32>
    %40 = vector.shape_cast %39 : vector<16x16x4xf32> to vector<256x4xf32>
    %41 = vector.extract_strided_slice %2 {offsets = [5, 0, 0], sizes = [1, 4, 8], strides = [1, 1, 1]} : vector<9x4x8xf32> to vector<1x4x8xf32>
    %42 = vector.shape_cast %41 : vector<1x4x8xf32> to vector<4x8xf32>
    %cst_16 = arith.constant dense<0.000000e+00> : vector<256x8xf32>
    %43 = tpu.matmul %40, %42, %cst_16 {dimension_numbers = #tpu.dot_dimension_numbers<[1], [0], [0], [1], [0, 0, 1, 1], [], []>} : vector<256x4xf32>, vector<4x8xf32>, vector<256x8xf32> -> vector<256x8xf32>
    %44 = arith.addf %38, %43 : vector<256x8xf32>
    %45 = vector.extract_strided_slice %7 {offsets = [2, 0, 0], sizes = [16, 16, 4], strides = [1, 1, 1]} : vector<18x18x4xf32> to vector<16x16x4xf32>
    %46 = vector.shape_cast %45 : vector<16x16x4xf32> to vector<256x4xf32>
    %47 = vector.extract_strided_slice %2 {offsets = [6, 0, 0], sizes = [1, 4, 8], strides = [1, 1, 1]} : vector<9x4x8xf32> to vector<1x4x8xf32>
    %48 = vector.shape_cast %47 : vector<1x4x8xf32> to vector<4x8xf32>
    %cst_17 = arith.constant dense<0.000000e+00> : vector<256x8xf32>
    %49 = tpu.matmul %46, %48, %cst_17 {dimension_numbers = #tpu.dot_dimension_numbers<[1], [0], [0], [1], [0, 0, 1, 1], [], []>} : vector<256x4xf32>, vector<4x8xf32>, vector<256x8xf32> -> vector<256x8xf32>
    %50 = arith.addf %44, %49 : vector<256x8xf32>
    %51 = vector.extract_strided_slice %7 {offsets = [2, 1, 0], sizes = [16, 16, 4], strides = [1, 1, 1]} : vector<18x18x4xf32> to vector<16x16x4xf32>
    %52 = vector.shape_cast %51 : vector<16x16x4xf32> to vector<256x4xf32>
    %53 = vector.extract_strided_slice %2 {offsets = [7, 0, 0], sizes = [1, 4, 8], strides = [1, 1, 1]} : vector<9x4x8xf32> to vector<1x4x8xf32>
    %54 = vector.shape_cast %53 : vector<1x4x8xf32> to vector<4x8xf32>
    %cst_18 = arith.constant dense<0.000000e+00> : vector<256x8xf32>
    %55 = tpu.matmul %52, %54, %cst_18 {dimension_numbers = #tpu.dot_dimension_numbers<[1], [0], [0], [1], [0, 0, 1, 1], [], []>} : vector<256x4xf32>, vector<4x8xf32>, vector<256x8xf32> -> vector<256x8xf32>
    %56 = arith.addf %50, %55 : vector<256x8xf32>
    %57 = vector.extract_strided_slice %7 {offsets = [2, 2, 0], sizes = [16, 16, 4], strides = [1, 1, 1]} : vector<18x18x4xf32> to vector<16x16x4xf32>
    %58 = vector.shape_cast %57 : vector<16x16x4xf32> to vector<256x4xf32>
    %59 = vector.extract_strided_slice %2 {offsets = [8, 0, 0], sizes = [1, 4, 8], strides = [1, 1, 1]} : vector<9x4x8xf32> to vector<1x4x8xf32>
    %60 = vector.shape_cast %59 : vector<1x4x8xf32> to vector<4x8xf32>
    %cst_19 = arith.constant dense<0.000000e+00> : vector<256x8xf32>
    %61 = tpu.matmul %58, %60, %cst_19 {dimension_numbers = #tpu.dot_dimension_numbers<[1], [0], [0], [1], [0, 0, 1, 1], [], []>} : vector<256x4xf32>, vector<4x8xf32>, vector<256x8xf32> -> vector<256x8xf32>
    %62 = arith.addf %56, %61 : vector<256x8xf32>
    %cst_20 = arith.constant dense<0.000000e+00> : vector<8xf32>
    %63 = vector.multi_reduction <add>, %62, %cst_20 [0] : vector<256x8xf32> to vector<8xf32>
    %64 = vector.shape_cast %63 : vector<8xf32> to vector<1x8xf32>
    %cst_21 = arith.constant 2.560000e+02 : f32
    %65 = vector.broadcast %cst_21 : f32 to vector<1x8xf32>
    %66 = arith.divf %64, %65 : vector<1x8xf32>
    %67 = vector.broadcast %66 : vector<1x8xf32> to vector<256x8xf32>
    %68 = arith.subf %62, %67 : vector<256x8xf32>
    %69 = arith.mulf %68, %68 : vector<256x8xf32>
    %cst_22 = arith.constant dense<0.000000e+00> : vector<8xf32>
    %70 = vector.multi_reduction <add>, %69, %cst_22 [0] : vector<256x8xf32> to vector<8xf32>
    %71 = vector.shape_cast %70 : vector<8xf32> to vector<1x8xf32>
    %cst_23 = arith.constant 2.560000e+02 : f32
    %72 = vector.broadcast %cst_23 : f32 to vector<1x8xf32>
    %73 = arith.divf %71, %72 : vector<1x8xf32>
    %cst_24 = arith.constant 9.99999974E-6 : f32
    %74 = vector.broadcast %cst_24 : f32 to vector<1x8xf32>
    %75 = arith.addf %73, %74 : vector<1x8xf32>
    %76 = math.rsqrt %75 : vector<1x8xf32>
    %77 = vector.broadcast %76 : vector<1x8xf32> to vector<256x8xf32>
    %78 = arith.mulf %68, %77 : vector<256x8xf32>
    %cst_25 = arith.constant 0.000000e+00 : f32
    %79 = vector.broadcast %cst_25 : f32 to vector<256x8xf32>
    %80 = arith.cmpf oge, %78, %79 : vector<256x8xf32>
    %cst_26 = arith.constant 2.000000e-01 : f32
    %81 = vector.broadcast %cst_26 : f32 to vector<256x8xf32>
    %82 = arith.mulf %81, %78 : vector<256x8xf32>
    %83 = arith.select %80, %78, %82 : vector<256x8xi1>, vector<256x8xf32>
    %84 = vector.shape_cast %83 : vector<256x8xf32> to vector<16x16x8xf32>
    %c0_27 = arith.constant 0 : index
    %c0_28 = arith.constant 0 : index
    %c0_29 = arith.constant 0 : index
    %85 = vector.load %arg5[%c0_27, %c0_28, %c0_29] : memref<16x16x8xf32, #tpu.memory_space<vmem>>, vector<16x16x8xf32>
    tpu.vector_store %arg5[%c0_27, %c0_28, %c0_29], %84 {strides = array<i32>} : memref<16x16x8xf32, #tpu.memory_space<vmem>>, vector<16x16x8xf32>,
    %c0_30 = arith.constant 0 : index
    %c0_31 = arith.constant 0 : index
    %c0_32 = arith.constant 0 : index
    %86 = vector.load %arg5[%c0_30, %c0_31, %c0_32] : memref<16x16x8xf32, #tpu.memory_space<vmem>>, vector<16x16x8xf32>
    %cst_33 = arith.constant 0.000000e+00 : f32
    %87 = vector.broadcast %cst_33 : f32 to vector<16x1x8xf32>
    %88 = tpu.concatenate %87, %86, %87 in 1 : vector<16x1x8xf32>, vector<16x16x8xf32>, vector<16x1x8xf32> -> vector<16x18x8xf32>
    %cst_34 = arith.constant 0.000000e+00 : f32
    %89 = vector.broadcast %cst_34 : f32 to vector<1x18x8xf32>
    %90 = tpu.concatenate %89, %88, %89 in 0 : vector<1x18x8xf32>, vector<16x18x8xf32>, vector<1x18x8xf32> -> vector<18x18x8xf32>
    %cst_35 = arith.constant 0.000000e+00 : f32
    %91 = vector.broadcast %cst_35 : f32 to vector<256x8xf32>
    %92 = vector.extract_strided_slice %90 {offsets = [0, 0, 0], sizes = [16, 16, 8], strides = [1, 1, 1]} : vector<18x18x8xf32> to vector<16x16x8xf32>
    %93 = vector.shape_cast %92 : vector<16x16x8xf32> to vector<256x8xf32>
    %94 = vector.extract_strided_slice %3 {offsets = [0, 0, 0], sizes = [1, 8, 8], strides = [1, 1, 1]} : vector<9x8x8xf32> to vector<1x8x8xf32>
    %95 = vector.shape_cast %94 : vector<1x8x8xf32> to vector<8x8xf32>
    %cst_36 = arith.constant dense<0.000000e+00> : vector<256x8xf32>
    %96 = tpu.matmul %93, %95, %cst_36 {dimension_numbers = #tpu.dot_dimension_numbers<[1], [0], [0], [1], [0, 0, 1, 1], [], []>} : vector<256x8xf32>, vector<8x8xf32>, vector<256x8xf32> -> vector<256x8xf32>
    %97 = arith.addf %91, %96 : vector<256x8xf32>
    %98 = vector.extract_strided_slice %90 {offsets = [0, 1, 0], sizes = [16, 16, 8], strides = [1, 1, 1]} : vector<18x18x8xf32> to vector<16x16x8xf32>
    %99 = vector.shape_cast %98 : vector<16x16x8xf32> to vector<256x8xf32>
    %100 = vector.extract_strided_slice %3 {offsets = [1, 0, 0], sizes = [1, 8, 8], strides = [1, 1, 1]} : vector<9x8x8xf32> to vector<1x8x8xf32>
    %101 = vector.shape_cast %100 : vector<1x8x8xf32> to vector<8x8xf32>
    %cst_37 = arith.constant dense<0.000000e+00> : vector<256x8xf32>
    %102 = tpu.matmul %99, %101, %cst_37 {dimension_numbers = #tpu.dot_dimension_numbers<[1], [0], [0], [1], [0, 0, 1, 1], [], []>} : vector<256x8xf32>, vector<8x8xf32>, vector<256x8xf32> -> vector<256x8xf32>
    %103 = arith.addf %97, %102 : vector<256x8xf32>
    %104 = vector.extract_strided_slice %90 {offsets = [0, 2, 0], sizes = [16, 16, 8], strides = [1, 1, 1]} : vector<18x18x8xf32> to vector<16x16x8xf32>
    %105 = vector.shape_cast %104 : vector<16x16x8xf32> to vector<256x8xf32>
    %106 = vector.extract_strided_slice %3 {offsets = [2, 0, 0], sizes = [1, 8, 8], strides = [1, 1, 1]} : vector<9x8x8xf32> to vector<1x8x8xf32>
    %107 = vector.shape_cast %106 : vector<1x8x8xf32> to vector<8x8xf32>
    %cst_38 = arith.constant dense<0.000000e+00> : vector<256x8xf32>
    %108 = tpu.matmul %105, %107, %cst_38 {dimension_numbers = #tpu.dot_dimension_numbers<[1], [0], [0], [1], [0, 0, 1, 1], [], []>} : vector<256x8xf32>, vector<8x8xf32>, vector<256x8xf32> -> vector<256x8xf32>
    %109 = arith.addf %103, %108 : vector<256x8xf32>
    %110 = vector.extract_strided_slice %90 {offsets = [1, 0, 0], sizes = [16, 16, 8], strides = [1, 1, 1]} : vector<18x18x8xf32> to vector<16x16x8xf32>
    %111 = vector.shape_cast %110 : vector<16x16x8xf32> to vector<256x8xf32>
    %112 = vector.extract_strided_slice %3 {offsets = [3, 0, 0], sizes = [1, 8, 8], strides = [1, 1, 1]} : vector<9x8x8xf32> to vector<1x8x8xf32>
    %113 = vector.shape_cast %112 : vector<1x8x8xf32> to vector<8x8xf32>
    %cst_39 = arith.constant dense<0.000000e+00> : vector<256x8xf32>
    %114 = tpu.matmul %111, %113, %cst_39 {dimension_numbers = #tpu.dot_dimension_numbers<[1], [0], [0], [1], [0, 0, 1, 1], [], []>} : vector<256x8xf32>, vector<8x8xf32>, vector<256x8xf32> -> vector<256x8xf32>
    %115 = arith.addf %109, %114 : vector<256x8xf32>
    %116 = vector.extract_strided_slice %90 {offsets = [1, 1, 0], sizes = [16, 16, 8], strides = [1, 1, 1]} : vector<18x18x8xf32> to vector<16x16x8xf32>
    %117 = vector.shape_cast %116 : vector<16x16x8xf32> to vector<256x8xf32>
    %118 = vector.extract_strided_slice %3 {offsets = [4, 0, 0], sizes = [1, 8, 8], strides = [1, 1, 1]} : vector<9x8x8xf32> to vector<1x8x8xf32>
    %119 = vector.shape_cast %118 : vector<1x8x8xf32> to vector<8x8xf32>
    %cst_40 = arith.constant dense<0.000000e+00> : vector<256x8xf32>
    %120 = tpu.matmul %117, %119, %cst_40 {dimension_numbers = #tpu.dot_dimension_numbers<[1], [0], [0], [1], [0, 0, 1, 1], [], []>} : vector<256x8xf32>, vector<8x8xf32>, vector<256x8xf32> -> vector<256x8xf32>
    %121 = arith.addf %115, %120 : vector<256x8xf32>
    %122 = vector.extract_strided_slice %90 {offsets = [1, 2, 0], sizes = [16, 16, 8], strides = [1, 1, 1]} : vector<18x18x8xf32> to vector<16x16x8xf32>
    %123 = vector.shape_cast %122 : vector<16x16x8xf32> to vector<256x8xf32>
    %124 = vector.extract_strided_slice %3 {offsets = [5, 0, 0], sizes = [1, 8, 8], strides = [1, 1, 1]} : vector<9x8x8xf32> to vector<1x8x8xf32>
    %125 = vector.shape_cast %124 : vector<1x8x8xf32> to vector<8x8xf32>
    %cst_41 = arith.constant dense<0.000000e+00> : vector<256x8xf32>
    %126 = tpu.matmul %123, %125, %cst_41 {dimension_numbers = #tpu.dot_dimension_numbers<[1], [0], [0], [1], [0, 0, 1, 1], [], []>} : vector<256x8xf32>, vector<8x8xf32>, vector<256x8xf32> -> vector<256x8xf32>
    %127 = arith.addf %121, %126 : vector<256x8xf32>
    %128 = vector.extract_strided_slice %90 {offsets = [2, 0, 0], sizes = [16, 16, 8], strides = [1, 1, 1]} : vector<18x18x8xf32> to vector<16x16x8xf32>
    %129 = vector.shape_cast %128 : vector<16x16x8xf32> to vector<256x8xf32>
    %130 = vector.extract_strided_slice %3 {offsets = [6, 0, 0], sizes = [1, 8, 8], strides = [1, 1, 1]} : vector<9x8x8xf32> to vector<1x8x8xf32>
    %131 = vector.shape_cast %130 : vector<1x8x8xf32> to vector<8x8xf32>
    %cst_42 = arith.constant dense<0.000000e+00> : vector<256x8xf32>
    %132 = tpu.matmul %129, %131, %cst_42 {dimension_numbers = #tpu.dot_dimension_numbers<[1], [0], [0], [1], [0, 0, 1, 1], [], []>} : vector<256x8xf32>, vector<8x8xf32>, vector<256x8xf32> -> vector<256x8xf32>
    %133 = arith.addf %127, %132 : vector<256x8xf32>
    %134 = vector.extract_strided_slice %90 {offsets = [2, 1, 0], sizes = [16, 16, 8], strides = [1, 1, 1]} : vector<18x18x8xf32> to vector<16x16x8xf32>
    %135 = vector.shape_cast %134 : vector<16x16x8xf32> to vector<256x8xf32>
    %136 = vector.extract_strided_slice %3 {offsets = [7, 0, 0], sizes = [1, 8, 8], strides = [1, 1, 1]} : vector<9x8x8xf32> to vector<1x8x8xf32>
    %137 = vector.shape_cast %136 : vector<1x8x8xf32> to vector<8x8xf32>
    %cst_43 = arith.constant dense<0.000000e+00> : vector<256x8xf32>
    %138 = tpu.matmul %135, %137, %cst_43 {dimension_numbers = #tpu.dot_dimension_numbers<[1], [0], [0], [1], [0, 0, 1, 1], [], []>} : vector<256x8xf32>, vector<8x8xf32>, vector<256x8xf32> -> vector<256x8xf32>
    %139 = arith.addf %133, %138 : vector<256x8xf32>
    %140 = vector.extract_strided_slice %90 {offsets = [2, 2, 0], sizes = [16, 16, 8], strides = [1, 1, 1]} : vector<18x18x8xf32> to vector<16x16x8xf32>
    %141 = vector.shape_cast %140 : vector<16x16x8xf32> to vector<256x8xf32>
    %142 = vector.extract_strided_slice %3 {offsets = [8, 0, 0], sizes = [1, 8, 8], strides = [1, 1, 1]} : vector<9x8x8xf32> to vector<1x8x8xf32>
    %143 = vector.shape_cast %142 : vector<1x8x8xf32> to vector<8x8xf32>
    %cst_44 = arith.constant dense<0.000000e+00> : vector<256x8xf32>
    %144 = tpu.matmul %141, %143, %cst_44 {dimension_numbers = #tpu.dot_dimension_numbers<[1], [0], [0], [1], [0, 0, 1, 1], [], []>} : vector<256x8xf32>, vector<8x8xf32>, vector<256x8xf32> -> vector<256x8xf32>
    %145 = arith.addf %139, %144 : vector<256x8xf32>
    %cst_45 = arith.constant dense<0.000000e+00> : vector<8xf32>
    %146 = vector.multi_reduction <add>, %145, %cst_45 [0] : vector<256x8xf32> to vector<8xf32>
    %147 = vector.shape_cast %146 : vector<8xf32> to vector<1x8xf32>
    %cst_46 = arith.constant 2.560000e+02 : f32
    %148 = vector.broadcast %cst_46 : f32 to vector<1x8xf32>
    %149 = arith.divf %147, %148 : vector<1x8xf32>
    %150 = vector.broadcast %149 : vector<1x8xf32> to vector<256x8xf32>
    %151 = arith.subf %145, %150 : vector<256x8xf32>
    %152 = arith.mulf %151, %151 : vector<256x8xf32>
    %cst_47 = arith.constant dense<0.000000e+00> : vector<8xf32>
    %153 = vector.multi_reduction <add>, %152, %cst_47 [0] : vector<256x8xf32> to vector<8xf32>
    %154 = vector.shape_cast %153 : vector<8xf32> to vector<1x8xf32>
    %cst_48 = arith.constant 2.560000e+02 : f32
    %155 = vector.broadcast %cst_48 : f32 to vector<1x8xf32>
    %156 = arith.divf %154, %155 : vector<1x8xf32>
    %cst_49 = arith.constant 9.99999974E-6 : f32
    %157 = vector.broadcast %cst_49 : f32 to vector<1x8xf32>
    %158 = arith.addf %156, %157 : vector<1x8xf32>
    %159 = math.rsqrt %158 : vector<1x8xf32>
    %160 = vector.broadcast %159 : vector<1x8xf32> to vector<256x8xf32>
    %161 = arith.mulf %151, %160 : vector<256x8xf32>
    %cst_50 = arith.constant 0.000000e+00 : f32
    %162 = vector.broadcast %cst_50 : f32 to vector<256x8xf32>
    %163 = arith.cmpf oge, %161, %162 : vector<256x8xf32>
    %cst_51 = arith.constant 2.000000e-01 : f32
    %164 = vector.broadcast %cst_51 : f32 to vector<256x8xf32>
    %165 = arith.mulf %164, %161 : vector<256x8xf32>
    %166 = arith.select %163, %161, %165 : vector<256x8xi1>, vector<256x8xf32>
    %167 = vector.shape_cast %166 : vector<256x8xf32> to vector<16x16x8xf32>
    %c0_52 = arith.constant 0 : index
    %c0_53 = arith.constant 0 : index
    %c0_54 = arith.constant 0 : index
    %c0_55 = arith.constant 0 : index
    %168 = vector.load %arg4[%c0_52, %c0_53, %c0_54, %c0_55] : memref<1x16x16x8xf32, #tpu.memory_space<vmem>>, vector<1x16x16x8xf32>
    %169 = vector.shape_cast %168 : vector<1x16x16x8xf32> to vector<16x16x8xf32>
    %170 = vector.shape_cast %167 : vector<16x16x8xf32> to vector<1x16x16x8xf32>
    tpu.vector_store %arg4[%c0_52, %c0_53, %c0_54, %c0_55], %170 {strides = array<i32>} : memref<1x16x16x8xf32, #tpu.memory_space<vmem>>, vector<1x16x16x8xf32>,
    return
  }
  func.func @transform_0(%arg0: i32) -> (i32, i32, i32, i32) {
    %c0_i32 = arith.constant 0 : i32
    %c0_i32_0 = arith.constant 0 : i32
    %c0_i32_1 = arith.constant 0 : i32
    %c0_i32_2 = arith.constant 0 : i32
    return %arg0, %c0_i32, %c0_i32_0, %c0_i32_1 : i32, i32, i32, i32
  }
  func.func @transform_1(%arg0: i32) -> (i32, i32, i32) {
    %c0_i32 = arith.constant 0 : i32
    %c0_i32_0 = arith.constant 0 : i32
    %c0_i32_1 = arith.constant 0 : i32
    %c0_i32_2 = arith.constant 0 : i32
    return %c0_i32, %c0_i32_0, %c0_i32_1 : i32, i32, i32
  }
  func.func @transform_2(%arg0: i32) -> (i32, i32, i32) {
    %c0_i32 = arith.constant 0 : i32
    %c0_i32_0 = arith.constant 0 : i32
    %c0_i32_1 = arith.constant 0 : i32
    %c0_i32_2 = arith.constant 0 : i32
    return %c0_i32, %c0_i32_0, %c0_i32_1 : i32, i32, i32
  }
  func.func @transform_3(%arg0: i32) -> (i32, i32, i32, i32) {
    %c0_i32 = arith.constant 0 : i32
    %c0_i32_0 = arith.constant 0 : i32
    %c0_i32_1 = arith.constant 0 : i32
    %c0_i32_2 = arith.constant 0 : i32
    return %arg0, %c0_i32, %c0_i32_0, %c0_i32_1 : i32, i32, i32, i32
  }
}

</mosaic_0001>

<llo_original>
// kernel: tpu_custom_call.1
$region0: #{tpu_custom_call.1}
  #allocation0 [shape = 'u32[]', space=smem, size = 0x4, offset = 0x4, fixed_abs, tag = 'smem constant byte address 0x4 - core index']
  #allocation1 [shape = 'u32[144,128]{1,0:T(1,128)}', space=vmem, size = 0x12000, scoped, tag = 'internal scratch']
  #allocation2 [shape = 'f32[16,16,8]{2,1,0:T(8,128)}', space=vmem, size = 0x20000, scoped, tag = 'scratch operand']
  %s0 = inlined_call_operand.vmem [shape: f32[2,16,16,4], index: 0, kind: input, shape index: {}]
  %s1 = inlined_call_operand.vmem [shape: f32[9,4,8], index: 1, kind: input, shape index: {}]
  %s2 = inlined_call_operand.vmem [shape: f32[9,8,8], index: 2, kind: input, shape index: {}]
  %s3 = inlined_call_operand.vmem [shape: f32[2,16,16,8], index: 3, kind: output, shape index: {}]
  %s4 = sld [smem:[#allocation0]]
  $region45: #{tpu_custom_call.1} parent=0
    _
  %s6 = ssub.s32 1, %s4
  %s7 = scalar_select 0, %s6, %s4
  loop: start=0, step=1, limit=4
  $region2: #{tpu_custom_call.1} parent=0 // loop_pre_header
    _
  $region3: #{tpu_custom_call.1} parent=0 // loop_header
    %s9 = sphi 0, %s13
    %p10 = scmp.ge.s32.totalorder %s9, 4
    %s19 = sphi 0, %s21
    %s22 = sphi 0, %s19
    %s23 = sphi 0, %s22
    %s39 = sphi 0, %s23
    %s43 = sphi 0, %s43
    %s45 = sphi 0, %s43
    %s46 = sphi 0, %s45
    %s60 = sphi 0, %s46
    %s64 = sphi 0, %s64
    %s66 = sphi 0, %s64
    %s67 = sphi 0, %s66
    %s81 = sphi 0, %s67
    %s87 = sphi 0, %s89
    %s90 = sphi 0, %s87
    %s91 = sphi 0, %s90
    %s107 = sphi 0, %s91
  $region4: #{tpu_custom_call.1} parent=0 // loop_header_branch
    %12 = sbr.rel (%p10) target = $region8
  $region5: #{tpu_custom_call.1} parent=0 // loop_body
    %s14 = ssub.s32 %s9, 1
    %s15 = ssub.s32 %s9, 2
    %s16 = sadd.s32 %s9, 1
    %s17 = ssub.s32 %s9, %s16
    %p18 = scmp.eq.s32.totalorder %s17, 0
    %s20 = sadd.s32 %s19, 1
    %s21 = scalar_select %p18, %s19, %s20
    %p24 = pneg %p18
    %p25 = scmp.eq.s32.totalorder %s9, 1
    %p26 = por %p24, %p25
    %p27 = scmp.ne.s32.totalorder %s19, %s22
    %p28 = scmp.eq.s32.totalorder %s9, 0
    %p29 = por %p27, %p28
    %p30 = scmp.ne.s32.totalorder %s19, %s22
    %p31 = scmp.eq.s32.totalorder %s14, 1
    %p32 = por %p30, %p31
    %p33 = scmp.ne.s32.totalorder %s22, %s23
    %p34 = scmp.eq.s32.totalorder %s14, 0
    %p35 = por %p33, %p34
    %p36 = scmp.ne.s32.totalorder %s22, %s23
    %p37 = scmp.eq.s32.totalorder %s15, 1
    %p38 = por %p36, %p37
    %p40 = scmp.ne.s32.totalorder %s23, %s39
    %p41 = scmp.eq.s32.totalorder %s15, 0
    %p42 = por %p40, %p41
    %s44 = sadd.s32 %s43, 1
    %p47 = scmp.eq.s32.totalorder %s9, 1
    %p48 = scmp.ne.s32.totalorder %s43, %s45
    %p49 = scmp.eq.s32.totalorder %s9, 0
    %p50 = por %p48, %p49
    %p51 = scmp.ne.s32.totalorder %s43, %s45
    %p52 = scmp.eq.s32.totalorder %s14, 1
    %p53 = por %p51, %p52
    %p54 = scmp.ne.s32.totalorder %s45, %s46
    %p55 = scmp.eq.s32.totalorder %s14, 0
    %p56 = por %p54, %p55
    %p57 = scmp.ne.s32.totalorder %s45, %s46
    %p58 = scmp.eq.s32.totalorder %s15, 1
    %p59 = por %p57, %p58
    %p61 = scmp.ne.s32.totalorder %s46, %s60
    %p62 = scmp.eq.s32.totalorder %s15, 0
    %p63 = por %p61, %p62
    %s65 = sadd.s32 %s64, 1
    %p68 = scmp.eq.s32.totalorder %s9, 1
    %p69 = scmp.ne.s32.totalorder %s64, %s66
    %p70 = scmp.eq.s32.totalorder %s9, 0
    %p71 = por %p69, %p70
    %p72 = scmp.ne.s32.totalorder %s64, %s66
    %p73 = scmp.eq.s32.totalorder %s14, 1
    %p74 = por %p72, %p73
    %p75 = scmp.ne.s32.totalorder %s66, %s67
    %p76 = scmp.eq.s32.totalorder %s14, 0
    %p77 = por %p75, %p76
    %p78 = scmp.ne.s32.totalorder %s66, %s67
    %p79 = scmp.eq.s32.totalorder %s15, 1
    %p80 = por %p78, %p79
    %p82 = scmp.ne.s32.totalorder %s67, %s81
    %p83 = scmp.eq.s32.totalorder %s15, 0
    %p84 = por %p82, %p83
    %s85 = ssub.s32 %s9, %s16
    %p86 = scmp.eq.s32.totalorder %s85, 0
    %s88 = sadd.s32 %s87, 1
    %s89 = scalar_select %p86, %s87, %s88
    %p92 = pneg %p86
    %p93 = scmp.eq.s32.totalorder %s9, 1
    %p94 = por %p92, %p93
    %p95 = scmp.ne.s32.totalorder %s87, %s90
    %p96 = scmp.eq.s32.totalorder %s9, 0
    %p97 = por %p95, %p96
    %p98 = scmp.ne.s32.totalorder %s87, %s90
    %p99 = scmp.eq.s32.totalorder %s14, 1
    %p100 = por %p98, %p99
    %p101 = scmp.ne.s32.totalorder %s90, %s91
    %p102 = scmp.eq.s32.totalorder %s14, 0
    %p103 = por %p101, %p102
    %p104 = scmp.ne.s32.totalorder %s90, %s91
    %p105 = scmp.eq.s32.totalorder %s15, 1
    %p106 = por %p104, %p105
    %p108 = scmp.ne.s32.totalorder %s91, %s107
    %p109 = scmp.eq.s32.totalorder %s15, 0
    %p110 = por %p108, %p109
    %p111 = scmp.le.s32.totalorder 1, %s9
    %p112 = scmp.lt.s32.totalorder %s9, 3
    %p113 = pnand %p111, %p112
    %p114 = pneg %p113
    // Predicated region
    $region9: #{tpu_custom_call.1} parent=5 // pred_check
      _
    $region10: #{tpu_custom_call.1} parent=5 // pred_check_branch
      %116 = sbr.rel (%p113) target = $region12
    $region11: #{tpu_custom_call.1} parent=5 // pred_region
      %s117 = ssub.s32 %s9, 1
      // Predicated region
      $region13: #{tpu_custom_call.1} parent=11 // pred_check
        %p118 = pneg %p56
      $region14: #{tpu_custom_call.1} parent=11 // pred_check_branch
        %120 = sbr.rel (%p118) target = $region16
      $region15: #{tpu_custom_call.1} parent=11 // pred_region
        _
      $region16: #{tpu_custom_call.1} parent=11 // pred_fallthru
        _
      // Predicated region
      $region17: #{tpu_custom_call.1} parent=11 // pred_check
        %p121 = pneg %p77
      $region18: #{tpu_custom_call.1} parent=11 // pred_check_branch
        %123 = sbr.rel (%p121) target = $region20
      $region19: #{tpu_custom_call.1} parent=11 // pred_region
        _
      $region20: #{tpu_custom_call.1} parent=11 // pred_fallthru
        _
    $region12: #{tpu_custom_call.1} parent=5 // pred_fallthru
      _
    %p124 = scmp.lt.s32.totalorder %s9, 2
    // Predicated region
    $region21: #{tpu_custom_call.1} parent=5 // pred_check
      %p125 = pneg %p124
    $region22: #{tpu_custom_call.1} parent=5 // pred_check_branch
      %127 = sbr.rel (%p125) target = $region24
    $region23: #{tpu_custom_call.1} parent=5 // pred_region
      // Predicated region
      $region25: #{tpu_custom_call.1} parent=23 // pred_check
        %p128 = pneg %p29
      $region26: #{tpu_custom_call.1} parent=23 // pred_check_branch
        %130 = sbr.rel (%p128) target = $region28
      $region27: #{tpu_custom_call.1} parent=23 // pred_region
        %p131 = scmp.lt.s32.totalorder %s9, 1
        %s132 = scalar_select %p131, %s9, 1
        %s133 = smul.addr %s132, 32
        %s134 = smul.addr %s133, 8
        %s135 = scalar_lea.vmem %s0, %s134
      $region28: #{tpu_custom_call.1} parent=23 // pred_fallthru
        _
    $region24: #{tpu_custom_call.1} parent=5 // pred_fallthru
      _
    %p136 = scmp.le.s32.totalorder 1, %s9
    %p137 = scmp.lt.s32.totalorder %s9, 3
    %p138 = pnand %p136, %p137
    %p139 = pneg %p138
    // Predicated region
    $region29: #{tpu_custom_call.1} parent=5 // pred_check
      _
    $region30: #{tpu_custom_call.1} parent=5 // pred_check_branch
      %141 = sbr.rel (%p138) target = $region32
    $region31: #{tpu_custom_call.1} parent=5 // pred_region
      %s142 = ssub.s32 %s9, 1
      %p143 = scmp.lt.s32.totalorder %s14, 1
      %s144 = scalar_select %p143, %s14, 1
      %s145 = smul.addr %s144, 32
      %s146 = smul.addr %s145, 8
      %s147 = scalar_lea.vmem %s0, %s146
      %p148 = pneg %p35
      %p149 = pneg %p32
      %p150 = pneg %p56
      %p151 = pneg %p53
      %p152 = pneg %p77
      %p153 = pneg %p74
      %p154 = pneg %p103
      %p155 = pneg %p100
      %p156 = scmp.lt.s32.totalorder %s14, 1
      %s157 = scalar_select %p156, %s14, 1
      %s158 = smul.addr %s157, 32
      %s159 = smul.addr %s158, 8
      %s160 = scalar_lea.vmem %s3, %s159
      %p161 = scmp.lt.s32.totalorder %s14, 1
      %s162 = scalar_select %p161, %s14, 1
      %s163 = smul.addr %s162, 32
      %s164 = smul.addr %s163, 8
      %s165 = scalar_lea.vmem %s0, %s164
      %p166 = scmp.lt.s32.totalorder %s14, 1
      %s167 = scalar_select %p166, %s14, 1
      %s168 = smul.addr %s167, 32
      %s169 = smul.addr %s168, 8
      %s170 = scalar_lea.vmem %s3, %s169
      %v171 = vld [vmem:[%s165] sm:$0xff]
      %v172 = vld [vmem:[%s165 + $0x8] sm:$0xff]
      %v173 = vld [vmem:[%s165 + $0x10] sm:$0xff]
      %v174 = vld [vmem:[%s165 + $0x18] sm:$0xff]
      %v175 = vld [vmem:[%s165 + $0x20] sm:$0xff]
      %v176 = vld [vmem:[%s165 + $0x28] sm:$0xff]
      %v177 = vld [vmem:[%s165 + $0x30] sm:$0xff]
      %v178 = vld [vmem:[%s165 + $0x38] sm:$0xff]
      %v179 = vld [vmem:[%s165 + $0x40] sm:$0xff]
      %v180 = vld [vmem:[%s165 + $0x48] sm:$0xff]
      %v181 = vld [vmem:[%s165 + $0x50] sm:$0xff]
      %v182 = vld [vmem:[%s165 + $0x58] sm:$0xff]
      %v183 = vld [vmem:[%s165 + $0x60] sm:$0xff]
      %v184 = vld [vmem:[%s165 + $0x68] sm:$0xff]
      %v185 = vld [vmem:[%s165 + $0x70] sm:$0xff]
      %v186 = vld [vmem:[%s165 + $0x78] sm:$0xff]
      %v187 = vld [vmem:[%s165 + $0x80] sm:$0xff]
      %v188 = vld [vmem:[%s165 + $0x88] sm:$0xff]
      %v189 = vld [vmem:[%s165 + $0x90] sm:$0xff]
      %v190 = vld [vmem:[%s165 + $0x98] sm:$0xff]
      %v191 = vld [vmem:[%s165 + $0xa0] sm:$0xff]
      %v192 = vld [vmem:[%s165 + $0xa8] sm:$0xff]
      %v193 = vld [vmem:[%s165 + $0xb0] sm:$0xff]
      %v194 = vld [vmem:[%s165 + $0xb8] sm:$0xff]
      %v195 = vld [vmem:[%s165 + $0xc0] sm:$0xff]
      %v196 = vld [vmem:[%s165 + $0xc8] sm:$0xff]
      %v197 = vld [vmem:[%s165 + $0xd0] sm:$0xff]
      %v198 = vld [vmem:[%s165 + $0xd8] sm:$0xff]
      %v199 = vld [vmem:[%s165 + $0xe0] sm:$0xff]
      %v200 = vld [vmem:[%s165 + $0xe8] sm:$0xff]
      %v201 = vld [vmem:[%s165 + $0xf0] sm:$0xff]
      %v202 = vld [vmem:[%s165 + $0xf8] sm:$0xff]
      %v203 = vld [vmem:[%s1] sm:$0xf]
      %v204 = vld [vmem:[%s1 + $0x4] sm:$0xf]
      %v205 = vld [vmem:[%s1 + $0x8] sm:$0xf]
      %v206 = vld [vmem:[%s1 + $0xc] sm:$0xf]
      %v207 = vld [vmem:[%s1 + $0x10] sm:$0xf]
      %v208 = vld [vmem:[%s1 + $0x14] sm:$0xf]
      %v209 = vld [vmem:[%s1 + $0x18] sm:$0xf]
      %v210 = vld [vmem:[%s1 + $0x1c] sm:$0xf]
      %v211 = vld [vmem:[%s1 + $0x20] sm:$0xf]
      %v212 = vld [vmem:[%s2] sm:$0xff]
      %v213 = vld [vmem:[%s2 + $0x8] sm:$0xff]
      %v214 = vld [vmem:[%s2 + $0x10] sm:$0xff]
      %v215 = vld [vmem:[%s2 + $0x18] sm:$0xff]
      %v216 = vld [vmem:[%s2 + $0x20] sm:$0xff]
      %v217 = vld [vmem:[%s2 + $0x28] sm:$0xff]
      %v218 = vld [vmem:[%s2 + $0x30] sm:$0xff]
      %v219 = vld [vmem:[%s2 + $0x38] sm:$0xff]
      %v220 = vld [vmem:[%s2 + $0x40] sm:$0xff]
      %vm253 = vcmask 1040384
      %v254 = vrot.slane %v171, 7
      %v255 = vrot.slane %v172, 7
      %v256 = vsel %vm253, %v254, %v255
      %v257 = vrot.slane %v173, 7
      %v258 = vrot.slane %v174, 7
      %v259 = vsel %vm253, %v257, %v258
      %v260 = vrot.slane %v175, 7
      %v261 = vrot.slane %v176, 7
      %v262 = vsel %vm253, %v260, %v261
      %v263 = vrot.slane %v177, 7
      %v264 = vrot.slane %v178, 7
      %v265 = vsel %vm253, %v263, %v264
      %v266 = vrot.slane %v179, 7
      %v267 = vrot.slane %v180, 7
      %v268 = vsel %vm253, %v266, %v267
      %v269 = vrot.slane %v181, 7
      %v270 = vrot.slane %v182, 7
      %v271 = vsel %vm253, %v269, %v270
      %v272 = vrot.slane %v183, 7
      %v273 = vrot.slane %v184, 7
      %v274 = vsel %vm253, %v272, %v273
      %v275 = vrot.slane %v185, 7
      %v276 = vrot.slane %v186, 7
      %v277 = vsel %vm253, %v275, %v276
      %v278 = vrot.slane %v187, 7
      %v279 = vrot.slane %v188, 7
      %v280 = vsel %vm253, %v278, %v279
      %v281 = vrot.slane %v189, 7
      %v282 = vrot.slane %v190, 7
      %v283 = vsel %vm253, %v281, %v282
      %v284 = vrot.slane %v191, 7
      %v285 = vrot.slane %v192, 7
      %v286 = vsel %vm253, %v284, %v285
      %v287 = vrot.slane %v193, 7
      %v288 = vrot.slane %v194, 7
      %v289 = vsel %vm253, %v287, %v288
      %v290 = vrot.slane %v195, 7
      %v291 = vrot.slane %v196, 7
      %v292 = vsel %vm253, %v290, %v291
      %v293 = vrot.slane %v197, 7
      %v294 = vrot.slane %v198, 7
      %v295 = vsel %vm253, %v293, %v294
      %v296 = vrot.slane %v199, 7
      %v297 = vrot.slane %v200, 7
      %v298 = vsel %vm253, %v296, %v297
      %v299 = vrot.slane %v201, 7
      %v300 = vrot.slane %v202, 7
      %v301 = vsel %vm253, %v299, %v300
      %v334 = vsel %vm253, 0.0, %v254
      %v335 = vsel %vm253, 0.0, %v257
      %v336 = vsel %vm253, 0.0, %v260
      %v337 = vsel %vm253, 0.0, %v263
      %v338 = vsel %vm253, 0.0, %v266
      %v339 = vsel %vm253, 0.0, %v269
      %v340 = vsel %vm253, 0.0, %v272
      %v341 = vsel %vm253, 0.0, %v275
      %v342 = vsel %vm253, 0.0, %v278
      %v343 = vsel %vm253, 0.0, %v281
      %v344 = vsel %vm253, 0.0, %v284
      %v345 = vsel %vm253, 0.0, %v287
      %v346 = vsel %vm253, 0.0, %v290
      %v347 = vsel %vm253, 0.0, %v293
      %v348 = vsel %vm253, 0.0, %v296
      %v349 = vsel %vm253, 0.0, %v299
      %v350 = vsel %vm253, %v255, 0.0
      %v351 = vsel %vm253, %v258, 0.0
      %v352 = vsel %vm253, %v261, 0.0
      %v353 = vsel %vm253, %v264, 0.0
      %v354 = vsel %vm253, %v267, 0.0
      %v355 = vsel %vm253, %v270, 0.0
      %v356 = vsel %vm253, %v273, 0.0
      %v357 = vsel %vm253, %v276, 0.0
      %v358 = vsel %vm253, %v279, 0.0
      %v359 = vsel %vm253, %v282, 0.0
      %v360 = vsel %vm253, %v285, 0.0
      %v361 = vsel %vm253, %v288, 0.0
      %v362 = vsel %vm253, %v291, 0.0
      %v363 = vsel %vm253, %v294, 0.0
      %v364 = vsel %vm253, %v297, 0.0
      %v365 = vsel %vm253, %v300, 0.0
      %vm397 = vcmask 1046528
      %v398 = vrot.slane 0.0, 1
      %v399 = vsel %vm397, %v398, %v398
      %v400 = vrot.slane %v334, 1
      %v401 = vrot.slane %v256, 1
      %v402 = vsel %vm397, %v400, %v401
      %v403 = vrot.slane %v350, 1
      %v404 = vsel %vm397, %v401, %v403
      %v405 = vrot.slane %v335, 1
      %v406 = vrot.slane %v259, 1
      %v407 = vsel %vm397, %v405, %v406
      %v408 = vrot.slane %v351, 1
      %v409 = vsel %vm397, %v406, %v408
      %v410 = vrot.slane %v336, 1
      %v411 = vrot.slane %v262, 1
      %v412 = vsel %vm397, %v410, %v411
      %v413 = vrot.slane %v352, 1
      %v414 = vsel %vm397, %v411, %v413
      %v415 = vrot.slane %v337, 1
      %v416 = vrot.slane %v265, 1
      %v417 = vsel %vm397, %v415, %v416
      %v418 = vrot.slane %v353, 1
      %v419 = vsel %vm397, %v416, %v418
      %v420 = vrot.slane %v338, 1
      %v421 = vrot.slane %v268, 1
      %v422 = vsel %vm397, %v420, %v421
      %v423 = vrot.slane %v354, 1
      %v424 = vsel %vm397, %v421, %v423
      %v425 = vrot.slane %v339, 1
      %v426 = vrot.slane %v271, 1
      %v427 = vsel %vm397, %v425, %v426
      %v428 = vrot.slane %v355, 1
      %v429 = vsel %vm397, %v426, %v428
      %v430 = vrot.slane %v340, 1
      %v431 = vrot.slane %v274, 1
      %v432 = vsel %vm397, %v430, %v431
      %v433 = vrot.slane %v356, 1
      %v434 = vsel %vm397, %v431, %v433
      %v435 = vrot.slane %v341, 1
      %v436 = vrot.slane %v277, 1
      %v437 = vsel %vm397, %v435, %v436
      %v438 = vrot.slane %v357, 1
      %v439 = vsel %vm397, %v436, %v438
      %v440 = vrot.slane %v342, 1
      %v441 = vrot.slane %v280, 1
      %v442 = vsel %vm397, %v440, %v441
      %v443 = vrot.slane %v358, 1
      %v444 = vsel %vm397, %v441, %v443
      %v445 = vrot.slane %v343, 1
      %v446 = vrot.slane %v283, 1
      %v447 = vsel %vm397, %v445, %v446
      %v448 = vrot.slane %v359, 1
      %v449 = vsel %vm397, %v446, %v448
      %v450 = vrot.slane %v344, 1
      %v451 = vrot.slane %v286, 1
      %v452 = vsel %vm397, %v450, %v451
      %v453 = vrot.slane %v360, 1
      %v454 = vsel %vm397, %v451, %v453
      %v455 = vrot.slane %v345, 1
      %v456 = vrot.slane %v289, 1
      %v457 = vsel %vm397, %v455, %v456
      %v458 = vrot.slane %v361, 1
      %v459 = vsel %vm397, %v456, %v458
      %v460 = vrot.slane %v346, 1
      %v461 = vrot.slane %v292, 1
      %v462 = vsel %vm397, %v460, %v461
      %v463 = vrot.slane %v362, 1
      %v464 = vsel %vm397, %v461, %v463
      %v465 = vrot.slane %v347, 1
      %v466 = vrot.slane %v295, 1
      %v467 = vsel %vm397, %v465, %v466
      %v468 = vrot.slane %v363, 1
      %v469 = vsel %vm397, %v466, %v468
      %v470 = vrot.slane %v348, 1
      %v471 = vrot.slane %v298, 1
      %v472 = vsel %vm397, %v470, %v471
      %v473 = vrot.slane %v364, 1
      %v474 = vsel %vm397, %v471, %v473
      %vm475 = vcmask 31744
      %v476 = vsel %vm475, %v399, 0
      %v478 = vsel %vm475, %v402, 0
      %v480 = vsel %vm475, %v404, 0
      %v482 = vsel %vm475, %v407, 0
      %v484 = vsel %vm475, %v409, 0
      %v486 = vsel %vm475, %v412, 0
      %v488 = vsel %vm475, %v414, 0
      %v490 = vsel %vm475, %v417, 0
      %v492 = vsel %vm475, %v419, 0
      %v494 = vsel %vm475, %v422, 0
      %v496 = vsel %vm475, %v424, 0
      %v498 = vsel %vm475, %v427, 0
      %v500 = vsel %vm475, %v429, 0
      %v502 = vsel %vm475, %v432, 0
      %v504 = vsel %vm475, %v434, 0
      %v506 = vsel %vm475, %v437, 0
      %v508 = vsel %vm475, %v439, 0
      %v510 = vsel %vm475, %v442, 0
      %v512 = vsel %vm475, %v444, 0
      %v514 = vsel %vm475, %v447, 0
      %v516 = vsel %vm475, %v449, 0
      %v518 = vsel %vm475, %v452, 0
      %v520 = vsel %vm475, %v454, 0
      %v522 = vsel %vm475, %v457, 0
      %v524 = vsel %vm475, %v459, 0
      %v526 = vsel %vm475, %v462, 0
      %v528 = vsel %vm475, %v464, 0
      %v530 = vsel %vm475, %v467, 0
      %v532 = vsel %vm475, %v469, 0
      %v534 = vsel %vm475, %v472, 0
      %v536 = vsel %vm475, %v474, 0
      %vm538 = vcmask 1043456
      %v540 = vsel %vm538, %v204, 0
      %542 = vmatprep.subr.mxu0 0.0
      %543 = vmatpush1.msra.mxu0 %v540
      %544 = vmatprep.subr.mxu0 0.0
      %545 = vmatpush1.msra.mxu0 0.0
      %546 = vmatprep.subr.mxu0 0.0
      %547 = vmatpush1.msra.mxu0 0.0
      %548 = vmatprep.subr.mxu0 0.0
      %549 = vmatpush1.msra.mxu0 0.0
      %550 = vmatprep.subr.mxu0 0.0
      %551 = vmatpush1.msra.mxu0 0.0
      %552 = vmatprep.subr.mxu0 0.0
      %553 = vmatpush1.msra.mxu0 0.0
      %554 = vmatprep.subr.mxu0 0.0
      %555 = vmatpush1.msra.mxu0 0.0
      %556 = vmatprep.subr.mxu0 0.0
      %557 = vmatpush1.msra.mxu0 0.0
      %558 = vmatprep.subr.mxu0 0.0
      %559 = vmatpush1.msra.mxu0 0.0
      %560 = vmatprep.subr.mxu0 0.0
      %561 = vmatpush1.msra.mxu0 0.0
      %562 = vmatprep.subr.mxu0 0.0
      %563 = vmatpush1.msra.mxu0 0.0
      %564 = vmatprep.subr.mxu0 0.0
      %565 = vmatpush1.msra.mxu0 0.0
      %566 = vmatprep.subr.mxu0 0.0
      %567 = vmatpush1.msra.mxu0 0.0
      %568 = vmatprep.subr.mxu0 0.0
      %569 = vmatpush1.msra.mxu0 0.0
      %570 = vmatprep.subr.mxu0 0.0
      %571 = vmatpush1.msra.mxu0 0.0
      %572 = vmatprep.subr.mxu0 0.0
      %573 = vmatpush1.msra.mxu0 0.0
      %574 = vmatprep.subr.mxu0 0.0
      %575 = vmatpush1.msra.mxu0 0.0
      %576 = vmatprep.subr.mxu0 0.0
      %577 = vmatpush1.msra.mxu0 0.0
      %578 = vmatprep.subr.mxu0 0.0
      %579 = vmatpush1.msra.mxu0 0.0
      %580 = vmatprep.subr.mxu0 0.0
      %581 = vmatpush1.msra.mxu0 0.0
      %582 = vmatprep.subr.mxu0 0.0
      %583 = vmatpush1.msra.mxu0 0.0
      %584 = vmatprep.subr.mxu0 0.0
      %585 = vmatpush1.msra.mxu0 0.0
      %586 = vmatprep.subr.mxu0 0.0
      %587 = vmatpush1.msra.mxu0 0.0
      %588 = vmatprep.subr.mxu0 0.0
      %589 = vmatpush1.msra.mxu0 0.0
      %590 = vmatprep.subr.mxu0 0.0
      %591 = vmatpush1.msra.mxu0 0.0
      %592 = vmatprep.subr.mxu0 0.0
      %593 = vmatpush1.msra.mxu0 0.0
      %594 = vmatprep.subr.mxu0 0.0
      %595 = vmatpush1.msra.mxu0 0.0
      %596 = vmatprep.subr.mxu0 0.0
      %597 = vmatpush1.msra.mxu0 0.0
      %598 = vmatprep.subr.mxu0 0.0
      %599 = vmatpush1.msra.mxu0 0.0
      %600 = vmatprep.subr.mxu0 0.0
      %601 = vmatpush1.msra.mxu0 0.0
      %602 = vmatprep.subr.mxu0 0.0
      %603 = vmatpush1.msra.mxu0 0.0
      %604 = vmatprep.subr.mxu0 0.0
      %605 = vmatpush1.msra.mxu0 0.0
      %606 = vmatprep.mubr.f32.mxu0 0.0
      %607 = vmatmul.mubr.f32.gmra.mrb[0].mxu0 %v476
      %v608 = vpop.f32.mrb[0].mxu0
      %v609 = vadd.f32 0.0, %v608
      %v610 = vpop.f32.mrb[0].mxu0
      %611 = vmatprep.mubr.f32.mxu0 0.0
      %612 = vmatmul.mubr.f32.gmra.mrb[0].mxu0 %v476
      %v613 = vpop.f32.mrb[0].mxu0
      %v614 = vadd.f32 0.0, %v613
      %v615 = vpop.f32.mrb[0].mxu0
      %616 = vmatprep.mubr.f32.mxu0 0.0
      %617 = vmatmul.mubr.f32.gmra.mrb[0].mxu0 %v478
      %v618 = vpop.f32.mrb[0].mxu0
      %v619 = vadd.f32 0.0, %v618
      %v620 = vpop.f32.mrb[0].mxu0
      %621 = vmatprep.mubr.f32.mxu0 0.0
      %622 = vmatmul.mubr.f32.gmra.mrb[0].mxu0 %v480
      %v623 = vpop.f32.mrb[0].mxu0
      %v624 = vadd.f32 0.0, %v623
      %v625 = vpop.f32.mrb[0].mxu0
      %626 = vmatprep.mubr.f32.mxu0 0.0
      %627 = vmatmul.mubr.f32.gmra.mrb[0].mxu0 %v482
      %v628 = vpop.f32.mrb[0].mxu0
      %v629 = vadd.f32 0.0, %v628
      %v630 = vpop.f32.mrb[0].mxu0
      %631 = vmatprep.mubr.f32.mxu0 0.0
      %632 = vmatmul.mubr.f32.gmra.mrb[0].mxu0 %v484
      %v633 = vpop.f32.mrb[0].mxu0
      %v634 = vadd.f32 0.0, %v633
      %v635 = vpop.f32.mrb[0].mxu0
      %636 = vmatprep.mubr.f32.mxu0 0.0
      %637 = vmatmul.mubr.f32.gmra.mrb[0].mxu0 %v486
      %v638 = vpop.f32.mrb[0].mxu0
      %v639 = vadd.f32 0.0, %v638
      %v640 = vpop.f32.mrb[0].mxu0
      %641 = vmatprep.mubr.f32.mxu0 0.0
      %642 = vmatmul.mubr.f32.gmra.mrb[0].mxu0 %v488
      %v643 = vpop.f32.mrb[0].mxu0
      %v644 = vadd.f32 0.0, %v643
      %v645 = vpop.f32.mrb[0].mxu0
      %646 = vmatprep.mubr.f32.mxu0 0.0
      %647 = vmatmul.mubr.f32.gmra.mrb[0].mxu0 %v490
      %v648 = vpop.f32.mrb[0].mxu0
      %v649 = vadd.f32 0.0, %v648
      %v650 = vpop.f32.mrb[0].mxu0
      %651 = vmatprep.mubr.f32.mxu0 0.0
      %652 = vmatmul.mubr.f32.gmra.mrb[0].mxu0 %v492
      %v653 = vpop.f32.mrb[0].mxu0
      %v654 = vadd.f32 0.0, %v653
      %v655 = vpop.f32.mrb[0].mxu0
      %656 = vmatprep.mubr.f32.mxu0 0.0
      %657 = vmatmul.mubr.f32.gmra.mrb[0].mxu0 %v494
      %v658 = vpop.f32.mrb[0].mxu0
      %v659 = vadd.f32 0.0, %v658
      %v660 = vpop.f32.mrb[0].mxu0
      %661 = vmatprep.mubr.f32.mxu0 0.0
      %662 = vmatmul.mubr.f32.gmra.mrb[0].mxu0 %v496
      %v663 = vpop.f32.mrb[0].mxu0
      %v664 = vadd.f32 0.0, %v663
      %v665 = vpop.f32.mrb[0].mxu0
      %666 = vmatprep.mubr.f32.mxu0 0.0
      %667 = vmatmul.mubr.f32.gmra.mrb[0].mxu0 %v498
      %v668 = vpop.f32.mrb[0].mxu0
      %v669 = vadd.f32 0.0, %v668
      %v670 = vpop.f32.mrb[0].mxu0
      %671 = vmatprep.mubr.f32.mxu0 0.0
      %672 = vmatmul.mubr.f32.gmra.mrb[0].mxu0 %v500
      %v673 = vpop.f32.mrb[0].mxu0
      %v674 = vadd.f32 0.0, %v673
      %v675 = vpop.f32.mrb[0].mxu0
      %676 = vmatprep.mubr.f32.mxu0 0.0
      %677 = vmatmul.mubr.f32.gmra.mrb[0].mxu0 %v502
      %v678 = vpop.f32.mrb[0].mxu0
      %v679 = vadd.f32 0.0, %v678
      %v680 = vpop.f32.mrb[0].mxu0
      %681 = vmatprep.mubr.f32.mxu0 0.0
      %682 = vmatmul.mubr.f32.gmra.mrb[0].mxu0 %v504
      %v683 = vpop.f32.mrb[0].mxu0
      %v684 = vadd.f32 0.0, %v683
      %v685 = vpop.f32.mrb[0].mxu0
      %686 = vmatprep.mubr.f32.mxu0 0.0
      %687 = vmatmul.mubr.f32.gmra.mrb[0].mxu0 %v506
      %v688 = vpop.f32.mrb[0].mxu0
      %v689 = vadd.f32 0.0, %v688
      %v690 = vpop.f32.mrb[0].mxu0
      %691 = vmatprep.mubr.f32.mxu0 0.0
      %692 = vmatmul.mubr.f32.gmra.mrb[0].mxu0 %v508
      %v693 = vpop.f32.mrb[0].mxu0
      %v694 = vadd.f32 0.0, %v693
      %v695 = vpop.f32.mrb[0].mxu0
      %696 = vmatprep.mubr.f32.mxu0 0.0
      %697 = vmatmul.mubr.f32.gmra.mrb[0].mxu0 %v510
      %v698 = vpop.f32.mrb[0].mxu0
      %v699 = vadd.f32 0.0, %v698
      %v700 = vpop.f32.mrb[0].mxu0
      %701 = vmatprep.mubr.f32.mxu0 0.0
      %702 = vmatmul.mubr.f32.gmra.mrb[0].mxu0 %v512
      %v703 = vpop.f32.mrb[0].mxu0
      %v704 = vadd.f32 0.0, %v703
      %v705 = vpop.f32.mrb[0].mxu0
      %706 = vmatprep.mubr.f32.mxu0 0.0
      %707 = vmatmul.mubr.f32.gmra.mrb[0].mxu0 %v514
      %v708 = vpop.f32.mrb[0].mxu0
      %v709 = vadd.f32 0.0, %v708
      %v710 = vpop.f32.mrb[0].mxu0
      %711 = vmatprep.mubr.f32.mxu0 0.0
      %712 = vmatmul.mubr.f32.gmra.mrb[0].mxu0 %v516
      %v713 = vpop.f32.mrb[0].mxu0
      %v714 = vadd.f32 0.0, %v713
      %v715 = vpop.f32.mrb[0].mxu0
      %716 = vmatprep.mubr.f32.mxu0 0.0
      %717 = vmatmul.mubr.f32.gmra.mrb[0].mxu0 %v518
      %v718 = vpop.f32.mrb[0].mxu0
      %v719 = vadd.f32 0.0, %v718
      %v720 = vpop.f32.mrb[0].mxu0
      %721 = vmatprep.mubr.f32.mxu0 0.0
      %722 = vmatmul.mubr.f32.gmra.mrb[0].mxu0 %v520
      %v723 = vpop.f32.mrb[0].mxu0
      %v724 = vadd.f32 0.0, %v723
      %v725 = vpop.f32.mrb[0].mxu0
      %726 = vmatprep.mubr.f32.mxu0 0.0
      %727 = vmatmul.mubr.f32.gmra.mrb[0].mxu0 %v522
      %v728 = vpop.f32.mrb[0].mxu0
      %v729 = vadd.f32 0.0, %v728
      %v730 = vpop.f32.mrb[0].mxu0
      %731 = vmatprep.mubr.f32.mxu0 0.0
      %732 = vmatmul.mubr.f32.gmra.mrb[0].mxu0 %v524
      %v733 = vpop.f32.mrb[0].mxu0
      %v734 = vadd.f32 0.0, %v733
      %v735 = vpop.f32.mrb[0].mxu0
      %736 = vmatprep.mubr.f32.mxu0 0.0
      %737 = vmatmul.mubr.f32.gmra.mrb[0].mxu0 %v526
      %v738 = vpop.f32.mrb[0].mxu0
      %v739 = vadd.f32 0.0, %v738
      %v740 = vpop.f32.mrb[0].mxu0
      %741 = vmatprep.mubr.f32.mxu0 0.0
      %742 = vmatmul.mubr.f32.gmra.mrb[0].mxu0 %v528
      %v743 = vpop.f32.mrb[0].mxu0
      %v744 = vadd.f32 0.0, %v743
      %v745 = vpop.f32.mrb[0].mxu0
      %746 = vmatprep.mubr.f32.mxu0 0.0
      %747 = vmatmul.mubr.f32.gmra.mrb[0].mxu0 %v530
      %v748 = vpop.f32.mrb[0].mxu0
      %v749 = vadd.f32 0.0, %v748
      %v750 = vpop.f32.mrb[0].mxu0
      %751 = vmatprep.mubr.f32.mxu0 0.0
      %752 = vmatmul.mubr.f32.gmra.mrb[0].mxu0 %v532
      %v753 = vpop.f32.mrb[0].mxu0
      %v754 = vadd.f32 0.0, %v753
      %v755 = vpop.f32.mrb[0].mxu0
      %756 = vmatprep.mubr.f32.mxu0 0.0
      %757 = vmatmul.mubr.f32.gmra.mrb[0].mxu0 %v534
      %v758 = vpop.f32.mrb[0].mxu0
      %v759 = vadd.f32 0.0, %v758
      %v760 = vpop.f32.mrb[0].mxu0
      %761 = vmatprep.mubr.f32.mxu0 0.0
      %762 = vmatmul.mubr.f32.gmra.mrb[0].mxu0 %v536
      %v763 = vpop.f32.mrb[0].mxu0
      %v764 = vadd.f32 0.0, %v763
      %v765 = vpop.f32.mrb[0].mxu0
      %766 = vdwg.mxu0
      %v767 = vsel %vm475, 0.0, 0
      %v769 = vsel %vm475, %v334, 0
      %v771 = vsel %vm475, %v256, 0
      %v773 = vsel %vm475, %v335, 0
      %v775 = vsel %vm475, %v259, 0
      %v777 = vsel %vm475, %v336, 0
      %v779 = vsel %vm475, %v262, 0
      %v781 = vsel %vm475, %v337, 0
      %v783 = vsel %vm475, %v265, 0
      %v785 = vsel %vm475, %v338, 0
      %v787 = vsel %vm475, %v268, 0
      %v789 = vsel %vm475, %v339, 0
      %v791 = vsel %vm475, %v271, 0
      %v793 = vsel %vm475, %v340, 0
      %v795 = vsel %vm475, %v274, 0
      %v797 = vsel %vm475, %v341, 0
      %v799 = vsel %vm475, %v277, 0
      %v801 = vsel %vm475, %v342, 0
      %v803 = vsel %vm475, %v280, 0
      %v805 = vsel %vm475, %v343, 0
      %v807 = vsel %vm475, %v283, 0
      %v809 = vsel %vm475, %v344, 0
      %v811 = vsel %vm475, %v286, 0
      %v813 = vsel %vm475, %v345, 0
      %v815 = vsel %vm475, %v289, 0
      %v817 = vsel %vm475, %v346, 0
      %v819 = vsel %vm475, %v292, 0
      %v821 = vsel %vm475, %v347, 0
      %v823 = vsel %vm475, %v295, 0
      %v825 = vsel %vm475, %v348, 0
      %v827 = vsel %vm475, %v298, 0
      %v830 = vsel %vm538, %v203, 0
      %832 = vmatprep.subr.mxu0 0.0
      %833 = vmatpush1.msra.mxu0 %v830
      %834 = vmatprep.subr.mxu0 0.0
      %835 = vmatpush1.msra.mxu0 0.0
      %836 = vmatprep.subr.mxu0 0.0
      %837 = vmatpush1.msra.mxu0 0.0
      %838 = vmatprep.subr.mxu0 0.0
      %839 = vmatpush1.msra.mxu0 0.0
      %840 = vmatprep.subr.mxu0 0.0
      %841 = vmatpush1.msra.mxu0 0.0
      %842 = vmatprep.subr.mxu0 0.0
      %843 = vmatpush1.msra.mxu0 0.0
      %844 = vmatprep.subr.mxu0 0.0
      %845 = vmatpush1.msra.mxu0 0.0
      %846 = vmatprep.subr.mxu0 0.0
      %847 = vmatpush1.msra.mxu0 0.0
      %848 = vmatprep.subr.mxu0 0.0
      %849 = vmatpush1.msra.mxu0 0.0
      %850 = vmatprep.subr.mxu0 0.0
      %851 = vmatpush1.msra.mxu0 0.0
      %852 = vmatprep.subr.mxu0 0.0
      %853 = vmatpush1.msra.mxu0 0.0
      %854 = vmatprep.subr.mxu0 0.0
      %855 = vmatpush1.msra.mxu0 0.0
      %856 = vmatprep.subr.mxu0 0.0
      %857 = vmatpush1.msra.mxu0 0.0
      %858 = vmatprep.subr.mxu0 0.0
      %859 = vmatpush1.msra.mxu0 0.0
      %860 = vmatprep.subr.mxu0 0.0
      %861 = vmatpush1.msra.mxu0 0.0
      %862 = vmatprep.subr.mxu0 0.0
      %863 = vmatpush1.msra.mxu0 0.0
      %864 = vmatprep.subr.mxu0 0.0
      %865 = vmatpush1.msra.mxu0 0.0
      %866 = vmatprep.subr.mxu0 0.0
      %867 = vmatpush1.msra.mxu0 0.0
      %868 = vmatprep.subr.mxu0 0.0
      %869 = vmatpush1.msra.mxu0 0.0
      %870 = vmatprep.subr.mxu0 0.0
      %871 = vmatpush1.msra.mxu0 0.0
      %872 = vmatprep.subr.mxu0 0.0
      %873 = vmatpush1.msra.mxu0 0.0
      %874 = vmatprep.subr.mxu0 0.0
      %875 = vmatpush1.msra.mxu0 0.0
      %876 = vmatprep.subr.mxu0 0.0
      %877 = vmatpush1.msra.mxu0 0.0
      %878 = vmatprep.subr.mxu0 0.0
      %879 = vmatpush1.msra.mxu0 0.0
      %880 = vmatprep.subr.mxu0 0.0
      %881 = vmatpush1.msra.mxu0 0.0
      %882 = vmatprep.subr.mxu0 0.0
      %883 = vmatpush1.msra.mxu0 0.0
      %884 = vmatprep.subr.mxu0 0.0
      %885 = vmatpush1.msra.mxu0 0.0
      %886 = vmatprep.subr.mxu0 0.0
      %887 = vmatpush1.msra.mxu0 0.0
      %888 = vmatprep.subr.mxu0 0.0
      %889 = vmatpush1.msra.mxu0 0.0
      %890 = vmatprep.subr.mxu0 0.0
      %891 = vmatpush1.msra.mxu0 0.0
      %892 = vmatprep.subr.mxu0 0.0
      %893 = vmatpush1.msra.mxu0 0.0
      %894 = vmatprep.subr.mxu0 0.0
      %895 = vmatpush1.msra.mxu0 0.0
      %896 = vmatprep.mubr.f32.mxu0 0.0
      %897 = vmatmul.mubr.f32.gmra.mrb[0].mxu0 %v767
      %v898 = vpop.f32.mrb[0].mxu0
      %v899 = vadd.f32 %v609, %v898
      %v900 = vpop.f32.mrb[0].mxu0
      %901 = vmatprep.mubr.f32.mxu0 0.0
      %902 = vmatmul.mubr.f32.gmra.mrb[0].mxu0 %v767
      %v903 = vpop.f32.mrb[0].mxu0
      %v904 = vadd.f32 %v614, %v903
      %v905 = vpop.f32.mrb[0].mxu0
      %906 = vmatprep.mubr.f32.mxu0 0.0
      %907 = vmatmul.mubr.f32.gmra.mrb[0].mxu0 %v769
      %v908 = vpop.f32.mrb[0].mxu0
      %v909 = vadd.f32 %v619, %v908
      %v910 = vpop.f32.mrb[0].mxu0
      %911 = vmatprep.mubr.f32.mxu0 0.0
      %912 = vmatmul.mubr.f32.gmra.mrb[0].mxu0 %v771
      %v913 = vpop.f32.mrb[0].mxu0
      %v914 = vadd.f32 %v624, %v913
      %v915 = vpop.f32.mrb[0].mxu0
      %916 = vmatprep.mubr.f32.mxu0 0.0
      %917 = vmatmul.mubr.f32.gmra.mrb[0].mxu0 %v773
      %v918 = vpop.f32.mrb[0].mxu0
      %v919 = vadd.f32 %v629, %v918
      %v920 = vpop.f32.mrb[0].mxu0
      %921 = vmatprep.mubr.f32.mxu0 0.0
      %922 = vmatmul.mubr.f32.gmra.mrb[0].mxu0 %v775
      %v923 = vpop.f32.mrb[0].mxu0
      %v924 = vadd.f32 %v634, %v923
      %v925 = vpop.f32.mrb[0].mxu0
      %926 = vmatprep.mubr.f32.mxu0 0.0
      %927 = vmatmul.mubr.f32.gmra.mrb[0].mxu0 %v777
      %v928 = vpop.f32.mrb[0].mxu0
      %v929 = vadd.f32 %v639, %v928
      %v930 = vpop.f32.mrb[0].mxu0
      %931 = vmatprep.mubr.f32.mxu0 0.0
      %932 = vmatmul.mubr.f32.gmra.mrb[0].mxu0 %v779
      %v933 = vpop.f32.mrb[0].mxu0
      %v934 = vadd.f32 %v644, %v933
      %v935 = vpop.f32.mrb[0].mxu0
      %936 = vmatprep.mubr.f32.mxu0 0.0
      %937 = vmatmul.mubr.f32.gmra.mrb[0].mxu0 %v781
      %v938 = vpop.f32.mrb[0].mxu0
      %v939 = vadd.f32 %v649, %v938
      %v940 = vpop.f32.mrb[0].mxu0
      %941 = vmatprep.mubr.f32.mxu0 0.0
      %942 = vmatmul.mubr.f32.gmra.mrb[0].mxu0 %v783
      %v943 = vpop.f32.mrb[0].mxu0
      %v944 = vadd.f32 %v654, %v943
      %v945 = vpop.f32.mrb[0].mxu0
      %946 = vmatprep.mubr.f32.mxu0 0.0
      %947 = vmatmul.mubr.f32.gmra.mrb[0].mxu0 %v785
      %v948 = vpop.f32.mrb[0].mxu0
      %v949 = vadd.f32 %v659, %v948
      %v950 = vpop.f32.mrb[0].mxu0
      %951 = vmatprep.mubr.f32.mxu0 0.0
      %952 = vmatmul.mubr.f32.gmra.mrb[0].mxu0 %v787
      %v953 = vpop.f32.mrb[0].mxu0
      %v954 = vadd.f32 %v664, %v953
      %v955 = vpop.f32.mrb[0].mxu0
      %956 = vmatprep.mubr.f32.mxu0 0.0
      %957 = vmatmul.mubr.f32.gmra.mrb[0].mxu0 %v789
      %v958 = vpop.f32.mrb[0].mxu0
      %v959 = vadd.f32 %v669, %v958
      %v960 = vpop.f32.mrb[0].mxu0
      %961 = vmatprep.mubr.f32.mxu0 0.0
      %962 = vmatmul.mubr.f32.gmra.mrb[0].mxu0 %v791
      %v963 = vpop.f32.mrb[0].mxu0
      %v964 = vadd.f32 %v674, %v963
      %v965 = vpop.f32.mrb[0].mxu0
      %966 = vmatprep.mubr.f32.mxu0 0.0
      %967 = vmatmul.mubr.f32.gmra.mrb[0].mxu0 %v793
      %v968 = vpop.f32.mrb[0].mxu0
      %v969 = vadd.f32 %v679, %v968
      %v970 = vpop.f32.mrb[0].mxu0
      %971 = vmatprep.mubr.f32.mxu0 0.0
      %972 = vmatmul.mubr.f32.gmra.mrb[0].mxu0 %v795
      %v973 = vpop.f32.mrb[0].mxu0
      %v974 = vadd.f32 %v684, %v973
      %v975 = vpop.f32.mrb[0].mxu0
      %976 = vmatprep.mubr.f32.mxu0 0.0
      %977 = vmatmul.mubr.f32.gmra.mrb[0].mxu0 %v797
      %v978 = vpop.f32.mrb[0].mxu0
      %v979 = vadd.f32 %v689, %v978
      %v980 = vpop.f32.mrb[0].mxu0
      %981 = vmatprep.mubr.f32.mxu0 0.0
      %982 = vmatmul.mubr.f32.gmra.mrb[0].mxu0 %v799
      %v983 = vpop.f32.mrb[0].mxu0
      %v984 = vadd.f32 %v694, %v983
      %v985 = vpop.f32.mrb[0].mxu0
      %986 = vmatprep.mubr.f32.mxu0 0.0
      %987 = vmatmul.mubr.f32.gmra.mrb[0].mxu0 %v801
      %v988 = vpop.f32.mrb[0].mxu0
      %v989 = vadd.f32 %v699, %v988
      %v990 = vpop.f32.mrb[0].mxu0
      %991 = vmatprep.mubr.f32.mxu0 0.0
      %992 = vmatmul.mubr.f32.gmra.mrb[0].mxu0 %v803
      %v993 = vpop.f32.mrb[0].mxu0
      %v994 = vadd.f32 %v704, %v993
      %v995 = vpop.f32.mrb[0].mxu0
      %996 = vmatprep.mubr.f32.mxu0 0.0
      %997 = vmatmul.mubr.f32.gmra.mrb[0].mxu0 %v805
      %v998 = vpop.f32.mrb[0].mxu0
      %v999 = vadd.f32 %v709, %v998
      %v1000 = vpop.f32.mrb[0].mxu0
      %1001 = vmatprep.mubr.f32.mxu0 0.0
      %1002 = vmatmul.mubr.f32.gmra.mrb[0].mxu0 %v807
      %v1003 = vpop.f32.mrb[0].mxu0
      %v1004 = vadd.f32 %v714, %v1003
      %v1005 = vpop.f32.mrb[0].mxu0
      %1006 = vmatprep.mubr.f32.mxu0 0.0
      %1007 = vmatmul.mubr.f32.gmra.mrb[0].mxu0 %v809
      %v1008 = vpop.f32.mrb[0].mxu0
      %v1009 = vadd.f32 %v719, %v1008
      %v1010 = vpop.f32.mrb[0].mxu0
      %1011 = vmatprep.mubr.f32.mxu0 0.0
      %1012 = vmatmul.mubr.f32.gmra.mrb[0].mxu0 %v811
      %v1013 = vpop.f32.mrb[0].mxu0
      %v1014 = vadd.f32 %v724, %v1013
      %v1015 = vpop.f32.mrb[0].mxu0
      %1016 = vmatprep.mubr.f32.mxu0 0.0
      %1017 = vmatmul.mubr.f32.gmra.mrb[0].mxu0 %v813
      %v1018 = vpop.f32.mrb[0].mxu0
      %v1019 = vadd.f32 %v729, %v1018
      %v1020 = vpop.f32.mrb[0].mxu0
      %1021 = vmatprep.mubr.f32.mxu0 0.0
      %1022 = vmatmul.mubr.f32.gmra.mrb[0].mxu0 %v815
      %v1023 = vpop.f32.mrb[0].mxu0
      %v1024 = vadd.f32 %v734, %v1023
      %v1025 = vpop.f32.mrb[0].mxu0
      %1026 = vmatprep.mubr.f32.mxu0 0.0
      %1027 = vmatmul.mubr.f32.gmra.mrb[0].mxu0 %v817
      %v1028 = vpop.f32.mrb[0].mxu0
      %v1029 = vadd.f32 %v739, %v1028
      %v1030 = vpop.f32.mrb[0].mxu0
      %1031 = vmatprep.mubr.f32.mxu0 0.0
      %1032 = vmatmul.mubr.f32.gmra.mrb[0].mxu0 %v819
      %v1033 = vpop.f32.mrb[0].mxu0
      %v1034 = vadd.f32 %v744, %v1033
      %v1035 = vpop.f32.mrb[0].mxu0
      %1036 = vmatprep.mubr.f32.mxu0 0.0
      %1037 = vmatmul.mubr.f32.gmra.mrb[0].mxu0 %v821
      %v1038 = vpop.f32.mrb[0].mxu0
      %v1039 = vadd.f32 %v749, %v1038
      %v1040 = vpop.f32.mrb[0].mxu0
      %1041 = vmatprep.mubr.f32.mxu0 0.0
      %1042 = vmatmul.mubr.f32.gmra.mrb[0].mxu0 %v823
      %v1043 = vpop.f32.mrb[0].mxu0
      %v1044 = vadd.f32 %v754, %v1043
      %v1045 = vpop.f32.mrb[0].mxu0
      %1046 = vmatprep.mubr.f32.mxu0 0.0
      %1047 = vmatmul.mubr.f32.gmra.mrb[0].mxu0 %v825
      %v1048 = vpop.f32.mrb[0].mxu0
      %v1049 = vadd.f32 %v759, %v1048
      %v1050 = vpop.f32.mrb[0].mxu0
      %1051 = vmatprep.mubr.f32.mxu0 0.0
      %1052 = vmatmul.mubr.f32.gmra.mrb[0].mxu0 %v827
      %v1053 = vpop.f32.mrb[0].mxu0
      %v1054 = vadd.f32 %v764, %v1053
      %v1055 = vpop.f32.mrb[0].mxu0
      %1056 = vdwg.mxu0
      %vm1057 = vcmask 1045504
      %v1058 = vrot.slane 0.0, 2
      %v1059 = vsel %vm1057, %v1058, %v1058
      %v1060 = vrot.slane %v334, 2
      %v1061 = vrot.slane %v256, 2
      %v1062 = vsel %vm1057, %v1060, %v1061
      %v1063 = vrot.slane %v350, 2
      %v1064 = vsel %vm1057, %v1061, %v1063
      %v1065 = vrot.slane %v335, 2
      %v1066 = vrot.slane %v259, 2
      %v1067 = vsel %vm1057, %v1065, %v1066
      %v1068 = vrot.slane %v351, 2
      %v1069 = vsel %vm1057, %v1066, %v1068
      %v1070 = vrot.slane %v336, 2
      %v1071 = vrot.slane %v262, 2
      %v1072 = vsel %vm1057, %v1070, %v1071
      %v1073 = vrot.slane %v352, 2
      %v1074 = vsel %vm1057, %v1071, %v1073
      %v1075 = vrot.slane %v337, 2
      %v1076 = vrot.slane %v265, 2
      %v1077 = vsel %vm1057, %v1075, %v1076
      %v1078 = vrot.slane %v353, 2
      %v1079 = vsel %vm1057, %v1076, %v1078
      %v1080 = vrot.slane %v338, 2
      %v1081 = vrot.slane %v268, 2
      %v1082 = vsel %vm1057, %v1080, %v1081
      %v1083 = vrot.slane %v354, 2
      %v1084 = vsel %vm1057, %v1081, %v1083
      %v1085 = vrot.slane %v339, 2
      %v1086 = vrot.slane %v271, 2
      %v1087 = vsel %vm1057, %v1085, %v1086
      %v1088 = vrot.slane %v355, 2
      %v1089 = vsel %vm1057, %v1086, %v1088
      %v1090 = vrot.slane %v340, 2
      %v1091 = vrot.slane %v274, 2
      %v1092 = vsel %vm1057, %v1090, %v1091
      %v1093 = vrot.slane %v356, 2
      %v1094 = vsel %vm1057, %v1091, %v1093
      %v1095 = vrot.slane %v341, 2
      %v1096 = vrot.slane %v277, 2
      %v1097 = vsel %vm1057, %v1095, %v1096
      %v1098 = vrot.slane %v357, 2
      %v1099 = vsel %vm1057, %v1096, %v1098
      %v1100 = vrot.slane %v342, 2
      %v1101 = vrot.slane %v280, 2
      %v1102 = vsel %vm1057, %v1100, %v1101
      %v1103 = vrot.slane %v358, 2
      %v1104 = vsel %vm1057, %v1101, %v1103
      %v1105 = vrot.slane %v343, 2
      %v1106 = vrot.slane %v283, 2
      %v1107 = vsel %vm1057, %v1105, %v1106
      %v1108 = vrot.slane %v359, 2
      %v1109 = vsel %vm1057, %v1106, %v1108
      %v1110 = vrot.slane %v344, 2
      %v1111 = vrot.slane %v286, 2
      %v1112 = vsel %vm1057, %v1110, %v1111
      %v1113 = vrot.slane %v360, 2
      %v1114 = vsel %vm1057, %v1111, %v1113
      %v1115 = vrot.slane %v345, 2
      %v1116 = vrot.slane %v289, 2
      %v1117 = vsel %vm1057, %v1115, %v1116
      %v1118 = vrot.slane %v361, 2
      %v1119 = vsel %vm1057, %v1116, %v1118
      %v1120 = vrot.slane %v346, 2
      %v1121 = vrot.slane %v292, 2
      %v1122 = vsel %vm1057, %v1120, %v1121
      %v1123 = vrot.slane %v362, 2
      %v1124 = vsel %vm1057, %v1121, %v1123
      %v1125 = vrot.slane %v347, 2
      %v1126 = vrot.slane %v295, 2
      %v1127 = vsel %vm1057, %v1125, %v1126
      %v1128 = vrot.slane %v363, 2
      %v1129 = vsel %vm1057, %v1126, %v1128
      %v1130 = vrot.slane %v348, 2
      %v1131 = vrot.slane %v298, 2
      %v1132 = vsel %vm1057, %v1130, %v1131
      %v1133 = vrot.slane %v364, 2
      %v1134 = vsel %vm1057, %v1131, %v1133
      %v1135 = vsel %vm475, %v1059, 0
      %v1137 = vsel %vm475, %v1062, 0
      %v1139 = vsel %vm475, %v1064, 0
      %v1141 = vsel %vm475, %v1067, 0
      %v1143 = vsel %vm475, %v1069, 0
      %v1145 = vsel %vm475, %v1072, 0
      %v1147 = vsel %vm475, %v1074, 0
      %v1149 = vsel %vm475, %v1077, 0
      %v1151 = vsel %vm475, %v1079, 0
      %v1153 = vsel %vm475, %v1082, 0
      %v1155 = vsel %vm475, %v1084, 0
      %v1157 = vsel %vm475, %v1087, 0
      %v1159 = vsel %vm475, %v1089, 0
      %v1161 = vsel %vm475, %v1092, 0
      %v1163 = vsel %vm475, %v1094, 0
      %v1165 = vsel %vm475, %v1097, 0
      %v1167 = vsel %vm475, %v1099, 0
      %v1169 = vsel %vm475, %v1102, 0
      %v1171 = vsel %vm475, %v1104, 0
      %v1173 = vsel %vm475, %v1107, 0
      %v1175 = vsel %vm475, %v1109, 0
      %v1177 = vsel %vm475, %v1112, 0
      %v1179 = vsel %vm475, %v1114, 0
      %v1181 = vsel %vm475, %v1117, 0
      %v1183 = vsel %vm475, %v1119, 0
      %v1185 = vsel %vm475, %v1122, 0
      %v1187 = vsel %vm475, %v1124, 0
      %v1189 = vsel %vm475, %v1127, 0
      %v1191 = vsel %vm475, %v1129, 0
      %v1193 = vsel %vm475, %v1132, 0
      %v1195 = vsel %vm475, %v1134, 0
      %v1198 = vsel %vm538, %v205, 0
      %1200 = vmatprep.subr.mxu0 0.0
      %1201 = vmatpush1.msra.mxu0 %v1198
      %1202 = vmatprep.subr.mxu0 0.0
      %1203 = vmatpush1.msra.mxu0 0.0
      %1204 = vmatprep.subr.mxu0 0.0
      %1205 = vmatpush1.msra.mxu0 0.0
      %1206 = vmatprep.subr.mxu0 0.0
      %1207 = vmatpush1.msra.mxu0 0.0
      %1208 = vmatprep.subr.mxu0 0.0
      %1209 = vmatpush1.msra.mxu0 0.0
      %1210 = vmatprep.subr.mxu0 0.0
      %1211 = vmatpush1.msra.mxu0 0.0
      %1212 = vmatprep.subr.mxu0 0.0
      %1213 = vmatpush1.msra.mxu0 0.0
      %1214 = vmatprep.subr.mxu0 0.0
      %1215 = vmatpush1.msra.mxu0 0.0
      %1216 = vmatprep.subr.mxu0 0.0
      %1217 = vmatpush1.msra.mxu0 0.0
      %1218 = vmatprep.subr.mxu0 0.0
      %1219 = vmatpush1.msra.mxu0 0.0
      %1220 = vmatprep.subr.mxu0 0.0
      %1221 = vmatpush1.msra.mxu0 0.0
      %1222 = vmatprep.subr.mxu0 0.0
      %1223 = vmatpush1.msra.mxu0 0.0
      %1224 = vmatprep.subr.mxu0 0.0
      %1225 = vmatpush1.msra.mxu0 0.0
      %1226 = vmatprep.subr.mxu0 0.0
      %1227 = vmatpush1.msra.mxu0 0.0
      %1228 = vmatprep.subr.mxu0 0.0
      %1229 = vmatpush1.msra.mxu0 0.0
      %1230 = vmatprep.subr.mxu0 0.0
      %1231 = vmatpush1.msra.mxu0 0.0
      %1232 = vmatprep.subr.mxu0 0.0
      %1233 = vmatpush1.msra.mxu0 0.0
      %1234 = vmatprep.subr.mxu0 0.0
      %1235 = vmatpush1.msra.mxu0 0.0
      %1236 = vmatprep.subr.mxu0 0.0
      %1237 = vmatpush1.msra.mxu0 0.0
      %1238 = vmatprep.subr.mxu0 0.0
      %1239 = vmatpush1.msra.mxu0 0.0
      %1240 = vmatprep.subr.mxu0 0.0
      %1241 = vmatpush1.msra.mxu0 0.0
      %1242 = vmatprep.subr.mxu0 0.0
      %1243 = vmatpush1.msra.mxu0 0.0
      %1244 = vmatprep.subr.mxu0 0.0
      %1245 = vmatpush1.msra.mxu0 0.0
      %1246 = vmatprep.subr.mxu0 0.0
      %1247 = vmatpush1.msra.mxu0 0.0
      %1248 = vmatprep.subr.mxu0 0.0
      %1249 = vmatpush1.msra.mxu0 0.0
      %1250 = vmatprep.subr.mxu0 0.0
      %1251 = vmatpush1.msra.mxu0 0.0
      %1252 = vmatprep.subr.mxu0 0.0
      %1253 = vmatpush1.msra.mxu0 0.0
      %1254 = vmatprep.subr.mxu0 0.0
      %1255 = vmatpush1.msra.mxu0 0.0
      %1256 = vmatprep.subr.mxu0 0.0
      %1257 = vmatpush1.msra.mxu0 0.0
      %1258 = vmatprep.subr.mxu0 0.0
      %1259 = vmatpush1.msra.mxu0 0.0
      %1260 = vmatprep.subr.mxu0 0.0
      %1261 = vmatpush1.msra.mxu0 0.0
      %1262 = vmatprep.subr.mxu0 0.0
      %1263 = vmatpush1.msra.mxu0 0.0
      %1264 = vmatprep.mubr.f32.mxu0 0.0
      %1265 = vmatmul.mubr.f32.gmra.mrb[0].mxu0 %v1135
      %v1266 = vpop.f32.mrb[0].mxu0
      %v1267 = vadd.f32 0.0, %v1266
      %v1268 = vpop.f32.mrb[0].mxu0
      %1269 = vmatprep.mubr.f32.mxu0 0.0
      %1270 = vmatmul.mubr.f32.gmra.mrb[0].mxu0 %v1135
      %v1271 = vpop.f32.mrb[0].mxu0
      %v1272 = vadd.f32 0.0, %v1271
      %v1273 = vpop.f32.mrb[0].mxu0
      %1274 = vmatprep.mubr.f32.mxu0 0.0
      %1275 = vmatmul.mubr.f32.gmra.mrb[0].mxu0 %v1137
      %v1276 = vpop.f32.mrb[0].mxu0
      %v1277 = vadd.f32 0.0, %v1276
      %v1278 = vpop.f32.mrb[0].mxu0
      %1279 = vmatprep.mubr.f32.mxu0 0.0
      %1280 = vmatmul.mubr.f32.gmra.mrb[0].mxu0 %v1139
      %v1281 = vpop.f32.mrb[0].mxu0
      %v1282 = vadd.f32 0.0, %v1281
      %v1283 = vpop.f32.mrb[0].mxu0
      %1284 = vmatprep.mubr.f32.mxu0 0.0
      %1285 = vmatmul.mubr.f32.gmra.mrb[0].mxu0 %v1141
      %v1286 = vpop.f32.mrb[0].mxu0
      %v1287 = vadd.f32 0.0, %v1286
      %v1288 = vpop.f32.mrb[0].mxu0
      %1289 = vmatprep.mubr.f32.mxu0 0.0
      %1290 = vmatmul.mubr.f32.gmra.mrb[0].mxu0 %v1143
      %v1291 = vpop.f32.mrb[0].mxu0
      %v1292 = vadd.f32 0.0, %v1291
      %v1293 = vpop.f32.mrb[0].mxu0
      %1294 = vmatprep.mubr.f32.mxu0 0.0
      %1295 = vmatmul.mubr.f32.gmra.mrb[0].mxu0 %v1145
      %v1296 = vpop.f32.mrb[0].mxu0
      %v1297 = vadd.f32 0.0, %v1296
      %v1298 = vpop.f32.mrb[0].mxu0
      %1299 = vmatprep.mubr.f32.mxu0 0.0
      %1300 = vmatmul.mubr.f32.gmra.mrb[0].mxu0 %v1147
      %v1301 = vpop.f32.mrb[0].mxu0
      %v1302 = vadd.f32 0.0, %v1301
      %v1303 = vpop.f32.mrb[0].mxu0
      %1304 = vmatprep.mubr.f32.mxu0 0.0
      %1305 = vmatmul.mubr.f32.gmra.mrb[0].mxu0 %v1149
      %v1306 = vpop.f32.mrb[0].mxu0
      %v1307 = vadd.f32 0.0, %v1306
      %v1308 = vpop.f32.mrb[0].mxu0
      %1309 = vmatprep.mubr.f32.mxu0 0.0
      %1310 = vmatmul.mubr.f32.gmra.mrb[0].mxu0 %v1151
      %v1311 = vpop.f32.mrb[0].mxu0
      %v1312 = vadd.f32 0.0, %v1311
      %v1313 = vpop.f32.mrb[0].mxu0
      %1314 = vmatprep.mubr.f32.mxu0 0.0
      %1315 = vmatmul.mubr.f32.gmra.mrb[0].mxu0 %v1153
      %v1316 = vpop.f32.mrb[0].mxu0
      %v1317 = vadd.f32 0.0, %v1316
      %v1318 = vpop.f32.mrb[0].mxu0
      %1319 = vmatprep.mubr.f32.mxu0 0.0
      %1320 = vmatmul.mubr.f32.gmra.mrb[0].mxu0 %v1155
      %v1321 = vpop.f32.mrb[0].mxu0
      %v1322 = vadd.f32 0.0, %v1321
      %v1323 = vpop.f32.mrb[0].mxu0
      %1324 = vmatprep.mubr.f32.mxu0 0.0
      %1325 = vmatmul.mubr.f32.gmra.mrb[0].mxu0 %v1157
      %v1326 = vpop.f32.mrb[0].mxu0
      %v1327 = vadd.f32 0.0, %v1326
      %v1328 = vpop.f32.mrb[0].mxu0
      %1329 = vmatprep.mubr.f32.mxu0 0.0
      %1330 = vmatmul.mubr.f32.gmra.mrb[0].mxu0 %v1159
      %v1331 = vpop.f32.mrb[0].mxu0
      %v1332 = vadd.f32 0.0, %v1331
      %v1333 = vpop.f32.mrb[0].mxu0
      %1334 = vmatprep.mubr.f32.mxu0 0.0
      %1335 = vmatmul.mubr.f32.gmra.mrb[0].mxu0 %v1161
      %v1336 = vpop.f32.mrb[0].mxu0
      %v1337 = vadd.f32 0.0, %v1336
      %v1338 = vpop.f32.mrb[0].mxu0
      %1339 = vmatprep.mubr.f32.mxu0 0.0
      %1340 = vmatmul.mubr.f32.gmra.mrb[0].mxu0 %v1163
      %v1341 = vpop.f32.mrb[0].mxu0
      %v1342 = vadd.f32 0.0, %v1341
      %v1343 = vpop.f32.mrb[0].mxu0
      %1344 = vmatprep.mubr.f32.mxu0 0.0
      %1345 = vmatmul.mubr.f32.gmra.mrb[0].mxu0 %v1165
      %v1346 = vpop.f32.mrb[0].mxu0
      %v1347 = vadd.f32 0.0, %v1346
      %v1348 = vpop.f32.mrb[0].mxu0
      %1349 = vmatprep.mubr.f32.mxu0 0.0
      %1350 = vmatmul.mubr.f32.gmra.mrb[0].mxu0 %v1167
      %v1351 = vpop.f32.mrb[0].mxu0
      %v1352 = vadd.f32 0.0, %v1351
      %v1353 = vpop.f32.mrb[0].mxu0
      %1354 = vmatprep.mubr.f32.mxu0 0.0
      %1355 = vmatmul.mubr.f32.gmra.mrb[0].mxu0 %v1169
      %v1356 = vpop.f32.mrb[0].mxu0
      %v1357 = vadd.f32 0.0, %v1356
      %v1358 = vpop.f32.mrb[0].mxu0
      %1359 = vmatprep.mubr.f32.mxu0 0.0
      %1360 = vmatmul.mubr.f32.gmra.mrb[0].mxu0 %v1171
      %v1361 = vpop.f32.mrb[0].mxu0
      %v1362 = vadd.f32 0.0, %v1361
      %v1363 = vpop.f32.mrb[0].mxu0
      %1364 = vmatprep.mubr.f32.mxu0 0.0
      %1365 = vmatmul.mubr.f32.gmra.mrb[0].mxu0 %v1173
      %v1366 = vpop.f32.mrb[0].mxu0
      %v1367 = vadd.f32 0.0, %v1366
      %v1368 = vpop.f32.mrb[0].mxu0
      %1369 = vmatprep.mubr.f32.mxu0 0.0
      %1370 = vmatmul.mubr.f32.gmra.mrb[0].mxu0 %v1175
      %v1371 = vpop.f32.mrb[0].mxu0
      %v1372 = vadd.f32 0.0, %v1371
      %v1373 = vpop.f32.mrb[0].mxu0
      %1374 = vmatprep.mubr.f32.mxu0 0.0
      %1375 = vmatmul.mubr.f32.gmra.mrb[0].mxu0 %v1177
      %v1376 = vpop.f32.mrb[0].mxu0
      %v1377 = vadd.f32 0.0, %v1376
      %v1378 = vpop.f32.mrb[0].mxu0
      %1379 = vmatprep.mubr.f32.mxu0 0.0
      %1380 = vmatmul.mubr.f32.gmra.mrb[0].mxu0 %v1179
      %v1381 = vpop.f32.mrb[0].mxu0
      %v1382 = vadd.f32 0.0, %v1381
      %v1383 = vpop.f32.mrb[0].mxu0
      %1384 = vmatprep.mubr.f32.mxu0 0.0
      %1385 = vmatmul.mubr.f32.gmra.mrb[0].mxu0 %v1181
      %v1386 = vpop.f32.mrb[0].mxu0
      %v1387 = vadd.f32 0.0, %v1386
      %v1388 = vpop.f32.mrb[0].mxu0
      %1389 = vmatprep.mubr.f32.mxu0 0.0
      %1390 = vmatmul.mubr.f32.gmra.mrb[0].mxu0 %v1183
      %v1391 = vpop.f32.mrb[0].mxu0
      %v1392 = vadd.f32 0.0, %v1391
      %v1393 = vpop.f32.mrb[0].mxu0
      %1394 = vmatprep.mubr.f32.mxu0 0.0
      %1395 = vmatmul.mubr.f32.gmra.mrb[0].mxu0 %v1185
      %v1396 = vpop.f32.mrb[0].mxu0
      %v1397 = vadd.f32 0.0, %v1396
      %v1398 = vpop.f32.mrb[0].mxu0
      %1399 = vmatprep.mubr.f32.mxu0 0.0
      %1400 = vmatmul.mubr.f32.gmra.mrb[0].mxu0 %v1187
      %v1401 = vpop.f32.mrb[0].mxu0
      %v1402 = vadd.f32 0.0, %v1401
      %v1403 = vpop.f32.mrb[0].mxu0
      %1404 = vmatprep.mubr.f32.mxu0 0.0
      %1405 = vmatmul.mubr.f32.gmra.mrb[0].mxu0 %v1189
      %v1406 = vpop.f32.mrb[0].mxu0
      %v1407 = vadd.f32 0.0, %v1406
      %v1408 = vpop.f32.mrb[0].mxu0
      %1409 = vmatprep.mubr.f32.mxu0 0.0
      %1410 = vmatmul.mubr.f32.gmra.mrb[0].mxu0 %v1191
      %v1411 = vpop.f32.mrb[0].mxu0
      %v1412 = vadd.f32 0.0, %v1411
      %v1413 = vpop.f32.mrb[0].mxu0
      %1414 = vmatprep.mubr.f32.mxu0 0.0
      %1415 = vmatmul.mubr.f32.gmra.mrb[0].mxu0 %v1193
      %v1416 = vpop.f32.mrb[0].mxu0
      %v1417 = vadd.f32 0.0, %v1416
      %v1418 = vpop.f32.mrb[0].mxu0
      %1419 = vmatprep.mubr.f32.mxu0 0.0
      %1420 = vmatmul.mubr.f32.gmra.mrb[0].mxu0 %v1195
      %v1421 = vpop.f32.mrb[0].mxu0
      %v1422 = vadd.f32 0.0, %v1421
      %v1423 = vpop.f32.mrb[0].mxu0
      %1424 = vdwg.mxu0
      %v1425 = vadd.f32 %v899, %v1267
      %v1426 = vadd.f32 %v904, %v1272
      %v1427 = vadd.f32 %v909, %v1277
      %v1428 = vadd.f32 %v914, %v1282
      %v1429 = vadd.f32 %v919, %v1287
      %v1430 = vadd.f32 %v924, %v1292
      %v1431 = vadd.f32 %v929, %v1297
      %v1432 = vadd.f32 %v934, %v1302
      %v1433 = vadd.f32 %v939, %v1307
      %v1434 = vadd.f32 %v944, %v1312
      %v1435 = vadd.f32 %v949, %v1317
      %v1436 = vadd.f32 %v954, %v1322
      %v1437 = vadd.f32 %v959, %v1327
      %v1438 = vadd.f32 %v964, %v1332
      %v1439 = vadd.f32 %v969, %v1337
      %v1440 = vadd.f32 %v974, %v1342
      %v1441 = vadd.f32 %v979, %v1347
      %v1442 = vadd.f32 %v984, %v1352
      %v1443 = vadd.f32 %v989, %v1357
      %v1444 = vadd.f32 %v994, %v1362
      %v1445 = vadd.f32 %v999, %v1367
      %v1446 = vadd.f32 %v1004, %v1372
      %v1447 = vadd.f32 %v1009, %v1377
      %v1448 = vadd.f32 %v1014, %v1382
      %v1449 = vadd.f32 %v1019, %v1387
      %v1450 = vadd.f32 %v1024, %v1392
      %v1451 = vadd.f32 %v1029, %v1397
      %v1452 = vadd.f32 %v1034, %v1402
      %v1453 = vadd.f32 %v1039, %v1407
      %v1454 = vadd.f32 %v1044, %v1412
      %v1455 = vadd.f32 %v1049, %v1417
      %v1456 = vadd.f32 %v1054, %v1422
      %v1458 = vsel %vm475, %v349, 0
      %v1460 = vsel %vm475, %v301, 0
      %v1463 = vsel %vm538, %v206, 0
      %1465 = vmatprep.subr.mxu0 0.0
      %1466 = vmatpush1.msra.mxu0 %v1463
      %1467 = vmatprep.subr.mxu0 0.0
      %1468 = vmatpush1.msra.mxu0 0.0
      %1469 = vmatprep.subr.mxu0 0.0
      %1470 = vmatpush1.msra.mxu0 0.0
      %1471 = vmatprep.subr.mxu0 0.0
      %1472 = vmatpush1.msra.mxu0 0.0
      %1473 = vmatprep.subr.mxu0 0.0
      %1474 = vmatpush1.msra.mxu0 0.0
      %1475 = vmatprep.subr.mxu0 0.0
      %1476 = vmatpush1.msra.mxu0 0.0
      %1477 = vmatprep.subr.mxu0 0.0
      %1478 = vmatpush1.msra.mxu0 0.0
      %1479 = vmatprep.subr.mxu0 0.0
      %1480 = vmatpush1.msra.mxu0 0.0
      %1481 = vmatprep.subr.mxu0 0.0
      %1482 = vmatpush1.msra.mxu0 0.0
      %1483 = vmatprep.subr.mxu0 0.0
      %1484 = vmatpush1.msra.mxu0 0.0
      %1485 = vmatprep.subr.mxu0 0.0
      %1486 = vmatpush1.msra.mxu0 0.0
      %1487 = vmatprep.subr.mxu0 0.0
      %1488 = vmatpush1.msra.mxu0 0.0
      %1489 = vmatprep.subr.mxu0 0.0
      %1490 = vmatpush1.msra.mxu0 0.0
      %1491 = vmatprep.subr.mxu0 0.0
      %1492 = vmatpush1.msra.mxu0 0.0
      %1493 = vmatprep.subr.mxu0 0.0
      %1494 = vmatpush1.msra.mxu0 0.0
      %1495 = vmatprep.subr.mxu0 0.0
      %1496 = vmatpush1.msra.mxu0 0.0
      %1497 = vmatprep.subr.mxu0 0.0
      %1498 = vmatpush1.msra.mxu0 0.0
      %1499 = vmatprep.subr.mxu0 0.0
      %1500 = vmatpush1.msra.mxu0 0.0
      %1501 = vmatprep.subr.mxu0 0.0
      %1502 = vmatpush1.msra.mxu0 0.0
      %1503 = vmatprep.subr.mxu0 0.0
      %1504 = vmatpush1.msra.mxu0 0.0
      %1505 = vmatprep.subr.mxu0 0.0
      %1506 = vmatpush1.msra.mxu0 0.0
      %1507 = vmatprep.subr.mxu0 0.0
      %1508 = vmatpush1.msra.mxu0 0.0
      %1509 = vmatprep.subr.mxu0 0.0
      %1510 = vmatpush1.msra.mxu0 0.0
      %1511 = vmatprep.subr.mxu0 0.0
      %1512 = vmatpush1.msra.mxu0 0.0
      %1513 = vmatprep.subr.mxu0 0.0
      %1514 = vmatpush1.msra.mxu0 0.0
      %1515 = vmatprep.subr.mxu0 0.0
      %1516 = vmatpush1.msra.mxu0 0.0
      %1517 = vmatprep.subr.mxu0 0.0
      %1518 = vmatpush1.msra.mxu0 0.0
      %1519 = vmatprep.subr.mxu0 0.0
      %1520 = vmatpush1.msra.mxu0 0.0
      %1521 = vmatprep.subr.mxu0 0.0
      %1522 = vmatpush1.msra.mxu0 0.0
      %1523 = vmatprep.subr.mxu0 0.0
      %1524 = vmatpush1.msra.mxu0 0.0
      %1525 = vmatprep.subr.mxu0 0.0
      %1526 = vmatpush1.msra.mxu0 0.0
      %1527 = vmatprep.subr.mxu0 0.0
      %1528 = vmatpush1.msra.mxu0 0.0
      %1529 = vmatprep.mubr.f32.mxu0 0.0
      %1530 = vmatmul.mubr.f32.gmra.mrb[0].mxu0 %v769
      %v1531 = vpop.f32.mrb[0].mxu0
      %v1532 = vadd.f32 0.0, %v1531
      %v1533 = vpop.f32.mrb[0].mxu0
      %1534 = vmatprep.mubr.f32.mxu0 0.0
      %1535 = vmatmul.mubr.f32.gmra.mrb[0].mxu0 %v771
      %v1536 = vpop.f32.mrb[0].mxu0
      %v1537 = vadd.f32 0.0, %v1536
      %v1538 = vpop.f32.mrb[0].mxu0
      %1539 = vmatprep.mubr.f32.mxu0 0.0
      %1540 = vmatmul.mubr.f32.gmra.mrb[0].mxu0 %v773
      %v1541 = vpop.f32.mrb[0].mxu0
      %v1542 = vadd.f32 0.0, %v1541
      %v1543 = vpop.f32.mrb[0].mxu0
      %1544 = vmatprep.mubr.f32.mxu0 0.0
      %1545 = vmatmul.mubr.f32.gmra.mrb[0].mxu0 %v775
      %v1546 = vpop.f32.mrb[0].mxu0
      %v1547 = vadd.f32 0.0, %v1546
      %v1548 = vpop.f32.mrb[0].mxu0
      %1549 = vmatprep.mubr.f32.mxu0 0.0
      %1550 = vmatmul.mubr.f32.gmra.mrb[0].mxu0 %v777
      %v1551 = vpop.f32.mrb[0].mxu0
      %v1552 = vadd.f32 0.0, %v1551
      %v1553 = vpop.f32.mrb[0].mxu0
      %1554 = vmatprep.mubr.f32.mxu0 0.0
      %1555 = vmatmul.mubr.f32.gmra.mrb[0].mxu0 %v779
      %v1556 = vpop.f32.mrb[0].mxu0
      %v1557 = vadd.f32 0.0, %v1556
      %v1558 = vpop.f32.mrb[0].mxu0
      %1559 = vmatprep.mubr.f32.mxu0 0.0
      %1560 = vmatmul.mubr.f32.gmra.mrb[0].mxu0 %v781
      %v1561 = vpop.f32.mrb[0].mxu0
      %v1562 = vadd.f32 0.0, %v1561
      %v1563 = vpop.f32.mrb[0].mxu0
      %1564 = vmatprep.mubr.f32.mxu0 0.0
      %1565 = vmatmul.mubr.f32.gmra.mrb[0].mxu0 %v783
      %v1566 = vpop.f32.mrb[0].mxu0
      %v1567 = vadd.f32 0.0, %v1566
      %v1568 = vpop.f32.mrb[0].mxu0
      %1569 = vmatprep.mubr.f32.mxu0 0.0
      %1570 = vmatmul.mubr.f32.gmra.mrb[0].mxu0 %v785
      %v1571 = vpop.f32.mrb[0].mxu0
      %v1572 = vadd.f32 0.0, %v1571
      %v1573 = vpop.f32.mrb[0].mxu0
      %1574 = vmatprep.mubr.f32.mxu0 0.0
      %1575 = vmatmul.mubr.f32.gmra.mrb[0].mxu0 %v787
      %v1576 = vpop.f32.mrb[0].mxu0
      %v1577 = vadd.f32 0.0, %v1576
      %v1578 = vpop.f32.mrb[0].mxu0
      %1579 = vmatprep.mubr.f32.mxu0 0.0
      %1580 = vmatmul.mubr.f32.gmra.mrb[0].mxu0 %v789
      %v1581 = vpop.f32.mrb[0].mxu0
      %v1582 = vadd.f32 0.0, %v1581
      %v1583 = vpop.f32.mrb[0].mxu0
      %1584 = vmatprep.mubr.f32.mxu0 0.0
      %1585 = vmatmul.mubr.f32.gmra.mrb[0].mxu0 %v791
      %v1586 = vpop.f32.mrb[0].mxu0
      %v1587 = vadd.f32 0.0, %v1586
      %v1588 = vpop.f32.mrb[0].mxu0
      %1589 = vmatprep.mubr.f32.mxu0 0.0
      %1590 = vmatmul.mubr.f32.gmra.mrb[0].mxu0 %v793
      %v1591 = vpop.f32.mrb[0].mxu0
      %v1592 = vadd.f32 0.0, %v1591
      %v1593 = vpop.f32.mrb[0].mxu0
      %1594 = vmatprep.mubr.f32.mxu0 0.0
      %1595 = vmatmul.mubr.f32.gmra.mrb[0].mxu0 %v795
      %v1596 = vpop.f32.mrb[0].mxu0
      %v1597 = vadd.f32 0.0, %v1596
      %v1598 = vpop.f32.mrb[0].mxu0
      %1599 = vmatprep.mubr.f32.mxu0 0.0
      %1600 = vmatmul.mubr.f32.gmra.mrb[0].mxu0 %v797
      %v1601 = vpop.f32.mrb[0].mxu0
      %v1602 = vadd.f32 0.0, %v1601
      %v1603 = vpop.f32.mrb[0].mxu0
      %1604 = vmatprep.mubr.f32.mxu0 0.0
      %1605 = vmatmul.mubr.f32.gmra.mrb[0].mxu0 %v799
      %v1606 = vpop.f32.mrb[0].mxu0
      %v1607 = vadd.f32 0.0, %v1606
      %v1608 = vpop.f32.mrb[0].mxu0
      %1609 = vmatprep.mubr.f32.mxu0 0.0
      %1610 = vmatmul.mubr.f32.gmra.mrb[0].mxu0 %v801
      %v1611 = vpop.f32.mrb[0].mxu0
      %v1612 = vadd.f32 0.0, %v1611
      %v1613 = vpop.f32.mrb[0].mxu0
      %1614 = vmatprep.mubr.f32.mxu0 0.0
      %1615 = vmatmul.mubr.f32.gmra.mrb[0].mxu0 %v803
      %v1616 = vpop.f32.mrb[0].mxu0
      %v1617 = vadd.f32 0.0, %v1616
      %v1618 = vpop.f32.mrb[0].mxu0
      %1619 = vmatprep.mubr.f32.mxu0 0.0
      %1620 = vmatmul.mubr.f32.gmra.mrb[0].mxu0 %v805
      %v1621 = vpop.f32.mrb[0].mxu0
      %v1622 = vadd.f32 0.0, %v1621
      %v1623 = vpop.f32.mrb[0].mxu0
      %1624 = vmatprep.mubr.f32.mxu0 0.0
      %1625 = vmatmul.mubr.f32.gmra.mrb[0].mxu0 %v807
      %v1626 = vpop.f32.mrb[0].mxu0
      %v1627 = vadd.f32 0.0, %v1626
      %v1628 = vpop.f32.mrb[0].mxu0
      %1629 = vmatprep.mubr.f32.mxu0 0.0
      %1630 = vmatmul.mubr.f32.gmra.mrb[0].mxu0 %v809
      %v1631 = vpop.f32.mrb[0].mxu0
      %v1632 = vadd.f32 0.0, %v1631
      %v1633 = vpop.f32.mrb[0].mxu0
      %1634 = vmatprep.mubr.f32.mxu0 0.0
      %1635 = vmatmul.mubr.f32.gmra.mrb[0].mxu0 %v811
      %v1636 = vpop.f32.mrb[0].mxu0
      %v1637 = vadd.f32 0.0, %v1636
      %v1638 = vpop.f32.mrb[0].mxu0
      %1639 = vmatprep.mubr.f32.mxu0 0.0
      %1640 = vmatmul.mubr.f32.gmra.mrb[0].mxu0 %v813
      %v1641 = vpop.f32.mrb[0].mxu0
      %v1642 = vadd.f32 0.0, %v1641
      %v1643 = vpop.f32.mrb[0].mxu0
      %1644 = vmatprep.mubr.f32.mxu0 0.0
      %1645 = vmatmul.mubr.f32.gmra.mrb[0].mxu0 %v815
      %v1646 = vpop.f32.mrb[0].mxu0
      %v1647 = vadd.f32 0.0, %v1646
      %v1648 = vpop.f32.mrb[0].mxu0
      %1649 = vmatprep.mubr.f32.mxu0 0.0
      %1650 = vmatmul.mubr.f32.gmra.mrb[0].mxu0 %v817
      %v1651 = vpop.f32.mrb[0].mxu0
      %v1652 = vadd.f32 0.0, %v1651
      %v1653 = vpop.f32.mrb[0].mxu0
      %1654 = vmatprep.mubr.f32.mxu0 0.0
      %1655 = vmatmul.mubr.f32.gmra.mrb[0].mxu0 %v819
      %v1656 = vpop.f32.mrb[0].mxu0
      %v1657 = vadd.f32 0.0, %v1656
      %v1658 = vpop.f32.mrb[0].mxu0
      %1659 = vmatprep.mubr.f32.mxu0 0.0
      %1660 = vmatmul.mubr.f32.gmra.mrb[0].mxu0 %v821
      %v1661 = vpop.f32.mrb[0].mxu0
      %v1662 = vadd.f32 0.0, %v1661
      %v1663 = vpop.f32.mrb[0].mxu0
      %1664 = vmatprep.mubr.f32.mxu0 0.0
      %1665 = vmatmul.mubr.f32.gmra.mrb[0].mxu0 %v823
      %v1666 = vpop.f32.mrb[0].mxu0
      %v1667 = vadd.f32 0.0, %v1666
      %v1668 = vpop.f32.mrb[0].mxu0
      %1669 = vmatprep.mubr.f32.mxu0 0.0
      %1670 = vmatmul.mubr.f32.gmra.mrb[0].mxu0 %v825
      %v1671 = vpop.f32.mrb[0].mxu0
      %v1672 = vadd.f32 0.0, %v1671
      %v1673 = vpop.f32.mrb[0].mxu0
      %1674 = vmatprep.mubr.f32.mxu0 0.0
      %1675 = vmatmul.mubr.f32.gmra.mrb[0].mxu0 %v827
      %v1676 = vpop.f32.mrb[0].mxu0
      %v1677 = vadd.f32 0.0, %v1676
      %v1678 = vpop.f32.mrb[0].mxu0
      %1679 = vmatprep.mubr.f32.mxu0 0.0
      %1680 = vmatmul.mubr.f32.gmra.mrb[0].mxu0 %v1458
      %v1681 = vpop.f32.mrb[0].mxu0
      %v1682 = vadd.f32 0.0, %v1681
      %v1683 = vpop.f32.mrb[0].mxu0
      %1684 = vmatprep.mubr.f32.mxu0 0.0
      %1685 = vmatmul.mubr.f32.gmra.mrb[0].mxu0 %v1460
      %v1686 = vpop.f32.mrb[0].mxu0
      %v1687 = vadd.f32 0.0, %v1686
      %v1688 = vpop.f32.mrb[0].mxu0
      %1689 = vdwg.mxu0
      %v1690 = vadd.f32 %v1425, %v1532
      %v1691 = vadd.f32 %v1426, %v1537
      %v1692 = vadd.f32 %v1427, %v1542
      %v1693 = vadd.f32 %v1428, %v1547
      %v1694 = vadd.f32 %v1429, %v1552
      %v1695 = vadd.f32 %v1430, %v1557
      %v1696 = vadd.f32 %v1431, %v1562
      %v1697 = vadd.f32 %v1432, %v1567
      %v1698 = vadd.f32 %v1433, %v1572
      %v1699 = vadd.f32 %v1434, %v1577
      %v1700 = vadd.f32 %v1435, %v1582
      %v1701 = vadd.f32 %v1436, %v1587
      %v1702 = vadd.f32 %v1437, %v1592
      %v1703 = vadd.f32 %v1438, %v1597
      %v1704 = vadd.f32 %v1439, %v1602
      %v1705 = vadd.f32 %v1440, %v1607
      %v1706 = vadd.f32 %v1441, %v1612
      %v1707 = vadd.f32 %v1442, %v1617
      %v1708 = vadd.f32 %v1443, %v1622
      %v1709 = vadd.f32 %v1444, %v1627
      %v1710 = vadd.f32 %v1445, %v1632
      %v1711 = vadd.f32 %v1446, %v1637
      %v1712 = vadd.f32 %v1447, %v1642
      %v1713 = vadd.f32 %v1448, %v1647
      %v1714 = vadd.f32 %v1449, %v1652
      %v1715 = vadd.f32 %v1450, %v1657
      %v1716 = vadd.f32 %v1451, %v1662
      %v1717 = vadd.f32 %v1452, %v1667
      %v1718 = vadd.f32 %v1453, %v1672
      %v1719 = vadd.f32 %v1454, %v1677
      %v1720 = vadd.f32 %v1455, %v1682
      %v1721 = vadd.f32 %v1456, %v1687
      %v1723 = vrot.slane %v349, 1
      %v1724 = vrot.slane %v301, 1
      %v1725 = vsel %vm397, %v1723, %v1724
      %v1726 = vrot.slane %v365, 1
      %v1727 = vsel %vm397, %v1724, %v1726
      %v1728 = vsel %vm475, %v1725, 0
      %v1730 = vsel %vm475, %v1727, 0
      %v1733 = vsel %vm538, %v207, 0
      %1735 = vmatprep.subr.mxu0 0.0
      %1736 = vmatpush1.msra.mxu0 %v1733
      %1737 = vmatprep.subr.mxu0 0.0
      %1738 = vmatpush1.msra.mxu0 0.0
      %1739 = vmatprep.subr.mxu0 0.0
      %1740 = vmatpush1.msra.mxu0 0.0
      %1741 = vmatprep.subr.mxu0 0.0
      %1742 = vmatpush1.msra.mxu0 0.0
      %1743 = vmatprep.subr.mxu0 0.0
      %1744 = vmatpush1.msra.mxu0 0.0
      %1745 = vmatprep.subr.mxu0 0.0
      %1746 = vmatpush1.msra.mxu0 0.0
      %1747 = vmatprep.subr.mxu0 0.0
      %1748 = vmatpush1.msra.mxu0 0.0
      %1749 = vmatprep.subr.mxu0 0.0
      %1750 = vmatpush1.msra.mxu0 0.0
      %1751 = vmatprep.subr.mxu0 0.0
      %1752 = vmatpush1.msra.mxu0 0.0
      %1753 = vmatprep.subr.mxu0 0.0
      %1754 = vmatpush1.msra.mxu0 0.0
      %1755 = vmatprep.subr.mxu0 0.0
      %1756 = vmatpush1.msra.mxu0 0.0
      %1757 = vmatprep.subr.mxu0 0.0
      %1758 = vmatpush1.msra.mxu0 0.0
      %1759 = vmatprep.subr.mxu0 0.0
      %1760 = vmatpush1.msra.mxu0 0.0
      %1761 = vmatprep.subr.mxu0 0.0
      %1762 = vmatpush1.msra.mxu0 0.0
      %1763 = vmatprep.subr.mxu0 0.0
      %1764 = vmatpush1.msra.mxu0 0.0
      %1765 = vmatprep.subr.mxu0 0.0
      %1766 = vmatpush1.msra.mxu0 0.0
      %1767 = vmatprep.subr.mxu0 0.0
      %1768 = vmatpush1.msra.mxu0 0.0
      %1769 = vmatprep.subr.mxu0 0.0
      %1770 = vmatpush1.msra.mxu0 0.0
      %1771 = vmatprep.subr.mxu0 0.0
      %1772 = vmatpush1.msra.mxu0 0.0
      %1773 = vmatprep.subr.mxu0 0.0
      %1774 = vmatpush1.msra.mxu0 0.0
      %1775 = vmatprep.subr.mxu0 0.0
      %1776 = vmatpush1.msra.mxu0 0.0
      %1777 = vmatprep.subr.mxu0 0.0
      %1778 = vmatpush1.msra.mxu0 0.0
      %1779 = vmatprep.subr.mxu0 0.0
      %1780 = vmatpush1.msra.mxu0 0.0
      %1781 = vmatprep.subr.mxu0 0.0
      %1782 = vmatpush1.msra.mxu0 0.0
      %1783 = vmatprep.subr.mxu0 0.0
      %1784 = vmatpush1.msra.mxu0 0.0
      %1785 = vmatprep.subr.mxu0 0.0
      %1786 = vmatpush1.msra.mxu0 0.0
      %1787 = vmatprep.subr.mxu0 0.0
      %1788 = vmatpush1.msra.mxu0 0.0
      %1789 = vmatprep.subr.mxu0 0.0
      %1790 = vmatpush1.msra.mxu0 0.0
      %1791 = vmatprep.subr.mxu0 0.0
      %1792 = vmatpush1.msra.mxu0 0.0
      %1793 = vmatprep.subr.mxu0 0.0
      %1794 = vmatpush1.msra.mxu0 0.0
      %1795 = vmatprep.subr.mxu0 0.0
      %1796 = vmatpush1.msra.mxu0 0.0
      %1797 = vmatprep.subr.mxu0 0.0
      %1798 = vmatpush1.msra.mxu0 0.0
      %1799 = vmatprep.mubr.f32.mxu0 0.0
      %1800 = vmatmul.mubr.f32.gmra.mrb[0].mxu0 %v478
      %v1801 = vpop.f32.mrb[0].mxu0
      %v1802 = vadd.f32 0.0, %v1801
      %v1803 = vpop.f32.mrb[0].mxu0
      %1804 = vmatprep.mubr.f32.mxu0 0.0
      %1805 = vmatmul.mubr.f32.gmra.mrb[0].mxu0 %v480
      %v1806 = vpop.f32.mrb[0].mxu0
      %v1807 = vadd.f32 0.0, %v1806
      %v1808 = vpop.f32.mrb[0].mxu0
      %1809 = vmatprep.mubr.f32.mxu0 0.0
      %1810 = vmatmul.mubr.f32.gmra.mrb[0].mxu0 %v482
      %v1811 = vpop.f32.mrb[0].mxu0
      %v1812 = vadd.f32 0.0, %v1811
      %v1813 = vpop.f32.mrb[0].mxu0
      %1814 = vmatprep.mubr.f32.mxu0 0.0
      %1815 = vmatmul.mubr.f32.gmra.mrb[0].mxu0 %v484
      %v1816 = vpop.f32.mrb[0].mxu0
      %v1817 = vadd.f32 0.0, %v1816
      %v1818 = vpop.f32.mrb[0].mxu0
      %1819 = vmatprep.mubr.f32.mxu0 0.0
      %1820 = vmatmul.mubr.f32.gmra.mrb[0].mxu0 %v486
      %v1821 = vpop.f32.mrb[0].mxu0
      %v1822 = vadd.f32 0.0, %v1821
      %v1823 = vpop.f32.mrb[0].mxu0
      %1824 = vmatprep.mubr.f32.mxu0 0.0
      %1825 = vmatmul.mubr.f32.gmra.mrb[0].mxu0 %v488
      %v1826 = vpop.f32.mrb[0].mxu0
      %v1827 = vadd.f32 0.0, %v1826
      %v1828 = vpop.f32.mrb[0].mxu0
      %1829 = vmatprep.mubr.f32.mxu0 0.0
      %1830 = vmatmul.mubr.f32.gmra.mrb[0].mxu0 %v490
      %v1831 = vpop.f32.mrb[0].mxu0
      %v1832 = vadd.f32 0.0, %v1831
      %v1833 = vpop.f32.mrb[0].mxu0
      %1834 = vmatprep.mubr.f32.mxu0 0.0
      %1835 = vmatmul.mubr.f32.gmra.mrb[0].mxu0 %v492
      %v1836 = vpop.f32.mrb[0].mxu0
      %v1837 = vadd.f32 0.0, %v1836
      %v1838 = vpop.f32.mrb[0].mxu0
      %1839 = vmatprep.mubr.f32.mxu0 0.0
      %1840 = vmatmul.mubr.f32.gmra.mrb[0].mxu0 %v494
      %v1841 = vpop.f32.mrb[0].mxu0
      %v1842 = vadd.f32 0.0, %v1841
      %v1843 = vpop.f32.mrb[0].mxu0
      %1844 = vmatprep.mubr.f32.mxu0 0.0
      %1845 = vmatmul.mubr.f32.gmra.mrb[0].mxu0 %v496
      %v1846 = vpop.f32.mrb[0].mxu0
      %v1847 = vadd.f32 0.0, %v1846
      %v1848 = vpop.f32.mrb[0].mxu0
      %1849 = vmatprep.mubr.f32.mxu0 0.0
      %1850 = vmatmul.mubr.f32.gmra.mrb[0].mxu0 %v498
      %v1851 = vpop.f32.mrb[0].mxu0
      %v1852 = vadd.f32 0.0, %v1851
      %v1853 = vpop.f32.mrb[0].mxu0
      %1854 = vmatprep.mubr.f32.mxu0 0.0
      %1855 = vmatmul.mubr.f32.gmra.mrb[0].mxu0 %v500
      %v1856 = vpop.f32.mrb[0].mxu0
      %v1857 = vadd.f32 0.0, %v1856
      %v1858 = vpop.f32.mrb[0].mxu0
      %1859 = vmatprep.mubr.f32.mxu0 0.0
      %1860 = vmatmul.mubr.f32.gmra.mrb[0].mxu0 %v502
      %v1861 = vpop.f32.mrb[0].mxu0
      %v1862 = vadd.f32 0.0, %v1861
      %v1863 = vpop.f32.mrb[0].mxu0
      %1864 = vmatprep.mubr.f32.mxu0 0.0
      %1865 = vmatmul.mubr.f32.gmra.mrb[0].mxu0 %v504
      %v1866 = vpop.f32.mrb[0].mxu0
      %v1867 = vadd.f32 0.0, %v1866
      %v1868 = vpop.f32.mrb[0].mxu0
      %1869 = vmatprep.mubr.f32.mxu0 0.0
      %1870 = vmatmul.mubr.f32.gmra.mrb[0].mxu0 %v506
      %v1871 = vpop.f32.mrb[0].mxu0
      %v1872 = vadd.f32 0.0, %v1871
      %v1873 = vpop.f32.mrb[0].mxu0
      %1874 = vmatprep.mubr.f32.mxu0 0.0
      %1875 = vmatmul.mubr.f32.gmra.mrb[0].mxu0 %v508
      %v1876 = vpop.f32.mrb[0].mxu0
      %v1877 = vadd.f32 0.0, %v1876
      %v1878 = vpop.f32.mrb[0].mxu0
      %1879 = vmatprep.mubr.f32.mxu0 0.0
      %1880 = vmatmul.mubr.f32.gmra.mrb[0].mxu0 %v510
      %v1881 = vpop.f32.mrb[0].mxu0
      %v1882 = vadd.f32 0.0, %v1881
      %v1883 = vpop.f32.mrb[0].mxu0
      %1884 = vmatprep.mubr.f32.mxu0 0.0
      %1885 = vmatmul.mubr.f32.gmra.mrb[0].mxu0 %v512
      %v1886 = vpop.f32.mrb[0].mxu0
      %v1887 = vadd.f32 0.0, %v1886
      %v1888 = vpop.f32.mrb[0].mxu0
      %1889 = vmatprep.mubr.f32.mxu0 0.0
      %1890 = vmatmul.mubr.f32.gmra.mrb[0].mxu0 %v514
      %v1891 = vpop.f32.mrb[0].mxu0
      %v1892 = vadd.f32 0.0, %v1891
      %v1893 = vpop.f32.mrb[0].mxu0
      %1894 = vmatprep.mubr.f32.mxu0 0.0
      %1895 = vmatmul.mubr.f32.gmra.mrb[0].mxu0 %v516
      %v1896 = vpop.f32.mrb[0].mxu0
      %v1897 = vadd.f32 0.0, %v1896
      %v1898 = vpop.f32.mrb[0].mxu0
      %1899 = vmatprep.mubr.f32.mxu0 0.0
      %1900 = vmatmul.mubr.f32.gmra.mrb[0].mxu0 %v518
      %v1901 = vpop.f32.mrb[0].mxu0
      %v1902 = vadd.f32 0.0, %v1901
      %v1903 = vpop.f32.mrb[0].mxu0
      %1904 = vmatprep.mubr.f32.mxu0 0.0
      %1905 = vmatmul.mubr.f32.gmra.mrb[0].mxu0 %v520
      %v1906 = vpop.f32.mrb[0].mxu0
      %v1907 = vadd.f32 0.0, %v1906
      %v1908 = vpop.f32.mrb[0].mxu0
      %1909 = vmatprep.mubr.f32.mxu0 0.0
      %1910 = vmatmul.mubr.f32.gmra.mrb[0].mxu0 %v522
      %v1911 = vpop.f32.mrb[0].mxu0
      %v1912 = vadd.f32 0.0, %v1911
      %v1913 = vpop.f32.mrb[0].mxu0
      %1914 = vmatprep.mubr.f32.mxu0 0.0
      %1915 = vmatmul.mubr.f32.gmra.mrb[0].mxu0 %v524
      %v1916 = vpop.f32.mrb[0].mxu0
      %v1917 = vadd.f32 0.0, %v1916
      %v1918 = vpop.f32.mrb[0].mxu0
      %1919 = vmatprep.mubr.f32.mxu0 0.0
      %1920 = vmatmul.mubr.f32.gmra.mrb[0].mxu0 %v526
      %v1921 = vpop.f32.mrb[0].mxu0
      %v1922 = vadd.f32 0.0, %v1921
      %v1923 = vpop.f32.mrb[0].mxu0
      %1924 = vmatprep.mubr.f32.mxu0 0.0
      %1925 = vmatmul.mubr.f32.gmra.mrb[0].mxu0 %v528
      %v1926 = vpop.f32.mrb[0].mxu0
      %v1927 = vadd.f32 0.0, %v1926
      %v1928 = vpop.f32.mrb[0].mxu0
      %1929 = vmatprep.mubr.f32.mxu0 0.0
      %1930 = vmatmul.mubr.f32.gmra.mrb[0].mxu0 %v530
      %v1931 = vpop.f32.mrb[0].mxu0
      %v1932 = vadd.f32 0.0, %v1931
      %v1933 = vpop.f32.mrb[0].mxu0
      %1934 = vmatprep.mubr.f32.mxu0 0.0
      %1935 = vmatmul.mubr.f32.gmra.mrb[0].mxu0 %v532
      %v1936 = vpop.f32.mrb[0].mxu0
      %v1937 = vadd.f32 0.0, %v1936
      %v1938 = vpop.f32.mrb[0].mxu0
      %1939 = vmatprep.mubr.f32.mxu0 0.0
      %1940 = vmatmul.mubr.f32.gmra.mrb[0].mxu0 %v534
      %v1941 = vpop.f32.mrb[0].mxu0
      %v1942 = vadd.f32 0.0, %v1941
      %v1943 = vpop.f32.mrb[0].mxu0
      %1944 = vmatprep.mubr.f32.mxu0 0.0
      %1945 = vmatmul.mubr.f32.gmra.mrb[0].mxu0 %v536
      %v1946 = vpop.f32.mrb[0].mxu0
      %v1947 = vadd.f32 0.0, %v1946
      %v1948 = vpop.f32.mrb[0].mxu0
      %1949 = vmatprep.mubr.f32.mxu0 0.0
      %1950 = vmatmul.mubr.f32.gmra.mrb[0].mxu0 %v1728
      %v1951 = vpop.f32.mrb[0].mxu0
      %v1952 = vadd.f32 0.0, %v1951
      %v1953 = vpop.f32.mrb[0].mxu0
      %1954 = vmatprep.mubr.f32.mxu0 0.0
      %1955 = vmatmul.mubr.f32.gmra.mrb[0].mxu0 %v1730
      %v1956 = vpop.f32.mrb[0].mxu0
      %v1957 = vadd.f32 0.0, %v1956
      %v1958 = vpop.f32.mrb[0].mxu0
      %1959 = vdwg.mxu0
      %v1960 = vadd.f32 %v1690, %v1802
      %v1961 = vadd.f32 %v1691, %v1807
      %v1962 = vadd.f32 %v1692, %v1812
      %v1963 = vadd.f32 %v1693, %v1817
      %v1964 = vadd.f32 %v1694, %v1822
      %v1965 = vadd.f32 %v1695, %v1827
      %v1966 = vadd.f32 %v1696, %v1832
      %v1967 = vadd.f32 %v1697, %v1837
      %v1968 = vadd.f32 %v1698, %v1842
      %v1969 = vadd.f32 %v1699, %v1847
      %v1970 = vadd.f32 %v1700, %v1852
      %v1971 = vadd.f32 %v1701, %v1857
      %v1972 = vadd.f32 %v1702, %v1862
      %v1973 = vadd.f32 %v1703, %v1867
      %v1974 = vadd.f32 %v1704, %v1872
      %v1975 = vadd.f32 %v1705, %v1877
      %v1976 = vadd.f32 %v1706, %v1882
      %v1977 = vadd.f32 %v1707, %v1887
      %v1978 = vadd.f32 %v1708, %v1892
      %v1979 = vadd.f32 %v1709, %v1897
      %v1980 = vadd.f32 %v1710, %v1902
      %v1981 = vadd.f32 %v1711, %v1907
      %v1982 = vadd.f32 %v1712, %v1912
      %v1983 = vadd.f32 %v1713, %v1917
      %v1984 = vadd.f32 %v1714, %v1922
      %v1985 = vadd.f32 %v1715, %v1927
      %v1986 = vadd.f32 %v1716, %v1932
      %v1987 = vadd.f32 %v1717, %v1937
      %v1988 = vadd.f32 %v1718, %v1942
      %v1989 = vadd.f32 %v1719, %v1947
      %v1990 = vadd.f32 %v1720, %v1952
      %v1991 = vadd.f32 %v1721, %v1957
      %v1992 = vrot.slane %v349, 2
      %v1993 = vrot.slane %v301, 2
      %v1994 = vsel %vm1057, %v1992, %v1993
      %v1995 = vrot.slane %v365, 2
      %v1996 = vsel %vm1057, %v1993, %v1995
      %v1997 = vsel %vm475, %v1994, 0
      %v1999 = vsel %vm475, %v1996, 0
      %v2002 = vsel %vm538, %v208, 0
      %2004 = vmatprep.subr.mxu0 0.0
      %2005 = vmatpush1.msra.mxu0 %v2002
      %2006 = vmatprep.subr.mxu0 0.0
      %2007 = vmatpush1.msra.mxu0 0.0
      %2008 = vmatprep.subr.mxu0 0.0
      %2009 = vmatpush1.msra.mxu0 0.0
      %2010 = vmatprep.subr.mxu0 0.0
      %2011 = vmatpush1.msra.mxu0 0.0
      %2012 = vmatprep.subr.mxu0 0.0
      %2013 = vmatpush1.msra.mxu0 0.0
      %2014 = vmatprep.subr.mxu0 0.0
      %2015 = vmatpush1.msra.mxu0 0.0
      %2016 = vmatprep.subr.mxu0 0.0
      %2017 = vmatpush1.msra.mxu0 0.0
      %2018 = vmatprep.subr.mxu0 0.0
      %2019 = vmatpush1.msra.mxu0 0.0
      %2020 = vmatprep.subr.mxu0 0.0
      %2021 = vmatpush1.msra.mxu0 0.0
      %2022 = vmatprep.subr.mxu0 0.0
      %2023 = vmatpush1.msra.mxu0 0.0
      %2024 = vmatprep.subr.mxu0 0.0
      %2025 = vmatpush1.msra.mxu0 0.0
      %2026 = vmatprep.subr.mxu0 0.0
      %2027 = vmatpush1.msra.mxu0 0.0
      %2028 = vmatprep.subr.mxu0 0.0
      %2029 = vmatpush1.msra.mxu0 0.0
      %2030 = vmatprep.subr.mxu0 0.0
      %2031 = vmatpush1.msra.mxu0 0.0
      %2032 = vmatprep.subr.mxu0 0.0
      %2033 = vmatpush1.msra.mxu0 0.0
      %2034 = vmatprep.subr.mxu0 0.0
      %2035 = vmatpush1.msra.mxu0 0.0
      %2036 = vmatprep.subr.mxu0 0.0
      %2037 = vmatpush1.msra.mxu0 0.0
      %2038 = vmatprep.subr.mxu0 0.0
      %2039 = vmatpush1.msra.mxu0 0.0
      %2040 = vmatprep.subr.mxu0 0.0
      %2041 = vmatpush1.msra.mxu0 0.0
      %2042 = vmatprep.subr.mxu0 0.0
      %2043 = vmatpush1.msra.mxu0 0.0
      %2044 = vmatprep.subr.mxu0 0.0
      %2045 = vmatpush1.msra.mxu0 0.0
      %2046 = vmatprep.subr.mxu0 0.0
      %2047 = vmatpush1.msra.mxu0 0.0
      %2048 = vmatprep.subr.mxu0 0.0
      %2049 = vmatpush1.msra.mxu0 0.0
      %2050 = vmatprep.subr.mxu0 0.0
      %2051 = vmatpush1.msra.mxu0 0.0
      %2052 = vmatprep.subr.mxu0 0.0
      %2053 = vmatpush1.msra.mxu0 0.0
      %2054 = vmatprep.subr.mxu0 0.0
      %2055 = vmatpush1.msra.mxu0 0.0
      %2056 = vmatprep.subr.mxu0 0.0
      %2057 = vmatpush1.msra.mxu0 0.0
      %2058 = vmatprep.subr.mxu0 0.0
      %2059 = vmatpush1.msra.mxu0 0.0
      %2060 = vmatprep.subr.mxu0 0.0
      %2061 = vmatpush1.msra.mxu0 0.0
      %2062 = vmatprep.subr.mxu0 0.0
      %2063 = vmatpush1.msra.mxu0 0.0
      %2064 = vmatprep.subr.mxu0 0.0
      %2065 = vmatpush1.msra.mxu0 0.0
      %2066 = vmatprep.subr.mxu0 0.0
      %2067 = vmatpush1.msra.mxu0 0.0
      %2068 = vmatprep.mubr.f32.mxu0 0.0
      %2069 = vmatmul.mubr.f32.gmra.mrb[0].mxu0 %v1137
      %v2070 = vpop.f32.mrb[0].mxu0
      %v2071 = vadd.f32 0.0, %v2070
      %v2072 = vpop.f32.mrb[0].mxu0
      %2073 = vmatprep.mubr.f32.mxu0 0.0
      %2074 = vmatmul.mubr.f32.gmra.mrb[0].mxu0 %v1139
      %v2075 = vpop.f32.mrb[0].mxu0
      %v2076 = vadd.f32 0.0, %v2075
      %v2077 = vpop.f32.mrb[0].mxu0
      %2078 = vmatprep.mubr.f32.mxu0 0.0
      %2079 = vmatmul.mubr.f32.gmra.mrb[0].mxu0 %v1141
      %v2080 = vpop.f32.mrb[0].mxu0
      %v2081 = vadd.f32 0.0, %v2080
      %v2082 = vpop.f32.mrb[0].mxu0
      %2083 = vmatprep.mubr.f32.mxu0 0.0
      %2084 = vmatmul.mubr.f32.gmra.mrb[0].mxu0 %v1143
      %v2085 = vpop.f32.mrb[0].mxu0
      %v2086 = vadd.f32 0.0, %v2085
      %v2087 = vpop.f32.mrb[0].mxu0
      %2088 = vmatprep.mubr.f32.mxu0 0.0
      %2089 = vmatmul.mubr.f32.gmra.mrb[0].mxu0 %v1145
      %v2090 = vpop.f32.mrb[0].mxu0
      %v2091 = vadd.f32 0.0, %v2090
      %v2092 = vpop.f32.mrb[0].mxu0
      %2093 = vmatprep.mubr.f32.mxu0 0.0
      %2094 = vmatmul.mubr.f32.gmra.mrb[0].mxu0 %v1147
      %v2095 = vpop.f32.mrb[0].mxu0
      %v2096 = vadd.f32 0.0, %v2095
      %v2097 = vpop.f32.mrb[0].mxu0
      %2098 = vmatprep.mubr.f32.mxu0 0.0
      %2099 = vmatmul.mubr.f32.gmra.mrb[0].mxu0 %v1149
      %v2100 = vpop.f32.mrb[0].mxu0
      %v2101 = vadd.f32 0.0, %v2100
      %v2102 = vpop.f32.mrb[0].mxu0
      %2103 = vmatprep.mubr.f32.mxu0 0.0
      %2104 = vmatmul.mubr.f32.gmra.mrb[0].mxu0 %v1151
      %v2105 = vpop.f32.mrb[0].mxu0
      %v2106 = vadd.f32 0.0, %v2105
      %v2107 = vpop.f32.mrb[0].mxu0
      %2108 = vmatprep.mubr.f32.mxu0 0.0
      %2109 = vmatmul.mubr.f32.gmra.mrb[0].mxu0 %v1153
      %v2110 = vpop.f32.mrb[0].mxu0
      %v2111 = vadd.f32 0.0, %v2110
      %v2112 = vpop.f32.mrb[0].mxu0
      %2113 = vmatprep.mubr.f32.mxu0 0.0
      %2114 = vmatmul.mubr.f32.gmra.mrb[0].mxu0 %v1155
      %v2115 = vpop.f32.mrb[0].mxu0
      %v2116 = vadd.f32 0.0, %v2115
      %v2117 = vpop.f32.mrb[0].mxu0
      %2118 = vmatprep.mubr.f32.mxu0 0.0
      %2119 = vmatmul.mubr.f32.gmra.mrb[0].mxu0 %v1157
      %v2120 = vpop.f32.mrb[0].mxu0
      %v2121 = vadd.f32 0.0, %v2120
      %v2122 = vpop.f32.mrb[0].mxu0
      %2123 = vmatprep.mubr.f32.mxu0 0.0
      %2124 = vmatmul.mubr.f32.gmra.mrb[0].mxu0 %v1159
      %v2125 = vpop.f32.mrb[0].mxu0
      %v2126 = vadd.f32 0.0, %v2125
      %v2127 = vpop.f32.mrb[0].mxu0
      %2128 = vmatprep.mubr.f32.mxu0 0.0
      %2129 = vmatmul.mubr.f32.gmra.mrb[0].mxu0 %v1161
      %v2130 = vpop.f32.mrb[0].mxu0
      %v2131 = vadd.f32 0.0, %v2130
      %v2132 = vpop.f32.mrb[0].mxu0
      %2133 = vmatprep.mubr.f32.mxu0 0.0
      %2134 = vmatmul.mubr.f32.gmra.mrb[0].mxu0 %v1163
      %v2135 = vpop.f32.mrb[0].mxu0
      %v2136 = vadd.f32 0.0, %v2135
      %v2137 = vpop.f32.mrb[0].mxu0
      %2138 = vmatprep.mubr.f32.mxu0 0.0
      %2139 = vmatmul.mubr.f32.gmra.mrb[0].mxu0 %v1165
      %v2140 = vpop.f32.mrb[0].mxu0
      %v2141 = vadd.f32 0.0, %v2140
      %v2142 = vpop.f32.mrb[0].mxu0
      %2143 = vmatprep.mubr.f32.mxu0 0.0
      %2144 = vmatmul.mubr.f32.gmra.mrb[0].mxu0 %v1167
      %v2145 = vpop.f32.mrb[0].mxu0
      %v2146 = vadd.f32 0.0, %v2145
      %v2147 = vpop.f32.mrb[0].mxu0
      %2148 = vmatprep.mubr.f32.mxu0 0.0
      %2149 = vmatmul.mubr.f32.gmra.mrb[0].mxu0 %v1169
      %v2150 = vpop.f32.mrb[0].mxu0
      %v2151 = vadd.f32 0.0, %v2150
      %v2152 = vpop.f32.mrb[0].mxu0
      %2153 = vmatprep.mubr.f32.mxu0 0.0
      %2154 = vmatmul.mubr.f32.gmra.mrb[0].mxu0 %v1171
      %v2155 = vpop.f32.mrb[0].mxu0
      %v2156 = vadd.f32 0.0, %v2155
      %v2157 = vpop.f32.mrb[0].mxu0
      %2158 = vmatprep.mubr.f32.mxu0 0.0
      %2159 = vmatmul.mubr.f32.gmra.mrb[0].mxu0 %v1173
      %v2160 = vpop.f32.mrb[0].mxu0
      %v2161 = vadd.f32 0.0, %v2160
      %v2162 = vpop.f32.mrb[0].mxu0
      %2163 = vmatprep.mubr.f32.mxu0 0.0
      %2164 = vmatmul.mubr.f32.gmra.mrb[0].mxu0 %v1175
      %v2165 = vpop.f32.mrb[0].mxu0
      %v2166 = vadd.f32 0.0, %v2165
      %v2167 = vpop.f32.mrb[0].mxu0
      %2168 = vmatprep.mubr.f32.mxu0 0.0
      %2169 = vmatmul.mubr.f32.gmra.mrb[0].mxu0 %v1177
      %v2170 = vpop.f32.mrb[0].mxu0
      %v2171 = vadd.f32 0.0, %v2170
      %v2172 = vpop.f32.mrb[0].mxu0
      %2173 = vmatprep.mubr.f32.mxu0 0.0
      %2174 = vmatmul.mubr.f32.gmra.mrb[0].mxu0 %v1179
      %v2175 = vpop.f32.mrb[0].mxu0
      %v2176 = vadd.f32 0.0, %v2175
      %v2177 = vpop.f32.mrb[0].mxu0
      %2178 = vmatprep.mubr.f32.mxu0 0.0
      %2179 = vmatmul.mubr.f32.gmra.mrb[0].mxu0 %v1181
      %v2180 = vpop.f32.mrb[0].mxu0
      %v2181 = vadd.f32 0.0, %v2180
      %v2182 = vpop.f32.mrb[0].mxu0
      %2183 = vmatprep.mubr.f32.mxu0 0.0
      %2184 = vmatmul.mubr.f32.gmra.mrb[0].mxu0 %v1183
      %v2185 = vpop.f32.mrb[0].mxu0
      %v2186 = vadd.f32 0.0, %v2185
      %v2187 = vpop.f32.mrb[0].mxu0
      %2188 = vmatprep.mubr.f32.mxu0 0.0
      %2189 = vmatmul.mubr.f32.gmra.mrb[0].mxu0 %v1185
      %v2190 = vpop.f32.mrb[0].mxu0
      %v2191 = vadd.f32 0.0, %v2190
      %v2192 = vpop.f32.mrb[0].mxu0
      %2193 = vmatprep.mubr.f32.mxu0 0.0
      %2194 = vmatmul.mubr.f32.gmra.mrb[0].mxu0 %v1187
      %v2195 = vpop.f32.mrb[0].mxu0
      %v2196 = vadd.f32 0.0, %v2195
      %v2197 = vpop.f32.mrb[0].mxu0
      %2198 = vmatprep.mubr.f32.mxu0 0.0
      %2199 = vmatmul.mubr.f32.gmra.mrb[0].mxu0 %v1189
      %v2200 = vpop.f32.mrb[0].mxu0
      %v2201 = vadd.f32 0.0, %v2200
      %v2202 = vpop.f32.mrb[0].mxu0
      %2203 = vmatprep.mubr.f32.mxu0 0.0
      %2204 = vmatmul.mubr.f32.gmra.mrb[0].mxu0 %v1191
      %v2205 = vpop.f32.mrb[0].mxu0
      %v2206 = vadd.f32 0.0, %v2205
      %v2207 = vpop.f32.mrb[0].mxu0
      %2208 = vmatprep.mubr.f32.mxu0 0.0
      %2209 = vmatmul.mubr.f32.gmra.mrb[0].mxu0 %v1193
      %v2210 = vpop.f32.mrb[0].mxu0
      %v2211 = vadd.f32 0.0, %v2210
      %v2212 = vpop.f32.mrb[0].mxu0
      %2213 = vmatprep.mubr.f32.mxu0 0.0
      %2214 = vmatmul.mubr.f32.gmra.mrb[0].mxu0 %v1195
      %v2215 = vpop.f32.mrb[0].mxu0
      %v2216 = vadd.f32 0.0, %v2215
      %v2217 = vpop.f32.mrb[0].mxu0
      %2218 = vmatprep.mubr.f32.mxu0 0.0
      %2219 = vmatmul.mubr.f32.gmra.mrb[0].mxu0 %v1997
      %v2220 = vpop.f32.mrb[0].mxu0
      %v2221 = vadd.f32 0.0, %v2220
      %v2222 = vpop.f32.mrb[0].mxu0
      %2223 = vmatprep.mubr.f32.mxu0 0.0
      %2224 = vmatmul.mubr.f32.gmra.mrb[0].mxu0 %v1999
      %v2225 = vpop.f32.mrb[0].mxu0
      %v2226 = vadd.f32 0.0, %v2225
      %v2227 = vpop.f32.mrb[0].mxu0
      %2228 = vdwg.mxu0
      %v2229 = vadd.f32 %v1960, %v2071
      %v2230 = vadd.f32 %v1961, %v2076
      %v2231 = vadd.f32 %v1962, %v2081
      %v2232 = vadd.f32 %v1963, %v2086
      %v2233 = vadd.f32 %v1964, %v2091
      %v2234 = vadd.f32 %v1965, %v2096
      %v2235 = vadd.f32 %v1966, %v2101
      %v2236 = vadd.f32 %v1967, %v2106
      %v2237 = vadd.f32 %v1968, %v2111
      %v2238 = vadd.f32 %v1969, %v2116
      %v2239 = vadd.f32 %v1970, %v2121
      %v2240 = vadd.f32 %v1971, %v2126
      %v2241 = vadd.f32 %v1972, %v2131
      %v2242 = vadd.f32 %v1973, %v2136
      %v2243 = vadd.f32 %v1974, %v2141
      %v2244 = vadd.f32 %v1975, %v2146
      %v2245 = vadd.f32 %v1976, %v2151
      %v2246 = vadd.f32 %v1977, %v2156
      %v2247 = vadd.f32 %v1978, %v2161
      %v2248 = vadd.f32 %v1979, %v2166
      %v2249 = vadd.f32 %v1980, %v2171
      %v2250 = vadd.f32 %v1981, %v2176
      %v2251 = vadd.f32 %v1982, %v2181
      %v2252 = vadd.f32 %v1983, %v2186
      %v2253 = vadd.f32 %v1984, %v2191
      %v2254 = vadd.f32 %v1985, %v2196
      %v2255 = vadd.f32 %v1986, %v2201
      %v2256 = vadd.f32 %v1987, %v2206
      %v2257 = vadd.f32 %v1988, %v2211
      %v2258 = vadd.f32 %v1989, %v2216
      %v2259 = vadd.f32 %v1990, %v2221
      %v2260 = vadd.f32 %v1991, %v2226
      %v2262 = vsel %vm538, %v209, 0
      %2264 = vmatprep.subr.mxu0 0.0
      %2265 = vmatpush1.msra.mxu0 %v2262
      %2266 = vmatprep.subr.mxu0 0.0
      %2267 = vmatpush1.msra.mxu0 0.0
      %2268 = vmatprep.subr.mxu0 0.0
      %2269 = vmatpush1.msra.mxu0 0.0
      %2270 = vmatprep.subr.mxu0 0.0
      %2271 = vmatpush1.msra.mxu0 0.0
      %2272 = vmatprep.subr.mxu0 0.0
      %2273 = vmatpush1.msra.mxu0 0.0
      %2274 = vmatprep.subr.mxu0 0.0
      %2275 = vmatpush1.msra.mxu0 0.0
      %2276 = vmatprep.subr.mxu0 0.0
      %2277 = vmatpush1.msra.mxu0 0.0
      %2278 = vmatprep.subr.mxu0 0.0
      %2279 = vmatpush1.msra.mxu0 0.0
      %2280 = vmatprep.subr.mxu0 0.0
      %2281 = vmatpush1.msra.mxu0 0.0
      %2282 = vmatprep.subr.mxu0 0.0
      %2283 = vmatpush1.msra.mxu0 0.0
      %2284 = vmatprep.subr.mxu0 0.0
      %2285 = vmatpush1.msra.mxu0 0.0
      %2286 = vmatprep.subr.mxu0 0.0
      %2287 = vmatpush1.msra.mxu0 0.0
      %2288 = vmatprep.subr.mxu0 0.0
      %2289 = vmatpush1.msra.mxu0 0.0
      %2290 = vmatprep.subr.mxu0 0.0
      %2291 = vmatpush1.msra.mxu0 0.0
      %2292 = vmatprep.subr.mxu0 0.0
      %2293 = vmatpush1.msra.mxu0 0.0
      %2294 = vmatprep.subr.mxu0 0.0
      %2295 = vmatpush1.msra.mxu0 0.0
      %2296 = vmatprep.subr.mxu0 0.0
      %2297 = vmatpush1.msra.mxu0 0.0
      %2298 = vmatprep.subr.mxu0 0.0
      %2299 = vmatpush1.msra.mxu0 0.0
      %2300 = vmatprep.subr.mxu0 0.0
      %2301 = vmatpush1.msra.mxu0 0.0
      %2302 = vmatprep.subr.mxu0 0.0
      %2303 = vmatpush1.msra.mxu0 0.0
      %2304 = vmatprep.subr.mxu0 0.0
      %2305 = vmatpush1.msra.mxu0 0.0
      %2306 = vmatprep.subr.mxu0 0.0
      %2307 = vmatpush1.msra.mxu0 0.0
      %2308 = vmatprep.subr.mxu0 0.0
      %2309 = vmatpush1.msra.mxu0 0.0
      %2310 = vmatprep.subr.mxu0 0.0
      %2311 = vmatpush1.msra.mxu0 0.0
      %2312 = vmatprep.subr.mxu0 0.0
      %2313 = vmatpush1.msra.mxu0 0.0
      %2314 = vmatprep.subr.mxu0 0.0
      %2315 = vmatpush1.msra.mxu0 0.0
      %2316 = vmatprep.subr.mxu0 0.0
      %2317 = vmatpush1.msra.mxu0 0.0
      %2318 = vmatprep.subr.mxu0 0.0
      %2319 = vmatpush1.msra.mxu0 0.0
      %2320 = vmatprep.subr.mxu0 0.0
      %2321 = vmatpush1.msra.mxu0 0.0
      %2322 = vmatprep.subr.mxu0 0.0
      %2323 = vmatpush1.msra.mxu0 0.0
      %2324 = vmatprep.subr.mxu0 0.0
      %2325 = vmatpush1.msra.mxu0 0.0
      %2326 = vmatprep.subr.mxu0 0.0
      %2327 = vmatpush1.msra.mxu0 0.0
      %2328 = vmatprep.mubr.f32.mxu0 0.0
      %2329 = vmatmul.mubr.f32.gmra.mrb[0].mxu0 %v773
      %v2330 = vpop.f32.mrb[0].mxu0
      %v2331 = vadd.f32 0.0, %v2330
      %v2332 = vpop.f32.mrb[0].mxu0
      %2333 = vmatprep.mubr.f32.mxu0 0.0
      %2334 = vmatmul.mubr.f32.gmra.mrb[0].mxu0 %v775
      %v2335 = vpop.f32.mrb[0].mxu0
      %v2336 = vadd.f32 0.0, %v2335
      %v2337 = vpop.f32.mrb[0].mxu0
      %2338 = vmatprep.mubr.f32.mxu0 0.0
      %2339 = vmatmul.mubr.f32.gmra.mrb[0].mxu0 %v777
      %v2340 = vpop.f32.mrb[0].mxu0
      %v2341 = vadd.f32 0.0, %v2340
      %v2342 = vpop.f32.mrb[0].mxu0
      %2343 = vmatprep.mubr.f32.mxu0 0.0
      %2344 = vmatmul.mubr.f32.gmra.mrb[0].mxu0 %v779
      %v2345 = vpop.f32.mrb[0].mxu0
      %v2346 = vadd.f32 0.0, %v2345
      %v2347 = vpop.f32.mrb[0].mxu0
      %2348 = vmatprep.mubr.f32.mxu0 0.0
      %2349 = vmatmul.mubr.f32.gmra.mrb[0].mxu0 %v781
      %v2350 = vpop.f32.mrb[0].mxu0
      %v2351 = vadd.f32 0.0, %v2350
      %v2352 = vpop.f32.mrb[0].mxu0
      %2353 = vmatprep.mubr.f32.mxu0 0.0
      %2354 = vmatmul.mubr.f32.gmra.mrb[0].mxu0 %v783
      %v2355 = vpop.f32.mrb[0].mxu0
      %v2356 = vadd.f32 0.0, %v2355
      %v2357 = vpop.f32.mrb[0].mxu0
      %2358 = vmatprep.mubr.f32.mxu0 0.0
      %2359 = vmatmul.mubr.f32.gmra.mrb[0].mxu0 %v785
      %v2360 = vpop.f32.mrb[0].mxu0
      %v2361 = vadd.f32 0.0, %v2360
      %v2362 = vpop.f32.mrb[0].mxu0
      %2363 = vmatprep.mubr.f32.mxu0 0.0
      %2364 = vmatmul.mubr.f32.gmra.mrb[0].mxu0 %v787
      %v2365 = vpop.f32.mrb[0].mxu0
      %v2366 = vadd.f32 0.0, %v2365
      %v2367 = vpop.f32.mrb[0].mxu0
      %2368 = vmatprep.mubr.f32.mxu0 0.0
      %2369 = vmatmul.mubr.f32.gmra.mrb[0].mxu0 %v789
      %v2370 = vpop.f32.mrb[0].mxu0
      %v2371 = vadd.f32 0.0, %v2370
      %v2372 = vpop.f32.mrb[0].mxu0
      %2373 = vmatprep.mubr.f32.mxu0 0.0
      %2374 = vmatmul.mubr.f32.gmra.mrb[0].mxu0 %v791
      %v2375 = vpop.f32.mrb[0].mxu0
      %v2376 = vadd.f32 0.0, %v2375
      %v2377 = vpop.f32.mrb[0].mxu0
      %2378 = vmatprep.mubr.f32.mxu0 0.0
      %2379 = vmatmul.mubr.f32.gmra.mrb[0].mxu0 %v793
      %v2380 = vpop.f32.mrb[0].mxu0
      %v2381 = vadd.f32 0.0, %v2380
      %v2382 = vpop.f32.mrb[0].mxu0
      %2383 = vmatprep.mubr.f32.mxu0 0.0
      %2384 = vmatmul.mubr.f32.gmra.mrb[0].mxu0 %v795
      %v2385 = vpop.f32.mrb[0].mxu0
      %v2386 = vadd.f32 0.0, %v2385
      %v2387 = vpop.f32.mrb[0].mxu0
      %2388 = vmatprep.mubr.f32.mxu0 0.0
      %2389 = vmatmul.mubr.f32.gmra.mrb[0].mxu0 %v797
      %v2390 = vpop.f32.mrb[0].mxu0
      %v2391 = vadd.f32 0.0, %v2390
      %v2392 = vpop.f32.mrb[0].mxu0
      %2393 = vmatprep.mubr.f32.mxu0 0.0
      %2394 = vmatmul.mubr.f32.gmra.mrb[0].mxu0 %v799
      %v2395 = vpop.f32.mrb[0].mxu0
      %v2396 = vadd.f32 0.0, %v2395
      %v2397 = vpop.f32.mrb[0].mxu0
      %2398 = vmatprep.mubr.f32.mxu0 0.0
      %2399 = vmatmul.mubr.f32.gmra.mrb[0].mxu0 %v801
      %v2400 = vpop.f32.mrb[0].mxu0
      %v2401 = vadd.f32 0.0, %v2400
      %v2402 = vpop.f32.mrb[0].mxu0
      %2403 = vmatprep.mubr.f32.mxu0 0.0
      %2404 = vmatmul.mubr.f32.gmra.mrb[0].mxu0 %v803
      %v2405 = vpop.f32.mrb[0].mxu0
      %v2406 = vadd.f32 0.0, %v2405
      %v2407 = vpop.f32.mrb[0].mxu0
      %2408 = vmatprep.mubr.f32.mxu0 0.0
      %2409 = vmatmul.mubr.f32.gmra.mrb[0].mxu0 %v805
      %v2410 = vpop.f32.mrb[0].mxu0
      %v2411 = vadd.f32 0.0, %v2410
      %v2412 = vpop.f32.mrb[0].mxu0
      %2413 = vmatprep.mubr.f32.mxu0 0.0
      %2414 = vmatmul.mubr.f32.gmra.mrb[0].mxu0 %v807
      %v2415 = vpop.f32.mrb[0].mxu0
      %v2416 = vadd.f32 0.0, %v2415
      %v2417 = vpop.f32.mrb[0].mxu0
      %2418 = vmatprep.mubr.f32.mxu0 0.0
      %2419 = vmatmul.mubr.f32.gmra.mrb[0].mxu0 %v809
      %v2420 = vpop.f32.mrb[0].mxu0
      %v2421 = vadd.f32 0.0, %v2420
      %v2422 = vpop.f32.mrb[0].mxu0
      %2423 = vmatprep.mubr.f32.mxu0 0.0
      %2424 = vmatmul.mubr.f32.gmra.mrb[0].mxu0 %v811
      %v2425 = vpop.f32.mrb[0].mxu0
      %v2426 = vadd.f32 0.0, %v2425
      %v2427 = vpop.f32.mrb[0].mxu0
      %2428 = vmatprep.mubr.f32.mxu0 0.0
      %2429 = vmatmul.mubr.f32.gmra.mrb[0].mxu0 %v813
      %v2430 = vpop.f32.mrb[0].mxu0
      %v2431 = vadd.f32 0.0, %v2430
      %v2432 = vpop.f32.mrb[0].mxu0
      %2433 = vmatprep.mubr.f32.mxu0 0.0
      %2434 = vmatmul.mubr.f32.gmra.mrb[0].mxu0 %v815
      %v2435 = vpop.f32.mrb[0].mxu0
      %v2436 = vadd.f32 0.0, %v2435
      %v2437 = vpop.f32.mrb[0].mxu0
      %2438 = vmatprep.mubr.f32.mxu0 0.0
      %2439 = vmatmul.mubr.f32.gmra.mrb[0].mxu0 %v817
      %v2440 = vpop.f32.mrb[0].mxu0
      %v2441 = vadd.f32 0.0, %v2440
      %v2442 = vpop.f32.mrb[0].mxu0
      %2443 = vmatprep.mubr.f32.mxu0 0.0
      %2444 = vmatmul.mubr.f32.gmra.mrb[0].mxu0 %v819
      %v2445 = vpop.f32.mrb[0].mxu0
      %v2446 = vadd.f32 0.0, %v2445
      %v2447 = vpop.f32.mrb[0].mxu0
      %2448 = vmatprep.mubr.f32.mxu0 0.0
      %2449 = vmatmul.mubr.f32.gmra.mrb[0].mxu0 %v821
      %v2450 = vpop.f32.mrb[0].mxu0
      %v2451 = vadd.f32 0.0, %v2450
      %v2452 = vpop.f32.mrb[0].mxu0
      %2453 = vmatprep.mubr.f32.mxu0 0.0
      %2454 = vmatmul.mubr.f32.gmra.mrb[0].mxu0 %v823
      %v2455 = vpop.f32.mrb[0].mxu0
      %v2456 = vadd.f32 0.0, %v2455
      %v2457 = vpop.f32.mrb[0].mxu0
      %2458 = vmatprep.mubr.f32.mxu0 0.0
      %2459 = vmatmul.mubr.f32.gmra.mrb[0].mxu0 %v825
      %v2460 = vpop.f32.mrb[0].mxu0
      %v2461 = vadd.f32 0.0, %v2460
      %v2462 = vpop.f32.mrb[0].mxu0
      %2463 = vmatprep.mubr.f32.mxu0 0.0
      %2464 = vmatmul.mubr.f32.gmra.mrb[0].mxu0 %v827
      %v2465 = vpop.f32.mrb[0].mxu0
      %v2466 = vadd.f32 0.0, %v2465
      %v2467 = vpop.f32.mrb[0].mxu0
      %2468 = vmatprep.mubr.f32.mxu0 0.0
      %2469 = vmatmul.mubr.f32.gmra.mrb[0].mxu0 %v1458
      %v2470 = vpop.f32.mrb[0].mxu0
      %v2471 = vadd.f32 0.0, %v2470
      %v2472 = vpop.f32.mrb[0].mxu0
      %2473 = vmatprep.mubr.f32.mxu0 0.0
      %2474 = vmatmul.mubr.f32.gmra.mrb[0].mxu0 %v1460
      %v2475 = vpop.f32.mrb[0].mxu0
      %v2476 = vadd.f32 0.0, %v2475
      %v2477 = vpop.f32.mrb[0].mxu0
      %2478 = vmatprep.mubr.f32.mxu0 0.0
      %2479 = vmatmul.mubr.f32.gmra.mrb[0].mxu0 %v767
      %v2480 = vpop.f32.mrb[0].mxu0
      %v2481 = vadd.f32 0.0, %v2480
      %v2482 = vpop.f32.mrb[0].mxu0
      %2483 = vmatprep.mubr.f32.mxu0 0.0
      %2484 = vmatmul.mubr.f32.gmra.mrb[0].mxu0 %v767
      %v2485 = vpop.f32.mrb[0].mxu0
      %v2486 = vadd.f32 0.0, %v2485
      %v2487 = vpop.f32.mrb[0].mxu0
      %2488 = vdwg.mxu0
      %v2489 = vadd.f32 %v2229, %v2331
      %v2490 = vadd.f32 %v2230, %v2336
      %v2491 = vadd.f32 %v2231, %v2341
      %v2492 = vadd.f32 %v2232, %v2346
      %v2493 = vadd.f32 %v2233, %v2351
      %v2494 = vadd.f32 %v2234, %v2356
      %v2495 = vadd.f32 %v2235, %v2361
      %v2496 = vadd.f32 %v2236, %v2366
      %v2497 = vadd.f32 %v2237, %v2371
      %v2498 = vadd.f32 %v2238, %v2376
      %v2499 = vadd.f32 %v2239, %v2381
      %v2500 = vadd.f32 %v2240, %v2386
      %v2501 = vadd.f32 %v2241, %v2391
      %v2502 = vadd.f32 %v2242, %v2396
      %v2503 = vadd.f32 %v2243, %v2401
      %v2504 = vadd.f32 %v2244, %v2406
      %v2505 = vadd.f32 %v2245, %v2411
      %v2506 = vadd.f32 %v2246, %v2416
      %v2507 = vadd.f32 %v2247, %v2421
      %v2508 = vadd.f32 %v2248, %v2426
      %v2509 = vadd.f32 %v2249, %v2431
      %v2510 = vadd.f32 %v2250, %v2436
      %v2511 = vadd.f32 %v2251, %v2441
      %v2512 = vadd.f32 %v2252, %v2446
      %v2513 = vadd.f32 %v2253, %v2451
      %v2514 = vadd.f32 %v2254, %v2456
      %v2515 = vadd.f32 %v2255, %v2461
      %v2516 = vadd.f32 %v2256, %v2466
      %v2517 = vadd.f32 %v2257, %v2471
      %v2518 = vadd.f32 %v2258, %v2476
      %v2519 = vadd.f32 %v2259, %v2481
      %v2520 = vadd.f32 %v2260, %v2486
      %v2522 = vsel %vm538, %v210, 0
      %2524 = vmatprep.subr.mxu0 0.0
      %2525 = vmatpush1.msra.mxu0 %v2522
      %2526 = vmatprep.subr.mxu0 0.0
      %2527 = vmatpush1.msra.mxu0 0.0
      %2528 = vmatprep.subr.mxu0 0.0
      %2529 = vmatpush1.msra.mxu0 0.0
      %2530 = vmatprep.subr.mxu0 0.0
      %2531 = vmatpush1.msra.mxu0 0.0
      %2532 = vmatprep.subr.mxu0 0.0
      %2533 = vmatpush1.msra.mxu0 0.0
      %2534 = vmatprep.subr.mxu0 0.0
      %2535 = vmatpush1.msra.mxu0 0.0
      %2536 = vmatprep.subr.mxu0 0.0
      %2537 = vmatpush1.msra.mxu0 0.0
      %2538 = vmatprep.subr.mxu0 0.0
      %2539 = vmatpush1.msra.mxu0 0.0
      %2540 = vmatprep.subr.mxu0 0.0
      %2541 = vmatpush1.msra.mxu0 0.0
      %2542 = vmatprep.subr.mxu0 0.0
      %2543 = vmatpush1.msra.mxu0 0.0
      %2544 = vmatprep.subr.mxu0 0.0
      %2545 = vmatpush1.msra.mxu0 0.0
      %2546 = vmatprep.subr.mxu0 0.0
      %2547 = vmatpush1.msra.mxu0 0.0
      %2548 = vmatprep.subr.mxu0 0.0
      %2549 = vmatpush1.msra.mxu0 0.0
      %2550 = vmatprep.subr.mxu0 0.0
      %2551 = vmatpush1.msra.mxu0 0.0
      %2552 = vmatprep.subr.mxu0 0.0
      %2553 = vmatpush1.msra.mxu0 0.0
      %2554 = vmatprep.subr.mxu0 0.0
      %2555 = vmatpush1.msra.mxu0 0.0
      %2556 = vmatprep.subr.mxu0 0.0
      %2557 = vmatpush1.msra.mxu0 0.0
      %2558 = vmatprep.subr.mxu0 0.0
      %2559 = vmatpush1.msra.mxu0 0.0
      %2560 = vmatprep.subr.mxu0 0.0
      %2561 = vmatpush1.msra.mxu0 0.0
      %2562 = vmatprep.subr.mxu0 0.0
      %2563 = vmatpush1.msra.mxu0 0.0
      %2564 = vmatprep.subr.mxu0 0.0
      %2565 = vmatpush1.msra.mxu0 0.0
      %2566 = vmatprep.subr.mxu0 0.0
      %2567 = vmatpush1.msra.mxu0 0.0
      %2568 = vmatprep.subr.mxu0 0.0
      %2569 = vmatpush1.msra.mxu0 0.0
      %2570 = vmatprep.subr.mxu0 0.0
      %2571 = vmatpush1.msra.mxu0 0.0
      %2572 = vmatprep.subr.mxu0 0.0
      %2573 = vmatpush1.msra.mxu0 0.0
      %2574 = vmatprep.subr.mxu0 0.0
      %2575 = vmatpush1.msra.mxu0 0.0
      %2576 = vmatprep.subr.mxu0 0.0
      %2577 = vmatpush1.msra.mxu0 0.0
      %2578 = vmatprep.subr.mxu0 0.0
      %2579 = vmatpush1.msra.mxu0 0.0
      %2580 = vmatprep.subr.mxu0 0.0
      %2581 = vmatpush1.msra.mxu0 0.0
      %2582 = vmatprep.subr.mxu0 0.0
      %2583 = vmatpush1.msra.mxu0 0.0
      %2584 = vmatprep.subr.mxu0 0.0
      %2585 = vmatpush1.msra.mxu0 0.0
      %2586 = vmatprep.subr.mxu0 0.0
      %2587 = vmatpush1.msra.mxu0 0.0
      %2588 = vmatprep.mubr.f32.mxu0 0.0
      %2589 = vmatmul.mubr.f32.gmra.mrb[0].mxu0 %v482
      %v2590 = vpop.f32.mrb[0].mxu0
      %v2591 = vadd.f32 0.0, %v2590
      %v2592 = vpop.f32.mrb[0].mxu0
      %2593 = vmatprep.mubr.f32.mxu0 0.0
      %2594 = vmatmul.mubr.f32.gmra.mrb[0].mxu0 %v484
      %v2595 = vpop.f32.mrb[0].mxu0
      %v2596 = vadd.f32 0.0, %v2595
      %v2597 = vpop.f32.mrb[0].mxu0
      %2598 = vmatprep.mubr.f32.mxu0 0.0
      %2599 = vmatmul.mubr.f32.gmra.mrb[0].mxu0 %v486
      %v2600 = vpop.f32.mrb[0].mxu0
      %v2601 = vadd.f32 0.0, %v2600
      %v2602 = vpop.f32.mrb[0].mxu0
      %2603 = vmatprep.mubr.f32.mxu0 0.0
      %2604 = vmatmul.mubr.f32.gmra.mrb[0].mxu0 %v488
      %v2605 = vpop.f32.mrb[0].mxu0
      %v2606 = vadd.f32 0.0, %v2605
      %v2607 = vpop.f32.mrb[0].mxu0
      %2608 = vmatprep.mubr.f32.mxu0 0.0
      %2609 = vmatmul.mubr.f32.gmra.mrb[0].mxu0 %v490
      %v2610 = vpop.f32.mrb[0].mxu0
      %v2611 = vadd.f32 0.0, %v2610
      %v2612 = vpop.f32.mrb[0].mxu0
      %2613 = vmatprep.mubr.f32.mxu0 0.0
      %2614 = vmatmul.mubr.f32.gmra.mrb[0].mxu0 %v492
      %v2615 = vpop.f32.mrb[0].mxu0
      %v2616 = vadd.f32 0.0, %v2615
      %v2617 = vpop.f32.mrb[0].mxu0
      %2618 = vmatprep.mubr.f32.mxu0 0.0
      %2619 = vmatmul.mubr.f32.gmra.mrb[0].mxu0 %v494
      %v2620 = vpop.f32.mrb[0].mxu0
      %v2621 = vadd.f32 0.0, %v2620
      %v2622 = vpop.f32.mrb[0].mxu0
      %2623 = vmatprep.mubr.f32.mxu0 0.0
      %2624 = vmatmul.mubr.f32.gmra.mrb[0].mxu0 %v496
      %v2625 = vpop.f32.mrb[0].mxu0
      %v2626 = vadd.f32 0.0, %v2625
      %v2627 = vpop.f32.mrb[0].mxu0
      %2628 = vmatprep.mubr.f32.mxu0 0.0
      %2629 = vmatmul.mubr.f32.gmra.mrb[0].mxu0 %v498
      %v2630 = vpop.f32.mrb[0].mxu0
      %v2631 = vadd.f32 0.0, %v2630
      %v2632 = vpop.f32.mrb[0].mxu0
      %2633 = vmatprep.mubr.f32.mxu0 0.0
      %2634 = vmatmul.mubr.f32.gmra.mrb[0].mxu0 %v500
      %v2635 = vpop.f32.mrb[0].mxu0
      %v2636 = vadd.f32 0.0, %v2635
      %v2637 = vpop.f32.mrb[0].mxu0
      %2638 = vmatprep.mubr.f32.mxu0 0.0
      %2639 = vmatmul.mubr.f32.gmra.mrb[0].mxu0 %v502
      %v2640 = vpop.f32.mrb[0].mxu0
      %v2641 = vadd.f32 0.0, %v2640
      %v2642 = vpop.f32.mrb[0].mxu0
      %2643 = vmatprep.mubr.f32.mxu0 0.0
      %2644 = vmatmul.mubr.f32.gmra.mrb[0].mxu0 %v504
      %v2645 = vpop.f32.mrb[0].mxu0
      %v2646 = vadd.f32 0.0, %v2645
      %v2647 = vpop.f32.mrb[0].mxu0
      %2648 = vmatprep.mubr.f32.mxu0 0.0
      %2649 = vmatmul.mubr.f32.gmra.mrb[0].mxu0 %v506
      %v2650 = vpop.f32.mrb[0].mxu0
      %v2651 = vadd.f32 0.0, %v2650
      %v2652 = vpop.f32.mrb[0].mxu0
      %2653 = vmatprep.mubr.f32.mxu0 0.0
      %2654 = vmatmul.mubr.f32.gmra.mrb[0].mxu0 %v508
      %v2655 = vpop.f32.mrb[0].mxu0
      %v2656 = vadd.f32 0.0, %v2655
      %v2657 = vpop.f32.mrb[0].mxu0
      %2658 = vmatprep.mubr.f32.mxu0 0.0
      %2659 = vmatmul.mubr.f32.gmra.mrb[0].mxu0 %v510
      %v2660 = vpop.f32.mrb[0].mxu0
      %v2661 = vadd.f32 0.0, %v2660
      %v2662 = vpop.f32.mrb[0].mxu0
      %2663 = vmatprep.mubr.f32.mxu0 0.0
      %2664 = vmatmul.mubr.f32.gmra.mrb[0].mxu0 %v512
      %v2665 = vpop.f32.mrb[0].mxu0
      %v2666 = vadd.f32 0.0, %v2665
      %v2667 = vpop.f32.mrb[0].mxu0
      %2668 = vmatprep.mubr.f32.mxu0 0.0
      %2669 = vmatmul.mubr.f32.gmra.mrb[0].mxu0 %v514
      %v2670 = vpop.f32.mrb[0].mxu0
      %v2671 = vadd.f32 0.0, %v2670
      %v2672 = vpop.f32.mrb[0].mxu0
      %2673 = vmatprep.mubr.f32.mxu0 0.0
      %2674 = vmatmul.mubr.f32.gmra.mrb[0].mxu0 %v516
      %v2675 = vpop.f32.mrb[0].mxu0
      %v2676 = vadd.f32 0.0, %v2675
      %v2677 = vpop.f32.mrb[0].mxu0
      %2678 = vmatprep.mubr.f32.mxu0 0.0
      %2679 = vmatmul.mubr.f32.gmra.mrb[0].mxu0 %v518
      %v2680 = vpop.f32.mrb[0].mxu0
      %v2681 = vadd.f32 0.0, %v2680
      %v2682 = vpop.f32.mrb[0].mxu0
      %2683 = vmatprep.mubr.f32.mxu0 0.0
      %2684 = vmatmul.mubr.f32.gmra.mrb[0].mxu0 %v520
      %v2685 = vpop.f32.mrb[0].mxu0
      %v2686 = vadd.f32 0.0, %v2685
      %v2687 = vpop.f32.mrb[0].mxu0
      %2688 = vmatprep.mubr.f32.mxu0 0.0
      %2689 = vmatmul.mubr.f32.gmra.mrb[0].mxu0 %v522
      %v2690 = vpop.f32.mrb[0].mxu0
      %v2691 = vadd.f32 0.0, %v2690
      %v2692 = vpop.f32.mrb[0].mxu0
      %2693 = vmatprep.mubr.f32.mxu0 0.0
      %2694 = vmatmul.mubr.f32.gmra.mrb[0].mxu0 %v524
      %v2695 = vpop.f32.mrb[0].mxu0
      %v2696 = vadd.f32 0.0, %v2695
      %v2697 = vpop.f32.mrb[0].mxu0
      %2698 = vmatprep.mubr.f32.mxu0 0.0
      %2699 = vmatmul.mubr.f32.gmra.mrb[0].mxu0 %v526
      %v2700 = vpop.f32.mrb[0].mxu0
      %v2701 = vadd.f32 0.0, %v2700
      %v2702 = vpop.f32.mrb[0].mxu0
      %2703 = vmatprep.mubr.f32.mxu0 0.0
      %2704 = vmatmul.mubr.f32.gmra.mrb[0].mxu0 %v528
      %v2705 = vpop.f32.mrb[0].mxu0
      %v2706 = vadd.f32 0.0, %v2705
      %v2707 = vpop.f32.mrb[0].mxu0
      %2708 = vmatprep.mubr.f32.mxu0 0.0
      %2709 = vmatmul.mubr.f32.gmra.mrb[0].mxu0 %v530
      %v2710 = vpop.f32.mrb[0].mxu0
      %v2711 = vadd.f32 0.0, %v2710
      %v2712 = vpop.f32.mrb[0].mxu0
      %2713 = vmatprep.mubr.f32.mxu0 0.0
      %2714 = vmatmul.mubr.f32.gmra.mrb[0].mxu0 %v532
      %v2715 = vpop.f32.mrb[0].mxu0
      %v2716 = vadd.f32 0.0, %v2715
      %v2717 = vpop.f32.mrb[0].mxu0
      %2718 = vmatprep.mubr.f32.mxu0 0.0
      %2719 = vmatmul.mubr.f32.gmra.mrb[0].mxu0 %v534
      %v2720 = vpop.f32.mrb[0].mxu0
      %v2721 = vadd.f32 0.0, %v2720
      %v2722 = vpop.f32.mrb[0].mxu0
      %2723 = vmatprep.mubr.f32.mxu0 0.0
      %2724 = vmatmul.mubr.f32.gmra.mrb[0].mxu0 %v536
      %v2725 = vpop.f32.mrb[0].mxu0
      %v2726 = vadd.f32 0.0, %v2725
      %v2727 = vpop.f32.mrb[0].mxu0
      %2728 = vmatprep.mubr.f32.mxu0 0.0
      %2729 = vmatmul.mubr.f32.gmra.mrb[0].mxu0 %v1728
      %v2730 = vpop.f32.mrb[0].mxu0
      %v2731 = vadd.f32 0.0, %v2730
      %v2732 = vpop.f32.mrb[0].mxu0
      %2733 = vmatprep.mubr.f32.mxu0 0.0
      %2734 = vmatmul.mubr.f32.gmra.mrb[0].mxu0 %v1730
      %v2735 = vpop.f32.mrb[0].mxu0
      %v2736 = vadd.f32 0.0, %v2735
      %v2737 = vpop.f32.mrb[0].mxu0
      %2738 = vmatprep.mubr.f32.mxu0 0.0
      %2739 = vmatmul.mubr.f32.gmra.mrb[0].mxu0 %v476
      %v2740 = vpop.f32.mrb[0].mxu0
      %v2741 = vadd.f32 0.0, %v2740
      %v2742 = vpop.f32.mrb[0].mxu0
      %2743 = vmatprep.mubr.f32.mxu0 0.0
      %2744 = vmatmul.mubr.f32.gmra.mrb[0].mxu0 %v476
      %v2745 = vpop.f32.mrb[0].mxu0
      %v2746 = vadd.f32 0.0, %v2745
      %v2747 = vpop.f32.mrb[0].mxu0
      %2748 = vdwg.mxu0
      %v2749 = vadd.f32 %v2489, %v2591
      %v2750 = vadd.f32 %v2490, %v2596
      %v2751 = vadd.f32 %v2491, %v2601
      %v2752 = vadd.f32 %v2492, %v2606
      %v2753 = vadd.f32 %v2493, %v2611
      %v2754 = vadd.f32 %v2494, %v2616
      %v2755 = vadd.f32 %v2495, %v2621
      %v2756 = vadd.f32 %v2496, %v2626
      %v2757 = vadd.f32 %v2497, %v2631
      %v2758 = vadd.f32 %v2498, %v2636
      %v2759 = vadd.f32 %v2499, %v2641
      %v2760 = vadd.f32 %v2500, %v2646
      %v2761 = vadd.f32 %v2501, %v2651
      %v2762 = vadd.f32 %v2502, %v2656
      %v2763 = vadd.f32 %v2503, %v2661
      %v2764 = vadd.f32 %v2504, %v2666
      %v2765 = vadd.f32 %v2505, %v2671
      %v2766 = vadd.f32 %v2506, %v2676
      %v2767 = vadd.f32 %v2507, %v2681
      %v2768 = vadd.f32 %v2508, %v2686
      %v2769 = vadd.f32 %v2509, %v2691
      %v2770 = vadd.f32 %v2510, %v2696
      %v2771 = vadd.f32 %v2511, %v2701
      %v2772 = vadd.f32 %v2512, %v2706
      %v2773 = vadd.f32 %v2513, %v2711
      %v2774 = vadd.f32 %v2514, %v2716
      %v2775 = vadd.f32 %v2515, %v2721
      %v2776 = vadd.f32 %v2516, %v2726
      %v2777 = vadd.f32 %v2517, %v2731
      %v2778 = vadd.f32 %v2518, %v2736
      %v2779 = vadd.f32 %v2519, %v2741
      %v2780 = vadd.f32 %v2520, %v2746
      %v2782 = vsel %vm538, %v211, 0
      %2784 = vmatprep.subr.mxu0 0.0
      %2785 = vmatpush1.msra.mxu0 %v2782
      %2786 = vmatprep.subr.mxu0 0.0
      %2787 = vmatpush1.msra.mxu0 0.0
      %2788 = vmatprep.subr.mxu0 0.0
      %2789 = vmatpush1.msra.mxu0 0.0
      %2790 = vmatprep.subr.mxu0 0.0
      %2791 = vmatpush1.msra.mxu0 0.0
      %2792 = vmatprep.subr.mxu0 0.0
      %2793 = vmatpush1.msra.mxu0 0.0
      %2794 = vmatprep.subr.mxu0 0.0
      %2795 = vmatpush1.msra.mxu0 0.0
      %2796 = vmatprep.subr.mxu0 0.0
      %2797 = vmatpush1.msra.mxu0 0.0
      %2798 = vmatprep.subr.mxu0 0.0
      %2799 = vmatpush1.msra.mxu0 0.0
      %2800 = vmatprep.subr.mxu0 0.0
      %2801 = vmatpush1.msra.mxu0 0.0
      %2802 = vmatprep.subr.mxu0 0.0
      %2803 = vmatpush1.msra.mxu0 0.0
      %2804 = vmatprep.subr.mxu0 0.0
      %2805 = vmatpush1.msra.mxu0 0.0
      %2806 = vmatprep.subr.mxu0 0.0
      %2807 = vmatpush1.msra.mxu0 0.0
      %2808 = vmatprep.subr.mxu0 0.0
      %2809 = vmatpush1.msra.mxu0 0.0
      %2810 = vmatprep.subr.mxu0 0.0
      %2811 = vmatpush1.msra.mxu0 0.0
      %2812 = vmatprep.subr.mxu0 0.0
      %2813 = vmatpush1.msra.mxu0 0.0
      %2814 = vmatprep.subr.mxu0 0.0
      %2815 = vmatpush1.msra.mxu0 0.0
      %2816 = vmatprep.subr.mxu0 0.0
      %2817 = vmatpush1.msra.mxu0 0.0
      %2818 = vmatprep.subr.mxu0 0.0
      %2819 = vmatpush1.msra.mxu0 0.0
      %2820 = vmatprep.subr.mxu0 0.0
      %2821 = vmatpush1.msra.mxu0 0.0
      %2822 = vmatprep.subr.mxu0 0.0
      %2823 = vmatpush1.msra.mxu0 0.0
      %2824 = vmatprep.subr.mxu0 0.0
      %2825 = vmatpush1.msra.mxu0 0.0
      %2826 = vmatprep.subr.mxu0 0.0
      %2827 = vmatpush1.msra.mxu0 0.0
      %2828 = vmatprep.subr.mxu0 0.0
      %2829 = vmatpush1.msra.mxu0 0.0
      %2830 = vmatprep.subr.mxu0 0.0
      %2831 = vmatpush1.msra.mxu0 0.0
      %2832 = vmatprep.subr.mxu0 0.0
      %2833 = vmatpush1.msra.mxu0 0.0
      %2834 = vmatprep.subr.mxu0 0.0
      %2835 = vmatpush1.msra.mxu0 0.0
      %2836 = vmatprep.subr.mxu0 0.0
      %2837 = vmatpush1.msra.mxu0 0.0
      %2838 = vmatprep.subr.mxu0 0.0
      %2839 = vmatpush1.msra.mxu0 0.0
      %2840 = vmatprep.subr.mxu0 0.0
      %2841 = vmatpush1.msra.mxu0 0.0
      %2842 = vmatprep.subr.mxu0 0.0
      %2843 = vmatpush1.msra.mxu0 0.0
      %2844 = vmatprep.subr.mxu0 0.0
      %2845 = vmatpush1.msra.mxu0 0.0
      %2846 = vmatprep.subr.mxu0 0.0
      %2847 = vmatpush1.msra.mxu0 0.0
      %2848 = vmatprep.mubr.f32.mxu0 0.0
      %2849 = vmatmul.mubr.f32.gmra.mrb[0].mxu0 %v1141
      %v2850 = vpop.f32.mrb[0].mxu0
      %v2851 = vadd.f32 0.0, %v2850
      %v2852 = vpop.f32.mrb[0].mxu0
      %2853 = vmatprep.mubr.f32.mxu0 0.0
      %2854 = vmatmul.mubr.f32.gmra.mrb[0].mxu0 %v1143
      %v2855 = vpop.f32.mrb[0].mxu0
      %v2856 = vadd.f32 0.0, %v2855
      %v2857 = vpop.f32.mrb[0].mxu0
      %2858 = vmatprep.mubr.f32.mxu0 0.0
      %2859 = vmatmul.mubr.f32.gmra.mrb[0].mxu0 %v1145
      %v2860 = vpop.f32.mrb[0].mxu0
      %v2861 = vadd.f32 0.0, %v2860
      %v2862 = vpop.f32.mrb[0].mxu0
      %2863 = vmatprep.mubr.f32.mxu0 0.0
      %2864 = vmatmul.mubr.f32.gmra.mrb[0].mxu0 %v1147
      %v2865 = vpop.f32.mrb[0].mxu0
      %v2866 = vadd.f32 0.0, %v2865
      %v2867 = vpop.f32.mrb[0].mxu0
      %2868 = vmatprep.mubr.f32.mxu0 0.0
      %2869 = vmatmul.mubr.f32.gmra.mrb[0].mxu0 %v1149
      %v2870 = vpop.f32.mrb[0].mxu0
      %v2871 = vadd.f32 0.0, %v2870
      %v2872 = vpop.f32.mrb[0].mxu0
      %2873 = vmatprep.mubr.f32.mxu0 0.0
      %2874 = vmatmul.mubr.f32.gmra.mrb[0].mxu0 %v1151
      %v2875 = vpop.f32.mrb[0].mxu0
      %v2876 = vadd.f32 0.0, %v2875
      %v2877 = vpop.f32.mrb[0].mxu0
      %2878 = vmatprep.mubr.f32.mxu0 0.0
      %2879 = vmatmul.mubr.f32.gmra.mrb[0].mxu0 %v1153
      %v2880 = vpop.f32.mrb[0].mxu0
      %v2881 = vadd.f32 0.0, %v2880
      %v2882 = vpop.f32.mrb[0].mxu0
      %2883 = vmatprep.mubr.f32.mxu0 0.0
      %2884 = vmatmul.mubr.f32.gmra.mrb[0].mxu0 %v1155
      %v2885 = vpop.f32.mrb[0].mxu0
      %v2886 = vadd.f32 0.0, %v2885
      %v2887 = vpop.f32.mrb[0].mxu0
      %2888 = vmatprep.mubr.f32.mxu0 0.0
      %2889 = vmatmul.mubr.f32.gmra.mrb[0].mxu0 %v1157
      %v2890 = vpop.f32.mrb[0].mxu0
      %v2891 = vadd.f32 0.0, %v2890
      %v2892 = vpop.f32.mrb[0].mxu0
      %2893 = vmatprep.mubr.f32.mxu0 0.0
      %2894 = vmatmul.mubr.f32.gmra.mrb[0].mxu0 %v1159
      %v2895 = vpop.f32.mrb[0].mxu0
      %v2896 = vadd.f32 0.0, %v2895
      %v2897 = vpop.f32.mrb[0].mxu0
      %2898 = vmatprep.mubr.f32.mxu0 0.0
      %2899 = vmatmul.mubr.f32.gmra.mrb[0].mxu0 %v1161
      %v2900 = vpop.f32.mrb[0].mxu0
      %v2901 = vadd.f32 0.0, %v2900
      %v2902 = vpop.f32.mrb[0].mxu0
      %2903 = vmatprep.mubr.f32.mxu0 0.0
      %2904 = vmatmul.mubr.f32.gmra.mrb[0].mxu0 %v1163
      %v2905 = vpop.f32.mrb[0].mxu0
      %v2906 = vadd.f32 0.0, %v2905
      %v2907 = vpop.f32.mrb[0].mxu0
      %2908 = vmatprep.mubr.f32.mxu0 0.0
      %2909 = vmatmul.mubr.f32.gmra.mrb[0].mxu0 %v1165
      %v2910 = vpop.f32.mrb[0].mxu0
      %v2911 = vadd.f32 0.0, %v2910
      %v2912 = vpop.f32.mrb[0].mxu0
      %2913 = vmatprep.mubr.f32.mxu0 0.0
      %2914 = vmatmul.mubr.f32.gmra.mrb[0].mxu0 %v1167
      %v2915 = vpop.f32.mrb[0].mxu0
      %v2916 = vadd.f32 0.0, %v2915
      %v2917 = vpop.f32.mrb[0].mxu0
      %2918 = vmatprep.mubr.f32.mxu0 0.0
      %2919 = vmatmul.mubr.f32.gmra.mrb[0].mxu0 %v1169
      %v2920 = vpop.f32.mrb[0].mxu0
      %v2921 = vadd.f32 0.0, %v2920
      %v2922 = vpop.f32.mrb[0].mxu0
      %2923 = vmatprep.mubr.f32.mxu0 0.0
      %2924 = vmatmul.mubr.f32.gmra.mrb[0].mxu0 %v1171
      %v2925 = vpop.f32.mrb[0].mxu0
      %v2926 = vadd.f32 0.0, %v2925
      %v2927 = vpop.f32.mrb[0].mxu0
      %2928 = vmatprep.mubr.f32.mxu0 0.0
      %2929 = vmatmul.mubr.f32.gmra.mrb[0].mxu0 %v1173
      %v2930 = vpop.f32.mrb[0].mxu0
      %v2931 = vadd.f32 0.0, %v2930
      %v2932 = vpop.f32.mrb[0].mxu0
      %2933 = vmatprep.mubr.f32.mxu0 0.0
      %2934 = vmatmul.mubr.f32.gmra.mrb[0].mxu0 %v1175
      %v2935 = vpop.f32.mrb[0].mxu0
      %v2936 = vadd.f32 0.0, %v2935
      %v2937 = vpop.f32.mrb[0].mxu0
      %2938 = vmatprep.mubr.f32.mxu0 0.0
      %2939 = vmatmul.mubr.f32.gmra.mrb[0].mxu0 %v1177
      %v2940 = vpop.f32.mrb[0].mxu0
      %v2941 = vadd.f32 0.0, %v2940
      %v2942 = vpop.f32.mrb[0].mxu0
      %2943 = vmatprep.mubr.f32.mxu0 0.0
      %2944 = vmatmul.mubr.f32.gmra.mrb[0].mxu0 %v1179
      %v2945 = vpop.f32.mrb[0].mxu0
      %v2946 = vadd.f32 0.0, %v2945
      %v2947 = vpop.f32.mrb[0].mxu0
      %2948 = vmatprep.mubr.f32.mxu0 0.0
      %2949 = vmatmul.mubr.f32.gmra.mrb[0].mxu0 %v1181
      %v2950 = vpop.f32.mrb[0].mxu0
      %v2951 = vadd.f32 0.0, %v2950
      %v2952 = vpop.f32.mrb[0].mxu0
      %2953 = vmatprep.mubr.f32.mxu0 0.0
      %2954 = vmatmul.mubr.f32.gmra.mrb[0].mxu0 %v1183
      %v2955 = vpop.f32.mrb[0].mxu0
      %v2956 = vadd.f32 0.0, %v2955
      %v2957 = vpop.f32.mrb[0].mxu0
      %2958 = vmatprep.mubr.f32.mxu0 0.0
      %2959 = vmatmul.mubr.f32.gmra.mrb[0].mxu0 %v1185
      %v2960 = vpop.f32.mrb[0].mxu0
      %v2961 = vadd.f32 0.0, %v2960
      %v2962 = vpop.f32.mrb[0].mxu0
      %2963 = vmatprep.mubr.f32.mxu0 0.0
      %2964 = vmatmul.mubr.f32.gmra.mrb[0].mxu0 %v1187
      %v2965 = vpop.f32.mrb[0].mxu0
      %v2966 = vadd.f32 0.0, %v2965
      %v2967 = vpop.f32.mrb[0].mxu0
      %2968 = vmatprep.mubr.f32.mxu0 0.0
      %2969 = vmatmul.mubr.f32.gmra.mrb[0].mxu0 %v1189
      %v2970 = vpop.f32.mrb[0].mxu0
      %v2971 = vadd.f32 0.0, %v2970
      %v2972 = vpop.f32.mrb[0].mxu0
      %2973 = vmatprep.mubr.f32.mxu0 0.0
      %2974 = vmatmul.mubr.f32.gmra.mrb[0].mxu0 %v1191
      %v2975 = vpop.f32.mrb[0].mxu0
      %v2976 = vadd.f32 0.0, %v2975
      %v2977 = vpop.f32.mrb[0].mxu0
      %2978 = vmatprep.mubr.f32.mxu0 0.0
      %2979 = vmatmul.mubr.f32.gmra.mrb[0].mxu0 %v1193
      %v2980 = vpop.f32.mrb[0].mxu0
      %v2981 = vadd.f32 0.0, %v2980
      %v2982 = vpop.f32.mrb[0].mxu0
      %2983 = vmatprep.mubr.f32.mxu0 0.0
      %2984 = vmatmul.mubr.f32.gmra.mrb[0].mxu0 %v1195
      %v2985 = vpop.f32.mrb[0].mxu0
      %v2986 = vadd.f32 0.0, %v2985
      %v2987 = vpop.f32.mrb[0].mxu0
      %2988 = vmatprep.mubr.f32.mxu0 0.0
      %2989 = vmatmul.mubr.f32.gmra.mrb[0].mxu0 %v1997
      %v2990 = vpop.f32.mrb[0].mxu0
      %v2991 = vadd.f32 0.0, %v2990
      %v2992 = vpop.f32.mrb[0].mxu0
      %2993 = vmatprep.mubr.f32.mxu0 0.0
      %2994 = vmatmul.mubr.f32.gmra.mrb[0].mxu0 %v1999
      %v2995 = vpop.f32.mrb[0].mxu0
      %v2996 = vadd.f32 0.0, %v2995
      %v2997 = vpop.f32.mrb[0].mxu0
      %2998 = vmatprep.mubr.f32.mxu0 0.0
      %2999 = vmatmul.mubr.f32.gmra.mrb[0].mxu0 %v1135
      %v3000 = vpop.f32.mrb[0].mxu0
      %v3001 = vadd.f32 0.0, %v3000
      %v3002 = vpop.f32.mrb[0].mxu0
      %3003 = vmatprep.mubr.f32.mxu0 0.0
      %3004 = vmatmul.mubr.f32.gmra.mrb[0].mxu0 %v1135
      %v3005 = vpop.f32.mrb[0].mxu0
      %v3006 = vadd.f32 0.0, %v3005
      %v3007 = vpop.f32.mrb[0].mxu0
      %3008 = vdwg.mxu0
      %v3009 = vadd.f32 %v2749, %v2851
      %v3010 = vadd.f32 %v2750, %v2856
      %v3011 = vadd.f32 %v2751, %v2861
      %v3012 = vadd.f32 %v2752, %v2866
      %v3013 = vadd.f32 %v2753, %v2871
      %v3014 = vadd.f32 %v2754, %v2876
      %v3015 = vadd.f32 %v2755, %v2881
      %v3016 = vadd.f32 %v2756, %v2886
      %v3017 = vadd.f32 %v2757, %v2891
      %v3018 = vadd.f32 %v2758, %v2896
      %v3019 = vadd.f32 %v2759, %v2901
      %v3020 = vadd.f32 %v2760, %v2906
      %v3021 = vadd.f32 %v2761, %v2911
      %v3022 = vadd.f32 %v2762, %v2916
      %v3023 = vadd.f32 %v2763, %v2921
      %v3024 = vadd.f32 %v2764, %v2926
      %v3025 = vadd.f32 %v2765, %v2931
      %v3026 = vadd.f32 %v2766, %v2936
      %v3027 = vadd.f32 %v2767, %v2941
      %v3028 = vadd.f32 %v2768, %v2946
      %v3029 = vadd.f32 %v2769, %v2951
      %v3030 = vadd.f32 %v2770, %v2956
      %v3031 = vadd.f32 %v2771, %v2961
      %v3032 = vadd.f32 %v2772, %v2966
      %v3033 = vadd.f32 %v2773, %v2971
      %v3034 = vadd.f32 %v2774, %v2976
      %v3035 = vadd.f32 %v2775, %v2981
      %v3036 = vadd.f32 %v2776, %v2986
      %v3037 = vadd.f32 %v2777, %v2991
      %v3038 = vadd.f32 %v2778, %v2996
      %v3039 = vadd.f32 %v2779, %v3001
      %v3040 = vadd.f32 %v2780, %v3006
      %vm3041 = vcmask 64512
      %v3042 = vsel %vm3041, %v3009, 0.0
      %v3043 = vsel %vm3041, %v3010, 0.0
      %v3044 = vadd.f32 %v3042, %v3043
      %v3045 = vsel %vm3041, %v3011, 0.0
      %v3046 = vadd.f32 %v3044, %v3045
      %v3047 = vsel %vm3041, %v3012, 0.0
      %v3048 = vadd.f32 %v3046, %v3047
      %v3049 = vsel %vm3041, %v3013, 0.0
      %v3050 = vadd.f32 %v3048, %v3049
      %v3051 = vsel %vm3041, %v3014, 0.0
      %v3052 = vadd.f32 %v3050, %v3051
      %v3053 = vsel %vm3041, %v3015, 0.0
      %v3054 = vadd.f32 %v3052, %v3053
      %v3055 = vsel %vm3041, %v3016, 0.0
      %v3056 = vadd.f32 %v3054, %v3055
      %v3057 = vsel %vm3041, %v3017, 0.0
      %v3058 = vadd.f32 %v3056, %v3057
      %v3059 = vsel %vm3041, %v3018, 0.0
      %v3060 = vadd.f32 %v3058, %v3059
      %v3061 = vsel %vm3041, %v3019, 0.0
      %v3062 = vadd.f32 %v3060, %v3061
      %v3063 = vsel %vm3041, %v3020, 0.0
      %v3064 = vadd.f32 %v3062, %v3063
      %v3065 = vsel %vm3041, %v3021, 0.0
      %v3066 = vadd.f32 %v3064, %v3065
      %v3067 = vsel %vm3041, %v3022, 0.0
      %v3068 = vadd.f32 %v3066, %v3067
      %v3069 = vsel %vm3041, %v3023, 0.0
      %v3070 = vadd.f32 %v3068, %v3069
      %v3071 = vsel %vm3041, %v3024, 0.0
      %v3072 = vadd.f32 %v3070, %v3071
      %v3073 = vsel %vm3041, %v3025, 0.0
      %v3074 = vadd.f32 %v3072, %v3073
      %v3075 = vsel %vm3041, %v3026, 0.0
      %v3076 = vadd.f32 %v3074, %v3075
      %v3077 = vsel %vm3041, %v3027, 0.0
      %v3078 = vadd.f32 %v3076, %v3077
      %v3079 = vsel %vm3041, %v3028, 0.0
      %v3080 = vadd.f32 %v3078, %v3079
      %v3081 = vsel %vm3041, %v3029, 0.0
      %v3082 = vadd.f32 %v3080, %v3081
      %v3083 = vsel %vm3041, %v3030, 0.0
      %v3084 = vadd.f32 %v3082, %v3083
      %v3085 = vsel %vm3041, %v3031, 0.0
      %v3086 = vadd.f32 %v3084, %v3085
      %v3087 = vsel %vm3041, %v3032, 0.0
      %v3088 = vadd.f32 %v3086, %v3087
      %v3089 = vsel %vm3041, %v3033, 0.0
      %v3090 = vadd.f32 %v3088, %v3089
      %v3091 = vsel %vm3041, %v3034, 0.0
      %v3092 = vadd.f32 %v3090, %v3091
      %v3093 = vsel %vm3041, %v3035, 0.0
      %v3094 = vadd.f32 %v3092, %v3093
      %v3095 = vsel %vm3041, %v3036, 0.0
      %v3096 = vadd.f32 %v3094, %v3095
      %v3097 = vsel %vm3041, %v3037, 0.0
      %v3098 = vadd.f32 %v3096, %v3097
      %v3099 = vsel %vm3041, %v3038, 0.0
      %v3100 = vadd.f32 %v3098, %v3099
      %v3101 = vsel %vm3041, %v3039, 0.0
      %v3102 = vadd.f32 %v3100, %v3101
      %v3103 = vsel %vm3041, %v3040, 0.0
      %v3104 = vadd.f32 %v3102, %v3103
      %v3105 = vrot.slane %v3104, 4
      %v3106 = vadd.f32 %v3104, %v3105
      %v3107 = vrot.slane %v3106, 2
      %v3108 = vadd.f32 %v3106, %v3107
      %v3109 = vrot.slane %v3108, 1
      %v3110 = vadd.f32 %v3108, %v3109
      %v3111 = vrcp.pop 256.0
      %v3112 = vmul.f32 %v3110, %v3111
      %v3113 = vsub.f32 %v3009, %v3112
      %v3114 = vsub.f32 %v3010, %v3112
      %v3115 = vsub.f32 %v3011, %v3112
      %v3116 = vsub.f32 %v3012, %v3112
      %v3117 = vsub.f32 %v3013, %v3112
      %v3118 = vsub.f32 %v3014, %v3112
      %v3119 = vsub.f32 %v3015, %v3112
      %v3120 = vsub.f32 %v3016, %v3112
      %v3121 = vsub.f32 %v3017, %v3112
      %v3122 = vsub.f32 %v3018, %v3112
      %v3123 = vsub.f32 %v3019, %v3112
      %v3124 = vsub.f32 %v3020, %v3112
      %v3125 = vsub.f32 %v3021, %v3112
      %v3126 = vsub.f32 %v3022, %v3112
      %v3127 = vsub.f32 %v3023, %v3112
      %v3128 = vsub.f32 %v3024, %v3112
      %v3129 = vsub.f32 %v3025, %v3112
      %v3130 = vsub.f32 %v3026, %v3112
      %v3131 = vsub.f32 %v3027, %v3112
      %v3132 = vsub.f32 %v3028, %v3112
      %v3133 = vsub.f32 %v3029, %v3112
      %v3134 = vsub.f32 %v3030, %v3112
      %v3135 = vsub.f32 %v3031, %v3112
      %v3136 = vsub.f32 %v3032, %v3112
      %v3137 = vsub.f32 %v3033, %v3112
      %v3138 = vsub.f32 %v3034, %v3112
      %v3139 = vsub.f32 %v3035, %v3112
      %v3140 = vsub.f32 %v3036, %v3112
      %v3141 = vsub.f32 %v3037, %v3112
      %v3142 = vsub.f32 %v3038, %v3112
      %v3143 = vsub.f32 %v3039, %v3112
      %v3144 = vsub.f32 %v3040, %v3112
      %v3145 = vmul.f32 %v3113, %v3113
      %v3146 = vmul.f32 %v3114, %v3114
      %v3147 = vmul.f32 %v3115, %v3115
      %v3148 = vmul.f32 %v3116, %v3116
      %v3149 = vmul.f32 %v3117, %v3117
      %v3150 = vmul.f32 %v3118, %v3118
      %v3151 = vmul.f32 %v3119, %v3119
      %v3152 = vmul.f32 %v3120, %v3120
      %v3153 = vmul.f32 %v3121, %v3121
      %v3154 = vmul.f32 %v3122, %v3122
      %v3155 = vmul.f32 %v3123, %v3123
      %v3156 = vmul.f32 %v3124, %v3124
      %v3157 = vmul.f32 %v3125, %v3125
      %v3158 = vmul.f32 %v3126, %v3126
      %v3159 = vmul.f32 %v3127, %v3127
      %v3160 = vmul.f32 %v3128, %v3128
      %v3161 = vmul.f32 %v3129, %v3129
      %v3162 = vmul.f32 %v3130, %v3130
      %v3163 = vmul.f32 %v3131, %v3131
      %v3164 = vmul.f32 %v3132, %v3132
      %v3165 = vmul.f32 %v3133, %v3133
      %v3166 = vmul.f32 %v3134, %v3134
      %v3167 = vmul.f32 %v3135, %v3135
      %v3168 = vmul.f32 %v3136, %v3136
      %v3169 = vmul.f32 %v3137, %v3137
      %v3170 = vmul.f32 %v3138, %v3138
      %v3171 = vmul.f32 %v3139, %v3139
      %v3172 = vmul.f32 %v3140, %v3140
      %v3173 = vmul.f32 %v3141, %v3141
      %v3174 = vmul.f32 %v3142, %v3142
      %v3175 = vmul.f32 %v3143, %v3143
      %v3176 = vmul.f32 %v3144, %v3144
      %v3177 = vsel %vm3041, %v3145, 0.0
      %v3178 = vsel %vm3041, %v3146, 0.0
      %v3179 = vadd.f32 %v3177, %v3178
      %v3180 = vsel %vm3041, %v3147, 0.0
      %v3181 = vadd.f32 %v3179, %v3180
      %v3182 = vsel %vm3041, %v3148, 0.0
      %v3183 = vadd.f32 %v3181, %v3182
      %v3184 = vsel %vm3041, %v3149, 0.0
      %v3185 = vadd.f32 %v3183, %v3184
      %v3186 = vsel %vm3041, %v3150, 0.0
      %v3187 = vadd.f32 %v3185, %v3186
      %v3188 = vsel %vm3041, %v3151, 0.0
      %v3189 = vadd.f32 %v3187, %v3188
      %v3190 = vsel %vm3041, %v3152, 0.0
      %v3191 = vadd.f32 %v3189, %v3190
      %v3192 = vsel %vm3041, %v3153, 0.0
      %v3193 = vadd.f32 %v3191, %v3192
      %v3194 = vsel %vm3041, %v3154, 0.0
      %v3195 = vadd.f32 %v3193, %v3194
      %v3196 = vsel %vm3041, %v3155, 0.0
      %v3197 = vadd.f32 %v3195, %v3196
      %v3198 = vsel %vm3041, %v3156, 0.0
      %v3199 = vadd.f32 %v3197, %v3198
      %v3200 = vsel %vm3041, %v3157, 0.0
      %v3201 = vadd.f32 %v3199, %v3200
      %v3202 = vsel %vm3041, %v3158, 0.0
      %v3203 = vadd.f32 %v3201, %v3202
      %v3204 = vsel %vm3041, %v3159, 0.0
      %v3205 = vadd.f32 %v3203, %v3204
      %v3206 = vsel %vm3041, %v3160, 0.0
      %v3207 = vadd.f32 %v3205, %v3206
      %v3208 = vsel %vm3041, %v3161, 0.0
      %v3209 = vadd.f32 %v3207, %v3208
      %v3210 = vsel %vm3041, %v3162, 0.0
      %v3211 = vadd.f32 %v3209, %v3210
      %v3212 = vsel %vm3041, %v3163, 0.0
      %v3213 = vadd.f32 %v3211, %v3212
      %v3214 = vsel %vm3041, %v3164, 0.0
      %v3215 = vadd.f32 %v3213, %v3214
      %v3216 = vsel %vm3041, %v3165, 0.0
      %v3217 = vadd.f32 %v3215, %v3216
      %v3218 = vsel %vm3041, %v3166, 0.0
      %v3219 = vadd.f32 %v3217, %v3218
      %v3220 = vsel %vm3041, %v3167, 0.0
      %v3221 = vadd.f32 %v3219, %v3220
      %v3222 = vsel %vm3041, %v3168, 0.0
      %v3223 = vadd.f32 %v3221, %v3222
      %v3224 = vsel %vm3041, %v3169, 0.0
      %v3225 = vadd.f32 %v3223, %v3224
      %v3226 = vsel %vm3041, %v3170, 0.0
      %v3227 = vadd.f32 %v3225, %v3226
      %v3228 = vsel %vm3041, %v3171, 0.0
      %v3229 = vadd.f32 %v3227, %v3228
      %v3230 = vsel %vm3041, %v3172, 0.0
      %v3231 = vadd.f32 %v3229, %v3230
      %v3232 = vsel %vm3041, %v3173, 0.0
      %v3233 = vadd.f32 %v3231, %v3232
      %v3234 = vsel %vm3041, %v3174, 0.0
      %v3235 = vadd.f32 %v3233, %v3234
      %v3236 = vsel %vm3041, %v3175, 0.0
      %v3237 = vadd.f32 %v3235, %v3236
      %v3238 = vsel %vm3041, %v3176, 0.0
      %v3239 = vadd.f32 %v3237, %v3238
      %v3240 = vrot.slane %v3239, 4
      %v3241 = vadd.f32 %v3239, %v3240
      %v3242 = vrot.slane %v3241, 2
      %v3243 = vadd.f32 %v3241, %v3242
      %v3244 = vrot.slane %v3243, 1
      %v3245 = vadd.f32 %v3243, %v3244
      %v3246 = vmul.f32 %v3245, %v3111
      %v3247 = vadd.f32 %v3246, 1e-05
      %v3248 = vrsqrt.pop %v3247
      %v3249 = vmul.f32 %v3113, %v3248
      %v3250 = vmul.f32 %v3114, %v3248
      %v3251 = vmul.f32 %v3115, %v3248
      %v3252 = vmul.f32 %v3116, %v3248
      %v3253 = vmul.f32 %v3117, %v3248
      %v3254 = vmul.f32 %v3118, %v3248
      %v3255 = vmul.f32 %v3119, %v3248
      %v3256 = vmul.f32 %v3120, %v3248
      %v3257 = vmul.f32 %v3121, %v3248
      %v3258 = vmul.f32 %v3122, %v3248
      %v3259 = vmul.f32 %v3123, %v3248
      %v3260 = vmul.f32 %v3124, %v3248
      %v3261 = vmul.f32 %v3125, %v3248
      %v3262 = vmul.f32 %v3126, %v3248
      %v3263 = vmul.f32 %v3127, %v3248
      %v3264 = vmul.f32 %v3128, %v3248
      %v3265 = vmul.f32 %v3129, %v3248
      %v3266 = vmul.f32 %v3130, %v3248
      %v3267 = vmul.f32 %v3131, %v3248
      %v3268 = vmul.f32 %v3132, %v3248
      %v3269 = vmul.f32 %v3133, %v3248
      %v3270 = vmul.f32 %v3134, %v3248
      %v3271 = vmul.f32 %v3135, %v3248
      %v3272 = vmul.f32 %v3136, %v3248
      %v3273 = vmul.f32 %v3137, %v3248
      %v3274 = vmul.f32 %v3138, %v3248
      %v3275 = vmul.f32 %v3139, %v3248
      %v3276 = vmul.f32 %v3140, %v3248
      %v3277 = vmul.f32 %v3141, %v3248
      %v3278 = vmul.f32 %v3142, %v3248
      %v3279 = vmul.f32 %v3143, %v3248
      %v3280 = vmul.f32 %v3144, %v3248
      %vm3281 = vcmp.ge.f32.partialorder %v3249, 0.0
      %vm3282 = vcmp.ge.f32.partialorder %v3250, 0.0
      %vm3283 = vcmp.ge.f32.partialorder %v3251, 0.0
      %vm3284 = vcmp.ge.f32.partialorder %v3252, 0.0
      %vm3285 = vcmp.ge.f32.partialorder %v3253, 0.0
      %vm3286 = vcmp.ge.f32.partialorder %v3254, 0.0
      %vm3287 = vcmp.ge.f32.partialorder %v3255, 0.0
      %vm3288 = vcmp.ge.f32.partialorder %v3256, 0.0
      %vm3289 = vcmp.ge.f32.partialorder %v3257, 0.0
      %vm3290 = vcmp.ge.f32.partialorder %v3258, 0.0
      %vm3291 = vcmp.ge.f32.partialorder %v3259, 0.0
      %vm3292 = vcmp.ge.f32.partialorder %v3260, 0.0
      %vm3293 = vcmp.ge.f32.partialorder %v3261, 0.0
      %vm3294 = vcmp.ge.f32.partialorder %v3262, 0.0
      %vm3295 = vcmp.ge.f32.partialorder %v3263, 0.0
      %vm3296 = vcmp.ge.f32.partialorder %v3264, 0.0
      %vm3297 = vcmp.ge.f32.partialorder %v3265, 0.0
      %vm3298 = vcmp.ge.f32.partialorder %v3266, 0.0
      %vm3299 = vcmp.ge.f32.partialorder %v3267, 0.0
      %vm3300 = vcmp.ge.f32.partialorder %v3268, 0.0
      %vm3301 = vcmp.ge.f32.partialorder %v3269, 0.0
      %vm3302 = vcmp.ge.f32.partialorder %v3270, 0.0
      %vm3303 = vcmp.ge.f32.partialorder %v3271, 0.0
      %vm3304 = vcmp.ge.f32.partialorder %v3272, 0.0
      %vm3305 = vcmp.ge.f32.partialorder %v3273, 0.0
      %vm3306 = vcmp.ge.f32.partialorder %v3274, 0.0
      %vm3307 = vcmp.ge.f32.partialorder %v3275, 0.0
      %vm3308 = vcmp.ge.f32.partialorder %v3276, 0.0
      %vm3309 = vcmp.ge.f32.partialorder %v3277, 0.0
      %vm3310 = vcmp.ge.f32.partialorder %v3278, 0.0
      %vm3311 = vcmp.ge.f32.partialorder %v3279, 0.0
      %vm3312 = vcmp.ge.f32.partialorder %v3280, 0.0
      %v3313 = vmul.f32 %v3249, 0.2
      %v3314 = vmul.f32 %v3250, 0.2
      %v3315 = vmul.f32 %v3251, 0.2
      %v3316 = vmul.f32 %v3252, 0.2
      %v3317 = vmul.f32 %v3253, 0.2
      %v3318 = vmul.f32 %v3254, 0.2
      %v3319 = vmul.f32 %v3255, 0.2
      %v3320 = vmul.f32 %v3256, 0.2
      %v3321 = vmul.f32 %v3257, 0.2
      %v3322 = vmul.f32 %v3258, 0.2
      %v3323 = vmul.f32 %v3259, 0.2
      %v3324 = vmul.f32 %v3260, 0.2
      %v3325 = vmul.f32 %v3261, 0.2
      %v3326 = vmul.f32 %v3262, 0.2
      %v3327 = vmul.f32 %v3263, 0.2
      %v3328 = vmul.f32 %v3264, 0.2
      %v3329 = vmul.f32 %v3265, 0.2
      %v3330 = vmul.f32 %v3266, 0.2
      %v3331 = vmul.f32 %v3267, 0.2
      %v3332 = vmul.f32 %v3268, 0.2
      %v3333 = vmul.f32 %v3269, 0.2
      %v3334 = vmul.f32 %v3270, 0.2
      %v3335 = vmul.f32 %v3271, 0.2
      %v3336 = vmul.f32 %v3272, 0.2
      %v3337 = vmul.f32 %v3273, 0.2
      %v3338 = vmul.f32 %v3274, 0.2
      %v3339 = vmul.f32 %v3275, 0.2
      %v3340 = vmul.f32 %v3276, 0.2
      %v3341 = vmul.f32 %v3277, 0.2
      %v3342 = vmul.f32 %v3278, 0.2
      %v3343 = vmul.f32 %v3279, 0.2
      %v3344 = vmul.f32 %v3280, 0.2
      %v3345 = vsel %vm3281, %v3249, %v3313
      %v3346 = vsel %vm3282, %v3250, %v3314
      %v3347 = vsel %vm3283, %v3251, %v3315
      %v3348 = vsel %vm3284, %v3252, %v3316
      %v3349 = vsel %vm3285, %v3253, %v3317
      %v3350 = vsel %vm3286, %v3254, %v3318
      %v3351 = vsel %vm3287, %v3255, %v3319
      %v3352 = vsel %vm3288, %v3256, %v3320
      %v3353 = vsel %vm3289, %v3257, %v3321
      %v3354 = vsel %vm3290, %v3258, %v3322
      %v3355 = vsel %vm3291, %v3259, %v3323
      %v3356 = vsel %vm3292, %v3260, %v3324
      %v3357 = vsel %vm3293, %v3261, %v3325
      %v3358 = vsel %vm3294, %v3262, %v3326
      %v3359 = vsel %vm3295, %v3263, %v3327
      %v3360 = vsel %vm3296, %v3264, %v3328
      %v3361 = vsel %vm3297, %v3265, %v3329
      %v3362 = vsel %vm3298, %v3266, %v3330
      %v3363 = vsel %vm3299, %v3267, %v3331
      %v3364 = vsel %vm3300, %v3268, %v3332
      %v3365 = vsel %vm3301, %v3269, %v3333
      %v3366 = vsel %vm3302, %v3270, %v3334
      %v3367 = vsel %vm3303, %v3271, %v3335
      %v3368 = vsel %vm3304, %v3272, %v3336
      %v3369 = vsel %vm3305, %v3273, %v3337
      %v3370 = vsel %vm3306, %v3274, %v3338
      %v3371 = vsel %vm3307, %v3275, %v3339
      %v3372 = vsel %vm3308, %v3276, %v3340
      %v3373 = vsel %vm3309, %v3277, %v3341
      %v3374 = vsel %vm3310, %v3278, %v3342
      %v3375 = vsel %vm3311, %v3279, %v3343
      %v3376 = vsel %vm3312, %v3280, %v3344
      %3377 = vst.msk [vmem:[#allocation2] sm:$0xff] %vm3041, %v3345
      %3378 = vst.msk [vmem:[#allocation2 + $0x8] sm:$0xff] %vm3041, %v3346
      %3379 = vst.msk [vmem:[#allocation2 + $0x10] sm:$0xff] %vm3041, %v3347
      %3380 = vst.msk [vmem:[#allocation2 + $0x18] sm:$0xff] %vm3041, %v3348
      %3381 = vst.msk [vmem:[#allocation2 + $0x20] sm:$0xff] %vm3041, %v3349
      %3382 = vst.msk [vmem:[#allocation2 + $0x28] sm:$0xff] %vm3041, %v3350
      %3383 = vst.msk [vmem:[#allocation2 + $0x30] sm:$0xff] %vm3041, %v3351
      %3384 = vst.msk [vmem:[#allocation2 + $0x38] sm:$0xff] %vm3041, %v3352
      %3385 = vst.msk [vmem:[#allocation2 + $0x40] sm:$0xff] %vm3041, %v3353
      %3386 = vst.msk [vmem:[#allocation2 + $0x48] sm:$0xff] %vm3041, %v3354
      %3387 = vst.msk [vmem:[#allocation2 + $0x50] sm:$0xff] %vm3041, %v3355
      %3388 = vst.msk [vmem:[#allocation2 + $0x58] sm:$0xff] %vm3041, %v3356
      %3389 = vst.msk [vmem:[#allocation2 + $0x60] sm:$0xff] %vm3041, %v3357
      %3390 = vst.msk [vmem:[#allocation2 + $0x68] sm:$0xff] %vm3041, %v3358
      %3391 = vst.msk [vmem:[#allocation2 + $0x70] sm:$0xff] %vm3041, %v3359
      %3392 = vst.msk [vmem:[#allocation2 + $0x78] sm:$0xff] %vm3041, %v3360
      %3393 = vst.msk [vmem:[#allocation2 + $0x80] sm:$0xff] %vm3041, %v3361
      %3394 = vst.msk [vmem:[#allocation2 + $0x88] sm:$0xff] %vm3041, %v3362
      %3395 = vst.msk [vmem:[#allocation2 + $0x90] sm:$0xff] %vm3041, %v3363
      %3396 = vst.msk [vmem:[#allocation2 + $0x98] sm:$0xff] %vm3041, %v3364
      %3397 = vst.msk [vmem:[#allocation2 + $0xa0] sm:$0xff] %vm3041, %v3365
      %3398 = vst.msk [vmem:[#allocation2 + $0xa8] sm:$0xff] %vm3041, %v3366
      %3399 = vst.msk [vmem:[#allocation2 + $0xb0] sm:$0xff] %vm3041, %v3367
      %3400 = vst.msk [vmem:[#allocation2 + $0xb8] sm:$0xff] %vm3041, %v3368
      %3401 = vst.msk [vmem:[#allocation2 + $0xc0] sm:$0xff] %vm3041, %v3369
      %3402 = vst.msk [vmem:[#allocation2 + $0xc8] sm:$0xff] %vm3041, %v3370
      %3403 = vst.msk [vmem:[#allocation2 + $0xd0] sm:$0xff] %vm3041, %v3371
      %3404 = vst.msk [vmem:[#allocation2 + $0xd8] sm:$0xff] %vm3041, %v3372
      %3405 = vst.msk [vmem:[#allocation2 + $0xe0] sm:$0xff] %vm3041, %v3373
      %3406 = vst.msk [vmem:[#allocation2 + $0xe8] sm:$0xff] %vm3041, %v3374
      %3407 = vst.msk [vmem:[#allocation2 + $0xf0] sm:$0xff] %vm3041, %v3375
      %3408 = vst.msk [vmem:[#allocation2 + $0xf8] sm:$0xff] %vm3041, %v3376
      %v3409 = vld [vmem:[#allocation2] sm:$0xff]
      %v3410 = vld [vmem:[#allocation2 + $0x8] sm:$0xff]
      %v3411 = vld [vmem:[#allocation2 + $0x10] sm:$0xff]
      %v3412 = vld [vmem:[#allocation2 + $0x18] sm:$0xff]
      %v3413 = vld [vmem:[#allocation2 + $0x20] sm:$0xff]
      %v3414 = vld [vmem:[#allocation2 + $0x28] sm:$0xff]
      %v3415 = vld [vmem:[#allocation2 + $0x30] sm:$0xff]
      %v3416 = vld [vmem:[#allocation2 + $0x38] sm:$0xff]
      %v3417 = vld [vmem:[#allocation2 + $0x40] sm:$0xff]
      %v3418 = vld [vmem:[#allocation2 + $0x48] sm:$0xff]
      %v3419 = vld [vmem:[#allocation2 + $0x50] sm:$0xff]
      %v3420 = vld [vmem:[#allocation2 + $0x58] sm:$0xff]
      %v3421 = vld [vmem:[#allocation2 + $0x60] sm:$0xff]
      %v3422 = vld [vmem:[#allocation2 + $0x68] sm:$0xff]
      %v3423 = vld [vmem:[#allocation2 + $0x70] sm:$0xff]
      %v3424 = vld [vmem:[#allocation2 + $0x78] sm:$0xff]
      %v3425 = vld [vmem:[#allocation2 + $0x80] sm:$0xff]
      %v3426 = vld [vmem:[#allocation2 + $0x88] sm:$0xff]
      %v3427 = vld [vmem:[#allocation2 + $0x90] sm:$0xff]
      %v3428 = vld [vmem:[#allocation2 + $0x98] sm:$0xff]
      %v3429 = vld [vmem:[#allocation2 + $0xa0] sm:$0xff]
      %v3430 = vld [vmem:[#allocation2 + $0xa8] sm:$0xff]
      %v3431 = vld [vmem:[#allocation2 + $0xb0] sm:$0xff]
      %v3432 = vld [vmem:[#allocation2 + $0xb8] sm:$0xff]
      %v3433 = vld [vmem:[#allocation2 + $0xc0] sm:$0xff]
      %v3434 = vld [vmem:[#allocation2 + $0xc8] sm:$0xff]
      %v3435 = vld [vmem:[#allocation2 + $0xd0] sm:$0xff]
      %v3436 = vld [vmem:[#allocation2 + $0xd8] sm:$0xff]
      %v3437 = vld [vmem:[#allocation2 + $0xe0] sm:$0xff]
      %v3438 = vld [vmem:[#allocation2 + $0xe8] sm:$0xff]
      %v3439 = vld [vmem:[#allocation2 + $0xf0] sm:$0xff]
      %v3440 = vld [vmem:[#allocation2 + $0xf8] sm:$0xff]
      %v3473 = vrot.slane %v3409, 7
      %v3474 = vrot.slane %v3410, 7
      %v3475 = vsel %vm253, %v3473, %v3474
      %v3476 = vrot.slane %v3411, 7
      %v3477 = vrot.slane %v3412, 7
      %v3478 = vsel %vm253, %v3476, %v3477
      %v3479 = vrot.slane %v3413, 7
      %v3480 = vrot.slane %v3414, 7
      %v3481 = vsel %vm253, %v3479, %v3480
      %v3482 = vrot.slane %v3415, 7
      %v3483 = vrot.slane %v3416, 7
      %v3484 = vsel %vm253, %v3482, %v3483
      %v3485 = vrot.slane %v3417, 7
      %v3486 = vrot.slane %v3418, 7
      %v3487 = vsel %vm253, %v3485, %v3486
      %v3488 = vrot.slane %v3419, 7
      %v3489 = vrot.slane %v3420, 7
      %v3490 = vsel %vm253, %v3488, %v3489
      %v3491 = vrot.slane %v3421, 7
      %v3492 = vrot.slane %v3422, 7
      %v3493 = vsel %vm253, %v3491, %v3492
      %v3494 = vrot.slane %v3423, 7
      %v3495 = vrot.slane %v3424, 7
      %v3496 = vsel %vm253, %v3494, %v3495
      %v3497 = vrot.slane %v3425, 7
      %v3498 = vrot.slane %v3426, 7
      %v3499 = vsel %vm253, %v3497, %v3498
      %v3500 = vrot.slane %v3427, 7
      %v3501 = vrot.slane %v3428, 7
      %v3502 = vsel %vm253, %v3500, %v3501
      %v3503 = vrot.slane %v3429, 7
      %v3504 = vrot.slane %v3430, 7
      %v3505 = vsel %vm253, %v3503, %v3504
      %v3506 = vrot.slane %v3431, 7
      %v3507 = vrot.slane %v3432, 7
      %v3508 = vsel %vm253, %v3506, %v3507
      %v3509 = vrot.slane %v3433, 7
      %v3510 = vrot.slane %v3434, 7
      %v3511 = vsel %vm253, %v3509, %v3510
      %v3512 = vrot.slane %v3435, 7
      %v3513 = vrot.slane %v3436, 7
      %v3514 = vsel %vm253, %v3512, %v3513
      %v3515 = vrot.slane %v3437, 7
      %v3516 = vrot.slane %v3438, 7
      %v3517 = vsel %vm253, %v3515, %v3516
      %v3518 = vrot.slane %v3439, 7
      %v3519 = vrot.slane %v3440, 7
      %v3520 = vsel %vm253, %v3518, %v3519
      %v3553 = vsel %vm253, 0.0, %v3473
      %v3554 = vsel %vm253, 0.0, %v3476
      %v3555 = vsel %vm253, 0.0, %v3479
      %v3556 = vsel %vm253, 0.0, %v3482
      %v3557 = vsel %vm253, 0.0, %v3485
      %v3558 = vsel %vm253, 0.0, %v3488
      %v3559 = vsel %vm253, 0.0, %v3491
      %v3560 = vsel %vm253, 0.0, %v3494
      %v3561 = vsel %vm253, 0.0, %v3497
      %v3562 = vsel %vm253, 0.0, %v3500
      %v3563 = vsel %vm253, 0.0, %v3503
      %v3564 = vsel %vm253, 0.0, %v3506
      %v3565 = vsel %vm253, 0.0, %v3509
      %v3566 = vsel %vm253, 0.0, %v3512
      %v3567 = vsel %vm253, 0.0, %v3515
      %v3568 = vsel %vm253, 0.0, %v3518
      %v3569 = vsel %vm253, %v3474, 0.0
      %v3570 = vsel %vm253, %v3477, 0.0
      %v3571 = vsel %vm253, %v3480, 0.0
      %v3572 = vsel %vm253, %v3483, 0.0
      %v3573 = vsel %vm253, %v3486, 0.0
      %v3574 = vsel %vm253, %v3489, 0.0
      %v3575 = vsel %vm253, %v3492, 0.0
      %v3576 = vsel %vm253, %v3495, 0.0
      %v3577 = vsel %vm253, %v3498, 0.0
      %v3578 = vsel %vm253, %v3501, 0.0
      %v3579 = vsel %vm253, %v3504, 0.0
      %v3580 = vsel %vm253, %v3507, 0.0
      %v3581 = vsel %vm253, %v3510, 0.0
      %v3582 = vsel %vm253, %v3513, 0.0
      %v3583 = vsel %vm253, %v3516, 0.0
      %v3584 = vsel %vm253, %v3519, 0.0
      %v3615 = vrot.slane %v3553, 1
      %v3616 = vrot.slane %v3475, 1
      %v3617 = vsel %vm397, %v3615, %v3616
      %v3618 = vrot.slane %v3569, 1
      %v3619 = vsel %vm397, %v3616, %v3618
      %v3620 = vrot.slane %v3554, 1
      %v3621 = vrot.slane %v3478, 1
      %v3622 = vsel %vm397, %v3620, %v3621
      %v3623 = vrot.slane %v3570, 1
      %v3624 = vsel %vm397, %v3621, %v3623
      %v3625 = vrot.slane %v3555, 1
      %v3626 = vrot.slane %v3481, 1
      %v3627 = vsel %vm397, %v3625, %v3626
      %v3628 = vrot.slane %v3571, 1
      %v3629 = vsel %vm397, %v3626, %v3628
      %v3630 = vrot.slane %v3556, 1
      %v3631 = vrot.slane %v3484, 1
      %v3632 = vsel %vm397, %v3630, %v3631
      %v3633 = vrot.slane %v3572, 1
      %v3634 = vsel %vm397, %v3631, %v3633
      %v3635 = vrot.slane %v3557, 1
      %v3636 = vrot.slane %v3487, 1
      %v3637 = vsel %vm397, %v3635, %v3636
      %v3638 = vrot.slane %v3573, 1
      %v3639 = vsel %vm397, %v3636, %v3638
      %v3640 = vrot.slane %v3558, 1
      %v3641 = vrot.slane %v3490, 1
      %v3642 = vsel %vm397, %v3640, %v3641
      %v3643 = vrot.slane %v3574, 1
      %v3644 = vsel %vm397, %v3641, %v3643
      %v3645 = vrot.slane %v3559, 1
      %v3646 = vrot.slane %v3493, 1
      %v3647 = vsel %vm397, %v3645, %v3646
      %v3648 = vrot.slane %v3575, 1
      %v3649 = vsel %vm397, %v3646, %v3648
      %v3650 = vrot.slane %v3560, 1
      %v3651 = vrot.slane %v3496, 1
      %v3652 = vsel %vm397, %v3650, %v3651
      %v3653 = vrot.slane %v3576, 1
      %v3654 = vsel %vm397, %v3651, %v3653
      %v3655 = vrot.slane %v3561, 1
      %v3656 = vrot.slane %v3499, 1
      %v3657 = vsel %vm397, %v3655, %v3656
      %v3658 = vrot.slane %v3577, 1
      %v3659 = vsel %vm397, %v3656, %v3658
      %v3660 = vrot.slane %v3562, 1
      %v3661 = vrot.slane %v3502, 1
      %v3662 = vsel %vm397, %v3660, %v3661
      %v3663 = vrot.slane %v3578, 1
      %v3664 = vsel %vm397, %v3661, %v3663
      %v3665 = vrot.slane %v3563, 1
      %v3666 = vrot.slane %v3505, 1
      %v3667 = vsel %vm397, %v3665, %v3666
      %v3668 = vrot.slane %v3579, 1
      %v3669 = vsel %vm397, %v3666, %v3668
      %v3670 = vrot.slane %v3564, 1
      %v3671 = vrot.slane %v3508, 1
      %v3672 = vsel %vm397, %v3670, %v3671
      %v3673 = vrot.slane %v3580, 1
      %v3674 = vsel %vm397, %v3671, %v3673
      %v3675 = vrot.slane %v3565, 1
      %v3676 = vrot.slane %v3511, 1
      %v3677 = vsel %vm397, %v3675, %v3676
      %v3678 = vrot.slane %v3581, 1
      %v3679 = vsel %vm397, %v3676, %v3678
      %v3680 = vrot.slane %v3566, 1
      %v3681 = vrot.slane %v3514, 1
      %v3682 = vsel %vm397, %v3680, %v3681
      %v3683 = vrot.slane %v3582, 1
      %v3684 = vsel %vm397, %v3681, %v3683
      %v3685 = vrot.slane %v3567, 1
      %v3686 = vrot.slane %v3517, 1
      %v3687 = vsel %vm397, %v3685, %v3686
      %v3688 = vrot.slane %v3583, 1
      %v3689 = vsel %vm397, %v3686, %v3688
      %v3690 = vsel %vm3041, %v399, 0
      %v3692 = vsel %vm3041, %v3617, 0
      %v3694 = vsel %vm3041, %v3619, 0
      %v3696 = vsel %vm3041, %v3622, 0
      %v3698 = vsel %vm3041, %v3624, 0
      %v3700 = vsel %vm3041, %v3627, 0
      %v3702 = vsel %vm3041, %v3629, 0
      %v3704 = vsel %vm3041, %v3632, 0
      %v3706 = vsel %vm3041, %v3634, 0
      %v3708 = vsel %vm3041, %v3637, 0
      %v3710 = vsel %vm3041, %v3639, 0
      %v3712 = vsel %vm3041, %v3642, 0
      %v3714 = vsel %vm3041, %v3644, 0
      %v3716 = vsel %vm3041, %v3647, 0
      %v3718 = vsel %vm3041, %v3649, 0
      %v3720 = vsel %vm3041, %v3652, 0
      %v3722 = vsel %vm3041, %v3654, 0
      %v3724 = vsel %vm3041, %v3657, 0
      %v3726 = vsel %vm3041, %v3659, 0
      %v3728 = vsel %vm3041, %v3662, 0
      %v3730 = vsel %vm3041, %v3664, 0
      %v3732 = vsel %vm3041, %v3667, 0
      %v3734 = vsel %vm3041, %v3669, 0
      %v3736 = vsel %vm3041, %v3672, 0
      %v3738 = vsel %vm3041, %v3674, 0
      %v3740 = vsel %vm3041, %v3677, 0
      %v3742 = vsel %vm3041, %v3679, 0
      %v3744 = vsel %vm3041, %v3682, 0
      %v3746 = vsel %vm3041, %v3684, 0
      %v3748 = vsel %vm3041, %v3687, 0
      %v3750 = vsel %vm3041, %v3689, 0
      %3752 = vmatprep.subr.mxu0 0.0
      %3753 = vmatpush1.msra.mxu0 %v213
      %3754 = vmatprep.subr.mxu0 0.0
      %3755 = vmatpush1.msra.mxu0 0.0
      %3756 = vmatprep.subr.mxu0 0.0
      %3757 = vmatpush1.msra.mxu0 0.0
      %3758 = vmatprep.subr.mxu0 0.0
      %3759 = vmatpush1.msra.mxu0 0.0
      %3760 = vmatprep.subr.mxu0 0.0
      %3761 = vmatpush1.msra.mxu0 0.0
      %3762 = vmatprep.subr.mxu0 0.0
      %3763 = vmatpush1.msra.mxu0 0.0
      %3764 = vmatprep.subr.mxu0 0.0
      %3765 = vmatpush1.msra.mxu0 0.0
      %3766 = vmatprep.subr.mxu0 0.0
      %3767 = vmatpush1.msra.mxu0 0.0
      %3768 = vmatprep.subr.mxu0 0.0
      %3769 = vmatpush1.msra.mxu0 0.0
      %3770 = vmatprep.subr.mxu0 0.0
      %3771 = vmatpush1.msra.mxu0 0.0
      %3772 = vmatprep.subr.mxu0 0.0
      %3773 = vmatpush1.msra.mxu0 0.0
      %3774 = vmatprep.subr.mxu0 0.0
      %3775 = vmatpush1.msra.mxu0 0.0
      %3776 = vmatprep.subr.mxu0 0.0
      %3777 = vmatpush1.msra.mxu0 0.0
      %3778 = vmatprep.subr.mxu0 0.0
      %3779 = vmatpush1.msra.mxu0 0.0
      %3780 = vmatprep.subr.mxu0 0.0
      %3781 = vmatpush1.msra.mxu0 0.0
      %3782 = vmatprep.subr.mxu0 0.0
      %3783 = vmatpush1.msra.mxu0 0.0
      %3784 = vmatprep.subr.mxu0 0.0
      %3785 = vmatpush1.msra.mxu0 0.0
      %3786 = vmatprep.subr.mxu0 0.0
      %3787 = vmatpush1.msra.mxu0 0.0
      %3788 = vmatprep.subr.mxu0 0.0
      %3789 = vmatpush1.msra.mxu0 0.0
      %3790 = vmatprep.subr.mxu0 0.0
      %3791 = vmatpush1.msra.mxu0 0.0
      %3792 = vmatprep.subr.mxu0 0.0
      %3793 = vmatpush1.msra.mxu0 0.0
      %3794 = vmatprep.subr.mxu0 0.0
      %3795 = vmatpush1.msra.mxu0 0.0
      %3796 = vmatprep.subr.mxu0 0.0
      %3797 = vmatpush1.msra.mxu0 0.0
      %3798 = vmatprep.subr.mxu0 0.0
      %3799 = vmatpush1.msra.mxu0 0.0
      %3800 = vmatprep.subr.mxu0 0.0
      %3801 = vmatpush1.msra.mxu0 0.0
      %3802 = vmatprep.subr.mxu0 0.0
      %3803 = vmatpush1.msra.mxu0 0.0
      %3804 = vmatprep.subr.mxu0 0.0
      %3805 = vmatpush1.msra.mxu0 0.0
      %3806 = vmatprep.subr.mxu0 0.0
      %3807 = vmatpush1.msra.mxu0 0.0
      %3808 = vmatprep.subr.mxu0 0.0
      %3809 = vmatpush1.msra.mxu0 0.0
      %3810 = vmatprep.subr.mxu0 0.0
      %3811 = vmatpush1.msra.mxu0 0.0
      %3812 = vmatprep.subr.mxu0 0.0
      %3813 = vmatpush1.msra.mxu0 0.0
      %3814 = vmatprep.subr.mxu0 0.0
      %3815 = vmatpush1.msra.mxu0 0.0
      %3816 = vmatprep.mubr.f32.mxu0 0.0
      %3817 = vmatmul.mubr.f32.gmra.mrb[0].mxu0 %v3690
      %v3818 = vpop.f32.mrb[0].mxu0
      %v3819 = vadd.f32 0.0, %v3818
      %v3820 = vpop.f32.mrb[0].mxu0
      %3821 = vmatprep.mubr.f32.mxu0 0.0
      %3822 = vmatmul.mubr.f32.gmra.mrb[0].mxu0 %v3690
      %v3823 = vpop.f32.mrb[0].mxu0
      %v3824 = vadd.f32 0.0, %v3823
      %v3825 = vpop.f32.mrb[0].mxu0
      %3826 = vmatprep.mubr.f32.mxu0 0.0
      %3827 = vmatmul.mubr.f32.gmra.mrb[0].mxu0 %v3692
      %v3828 = vpop.f32.mrb[0].mxu0
      %v3829 = vadd.f32 0.0, %v3828
      %v3830 = vpop.f32.mrb[0].mxu0
      %3831 = vmatprep.mubr.f32.mxu0 0.0
      %3832 = vmatmul.mubr.f32.gmra.mrb[0].mxu0 %v3694
      %v3833 = vpop.f32.mrb[0].mxu0
      %v3834 = vadd.f32 0.0, %v3833
      %v3835 = vpop.f32.mrb[0].mxu0
      %3836 = vmatprep.mubr.f32.mxu0 0.0
      %3837 = vmatmul.mubr.f32.gmra.mrb[0].mxu0 %v3696
      %v3838 = vpop.f32.mrb[0].mxu0
      %v3839 = vadd.f32 0.0, %v3838
      %v3840 = vpop.f32.mrb[0].mxu0
      %3841 = vmatprep.mubr.f32.mxu0 0.0
      %3842 = vmatmul.mubr.f32.gmra.mrb[0].mxu0 %v3698
      %v3843 = vpop.f32.mrb[0].mxu0
      %v3844 = vadd.f32 0.0, %v3843
      %v3845 = vpop.f32.mrb[0].mxu0
      %3846 = vmatprep.mubr.f32.mxu0 0.0
      %3847 = vmatmul.mubr.f32.gmra.mrb[0].mxu0 %v3700
      %v3848 = vpop.f32.mrb[0].mxu0
      %v3849 = vadd.f32 0.0, %v3848
      %v3850 = vpop.f32.mrb[0].mxu0
      %3851 = vmatprep.mubr.f32.mxu0 0.0
      %3852 = vmatmul.mubr.f32.gmra.mrb[0].mxu0 %v3702
      %v3853 = vpop.f32.mrb[0].mxu0
      %v3854 = vadd.f32 0.0, %v3853
      %v3855 = vpop.f32.mrb[0].mxu0
      %3856 = vmatprep.mubr.f32.mxu0 0.0
      %3857 = vmatmul.mubr.f32.gmra.mrb[0].mxu0 %v3704
      %v3858 = vpop.f32.mrb[0].mxu0
      %v3859 = vadd.f32 0.0, %v3858
      %v3860 = vpop.f32.mrb[0].mxu0
      %3861 = vmatprep.mubr.f32.mxu0 0.0
      %3862 = vmatmul.mubr.f32.gmra.mrb[0].mxu0 %v3706
      %v3863 = vpop.f32.mrb[0].mxu0
      %v3864 = vadd.f32 0.0, %v3863
      %v3865 = vpop.f32.mrb[0].mxu0
      %3866 = vmatprep.mubr.f32.mxu0 0.0
      %3867 = vmatmul.mubr.f32.gmra.mrb[0].mxu0 %v3708
      %v3868 = vpop.f32.mrb[0].mxu0
      %v3869 = vadd.f32 0.0, %v3868
      %v3870 = vpop.f32.mrb[0].mxu0
      %3871 = vmatprep.mubr.f32.mxu0 0.0
      %3872 = vmatmul.mubr.f32.gmra.mrb[0].mxu0 %v3710
      %v3873 = vpop.f32.mrb[0].mxu0
      %v3874 = vadd.f32 0.0, %v3873
      %v3875 = vpop.f32.mrb[0].mxu0
      %3876 = vmatprep.mubr.f32.mxu0 0.0
      %3877 = vmatmul.mubr.f32.gmra.mrb[0].mxu0 %v3712
      %v3878 = vpop.f32.mrb[0].mxu0
      %v3879 = vadd.f32 0.0, %v3878
      %v3880 = vpop.f32.mrb[0].mxu0
      %3881 = vmatprep.mubr.f32.mxu0 0.0
      %3882 = vmatmul.mubr.f32.gmra.mrb[0].mxu0 %v3714
      %v3883 = vpop.f32.mrb[0].mxu0
      %v3884 = vadd.f32 0.0, %v3883
      %v3885 = vpop.f32.mrb[0].mxu0
      %3886 = vmatprep.mubr.f32.mxu0 0.0
      %3887 = vmatmul.mubr.f32.gmra.mrb[0].mxu0 %v3716
      %v3888 = vpop.f32.mrb[0].mxu0
      %v3889 = vadd.f32 0.0, %v3888
      %v3890 = vpop.f32.mrb[0].mxu0
      %3891 = vmatprep.mubr.f32.mxu0 0.0
      %3892 = vmatmul.mubr.f32.gmra.mrb[0].mxu0 %v3718
      %v3893 = vpop.f32.mrb[0].mxu0
      %v3894 = vadd.f32 0.0, %v3893
      %v3895 = vpop.f32.mrb[0].mxu0
      %3896 = vmatprep.mubr.f32.mxu0 0.0
      %3897 = vmatmul.mubr.f32.gmra.mrb[0].mxu0 %v3720
      %v3898 = vpop.f32.mrb[0].mxu0
      %v3899 = vadd.f32 0.0, %v3898
      %v3900 = vpop.f32.mrb[0].mxu0
      %3901 = vmatprep.mubr.f32.mxu0 0.0
      %3902 = vmatmul.mubr.f32.gmra.mrb[0].mxu0 %v3722
      %v3903 = vpop.f32.mrb[0].mxu0
      %v3904 = vadd.f32 0.0, %v3903
      %v3905 = vpop.f32.mrb[0].mxu0
      %3906 = vmatprep.mubr.f32.mxu0 0.0
      %3907 = vmatmul.mubr.f32.gmra.mrb[0].mxu0 %v3724
      %v3908 = vpop.f32.mrb[0].mxu0
      %v3909 = vadd.f32 0.0, %v3908
      %v3910 = vpop.f32.mrb[0].mxu0
      %3911 = vmatprep.mubr.f32.mxu0 0.0
      %3912 = vmatmul.mubr.f32.gmra.mrb[0].mxu0 %v3726
      %v3913 = vpop.f32.mrb[0].mxu0
      %v3914 = vadd.f32 0.0, %v3913
      %v3915 = vpop.f32.mrb[0].mxu0
      %3916 = vmatprep.mubr.f32.mxu0 0.0
      %3917 = vmatmul.mubr.f32.gmra.mrb[0].mxu0 %v3728
      %v3918 = vpop.f32.mrb[0].mxu0
      %v3919 = vadd.f32 0.0, %v3918
      %v3920 = vpop.f32.mrb[0].mxu0
      %3921 = vmatprep.mubr.f32.mxu0 0.0
      %3922 = vmatmul.mubr.f32.gmra.mrb[0].mxu0 %v3730
      %v3923 = vpop.f32.mrb[0].mxu0
      %v3924 = vadd.f32 0.0, %v3923
      %v3925 = vpop.f32.mrb[0].mxu0
      %3926 = vmatprep.mubr.f32.mxu0 0.0
      %3927 = vmatmul.mubr.f32.gmra.mrb[0].mxu0 %v3732
      %v3928 = vpop.f32.mrb[0].mxu0
      %v3929 = vadd.f32 0.0, %v3928
      %v3930 = vpop.f32.mrb[0].mxu0
      %3931 = vmatprep.mubr.f32.mxu0 0.0
      %3932 = vmatmul.mubr.f32.gmra.mrb[0].mxu0 %v3734
      %v3933 = vpop.f32.mrb[0].mxu0
      %v3934 = vadd.f32 0.0, %v3933
      %v3935 = vpop.f32.mrb[0].mxu0
      %3936 = vmatprep.mubr.f32.mxu0 0.0
      %3937 = vmatmul.mubr.f32.gmra.mrb[0].mxu0 %v3736
      %v3938 = vpop.f32.mrb[0].mxu0
      %v3939 = vadd.f32 0.0, %v3938
      %v3940 = vpop.f32.mrb[0].mxu0
      %3941 = vmatprep.mubr.f32.mxu0 0.0
      %3942 = vmatmul.mubr.f32.gmra.mrb[0].mxu0 %v3738
      %v3943 = vpop.f32.mrb[0].mxu0
      %v3944 = vadd.f32 0.0, %v3943
      %v3945 = vpop.f32.mrb[0].mxu0
      %3946 = vmatprep.mubr.f32.mxu0 0.0
      %3947 = vmatmul.mubr.f32.gmra.mrb[0].mxu0 %v3740
      %v3948 = vpop.f32.mrb[0].mxu0
      %v3949 = vadd.f32 0.0, %v3948
      %v3950 = vpop.f32.mrb[0].mxu0
      %3951 = vmatprep.mubr.f32.mxu0 0.0
      %3952 = vmatmul.mubr.f32.gmra.mrb[0].mxu0 %v3742
      %v3953 = vpop.f32.mrb[0].mxu0
      %v3954 = vadd.f32 0.0, %v3953
      %v3955 = vpop.f32.mrb[0].mxu0
      %3956 = vmatprep.mubr.f32.mxu0 0.0
      %3957 = vmatmul.mubr.f32.gmra.mrb[0].mxu0 %v3744
      %v3958 = vpop.f32.mrb[0].mxu0
      %v3959 = vadd.f32 0.0, %v3958
      %v3960 = vpop.f32.mrb[0].mxu0
      %3961 = vmatprep.mubr.f32.mxu0 0.0
      %3962 = vmatmul.mubr.f32.gmra.mrb[0].mxu0 %v3746
      %v3963 = vpop.f32.mrb[0].mxu0
      %v3964 = vadd.f32 0.0, %v3963
      %v3965 = vpop.f32.mrb[0].mxu0
      %3966 = vmatprep.mubr.f32.mxu0 0.0
      %3967 = vmatmul.mubr.f32.gmra.mrb[0].mxu0 %v3748
      %v3968 = vpop.f32.mrb[0].mxu0
      %v3969 = vadd.f32 0.0, %v3968
      %v3970 = vpop.f32.mrb[0].mxu0
      %3971 = vmatprep.mubr.f32.mxu0 0.0
      %3972 = vmatmul.mubr.f32.gmra.mrb[0].mxu0 %v3750
      %v3973 = vpop.f32.mrb[0].mxu0
      %v3974 = vadd.f32 0.0, %v3973
      %v3975 = vpop.f32.mrb[0].mxu0
      %3976 = vdwg.mxu0
      %v3977 = vsel %vm3041, 0.0, 0
      %v3979 = vsel %vm3041, %v3553, 0
      %v3981 = vsel %vm3041, %v3475, 0
      %v3983 = vsel %vm3041, %v3554, 0
      %v3985 = vsel %vm3041, %v3478, 0
      %v3987 = vsel %vm3041, %v3555, 0
      %v3989 = vsel %vm3041, %v3481, 0
      %v3991 = vsel %vm3041, %v3556, 0
      %v3993 = vsel %vm3041, %v3484, 0
      %v3995 = vsel %vm3041, %v3557, 0
      %v3997 = vsel %vm3041, %v3487, 0
      %v3999 = vsel %vm3041, %v3558, 0
      %v4001 = vsel %vm3041, %v3490, 0
      %v4003 = vsel %vm3041, %v3559, 0
      %v4005 = vsel %vm3041, %v3493, 0
      %v4007 = vsel %vm3041, %v3560, 0
      %v4009 = vsel %vm3041, %v3496, 0
      %v4011 = vsel %vm3041, %v3561, 0
      %v4013 = vsel %vm3041, %v3499, 0
      %v4015 = vsel %vm3041, %v3562, 0
      %v4017 = vsel %vm3041, %v3502, 0
      %v4019 = vsel %vm3041, %v3563, 0
      %v4021 = vsel %vm3041, %v3505, 0
      %v4023 = vsel %vm3041, %v3564, 0
      %v4025 = vsel %vm3041, %v3508, 0
      %v4027 = vsel %vm3041, %v3565, 0
      %v4029 = vsel %vm3041, %v3511, 0
      %v4031 = vsel %vm3041, %v3566, 0
      %v4033 = vsel %vm3041, %v3514, 0
      %v4035 = vsel %vm3041, %v3567, 0
      %v4037 = vsel %vm3041, %v3517, 0
      %4039 = vmatprep.subr.mxu0 0.0
      %4040 = vmatpush1.msra.mxu0 %v212
      %4041 = vmatprep.subr.mxu0 0.0
      %4042 = vmatpush1.msra.mxu0 0.0
      %4043 = vmatprep.subr.mxu0 0.0
      %4044 = vmatpush1.msra.mxu0 0.0
      %4045 = vmatprep.subr.mxu0 0.0
      %4046 = vmatpush1.msra.mxu0 0.0
      %4047 = vmatprep.subr.mxu0 0.0
      %4048 = vmatpush1.msra.mxu0 0.0
      %4049 = vmatprep.subr.mxu0 0.0
      %4050 = vmatpush1.msra.mxu0 0.0
      %4051 = vmatprep.subr.mxu0 0.0
      %4052 = vmatpush1.msra.mxu0 0.0
      %4053 = vmatprep.subr.mxu0 0.0
      %4054 = vmatpush1.msra.mxu0 0.0
      %4055 = vmatprep.subr.mxu0 0.0
      %4056 = vmatpush1.msra.mxu0 0.0
      %4057 = vmatprep.subr.mxu0 0.0
      %4058 = vmatpush1.msra.mxu0 0.0
      %4059 = vmatprep.subr.mxu0 0.0
      %4060 = vmatpush1.msra.mxu0 0.0
      %4061 = vmatprep.subr.mxu0 0.0
      %4062 = vmatpush1.msra.mxu0 0.0
      %4063 = vmatprep.subr.mxu0 0.0
      %4064 = vmatpush1.msra.mxu0 0.0
      %4065 = vmatprep.subr.mxu0 0.0
      %4066 = vmatpush1.msra.mxu0 0.0
      %4067 = vmatprep.subr.mxu0 0.0
      %4068 = vmatpush1.msra.mxu0 0.0
      %4069 = vmatprep.subr.mxu0 0.0
      %4070 = vmatpush1.msra.mxu0 0.0
      %4071 = vmatprep.subr.mxu0 0.0
      %4072 = vmatpush1.msra.mxu0 0.0
      %4073 = vmatprep.subr.mxu0 0.0
      %4074 = vmatpush1.msra.mxu0 0.0
      %4075 = vmatprep.subr.mxu0 0.0
      %4076 = vmatpush1.msra.mxu0 0.0
      %4077 = vmatprep.subr.mxu0 0.0
      %4078 = vmatpush1.msra.mxu0 0.0
      %4079 = vmatprep.subr.mxu0 0.0
      %4080 = vmatpush1.msra.mxu0 0.0
      %4081 = vmatprep.subr.mxu0 0.0
      %4082 = vmatpush1.msra.mxu0 0.0
      %4083 = vmatprep.subr.mxu0 0.0
      %4084 = vmatpush1.msra.mxu0 0.0
      %4085 = vmatprep.subr.mxu0 0.0
      %4086 = vmatpush1.msra.mxu0 0.0
      %4087 = vmatprep.subr.mxu0 0.0
      %4088 = vmatpush1.msra.mxu0 0.0
      %4089 = vmatprep.subr.mxu0 0.0
      %4090 = vmatpush1.msra.mxu0 0.0
      %4091 = vmatprep.subr.mxu0 0.0
      %4092 = vmatpush1.msra.mxu0 0.0
      %4093 = vmatprep.subr.mxu0 0.0
      %4094 = vmatpush1.msra.mxu0 0.0
      %4095 = vmatprep.subr.mxu0 0.0
      %4096 = vmatpush1.msra.mxu0 0.0
      %4097 = vmatprep.subr.mxu0 0.0
      %4098 = vmatpush1.msra.mxu0 0.0
      %4099 = vmatprep.subr.mxu0 0.0
      %4100 = vmatpush1.msra.mxu0 0.0
      %4101 = vmatprep.subr.mxu0 0.0
      %4102 = vmatpush1.msra.mxu0 0.0
      %4103 = vmatprep.mubr.f32.mxu0 0.0
      %4104 = vmatmul.mubr.f32.gmra.mrb[0].mxu0 %v3977
      %v4105 = vpop.f32.mrb[0].mxu0
      %v4106 = vadd.f32 %v3819, %v4105
      %v4107 = vpop.f32.mrb[0].mxu0
      %4108 = vmatprep.mubr.f32.mxu0 0.0
      %4109 = vmatmul.mubr.f32.gmra.mrb[0].mxu0 %v3977
      %v4110 = vpop.f32.mrb[0].mxu0
      %v4111 = vadd.f32 %v3824, %v4110
      %v4112 = vpop.f32.mrb[0].mxu0
      %4113 = vmatprep.mubr.f32.mxu0 0.0
      %4114 = vmatmul.mubr.f32.gmra.mrb[0].mxu0 %v3979
      %v4115 = vpop.f32.mrb[0].mxu0
      %v4116 = vadd.f32 %v3829, %v4115
      %v4117 = vpop.f32.mrb[0].mxu0
      %4118 = vmatprep.mubr.f32.mxu0 0.0
      %4119 = vmatmul.mubr.f32.gmra.mrb[0].mxu0 %v3981
      %v4120 = vpop.f32.mrb[0].mxu0
      %v4121 = vadd.f32 %v3834, %v4120
      %v4122 = vpop.f32.mrb[0].mxu0
      %4123 = vmatprep.mubr.f32.mxu0 0.0
      %4124 = vmatmul.mubr.f32.gmra.mrb[0].mxu0 %v3983
      %v4125 = vpop.f32.mrb[0].mxu0
      %v4126 = vadd.f32 %v3839, %v4125
      %v4127 = vpop.f32.mrb[0].mxu0
      %4128 = vmatprep.mubr.f32.mxu0 0.0
      %4129 = vmatmul.mubr.f32.gmra.mrb[0].mxu0 %v3985
      %v4130 = vpop.f32.mrb[0].mxu0
      %v4131 = vadd.f32 %v3844, %v4130
      %v4132 = vpop.f32.mrb[0].mxu0
      %4133 = vmatprep.mubr.f32.mxu0 0.0
      %4134 = vmatmul.mubr.f32.gmra.mrb[0].mxu0 %v3987
      %v4135 = vpop.f32.mrb[0].mxu0
      %v4136 = vadd.f32 %v3849, %v4135
      %v4137 = vpop.f32.mrb[0].mxu0
      %4138 = vmatprep.mubr.f32.mxu0 0.0
      %4139 = vmatmul.mubr.f32.gmra.mrb[0].mxu0 %v3989
      %v4140 = vpop.f32.mrb[0].mxu0
      %v4141 = vadd.f32 %v3854, %v4140
      %v4142 = vpop.f32.mrb[0].mxu0
      %4143 = vmatprep.mubr.f32.mxu0 0.0
      %4144 = vmatmul.mubr.f32.gmra.mrb[0].mxu0 %v3991
      %v4145 = vpop.f32.mrb[0].mxu0
      %v4146 = vadd.f32 %v3859, %v4145
      %v4147 = vpop.f32.mrb[0].mxu0
      %4148 = vmatprep.mubr.f32.mxu0 0.0
      %4149 = vmatmul.mubr.f32.gmra.mrb[0].mxu0 %v3993
      %v4150 = vpop.f32.mrb[0].mxu0
      %v4151 = vadd.f32 %v3864, %v4150
      %v4152 = vpop.f32.mrb[0].mxu0
      %4153 = vmatprep.mubr.f32.mxu0 0.0
      %4154 = vmatmul.mubr.f32.gmra.mrb[0].mxu0 %v3995
      %v4155 = vpop.f32.mrb[0].mxu0
      %v4156 = vadd.f32 %v3869, %v4155
      %v4157 = vpop.f32.mrb[0].mxu0
      %4158 = vmatprep.mubr.f32.mxu0 0.0
      %4159 = vmatmul.mubr.f32.gmra.mrb[0].mxu0 %v3997
      %v4160 = vpop.f32.mrb[0].mxu0
      %v4161 = vadd.f32 %v3874, %v4160
      %v4162 = vpop.f32.mrb[0].mxu0
      %4163 = vmatprep.mubr.f32.mxu0 0.0
      %4164 = vmatmul.mubr.f32.gmra.mrb[0].mxu0 %v3999
      %v4165 = vpop.f32.mrb[0].mxu0
      %v4166 = vadd.f32 %v3879, %v4165
      %v4167 = vpop.f32.mrb[0].mxu0
      %4168 = vmatprep.mubr.f32.mxu0 0.0
      %4169 = vmatmul.mubr.f32.gmra.mrb[0].mxu0 %v4001
      %v4170 = vpop.f32.mrb[0].mxu0
      %v4171 = vadd.f32 %v3884, %v4170
      %v4172 = vpop.f32.mrb[0].mxu0
      %4173 = vmatprep.mubr.f32.mxu0 0.0
      %4174 = vmatmul.mubr.f32.gmra.mrb[0].mxu0 %v4003
      %v4175 = vpop.f32.mrb[0].mxu0
      %v4176 = vadd.f32 %v3889, %v4175
      %v4177 = vpop.f32.mrb[0].mxu0
      %4178 = vmatprep.mubr.f32.mxu0 0.0
      %4179 = vmatmul.mubr.f32.gmra.mrb[0].mxu0 %v4005
      %v4180 = vpop.f32.mrb[0].mxu0
      %v4181 = vadd.f32 %v3894, %v4180
      %v4182 = vpop.f32.mrb[0].mxu0
      %4183 = vmatprep.mubr.f32.mxu0 0.0
      %4184 = vmatmul.mubr.f32.gmra.mrb[0].mxu0 %v4007
      %v4185 = vpop.f32.mrb[0].mxu0
      %v4186 = vadd.f32 %v3899, %v4185
      %v4187 = vpop.f32.mrb[0].mxu0
      %4188 = vmatprep.mubr.f32.mxu0 0.0
      %4189 = vmatmul.mubr.f32.gmra.mrb[0].mxu0 %v4009
      %v4190 = vpop.f32.mrb[0].mxu0
      %v4191 = vadd.f32 %v3904, %v4190
      %v4192 = vpop.f32.mrb[0].mxu0
      %4193 = vmatprep.mubr.f32.mxu0 0.0
      %4194 = vmatmul.mubr.f32.gmra.mrb[0].mxu0 %v4011
      %v4195 = vpop.f32.mrb[0].mxu0
      %v4196 = vadd.f32 %v3909, %v4195
      %v4197 = vpop.f32.mrb[0].mxu0
      %4198 = vmatprep.mubr.f32.mxu0 0.0
      %4199 = vmatmul.mubr.f32.gmra.mrb[0].mxu0 %v4013
      %v4200 = vpop.f32.mrb[0].mxu0
      %v4201 = vadd.f32 %v3914, %v4200
      %v4202 = vpop.f32.mrb[0].mxu0
      %4203 = vmatprep.mubr.f32.mxu0 0.0
      %4204 = vmatmul.mubr.f32.gmra.mrb[0].mxu0 %v4015
      %v4205 = vpop.f32.mrb[0].mxu0
      %v4206 = vadd.f32 %v3919, %v4205
      %v4207 = vpop.f32.mrb[0].mxu0
      %4208 = vmatprep.mubr.f32.mxu0 0.0
      %4209 = vmatmul.mubr.f32.gmra.mrb[0].mxu0 %v4017
      %v4210 = vpop.f32.mrb[0].mxu0
      %v4211 = vadd.f32 %v3924, %v4210
      %v4212 = vpop.f32.mrb[0].mxu0
      %4213 = vmatprep.mubr.f32.mxu0 0.0
      %4214 = vmatmul.mubr.f32.gmra.mrb[0].mxu0 %v4019
      %v4215 = vpop.f32.mrb[0].mxu0
      %v4216 = vadd.f32 %v3929, %v4215
      %v4217 = vpop.f32.mrb[0].mxu0
      %4218 = vmatprep.mubr.f32.mxu0 0.0
      %4219 = vmatmul.mubr.f32.gmra.mrb[0].mxu0 %v4021
      %v4220 = vpop.f32.mrb[0].mxu0
      %v4221 = vadd.f32 %v3934, %v4220
      %v4222 = vpop.f32.mrb[0].mxu0
      %4223 = vmatprep.mubr.f32.mxu0 0.0
      %4224 = vmatmul.mubr.f32.gmra.mrb[0].mxu0 %v4023
      %v4225 = vpop.f32.mrb[0].mxu0
      %v4226 = vadd.f32 %v3939, %v4225
      %v4227 = vpop.f32.mrb[0].mxu0
      %4228 = vmatprep.mubr.f32.mxu0 0.0
      %4229 = vmatmul.mubr.f32.gmra.mrb[0].mxu0 %v4025
      %v4230 = vpop.f32.mrb[0].mxu0
      %v4231 = vadd.f32 %v3944, %v4230
      %v4232 = vpop.f32.mrb[0].mxu0
      %4233 = vmatprep.mubr.f32.mxu0 0.0
      %4234 = vmatmul.mubr.f32.gmra.mrb[0].mxu0 %v4027
      %v4235 = vpop.f32.mrb[0].mxu0
      %v4236 = vadd.f32 %v3949, %v4235
      %v4237 = vpop.f32.mrb[0].mxu0
      %4238 = vmatprep.mubr.f32.mxu0 0.0
      %4239 = vmatmul.mubr.f32.gmra.mrb[0].mxu0 %v4029
      %v4240 = vpop.f32.mrb[0].mxu0
      %v4241 = vadd.f32 %v3954, %v4240
      %v4242 = vpop.f32.mrb[0].mxu0
      %4243 = vmatprep.mubr.f32.mxu0 0.0
      %4244 = vmatmul.mubr.f32.gmra.mrb[0].mxu0 %v4031
      %v4245 = vpop.f32.mrb[0].mxu0
      %v4246 = vadd.f32 %v3959, %v4245
      %v4247 = vpop.f32.mrb[0].mxu0
      %4248 = vmatprep.mubr.f32.mxu0 0.0
      %4249 = vmatmul.mubr.f32.gmra.mrb[0].mxu0 %v4033
      %v4250 = vpop.f32.mrb[0].mxu0
      %v4251 = vadd.f32 %v3964, %v4250
      %v4252 = vpop.f32.mrb[0].mxu0
      %4253 = vmatprep.mubr.f32.mxu0 0.0
      %4254 = vmatmul.mubr.f32.gmra.mrb[0].mxu0 %v4035
      %v4255 = vpop.f32.mrb[0].mxu0
      %v4256 = vadd.f32 %v3969, %v4255
      %v4257 = vpop.f32.mrb[0].mxu0
      %4258 = vmatprep.mubr.f32.mxu0 0.0
      %4259 = vmatmul.mubr.f32.gmra.mrb[0].mxu0 %v4037
      %v4260 = vpop.f32.mrb[0].mxu0
      %v4261 = vadd.f32 %v3974, %v4260
      %v4262 = vpop.f32.mrb[0].mxu0
      %4263 = vdwg.mxu0
      %v4264 = vrot.slane %v3553, 2
      %v4265 = vrot.slane %v3475, 2
      %v4266 = vsel %vm1057, %v4264, %v4265
      %v4267 = vrot.slane %v3569, 2
      %v4268 = vsel %vm1057, %v4265, %v4267
      %v4269 = vrot.slane %v3554, 2
      %v4270 = vrot.slane %v3478, 2
      %v4271 = vsel %vm1057, %v4269, %v4270
      %v4272 = vrot.slane %v3570, 2
      %v4273 = vsel %vm1057, %v4270, %v4272
      %v4274 = vrot.slane %v3555, 2
      %v4275 = vrot.slane %v3481, 2
      %v4276 = vsel %vm1057, %v4274, %v4275
      %v4277 = vrot.slane %v3571, 2
      %v4278 = vsel %vm1057, %v4275, %v4277
      %v4279 = vrot.slane %v3556, 2
      %v4280 = vrot.slane %v3484, 2
      %v4281 = vsel %vm1057, %v4279, %v4280
      %v4282 = vrot.slane %v3572, 2
      %v4283 = vsel %vm1057, %v4280, %v4282
      %v4284 = vrot.slane %v3557, 2
      %v4285 = vrot.slane %v3487, 2
      %v4286 = vsel %vm1057, %v4284, %v4285
      %v4287 = vrot.slane %v3573, 2
      %v4288 = vsel %vm1057, %v4285, %v4287
      %v4289 = vrot.slane %v3558, 2
      %v4290 = vrot.slane %v3490, 2
      %v4291 = vsel %vm1057, %v4289, %v4290
      %v4292 = vrot.slane %v3574, 2
      %v4293 = vsel %vm1057, %v4290, %v4292
      %v4294 = vrot.slane %v3559, 2
      %v4295 = vrot.slane %v3493, 2
      %v4296 = vsel %vm1057, %v4294, %v4295
      %v4297 = vrot.slane %v3575, 2
      %v4298 = vsel %vm1057, %v4295, %v4297
      %v4299 = vrot.slane %v3560, 2
      %v4300 = vrot.slane %v3496, 2
      %v4301 = vsel %vm1057, %v4299, %v4300
      %v4302 = vrot.slane %v3576, 2
      %v4303 = vsel %vm1057, %v4300, %v4302
      %v4304 = vrot.slane %v3561, 2
      %v4305 = vrot.slane %v3499, 2
      %v4306 = vsel %vm1057, %v4304, %v4305
      %v4307 = vrot.slane %v3577, 2
      %v4308 = vsel %vm1057, %v4305, %v4307
      %v4309 = vrot.slane %v3562, 2
      %v4310 = vrot.slane %v3502, 2
      %v4311 = vsel %vm1057, %v4309, %v4310
      %v4312 = vrot.slane %v3578, 2
      %v4313 = vsel %vm1057, %v4310, %v4312
      %v4314 = vrot.slane %v3563, 2
      %v4315 = vrot.slane %v3505, 2
      %v4316 = vsel %vm1057, %v4314, %v4315
      %v4317 = vrot.slane %v3579, 2
      %v4318 = vsel %vm1057, %v4315, %v4317
      %v4319 = vrot.slane %v3564, 2
      %v4320 = vrot.slane %v3508, 2
      %v4321 = vsel %vm1057, %v4319, %v4320
      %v4322 = vrot.slane %v3580, 2
      %v4323 = vsel %vm1057, %v4320, %v4322
      %v4324 = vrot.slane %v3565, 2
      %v4325 = vrot.slane %v3511, 2
      %v4326 = vsel %vm1057, %v4324, %v4325
      %v4327 = vrot.slane %v3581, 2
      %v4328 = vsel %vm1057, %v4325, %v4327
      %v4329 = vrot.slane %v3566, 2
      %v4330 = vrot.slane %v3514, 2
      %v4331 = vsel %vm1057, %v4329, %v4330
      %v4332 = vrot.slane %v3582, 2
      %v4333 = vsel %vm1057, %v4330, %v4332
      %v4334 = vrot.slane %v3567, 2
      %v4335 = vrot.slane %v3517, 2
      %v4336 = vsel %vm1057, %v4334, %v4335
      %v4337 = vrot.slane %v3583, 2
      %v4338 = vsel %vm1057, %v4335, %v4337
      %v4339 = vsel %vm3041, %v1059, 0
      %v4341 = vsel %vm3041, %v4266, 0
      %v4343 = vsel %vm3041, %v4268, 0
      %v4345 = vsel %vm3041, %v4271, 0
      %v4347 = vsel %vm3041, %v4273, 0
      %v4349 = vsel %vm3041, %v4276, 0
      %v4351 = vsel %vm3041, %v4278, 0
      %v4353 = vsel %vm3041, %v4281, 0
      %v4355 = vsel %vm3041, %v4283, 0
      %v4357 = vsel %vm3041, %v4286, 0
      %v4359 = vsel %vm3041, %v4288, 0
      %v4361 = vsel %vm3041, %v4291, 0
      %v4363 = vsel %vm3041, %v4293, 0
      %v4365 = vsel %vm3041, %v4296, 0
      %v4367 = vsel %vm3041, %v4298, 0
      %v4369 = vsel %vm3041, %v4301, 0
      %v4371 = vsel %vm3041, %v4303, 0
      %v4373 = vsel %vm3041, %v4306, 0
      %v4375 = vsel %vm3041, %v4308, 0
      %v4377 = vsel %vm3041, %v4311, 0
      %v4379 = vsel %vm3041, %v4313, 0
      %v4381 = vsel %vm3041, %v4316, 0
      %v4383 = vsel %vm3041, %v4318, 0
      %v4385 = vsel %vm3041, %v4321, 0
      %v4387 = vsel %vm3041, %v4323, 0
      %v4389 = vsel %vm3041, %v4326, 0
      %v4391 = vsel %vm3041, %v4328, 0
      %v4393 = vsel %vm3041, %v4331, 0
      %v4395 = vsel %vm3041, %v4333, 0
      %v4397 = vsel %vm3041, %v4336, 0
      %v4399 = vsel %vm3041, %v4338, 0
      %4401 = vmatprep.subr.mxu0 0.0
      %4402 = vmatpush1.msra.mxu0 %v214
      %4403 = vmatprep.subr.mxu0 0.0
      %4404 = vmatpush1.msra.mxu0 0.0
      %4405 = vmatprep.subr.mxu0 0.0
      %4406 = vmatpush1.msra.mxu0 0.0
      %4407 = vmatprep.subr.mxu0 0.0
      %4408 = vmatpush1.msra.mxu0 0.0
      %4409 = vmatprep.subr.mxu0 0.0
      %4410 = vmatpush1.msra.mxu0 0.0
      %4411 = vmatprep.subr.mxu0 0.0
      %4412 = vmatpush1.msra.mxu0 0.0
      %4413 = vmatprep.subr.mxu0 0.0
      %4414 = vmatpush1.msra.mxu0 0.0
      %4415 = vmatprep.subr.mxu0 0.0
      %4416 = vmatpush1.msra.mxu0 0.0
      %4417 = vmatprep.subr.mxu0 0.0
      %4418 = vmatpush1.msra.mxu0 0.0
      %4419 = vmatprep.subr.mxu0 0.0
      %4420 = vmatpush1.msra.mxu0 0.0
      %4421 = vmatprep.subr.mxu0 0.0
      %4422 = vmatpush1.msra.mxu0 0.0
      %4423 = vmatprep.subr.mxu0 0.0
      %4424 = vmatpush1.msra.mxu0 0.0
      %4425 = vmatprep.subr.mxu0 0.0
      %4426 = vmatpush1.msra.mxu0 0.0
      %4427 = vmatprep.subr.mxu0 0.0
      %4428 = vmatpush1.msra.mxu0 0.0
      %4429 = vmatprep.subr.mxu0 0.0
      %4430 = vmatpush1.msra.mxu0 0.0
      %4431 = vmatprep.subr.mxu0 0.0
      %4432 = vmatpush1.msra.mxu0 0.0
      %4433 = vmatprep.subr.mxu0 0.0
      %4434 = vmatpush1.msra.mxu0 0.0
      %4435 = vmatprep.subr.mxu0 0.0
      %4436 = vmatpush1.msra.mxu0 0.0
      %4437 = vmatprep.subr.mxu0 0.0
      %4438 = vmatpush1.msra.mxu0 0.0
      %4439 = vmatprep.subr.mxu0 0.0
      %4440 = vmatpush1.msra.mxu0 0.0
      %4441 = vmatprep.subr.mxu0 0.0
      %4442 = vmatpush1.msra.mxu0 0.0
      %4443 = vmatprep.subr.mxu0 0.0
      %4444 = vmatpush1.msra.mxu0 0.0
      %4445 = vmatprep.subr.mxu0 0.0
      %4446 = vmatpush1.msra.mxu0 0.0
      %4447 = vmatprep.subr.mxu0 0.0
      %4448 = vmatpush1.msra.mxu0 0.0
      %4449 = vmatprep.subr.mxu0 0.0
      %4450 = vmatpush1.msra.mxu0 0.0
      %4451 = vmatprep.subr.mxu0 0.0
      %4452 = vmatpush1.msra.mxu0 0.0
      %4453 = vmatprep.subr.mxu0 0.0
      %4454 = vmatpush1.msra.mxu0 0.0
      %4455 = vmatprep.subr.mxu0 0.0
      %4456 = vmatpush1.msra.mxu0 0.0
      %4457 = vmatprep.subr.mxu0 0.0
      %4458 = vmatpush1.msra.mxu0 0.0
      %4459 = vmatprep.subr.mxu0 0.0
      %4460 = vmatpush1.msra.mxu0 0.0
      %4461 = vmatprep.subr.mxu0 0.0
      %4462 = vmatpush1.msra.mxu0 0.0
      %4463 = vmatprep.subr.mxu0 0.0
      %4464 = vmatpush1.msra.mxu0 0.0
      %4465 = vmatprep.mubr.f32.mxu0 0.0
      %4466 = vmatmul.mubr.f32.gmra.mrb[0].mxu0 %v4339
      %v4467 = vpop.f32.mrb[0].mxu0
      %v4468 = vadd.f32 0.0, %v4467
      %v4469 = vpop.f32.mrb[0].mxu0
      %4470 = vmatprep.mubr.f32.mxu0 0.0
      %4471 = vmatmul.mubr.f32.gmra.mrb[0].mxu0 %v4339
      %v4472 = vpop.f32.mrb[0].mxu0
      %v4473 = vadd.f32 0.0, %v4472
      %v4474 = vpop.f32.mrb[0].mxu0
      %4475 = vmatprep.mubr.f32.mxu0 0.0
      %4476 = vmatmul.mubr.f32.gmra.mrb[0].mxu0 %v4341
      %v4477 = vpop.f32.mrb[0].mxu0
      %v4478 = vadd.f32 0.0, %v4477
      %v4479 = vpop.f32.mrb[0].mxu0
      %4480 = vmatprep.mubr.f32.mxu0 0.0
      %4481 = vmatmul.mubr.f32.gmra.mrb[0].mxu0 %v4343
      %v4482 = vpop.f32.mrb[0].mxu0
      %v4483 = vadd.f32 0.0, %v4482
      %v4484 = vpop.f32.mrb[0].mxu0
      %4485 = vmatprep.mubr.f32.mxu0 0.0
      %4486 = vmatmul.mubr.f32.gmra.mrb[0].mxu0 %v4345
      %v4487 = vpop.f32.mrb[0].mxu0
      %v4488 = vadd.f32 0.0, %v4487
      %v4489 = vpop.f32.mrb[0].mxu0
      %4490 = vmatprep.mubr.f32.mxu0 0.0
      %4491 = vmatmul.mubr.f32.gmra.mrb[0].mxu0 %v4347
      %v4492 = vpop.f32.mrb[0].mxu0
      %v4493 = vadd.f32 0.0, %v4492
      %v4494 = vpop.f32.mrb[0].mxu0
      %4495 = vmatprep.mubr.f32.mxu0 0.0
      %4496 = vmatmul.mubr.f32.gmra.mrb[0].mxu0 %v4349
      %v4497 = vpop.f32.mrb[0].mxu0
      %v4498 = vadd.f32 0.0, %v4497
      %v4499 = vpop.f32.mrb[0].mxu0
      %4500 = vmatprep.mubr.f32.mxu0 0.0
      %4501 = vmatmul.mubr.f32.gmra.mrb[0].mxu0 %v4351
      %v4502 = vpop.f32.mrb[0].mxu0
      %v4503 = vadd.f32 0.0, %v4502
      %v4504 = vpop.f32.mrb[0].mxu0
      %4505 = vmatprep.mubr.f32.mxu0 0.0
      %4506 = vmatmul.mubr.f32.gmra.mrb[0].mxu0 %v4353
      %v4507 = vpop.f32.mrb[0].mxu0
      %v4508 = vadd.f32 0.0, %v4507
      %v4509 = vpop.f32.mrb[0].mxu0
      %4510 = vmatprep.mubr.f32.mxu0 0.0
      %4511 = vmatmul.mubr.f32.gmra.mrb[0].mxu0 %v4355
      %v4512 = vpop.f32.mrb[0].mxu0
      %v4513 = vadd.f32 0.0, %v4512
      %v4514 = vpop.f32.mrb[0].mxu0
      %4515 = vmatprep.mubr.f32.mxu0 0.0
      %4516 = vmatmul.mubr.f32.gmra.mrb[0].mxu0 %v4357
      %v4517 = vpop.f32.mrb[0].mxu0
      %v4518 = vadd.f32 0.0, %v4517
      %v4519 = vpop.f32.mrb[0].mxu0
      %4520 = vmatprep.mubr.f32.mxu0 0.0
      %4521 = vmatmul.mubr.f32.gmra.mrb[0].mxu0 %v4359
      %v4522 = vpop.f32.mrb[0].mxu0
      %v4523 = vadd.f32 0.0, %v4522
      %v4524 = vpop.f32.mrb[0].mxu0
      %4525 = vmatprep.mubr.f32.mxu0 0.0
      %4526 = vmatmul.mubr.f32.gmra.mrb[0].mxu0 %v4361
      %v4527 = vpop.f32.mrb[0].mxu0
      %v4528 = vadd.f32 0.0, %v4527
      %v4529 = vpop.f32.mrb[0].mxu0
      %4530 = vmatprep.mubr.f32.mxu0 0.0
      %4531 = vmatmul.mubr.f32.gmra.mrb[0].mxu0 %v4363
      %v4532 = vpop.f32.mrb[0].mxu0
      %v4533 = vadd.f32 0.0, %v4532
      %v4534 = vpop.f32.mrb[0].mxu0
      %4535 = vmatprep.mubr.f32.mxu0 0.0
      %4536 = vmatmul.mubr.f32.gmra.mrb[0].mxu0 %v4365
      %v4537 = vpop.f32.mrb[0].mxu0
      %v4538 = vadd.f32 0.0, %v4537
      %v4539 = vpop.f32.mrb[0].mxu0
      %4540 = vmatprep.mubr.f32.mxu0 0.0
      %4541 = vmatmul.mubr.f32.gmra.mrb[0].mxu0 %v4367
      %v4542 = vpop.f32.mrb[0].mxu0
      %v4543 = vadd.f32 0.0, %v4542
      %v4544 = vpop.f32.mrb[0].mxu0
      %4545 = vmatprep.mubr.f32.mxu0 0.0
      %4546 = vmatmul.mubr.f32.gmra.mrb[0].mxu0 %v4369
      %v4547 = vpop.f32.mrb[0].mxu0
      %v4548 = vadd.f32 0.0, %v4547
      %v4549 = vpop.f32.mrb[0].mxu0
      %4550 = vmatprep.mubr.f32.mxu0 0.0
      %4551 = vmatmul.mubr.f32.gmra.mrb[0].mxu0 %v4371
      %v4552 = vpop.f32.mrb[0].mxu0
      %v4553 = vadd.f32 0.0, %v4552
      %v4554 = vpop.f32.mrb[0].mxu0
      %4555 = vmatprep.mubr.f32.mxu0 0.0
      %4556 = vmatmul.mubr.f32.gmra.mrb[0].mxu0 %v4373
      %v4557 = vpop.f32.mrb[0].mxu0
      %v4558 = vadd.f32 0.0, %v4557
      %v4559 = vpop.f32.mrb[0].mxu0
      %4560 = vmatprep.mubr.f32.mxu0 0.0
      %4561 = vmatmul.mubr.f32.gmra.mrb[0].mxu0 %v4375
      %v4562 = vpop.f32.mrb[0].mxu0
      %v4563 = vadd.f32 0.0, %v4562
      %v4564 = vpop.f32.mrb[0].mxu0
      %4565 = vmatprep.mubr.f32.mxu0 0.0
      %4566 = vmatmul.mubr.f32.gmra.mrb[0].mxu0 %v4377
      %v4567 = vpop.f32.mrb[0].mxu0
      %v4568 = vadd.f32 0.0, %v4567
      %v4569 = vpop.f32.mrb[0].mxu0
      %4570 = vmatprep.mubr.f32.mxu0 0.0
      %4571 = vmatmul.mubr.f32.gmra.mrb[0].mxu0 %v4379
      %v4572 = vpop.f32.mrb[0].mxu0
      %v4573 = vadd.f32 0.0, %v4572
      %v4574 = vpop.f32.mrb[0].mxu0
      %4575 = vmatprep.mubr.f32.mxu0 0.0
      %4576 = vmatmul.mubr.f32.gmra.mrb[0].mxu0 %v4381
      %v4577 = vpop.f32.mrb[0].mxu0
      %v4578 = vadd.f32 0.0, %v4577
      %v4579 = vpop.f32.mrb[0].mxu0
      %4580 = vmatprep.mubr.f32.mxu0 0.0
      %4581 = vmatmul.mubr.f32.gmra.mrb[0].mxu0 %v4383
      %v4582 = vpop.f32.mrb[0].mxu0
      %v4583 = vadd.f32 0.0, %v4582
      %v4584 = vpop.f32.mrb[0].mxu0
      %4585 = vmatprep.mubr.f32.mxu0 0.0
      %4586 = vmatmul.mubr.f32.gmra.mrb[0].mxu0 %v4385
      %v4587 = vpop.f32.mrb[0].mxu0
      %v4588 = vadd.f32 0.0, %v4587
      %v4589 = vpop.f32.mrb[0].mxu0
      %4590 = vmatprep.mubr.f32.mxu0 0.0
      %4591 = vmatmul.mubr.f32.gmra.mrb[0].mxu0 %v4387
      %v4592 = vpop.f32.mrb[0].mxu0
      %v4593 = vadd.f32 0.0, %v4592
      %v4594 = vpop.f32.mrb[0].mxu0
      %4595 = vmatprep.mubr.f32.mxu0 0.0
      %4596 = vmatmul.mubr.f32.gmra.mrb[0].mxu0 %v4389
      %v4597 = vpop.f32.mrb[0].mxu0
      %v4598 = vadd.f32 0.0, %v4597
      %v4599 = vpop.f32.mrb[0].mxu0
      %4600 = vmatprep.mubr.f32.mxu0 0.0
      %4601 = vmatmul.mubr.f32.gmra.mrb[0].mxu0 %v4391
      %v4602 = vpop.f32.mrb[0].mxu0
      %v4603 = vadd.f32 0.0, %v4602
      %v4604 = vpop.f32.mrb[0].mxu0
      %4605 = vmatprep.mubr.f32.mxu0 0.0
      %4606 = vmatmul.mubr.f32.gmra.mrb[0].mxu0 %v4393
      %v4607 = vpop.f32.mrb[0].mxu0
      %v4608 = vadd.f32 0.0, %v4607
      %v4609 = vpop.f32.mrb[0].mxu0
      %4610 = vmatprep.mubr.f32.mxu0 0.0
      %4611 = vmatmul.mubr.f32.gmra.mrb[0].mxu0 %v4395
      %v4612 = vpop.f32.mrb[0].mxu0
      %v4613 = vadd.f32 0.0, %v4612
      %v4614 = vpop.f32.mrb[0].mxu0
      %4615 = vmatprep.mubr.f32.mxu0 0.0
      %4616 = vmatmul.mubr.f32.gmra.mrb[0].mxu0 %v4397
      %v4617 = vpop.f32.mrb[0].mxu0
      %v4618 = vadd.f32 0.0, %v4617
      %v4619 = vpop.f32.mrb[0].mxu0
      %4620 = vmatprep.mubr.f32.mxu0 0.0
      %4621 = vmatmul.mubr.f32.gmra.mrb[0].mxu0 %v4399
      %v4622 = vpop.f32.mrb[0].mxu0
      %v4623 = vadd.f32 0.0, %v4622
      %v4624 = vpop.f32.mrb[0].mxu0
      %4625 = vdwg.mxu0
      %v4626 = vadd.f32 %v4106, %v4468
      %v4627 = vadd.f32 %v4111, %v4473
      %v4628 = vadd.f32 %v4116, %v4478
      %v4629 = vadd.f32 %v4121, %v4483
      %v4630 = vadd.f32 %v4126, %v4488
      %v4631 = vadd.f32 %v4131, %v4493
      %v4632 = vadd.f32 %v4136, %v4498
      %v4633 = vadd.f32 %v4141, %v4503
      %v4634 = vadd.f32 %v4146, %v4508
      %v4635 = vadd.f32 %v4151, %v4513
      %v4636 = vadd.f32 %v4156, %v4518
      %v4637 = vadd.f32 %v4161, %v4523
      %v4638 = vadd.f32 %v4166, %v4528
      %v4639 = vadd.f32 %v4171, %v4533
      %v4640 = vadd.f32 %v4176, %v4538
      %v4641 = vadd.f32 %v4181, %v4543
      %v4642 = vadd.f32 %v4186, %v4548
      %v4643 = vadd.f32 %v4191, %v4553
      %v4644 = vadd.f32 %v4196, %v4558
      %v4645 = vadd.f32 %v4201, %v4563
      %v4646 = vadd.f32 %v4206, %v4568
      %v4647 = vadd.f32 %v4211, %v4573
      %v4648 = vadd.f32 %v4216, %v4578
      %v4649 = vadd.f32 %v4221, %v4583
      %v4650 = vadd.f32 %v4226, %v4588
      %v4651 = vadd.f32 %v4231, %v4593
      %v4652 = vadd.f32 %v4236, %v4598
      %v4653 = vadd.f32 %v4241, %v4603
      %v4654 = vadd.f32 %v4246, %v4608
      %v4655 = vadd.f32 %v4251, %v4613
      %v4656 = vadd.f32 %v4256, %v4618
      %v4657 = vadd.f32 %v4261, %v4623
      %v4659 = vsel %vm3041, %v3568, 0
      %v4661 = vsel %vm3041, %v3520, 0
      %4663 = vmatprep.subr.mxu0 0.0
      %4664 = vmatpush1.msra.mxu0 %v215
      %4665 = vmatprep.subr.mxu0 0.0
      %4666 = vmatpush1.msra.mxu0 0.0
      %4667 = vmatprep.subr.mxu0 0.0
      %4668 = vmatpush1.msra.mxu0 0.0
      %4669 = vmatprep.subr.mxu0 0.0
      %4670 = vmatpush1.msra.mxu0 0.0
      %4671 = vmatprep.subr.mxu0 0.0
      %4672 = vmatpush1.msra.mxu0 0.0
      %4673 = vmatprep.subr.mxu0 0.0
      %4674 = vmatpush1.msra.mxu0 0.0
      %4675 = vmatprep.subr.mxu0 0.0
      %4676 = vmatpush1.msra.mxu0 0.0
      %4677 = vmatprep.subr.mxu0 0.0
      %4678 = vmatpush1.msra.mxu0 0.0
      %4679 = vmatprep.subr.mxu0 0.0
      %4680 = vmatpush1.msra.mxu0 0.0
      %4681 = vmatprep.subr.mxu0 0.0
      %4682 = vmatpush1.msra.mxu0 0.0
      %4683 = vmatprep.subr.mxu0 0.0
      %4684 = vmatpush1.msra.mxu0 0.0
      %4685 = vmatprep.subr.mxu0 0.0
      %4686 = vmatpush1.msra.mxu0 0.0
      %4687 = vmatprep.subr.mxu0 0.0
      %4688 = vmatpush1.msra.mxu0 0.0
      %4689 = vmatprep.subr.mxu0 0.0
      %4690 = vmatpush1.msra.mxu0 0.0
      %4691 = vmatprep.subr.mxu0 0.0
      %4692 = vmatpush1.msra.mxu0 0.0
      %4693 = vmatprep.subr.mxu0 0.0
      %4694 = vmatpush1.msra.mxu0 0.0
      %4695 = vmatprep.subr.mxu0 0.0
      %4696 = vmatpush1.msra.mxu0 0.0
      %4697 = vmatprep.subr.mxu0 0.0
      %4698 = vmatpush1.msra.mxu0 0.0
      %4699 = vmatprep.subr.mxu0 0.0
      %4700 = vmatpush1.msra.mxu0 0.0
      %4701 = vmatprep.subr.mxu0 0.0
      %4702 = vmatpush1.msra.mxu0 0.0
      %4703 = vmatprep.subr.mxu0 0.0
      %4704 = vmatpush1.msra.mxu0 0.0
      %4705 = vmatprep.subr.mxu0 0.0
      %4706 = vmatpush1.msra.mxu0 0.0
      %4707 = vmatprep.subr.mxu0 0.0
      %4708 = vmatpush1.msra.mxu0 0.0
      %4709 = vmatprep.subr.mxu0 0.0
      %4710 = vmatpush1.msra.mxu0 0.0
      %4711 = vmatprep.subr.mxu0 0.0
      %4712 = vmatpush1.msra.mxu0 0.0
      %4713 = vmatprep.subr.mxu0 0.0
      %4714 = vmatpush1.msra.mxu0 0.0
      %4715 = vmatprep.subr.mxu0 0.0
      %4716 = vmatpush1.msra.mxu0 0.0
      %4717 = vmatprep.subr.mxu0 0.0
      %4718 = vmatpush1.msra.mxu0 0.0
      %4719 = vmatprep.subr.mxu0 0.0
      %4720 = vmatpush1.msra.mxu0 0.0
      %4721 = vmatprep.subr.mxu0 0.0
      %4722 = vmatpush1.msra.mxu0 0.0
      %4723 = vmatprep.subr.mxu0 0.0
      %4724 = vmatpush1.msra.mxu0 0.0
      %4725 = vmatprep.subr.mxu0 0.0
      %4726 = vmatpush1.msra.mxu0 0.0
      %4727 = vmatprep.mubr.f32.mxu0 0.0
      %4728 = vmatmul.mubr.f32.gmra.mrb[0].mxu0 %v3979
      %v4729 = vpop.f32.mrb[0].mxu0
      %v4730 = vadd.f32 0.0, %v4729
      %v4731 = vpop.f32.mrb[0].mxu0
      %4732 = vmatprep.mubr.f32.mxu0 0.0
      %4733 = vmatmul.mubr.f32.gmra.mrb[0].mxu0 %v3981
      %v4734 = vpop.f32.mrb[0].mxu0
      %v4735 = vadd.f32 0.0, %v4734
      %v4736 = vpop.f32.mrb[0].mxu0
      %4737 = vmatprep.mubr.f32.mxu0 0.0
      %4738 = vmatmul.mubr.f32.gmra.mrb[0].mxu0 %v3983
      %v4739 = vpop.f32.mrb[0].mxu0
      %v4740 = vadd.f32 0.0, %v4739
      %v4741 = vpop.f32.mrb[0].mxu0
      %4742 = vmatprep.mubr.f32.mxu0 0.0
      %4743 = vmatmul.mubr.f32.gmra.mrb[0].mxu0 %v3985
      %v4744 = vpop.f32.mrb[0].mxu0
      %v4745 = vadd.f32 0.0, %v4744
      %v4746 = vpop.f32.mrb[0].mxu0
      %4747 = vmatprep.mubr.f32.mxu0 0.0
      %4748 = vmatmul.mubr.f32.gmra.mrb[0].mxu0 %v3987
      %v4749 = vpop.f32.mrb[0].mxu0
      %v4750 = vadd.f32 0.0, %v4749
      %v4751 = vpop.f32.mrb[0].mxu0
      %4752 = vmatprep.mubr.f32.mxu0 0.0
      %4753 = vmatmul.mubr.f32.gmra.mrb[0].mxu0 %v3989
      %v4754 = vpop.f32.mrb[0].mxu0
      %v4755 = vadd.f32 0.0, %v4754
      %v4756 = vpop.f32.mrb[0].mxu0
      %4757 = vmatprep.mubr.f32.mxu0 0.0
      %4758 = vmatmul.mubr.f32.gmra.mrb[0].mxu0 %v3991
      %v4759 = vpop.f32.mrb[0].mxu0
      %v4760 = vadd.f32 0.0, %v4759
      %v4761 = vpop.f32.mrb[0].mxu0
      %4762 = vmatprep.mubr.f32.mxu0 0.0
      %4763 = vmatmul.mubr.f32.gmra.mrb[0].mxu0 %v3993
      %v4764 = vpop.f32.mrb[0].mxu0
      %v4765 = vadd.f32 0.0, %v4764
      %v4766 = vpop.f32.mrb[0].mxu0
      %4767 = vmatprep.mubr.f32.mxu0 0.0
      %4768 = vmatmul.mubr.f32.gmra.mrb[0].mxu0 %v3995
      %v4769 = vpop.f32.mrb[0].mxu0
      %v4770 = vadd.f32 0.0, %v4769
      %v4771 = vpop.f32.mrb[0].mxu0
      %4772 = vmatprep.mubr.f32.mxu0 0.0
      %4773 = vmatmul.mubr.f32.gmra.mrb[0].mxu0 %v3997
      %v4774 = vpop.f32.mrb[0].mxu0
      %v4775 = vadd.f32 0.0, %v4774
      %v4776 = vpop.f32.mrb[0].mxu0
      %4777 = vmatprep.mubr.f32.mxu0 0.0
      %4778 = vmatmul.mubr.f32.gmra.mrb[0].mxu0 %v3999
      %v4779 = vpop.f32.mrb[0].mxu0
      %v4780 = vadd.f32 0.0, %v4779
      %v4781 = vpop.f32.mrb[0].mxu0
      %4782 = vmatprep.mubr.f32.mxu0 0.0
      %4783 = vmatmul.mubr.f32.gmra.mrb[0].mxu0 %v4001
      %v4784 = vpop.f32.mrb[0].mxu0
      %v4785 = vadd.f32 0.0, %v4784
      %v4786 = vpop.f32.mrb[0].mxu0
      %4787 = vmatprep.mubr.f32.mxu0 0.0
      %4788 = vmatmul.mubr.f32.gmra.mrb[0].mxu0 %v4003
      %v4789 = vpop.f32.mrb[0].mxu0
      %v4790 = vadd.f32 0.0, %v4789
      %v4791 = vpop.f32.mrb[0].mxu0
      %4792 = vmatprep.mubr.f32.mxu0 0.0
      %4793 = vmatmul.mubr.f32.gmra.mrb[0].mxu0 %v4005
      %v4794 = vpop.f32.mrb[0].mxu0
      %v4795 = vadd.f32 0.0, %v4794
      %v4796 = vpop.f32.mrb[0].mxu0
      %4797 = vmatprep.mubr.f32.mxu0 0.0
      %4798 = vmatmul.mubr.f32.gmra.mrb[0].mxu0 %v4007
      %v4799 = vpop.f32.mrb[0].mxu0
      %v4800 = vadd.f32 0.0, %v4799
      %v4801 = vpop.f32.mrb[0].mxu0
      %4802 = vmatprep.mubr.f32.mxu0 0.0
      %4803 = vmatmul.mubr.f32.gmra.mrb[0].mxu0 %v4009
      %v4804 = vpop.f32.mrb[0].mxu0
      %v4805 = vadd.f32 0.0, %v4804
      %v4806 = vpop.f32.mrb[0].mxu0
      %4807 = vmatprep.mubr.f32.mxu0 0.0
      %4808 = vmatmul.mubr.f32.gmra.mrb[0].mxu0 %v4011
      %v4809 = vpop.f32.mrb[0].mxu0
      %v4810 = vadd.f32 0.0, %v4809
      %v4811 = vpop.f32.mrb[0].mxu0
      %4812 = vmatprep.mubr.f32.mxu0 0.0
      %4813 = vmatmul.mubr.f32.gmra.mrb[0].mxu0 %v4013
      %v4814 = vpop.f32.mrb[0].mxu0
      %v4815 = vadd.f32 0.0, %v4814
      %v4816 = vpop.f32.mrb[0].mxu0
      %4817 = vmatprep.mubr.f32.mxu0 0.0
      %4818 = vmatmul.mubr.f32.gmra.mrb[0].mxu0 %v4015
      %v4819 = vpop.f32.mrb[0].mxu0
      %v4820 = vadd.f32 0.0, %v4819
      %v4821 = vpop.f32.mrb[0].mxu0
      %4822 = vmatprep.mubr.f32.mxu0 0.0
      %4823 = vmatmul.mubr.f32.gmra.mrb[0].mxu0 %v4017
      %v4824 = vpop.f32.mrb[0].mxu0
      %v4825 = vadd.f32 0.0, %v4824
      %v4826 = vpop.f32.mrb[0].mxu0
      %4827 = vmatprep.mubr.f32.mxu0 0.0
      %4828 = vmatmul.mubr.f32.gmra.mrb[0].mxu0 %v4019
      %v4829 = vpop.f32.mrb[0].mxu0
      %v4830 = vadd.f32 0.0, %v4829
      %v4831 = vpop.f32.mrb[0].mxu0
      %4832 = vmatprep.mubr.f32.mxu0 0.0
      %4833 = vmatmul.mubr.f32.gmra.mrb[0].mxu0 %v4021
      %v4834 = vpop.f32.mrb[0].mxu0
      %v4835 = vadd.f32 0.0, %v4834
      %v4836 = vpop.f32.mrb[0].mxu0
      %4837 = vmatprep.mubr.f32.mxu0 0.0
      %4838 = vmatmul.mubr.f32.gmra.mrb[0].mxu0 %v4023
      %v4839 = vpop.f32.mrb[0].mxu0
      %v4840 = vadd.f32 0.0, %v4839
      %v4841 = vpop.f32.mrb[0].mxu0
      %4842 = vmatprep.mubr.f32.mxu0 0.0
      %4843 = vmatmul.mubr.f32.gmra.mrb[0].mxu0 %v4025
      %v4844 = vpop.f32.mrb[0].mxu0
      %v4845 = vadd.f32 0.0, %v4844
      %v4846 = vpop.f32.mrb[0].mxu0
      %4847 = vmatprep.mubr.f32.mxu0 0.0
      %4848 = vmatmul.mubr.f32.gmra.mrb[0].mxu0 %v4027
      %v4849 = vpop.f32.mrb[0].mxu0
      %v4850 = vadd.f32 0.0, %v4849
      %v4851 = vpop.f32.mrb[0].mxu0
      %4852 = vmatprep.mubr.f32.mxu0 0.0
      %4853 = vmatmul.mubr.f32.gmra.mrb[0].mxu0 %v4029
      %v4854 = vpop.f32.mrb[0].mxu0
      %v4855 = vadd.f32 0.0, %v4854
      %v4856 = vpop.f32.mrb[0].mxu0
      %4857 = vmatprep.mubr.f32.mxu0 0.0
      %4858 = vmatmul.mubr.f32.gmra.mrb[0].mxu0 %v4031
      %v4859 = vpop.f32.mrb[0].mxu0
      %v4860 = vadd.f32 0.0, %v4859
      %v4861 = vpop.f32.mrb[0].mxu0
      %4862 = vmatprep.mubr.f32.mxu0 0.0
      %4863 = vmatmul.mubr.f32.gmra.mrb[0].mxu0 %v4033
      %v4864 = vpop.f32.mrb[0].mxu0
      %v4865 = vadd.f32 0.0, %v4864
      %v4866 = vpop.f32.mrb[0].mxu0
      %4867 = vmatprep.mubr.f32.mxu0 0.0
      %4868 = vmatmul.mubr.f32.gmra.mrb[0].mxu0 %v4035
      %v4869 = vpop.f32.mrb[0].mxu0
      %v4870 = vadd.f32 0.0, %v4869
      %v4871 = vpop.f32.mrb[0].mxu0
      %4872 = vmatprep.mubr.f32.mxu0 0.0
      %4873 = vmatmul.mubr.f32.gmra.mrb[0].mxu0 %v4037
      %v4874 = vpop.f32.mrb[0].mxu0
      %v4875 = vadd.f32 0.0, %v4874
      %v4876 = vpop.f32.mrb[0].mxu0
      %4877 = vmatprep.mubr.f32.mxu0 0.0
      %4878 = vmatmul.mubr.f32.gmra.mrb[0].mxu0 %v4659
      %v4879 = vpop.f32.mrb[0].mxu0
      %v4880 = vadd.f32 0.0, %v4879
      %v4881 = vpop.f32.mrb[0].mxu0
      %4882 = vmatprep.mubr.f32.mxu0 0.0
      %4883 = vmatmul.mubr.f32.gmra.mrb[0].mxu0 %v4661
      %v4884 = vpop.f32.mrb[0].mxu0
      %v4885 = vadd.f32 0.0, %v4884
      %v4886 = vpop.f32.mrb[0].mxu0
      %4887 = vdwg.mxu0
      %v4888 = vadd.f32 %v4626, %v4730
      %v4889 = vadd.f32 %v4627, %v4735
      %v4890 = vadd.f32 %v4628, %v4740
      %v4891 = vadd.f32 %v4629, %v4745
      %v4892 = vadd.f32 %v4630, %v4750
      %v4893 = vadd.f32 %v4631, %v4755
      %v4894 = vadd.f32 %v4632, %v4760
      %v4895 = vadd.f32 %v4633, %v4765
      %v4896 = vadd.f32 %v4634, %v4770
      %v4897 = vadd.f32 %v4635, %v4775
      %v4898 = vadd.f32 %v4636, %v4780
      %v4899 = vadd.f32 %v4637, %v4785
      %v4900 = vadd.f32 %v4638, %v4790
      %v4901 = vadd.f32 %v4639, %v4795
      %v4902 = vadd.f32 %v4640, %v4800
      %v4903 = vadd.f32 %v4641, %v4805
      %v4904 = vadd.f32 %v4642, %v4810
      %v4905 = vadd.f32 %v4643, %v4815
      %v4906 = vadd.f32 %v4644, %v4820
      %v4907 = vadd.f32 %v4645, %v4825
      %v4908 = vadd.f32 %v4646, %v4830
      %v4909 = vadd.f32 %v4647, %v4835
      %v4910 = vadd.f32 %v4648, %v4840
      %v4911 = vadd.f32 %v4649, %v4845
      %v4912 = vadd.f32 %v4650, %v4850
      %v4913 = vadd.f32 %v4651, %v4855
      %v4914 = vadd.f32 %v4652, %v4860
      %v4915 = vadd.f32 %v4653, %v4865
      %v4916 = vadd.f32 %v4654, %v4870
      %v4917 = vadd.f32 %v4655, %v4875
      %v4918 = vadd.f32 %v4656, %v4880
      %v4919 = vadd.f32 %v4657, %v4885
      %v4921 = vrot.slane %v3568, 1
      %v4922 = vrot.slane %v3520, 1
      %v4923 = vsel %vm397, %v4921, %v4922
      %v4924 = vrot.slane %v3584, 1
      %v4925 = vsel %vm397, %v4922, %v4924
      %v4926 = vsel %vm3041, %v4923, 0
      %v4928 = vsel %vm3041, %v4925, 0
      %4930 = vmatprep.subr.mxu0 0.0
      %4931 = vmatpush1.msra.mxu0 %v216
      %4932 = vmatprep.subr.mxu0 0.0
      %4933 = vmatpush1.msra.mxu0 0.0
      %4934 = vmatprep.subr.mxu0 0.0
      %4935 = vmatpush1.msra.mxu0 0.0
      %4936 = vmatprep.subr.mxu0 0.0
      %4937 = vmatpush1.msra.mxu0 0.0
      %4938 = vmatprep.subr.mxu0 0.0
      %4939 = vmatpush1.msra.mxu0 0.0
      %4940 = vmatprep.subr.mxu0 0.0
      %4941 = vmatpush1.msra.mxu0 0.0
      %4942 = vmatprep.subr.mxu0 0.0
      %4943 = vmatpush1.msra.mxu0 0.0
      %4944 = vmatprep.subr.mxu0 0.0
      %4945 = vmatpush1.msra.mxu0 0.0
      %4946 = vmatprep.subr.mxu0 0.0
      %4947 = vmatpush1.msra.mxu0 0.0
      %4948 = vmatprep.subr.mxu0 0.0
      %4949 = vmatpush1.msra.mxu0 0.0
      %4950 = vmatprep.subr.mxu0 0.0
      %4951 = vmatpush1.msra.mxu0 0.0
      %4952 = vmatprep.subr.mxu0 0.0
      %4953 = vmatpush1.msra.mxu0 0.0
      %4954 = vmatprep.subr.mxu0 0.0
      %4955 = vmatpush1.msra.mxu0 0.0
      %4956 = vmatprep.subr.mxu0 0.0
      %4957 = vmatpush1.msra.mxu0 0.0
      %4958 = vmatprep.subr.mxu0 0.0
      %4959 = vmatpush1.msra.mxu0 0.0
      %4960 = vmatprep.subr.mxu0 0.0
      %4961 = vmatpush1.msra.mxu0 0.0
      %4962 = vmatprep.subr.mxu0 0.0
      %4963 = vmatpush1.msra.mxu0 0.0
      %4964 = vmatprep.subr.mxu0 0.0
      %4965 = vmatpush1.msra.mxu0 0.0
      %4966 = vmatprep.subr.mxu0 0.0
      %4967 = vmatpush1.msra.mxu0 0.0
      %4968 = vmatprep.subr.mxu0 0.0
      %4969 = vmatpush1.msra.mxu0 0.0
      %4970 = vmatprep.subr.mxu0 0.0
      %4971 = vmatpush1.msra.mxu0 0.0
      %4972 = vmatprep.subr.mxu0 0.0
      %4973 = vmatpush1.msra.mxu0 0.0
      %4974 = vmatprep.subr.mxu0 0.0
      %4975 = vmatpush1.msra.mxu0 0.0
      %4976 = vmatprep.subr.mxu0 0.0
      %4977 = vmatpush1.msra.mxu0 0.0
      %4978 = vmatprep.subr.mxu0 0.0
      %4979 = vmatpush1.msra.mxu0 0.0
      %4980 = vmatprep.subr.mxu0 0.0
      %4981 = vmatpush1.msra.mxu0 0.0
      %4982 = vmatprep.subr.mxu0 0.0
      %4983 = vmatpush1.msra.mxu0 0.0
      %4984 = vmatprep.subr.mxu0 0.0
      %4985 = vmatpush1.msra.mxu0 0.0
      %4986 = vmatprep.subr.mxu0 0.0
      %4987 = vmatpush1.msra.mxu0 0.0
      %4988 = vmatprep.subr.mxu0 0.0
      %4989 = vmatpush1.msra.mxu0 0.0
      %4990 = vmatprep.subr.mxu0 0.0
      %4991 = vmatpush1.msra.mxu0 0.0
      %4992 = vmatprep.subr.mxu0 0.0
      %4993 = vmatpush1.msra.mxu0 0.0
      %4994 = vmatprep.mubr.f32.mxu0 0.0
      %4995 = vmatmul.mubr.f32.gmra.mrb[0].mxu0 %v3692
      %v4996 = vpop.f32.mrb[0].mxu0
      %v4997 = vadd.f32 0.0, %v4996
      %v4998 = vpop.f32.mrb[0].mxu0
      %4999 = vmatprep.mubr.f32.mxu0 0.0
      %5000 = vmatmul.mubr.f32.gmra.mrb[0].mxu0 %v3694
      %v5001 = vpop.f32.mrb[0].mxu0
      %v5002 = vadd.f32 0.0, %v5001
      %v5003 = vpop.f32.mrb[0].mxu0
      %5004 = vmatprep.mubr.f32.mxu0 0.0
      %5005 = vmatmul.mubr.f32.gmra.mrb[0].mxu0 %v3696
      %v5006 = vpop.f32.mrb[0].mxu0
      %v5007 = vadd.f32 0.0, %v5006
      %v5008 = vpop.f32.mrb[0].mxu0
      %5009 = vmatprep.mubr.f32.mxu0 0.0
      %5010 = vmatmul.mubr.f32.gmra.mrb[0].mxu0 %v3698
      %v5011 = vpop.f32.mrb[0].mxu0
      %v5012 = vadd.f32 0.0, %v5011
      %v5013 = vpop.f32.mrb[0].mxu0
      %5014 = vmatprep.mubr.f32.mxu0 0.0
      %5015 = vmatmul.mubr.f32.gmra.mrb[0].mxu0 %v3700
      %v5016 = vpop.f32.mrb[0].mxu0
      %v5017 = vadd.f32 0.0, %v5016
      %v5018 = vpop.f32.mrb[0].mxu0
      %5019 = vmatprep.mubr.f32.mxu0 0.0
      %5020 = vmatmul.mubr.f32.gmra.mrb[0].mxu0 %v3702
      %v5021 = vpop.f32.mrb[0].mxu0
      %v5022 = vadd.f32 0.0, %v5021
      %v5023 = vpop.f32.mrb[0].mxu0
      %5024 = vmatprep.mubr.f32.mxu0 0.0
      %5025 = vmatmul.mubr.f32.gmra.mrb[0].mxu0 %v3704
      %v5026 = vpop.f32.mrb[0].mxu0
      %v5027 = vadd.f32 0.0, %v5026
      %v5028 = vpop.f32.mrb[0].mxu0
      %5029 = vmatprep.mubr.f32.mxu0 0.0
      %5030 = vmatmul.mubr.f32.gmra.mrb[0].mxu0 %v3706
      %v5031 = vpop.f32.mrb[0].mxu0
      %v5032 = vadd.f32 0.0, %v5031
      %v5033 = vpop.f32.mrb[0].mxu0
      %5034 = vmatprep.mubr.f32.mxu0 0.0
      %5035 = vmatmul.mubr.f32.gmra.mrb[0].mxu0 %v3708
      %v5036 = vpop.f32.mrb[0].mxu0
      %v5037 = vadd.f32 0.0, %v5036
      %v5038 = vpop.f32.mrb[0].mxu0
      %5039 = vmatprep.mubr.f32.mxu0 0.0
      %5040 = vmatmul.mubr.f32.gmra.mrb[0].mxu0 %v3710
      %v5041 = vpop.f32.mrb[0].mxu0
      %v5042 = vadd.f32 0.0, %v5041
      %v5043 = vpop.f32.mrb[0].mxu0
      %5044 = vmatprep.mubr.f32.mxu0 0.0
      %5045 = vmatmul.mubr.f32.gmra.mrb[0].mxu0 %v3712
      %v5046 = vpop.f32.mrb[0].mxu0
      %v5047 = vadd.f32 0.0, %v5046
      %v5048 = vpop.f32.mrb[0].mxu0
      %5049 = vmatprep.mubr.f32.mxu0 0.0
      %5050 = vmatmul.mubr.f32.gmra.mrb[0].mxu0 %v3714
      %v5051 = vpop.f32.mrb[0].mxu0
      %v5052 = vadd.f32 0.0, %v5051
      %v5053 = vpop.f32.mrb[0].mxu0
      %5054 = vmatprep.mubr.f32.mxu0 0.0
      %5055 = vmatmul.mubr.f32.gmra.mrb[0].mxu0 %v3716
      %v5056 = vpop.f32.mrb[0].mxu0
      %v5057 = vadd.f32 0.0, %v5056
      %v5058 = vpop.f32.mrb[0].mxu0
      %5059 = vmatprep.mubr.f32.mxu0 0.0
      %5060 = vmatmul.mubr.f32.gmra.mrb[0].mxu0 %v3718
      %v5061 = vpop.f32.mrb[0].mxu0
      %v5062 = vadd.f32 0.0, %v5061
      %v5063 = vpop.f32.mrb[0].mxu0
      %5064 = vmatprep.mubr.f32.mxu0 0.0
      %5065 = vmatmul.mubr.f32.gmra.mrb[0].mxu0 %v3720
      %v5066 = vpop.f32.mrb[0].mxu0
      %v5067 = vadd.f32 0.0, %v5066
      %v5068 = vpop.f32.mrb[0].mxu0
      %5069 = vmatprep.mubr.f32.mxu0 0.0
      %5070 = vmatmul.mubr.f32.gmra.mrb[0].mxu0 %v3722
      %v5071 = vpop.f32.mrb[0].mxu0
      %v5072 = vadd.f32 0.0, %v5071
      %v5073 = vpop.f32.mrb[0].mxu0
      %5074 = vmatprep.mubr.f32.mxu0 0.0
      %5075 = vmatmul.mubr.f32.gmra.mrb[0].mxu0 %v3724
      %v5076 = vpop.f32.mrb[0].mxu0
      %v5077 = vadd.f32 0.0, %v5076
      %v5078 = vpop.f32.mrb[0].mxu0
      %5079 = vmatprep.mubr.f32.mxu0 0.0
      %5080 = vmatmul.mubr.f32.gmra.mrb[0].mxu0 %v3726
      %v5081 = vpop.f32.mrb[0].mxu0
      %v5082 = vadd.f32 0.0, %v5081
      %v5083 = vpop.f32.mrb[0].mxu0
      %5084 = vmatprep.mubr.f32.mxu0 0.0
      %5085 = vmatmul.mubr.f32.gmra.mrb[0].mxu0 %v3728
      %v5086 = vpop.f32.mrb[0].mxu0
      %v5087 = vadd.f32 0.0, %v5086
      %v5088 = vpop.f32.mrb[0].mxu0
      %5089 = vmatprep.mubr.f32.mxu0 0.0
      %5090 = vmatmul.mubr.f32.gmra.mrb[0].mxu0 %v3730
      %v5091 = vpop.f32.mrb[0].mxu0
      %v5092 = vadd.f32 0.0, %v5091
      %v5093 = vpop.f32.mrb[0].mxu0
      %5094 = vmatprep.mubr.f32.mxu0 0.0
      %5095 = vmatmul.mubr.f32.gmra.mrb[0].mxu0 %v3732
      %v5096 = vpop.f32.mrb[0].mxu0
      %v5097 = vadd.f32 0.0, %v5096
      %v5098 = vpop.f32.mrb[0].mxu0
      %5099 = vmatprep.mubr.f32.mxu0 0.0
      %5100 = vmatmul.mubr.f32.gmra.mrb[0].mxu0 %v3734
      %v5101 = vpop.f32.mrb[0].mxu0
      %v5102 = vadd.f32 0.0, %v5101
      %v5103 = vpop.f32.mrb[0].mxu0
      %5104 = vmatprep.mubr.f32.mxu0 0.0
      %5105 = vmatmul.mubr.f32.gmra.mrb[0].mxu0 %v3736
      %v5106 = vpop.f32.mrb[0].mxu0
      %v5107 = vadd.f32 0.0, %v5106
      %v5108 = vpop.f32.mrb[0].mxu0
      %5109 = vmatprep.mubr.f32.mxu0 0.0
      %5110 = vmatmul.mubr.f32.gmra.mrb[0].mxu0 %v3738
      %v5111 = vpop.f32.mrb[0].mxu0
      %v5112 = vadd.f32 0.0, %v5111
      %v5113 = vpop.f32.mrb[0].mxu0
      %5114 = vmatprep.mubr.f32.mxu0 0.0
      %5115 = vmatmul.mubr.f32.gmra.mrb[0].mxu0 %v3740
      %v5116 = vpop.f32.mrb[0].mxu0
      %v5117 = vadd.f32 0.0, %v5116
      %v5118 = vpop.f32.mrb[0].mxu0
      %5119 = vmatprep.mubr.f32.mxu0 0.0
      %5120 = vmatmul.mubr.f32.gmra.mrb[0].mxu0 %v3742
      %v5121 = vpop.f32.mrb[0].mxu0
      %v5122 = vadd.f32 0.0, %v5121
      %v5123 = vpop.f32.mrb[0].mxu0
      %5124 = vmatprep.mubr.f32.mxu0 0.0
      %5125 = vmatmul.mubr.f32.gmra.mrb[0].mxu0 %v3744
      %v5126 = vpop.f32.mrb[0].mxu0
      %v5127 = vadd.f32 0.0, %v5126
      %v5128 = vpop.f32.mrb[0].mxu0
      %5129 = vmatprep.mubr.f32.mxu0 0.0
      %5130 = vmatmul.mubr.f32.gmra.mrb[0].mxu0 %v3746
      %v5131 = vpop.f32.mrb[0].mxu0
      %v5132 = vadd.f32 0.0, %v5131
      %v5133 = vpop.f32.mrb[0].mxu0
      %5134 = vmatprep.mubr.f32.mxu0 0.0
      %5135 = vmatmul.mubr.f32.gmra.mrb[0].mxu0 %v3748
      %v5136 = vpop.f32.mrb[0].mxu0
      %v5137 = vadd.f32 0.0, %v5136
      %v5138 = vpop.f32.mrb[0].mxu0
      %5139 = vmatprep.mubr.f32.mxu0 0.0
      %5140 = vmatmul.mubr.f32.gmra.mrb[0].mxu0 %v3750
      %v5141 = vpop.f32.mrb[0].mxu0
      %v5142 = vadd.f32 0.0, %v5141
      %v5143 = vpop.f32.mrb[0].mxu0
      %5144 = vmatprep.mubr.f32.mxu0 0.0
      %5145 = vmatmul.mubr.f32.gmra.mrb[0].mxu0 %v4926
      %v5146 = vpop.f32.mrb[0].mxu0
      %v5147 = vadd.f32 0.0, %v5146
      %v5148 = vpop.f32.mrb[0].mxu0
      %5149 = vmatprep.mubr.f32.mxu0 0.0
      %5150 = vmatmul.mubr.f32.gmra.mrb[0].mxu0 %v4928
      %v5151 = vpop.f32.mrb[0].mxu0
      %v5152 = vadd.f32 0.0, %v5151
      %v5153 = vpop.f32.mrb[0].mxu0
      %5154 = vdwg.mxu0
      %v5155 = vadd.f32 %v4888, %v4997
      %v5156 = vadd.f32 %v4889, %v5002
      %v5157 = vadd.f32 %v4890, %v5007
      %v5158 = vadd.f32 %v4891, %v5012
      %v5159 = vadd.f32 %v4892, %v5017
      %v5160 = vadd.f32 %v4893, %v5022
      %v5161 = vadd.f32 %v4894, %v5027
      %v5162 = vadd.f32 %v4895, %v5032
      %v5163 = vadd.f32 %v4896, %v5037
      %v5164 = vadd.f32 %v4897, %v5042
      %v5165 = vadd.f32 %v4898, %v5047
      %v5166 = vadd.f32 %v4899, %v5052
      %v5167 = vadd.f32 %v4900, %v5057
      %v5168 = vadd.f32 %v4901, %v5062
      %v5169 = vadd.f32 %v4902, %v5067
      %v5170 = vadd.f32 %v4903, %v5072
      %v5171 = vadd.f32 %v4904, %v5077
      %v5172 = vadd.f32 %v4905, %v5082
      %v5173 = vadd.f32 %v4906, %v5087
      %v5174 = vadd.f32 %v4907, %v5092
      %v5175 = vadd.f32 %v4908, %v5097
      %v5176 = vadd.f32 %v4909, %v5102
      %v5177 = vadd.f32 %v4910, %v5107
      %v5178 = vadd.f32 %v4911, %v5112
      %v5179 = vadd.f32 %v4912, %v5117
      %v5180 = vadd.f32 %v4913, %v5122
      %v5181 = vadd.f32 %v4914, %v5127
      %v5182 = vadd.f32 %v4915, %v5132
      %v5183 = vadd.f32 %v4916, %v5137
      %v5184 = vadd.f32 %v4917, %v5142
      %v5185 = vadd.f32 %v4918, %v5147
      %v5186 = vadd.f32 %v4919, %v5152
      %v5187 = vrot.slane %v3568, 2
      %v5188 = vrot.slane %v3520, 2
      %v5189 = vsel %vm1057, %v5187, %v5188
      %v5190 = vrot.slane %v3584, 2
      %v5191 = vsel %vm1057, %v5188, %v5190
      %v5192 = vsel %vm3041, %v5189, 0
      %v5194 = vsel %vm3041, %v5191, 0
      %5196 = vmatprep.subr.mxu0 0.0
      %5197 = vmatpush1.msra.mxu0 %v217
      %5198 = vmatprep.subr.mxu0 0.0
      %5199 = vmatpush1.msra.mxu0 0.0
      %5200 = vmatprep.subr.mxu0 0.0
      %5201 = vmatpush1.msra.mxu0 0.0
      %5202 = vmatprep.subr.mxu0 0.0
      %5203 = vmatpush1.msra.mxu0 0.0
      %5204 = vmatprep.subr.mxu0 0.0
      %5205 = vmatpush1.msra.mxu0 0.0
      %5206 = vmatprep.subr.mxu0 0.0
      %5207 = vmatpush1.msra.mxu0 0.0
      %5208 = vmatprep.subr.mxu0 0.0
      %5209 = vmatpush1.msra.mxu0 0.0
      %5210 = vmatprep.subr.mxu0 0.0
      %5211 = vmatpush1.msra.mxu0 0.0
      %5212 = vmatprep.subr.mxu0 0.0
      %5213 = vmatpush1.msra.mxu0 0.0
      %5214 = vmatprep.subr.mxu0 0.0
      %5215 = vmatpush1.msra.mxu0 0.0
      %5216 = vmatprep.subr.mxu0 0.0
      %5217 = vmatpush1.msra.mxu0 0.0
      %5218 = vmatprep.subr.mxu0 0.0
      %5219 = vmatpush1.msra.mxu0 0.0
      %5220 = vmatprep.subr.mxu0 0.0
      %5221 = vmatpush1.msra.mxu0 0.0
      %5222 = vmatprep.subr.mxu0 0.0
      %5223 = vmatpush1.msra.mxu0 0.0
      %5224 = vmatprep.subr.mxu0 0.0
      %5225 = vmatpush1.msra.mxu0 0.0
      %5226 = vmatprep.subr.mxu0 0.0
      %5227 = vmatpush1.msra.mxu0 0.0
      %5228 = vmatprep.subr.mxu0 0.0
      %5229 = vmatpush1.msra.mxu0 0.0
      %5230 = vmatprep.subr.mxu0 0.0
      %5231 = vmatpush1.msra.mxu0 0.0
      %5232 = vmatprep.subr.mxu0 0.0
      %5233 = vmatpush1.msra.mxu0 0.0
      %5234 = vmatprep.subr.mxu0 0.0
      %5235 = vmatpush1.msra.mxu0 0.0
      %5236 = vmatprep.subr.mxu0 0.0
      %5237 = vmatpush1.msra.mxu0 0.0
      %5238 = vmatprep.subr.mxu0 0.0
      %5239 = vmatpush1.msra.mxu0 0.0
      %5240 = vmatprep.subr.mxu0 0.0
      %5241 = vmatpush1.msra.mxu0 0.0
      %5242 = vmatprep.subr.mxu0 0.0
      %5243 = vmatpush1.msra.mxu0 0.0
      %5244 = vmatprep.subr.mxu0 0.0
      %5245 = vmatpush1.msra.mxu0 0.0
      %5246 = vmatprep.subr.mxu0 0.0
      %5247 = vmatpush1.msra.mxu0 0.0
      %5248 = vmatprep.subr.mxu0 0.0
      %5249 = vmatpush1.msra.mxu0 0.0
      %5250 = vmatprep.subr.mxu0 0.0
      %5251 = vmatpush1.msra.mxu0 0.0
      %5252 = vmatprep.subr.mxu0 0.0
      %5253 = vmatpush1.msra.mxu0 0.0
      %5254 = vmatprep.subr.mxu0 0.0
      %5255 = vmatpush1.msra.mxu0 0.0
      %5256 = vmatprep.subr.mxu0 0.0
      %5257 = vmatpush1.msra.mxu0 0.0
      %5258 = vmatprep.subr.mxu0 0.0
      %5259 = vmatpush1.msra.mxu0 0.0
      %5260 = vmatprep.mubr.f32.mxu0 0.0
      %5261 = vmatmul.mubr.f32.gmra.mrb[0].mxu0 %v4341
      %v5262 = vpop.f32.mrb[0].mxu0
      %v5263 = vadd.f32 0.0, %v5262
      %v5264 = vpop.f32.mrb[0].mxu0
      %5265 = vmatprep.mubr.f32.mxu0 0.0
      %5266 = vmatmul.mubr.f32.gmra.mrb[0].mxu0 %v4343
      %v5267 = vpop.f32.mrb[0].mxu0
      %v5268 = vadd.f32 0.0, %v5267
      %v5269 = vpop.f32.mrb[0].mxu0
      %5270 = vmatprep.mubr.f32.mxu0 0.0
      %5271 = vmatmul.mubr.f32.gmra.mrb[0].mxu0 %v4345
      %v5272 = vpop.f32.mrb[0].mxu0
      %v5273 = vadd.f32 0.0, %v5272
      %v5274 = vpop.f32.mrb[0].mxu0
      %5275 = vmatprep.mubr.f32.mxu0 0.0
      %5276 = vmatmul.mubr.f32.gmra.mrb[0].mxu0 %v4347
      %v5277 = vpop.f32.mrb[0].mxu0
      %v5278 = vadd.f32 0.0, %v5277
      %v5279 = vpop.f32.mrb[0].mxu0
      %5280 = vmatprep.mubr.f32.mxu0 0.0
      %5281 = vmatmul.mubr.f32.gmra.mrb[0].mxu0 %v4349
      %v5282 = vpop.f32.mrb[0].mxu0
      %v5283 = vadd.f32 0.0, %v5282
      %v5284 = vpop.f32.mrb[0].mxu0
      %5285 = vmatprep.mubr.f32.mxu0 0.0
      %5286 = vmatmul.mubr.f32.gmra.mrb[0].mxu0 %v4351
      %v5287 = vpop.f32.mrb[0].mxu0
      %v5288 = vadd.f32 0.0, %v5287
      %v5289 = vpop.f32.mrb[0].mxu0
      %5290 = vmatprep.mubr.f32.mxu0 0.0
      %5291 = vmatmul.mubr.f32.gmra.mrb[0].mxu0 %v4353
      %v5292 = vpop.f32.mrb[0].mxu0
      %v5293 = vadd.f32 0.0, %v5292
      %v5294 = vpop.f32.mrb[0].mxu0
      %5295 = vmatprep.mubr.f32.mxu0 0.0
      %5296 = vmatmul.mubr.f32.gmra.mrb[0].mxu0 %v4355
      %v5297 = vpop.f32.mrb[0].mxu0
      %v5298 = vadd.f32 0.0, %v5297
      %v5299 = vpop.f32.mrb[0].mxu0
      %5300 = vmatprep.mubr.f32.mxu0 0.0
      %5301 = vmatmul.mubr.f32.gmra.mrb[0].mxu0 %v4357
      %v5302 = vpop.f32.mrb[0].mxu0
      %v5303 = vadd.f32 0.0, %v5302
      %v5304 = vpop.f32.mrb[0].mxu0
      %5305 = vmatprep.mubr.f32.mxu0 0.0
      %5306 = vmatmul.mubr.f32.gmra.mrb[0].mxu0 %v4359
      %v5307 = vpop.f32.mrb[0].mxu0
      %v5308 = vadd.f32 0.0, %v5307
      %v5309 = vpop.f32.mrb[0].mxu0
      %5310 = vmatprep.mubr.f32.mxu0 0.0
      %5311 = vmatmul.mubr.f32.gmra.mrb[0].mxu0 %v4361
      %v5312 = vpop.f32.mrb[0].mxu0
      %v5313 = vadd.f32 0.0, %v5312
      %v5314 = vpop.f32.mrb[0].mxu0
      %5315 = vmatprep.mubr.f32.mxu0 0.0
      %5316 = vmatmul.mubr.f32.gmra.mrb[0].mxu0 %v4363
      %v5317 = vpop.f32.mrb[0].mxu0
      %v5318 = vadd.f32 0.0, %v5317
      %v5319 = vpop.f32.mrb[0].mxu0
      %5320 = vmatprep.mubr.f32.mxu0 0.0
      %5321 = vmatmul.mubr.f32.gmra.mrb[0].mxu0 %v4365
      %v5322 = vpop.f32.mrb[0].mxu0
      %v5323 = vadd.f32 0.0, %v5322
      %v5324 = vpop.f32.mrb[0].mxu0
      %5325 = vmatprep.mubr.f32.mxu0 0.0
      %5326 = vmatmul.mubr.f32.gmra.mrb[0].mxu0 %v4367
      %v5327 = vpop.f32.mrb[0].mxu0
      %v5328 = vadd.f32 0.0, %v5327
      %v5329 = vpop.f32.mrb[0].mxu0
      %5330 = vmatprep.mubr.f32.mxu0 0.0
      %5331 = vmatmul.mubr.f32.gmra.mrb[0].mxu0 %v4369
      %v5332 = vpop.f32.mrb[0].mxu0
      %v5333 = vadd.f32 0.0, %v5332
      %v5334 = vpop.f32.mrb[0].mxu0
      %5335 = vmatprep.mubr.f32.mxu0 0.0
      %5336 = vmatmul.mubr.f32.gmra.mrb[0].mxu0 %v4371
      %v5337 = vpop.f32.mrb[0].mxu0
      %v5338 = vadd.f32 0.0, %v5337
      %v5339 = vpop.f32.mrb[0].mxu0
      %5340 = vmatprep.mubr.f32.mxu0 0.0
      %5341 = vmatmul.mubr.f32.gmra.mrb[0].mxu0 %v4373
      %v5342 = vpop.f32.mrb[0].mxu0
      %v5343 = vadd.f32 0.0, %v5342
      %v5344 = vpop.f32.mrb[0].mxu0
      %5345 = vmatprep.mubr.f32.mxu0 0.0
      %5346 = vmatmul.mubr.f32.gmra.mrb[0].mxu0 %v4375
      %v5347 = vpop.f32.mrb[0].mxu0
      %v5348 = vadd.f32 0.0, %v5347
      %v5349 = vpop.f32.mrb[0].mxu0
      %5350 = vmatprep.mubr.f32.mxu0 0.0
      %5351 = vmatmul.mubr.f32.gmra.mrb[0].mxu0 %v4377
      %v5352 = vpop.f32.mrb[0].mxu0
      %v5353 = vadd.f32 0.0, %v5352
      %v5354 = vpop.f32.mrb[0].mxu0
      %5355 = vmatprep.mubr.f32.mxu0 0.0
      %5356 = vmatmul.mubr.f32.gmra.mrb[0].mxu0 %v4379
      %v5357 = vpop.f32.mrb[0].mxu0
      %v5358 = vadd.f32 0.0, %v5357
      %v5359 = vpop.f32.mrb[0].mxu0
      %5360 = vmatprep.mubr.f32.mxu0 0.0
      %5361 = vmatmul.mubr.f32.gmra.mrb[0].mxu0 %v4381
      %v5362 = vpop.f32.mrb[0].mxu0
      %v5363 = vadd.f32 0.0, %v5362
      %v5364 = vpop.f32.mrb[0].mxu0
      %5365 = vmatprep.mubr.f32.mxu0 0.0
      %5366 = vmatmul.mubr.f32.gmra.mrb[0].mxu0 %v4383
      %v5367 = vpop.f32.mrb[0].mxu0
      %v5368 = vadd.f32 0.0, %v5367
      %v5369 = vpop.f32.mrb[0].mxu0
      %5370 = vmatprep.mubr.f32.mxu0 0.0
      %5371 = vmatmul.mubr.f32.gmra.mrb[0].mxu0 %v4385
      %v5372 = vpop.f32.mrb[0].mxu0
      %v5373 = vadd.f32 0.0, %v5372
      %v5374 = vpop.f32.mrb[0].mxu0
      %5375 = vmatprep.mubr.f32.mxu0 0.0
      %5376 = vmatmul.mubr.f32.gmra.mrb[0].mxu0 %v4387
      %v5377 = vpop.f32.mrb[0].mxu0
      %v5378 = vadd.f32 0.0, %v5377
      %v5379 = vpop.f32.mrb[0].mxu0
      %5380 = vmatprep.mubr.f32.mxu0 0.0
      %5381 = vmatmul.mubr.f32.gmra.mrb[0].mxu0 %v4389
      %v5382 = vpop.f32.mrb[0].mxu0
      %v5383 = vadd.f32 0.0, %v5382
      %v5384 = vpop.f32.mrb[0].mxu0
      %5385 = vmatprep.mubr.f32.mxu0 0.0
      %5386 = vmatmul.mubr.f32.gmra.mrb[0].mxu0 %v4391
      %v5387 = vpop.f32.mrb[0].mxu0
      %v5388 = vadd.f32 0.0, %v5387
      %v5389 = vpop.f32.mrb[0].mxu0
      %5390 = vmatprep.mubr.f32.mxu0 0.0
      %5391 = vmatmul.mubr.f32.gmra.mrb[0].mxu0 %v4393
      %v5392 = vpop.f32.mrb[0].mxu0
      %v5393 = vadd.f32 0.0, %v5392
      %v5394 = vpop.f32.mrb[0].mxu0
      %5395 = vmatprep.mubr.f32.mxu0 0.0
      %5396 = vmatmul.mubr.f32.gmra.mrb[0].mxu0 %v4395
      %v5397 = vpop.f32.mrb[0].mxu0
      %v5398 = vadd.f32 0.0, %v5397
      %v5399 = vpop.f32.mrb[0].mxu0
      %5400 = vmatprep.mubr.f32.mxu0 0.0
      %5401 = vmatmul.mubr.f32.gmra.mrb[0].mxu0 %v4397
      %v5402 = vpop.f32.mrb[0].mxu0
      %v5403 = vadd.f32 0.0, %v5402
      %v5404 = vpop.f32.mrb[0].mxu0
      %5405 = vmatprep.mubr.f32.mxu0 0.0
      %5406 = vmatmul.mubr.f32.gmra.mrb[0].mxu0 %v4399
      %v5407 = vpop.f32.mrb[0].mxu0
      %v5408 = vadd.f32 0.0, %v5407
      %v5409 = vpop.f32.mrb[0].mxu0
      %5410 = vmatprep.mubr.f32.mxu0 0.0
      %5411 = vmatmul.mubr.f32.gmra.mrb[0].mxu0 %v5192
      %v5412 = vpop.f32.mrb[0].mxu0
      %v5413 = vadd.f32 0.0, %v5412
      %v5414 = vpop.f32.mrb[0].mxu0
      %5415 = vmatprep.mubr.f32.mxu0 0.0
      %5416 = vmatmul.mubr.f32.gmra.mrb[0].mxu0 %v5194
      %v5417 = vpop.f32.mrb[0].mxu0
      %v5418 = vadd.f32 0.0, %v5417
      %v5419 = vpop.f32.mrb[0].mxu0
      %5420 = vdwg.mxu0
      %v5421 = vadd.f32 %v5155, %v5263
      %v5422 = vadd.f32 %v5156, %v5268
      %v5423 = vadd.f32 %v5157, %v5273
      %v5424 = vadd.f32 %v5158, %v5278
      %v5425 = vadd.f32 %v5159, %v5283
      %v5426 = vadd.f32 %v5160, %v5288
      %v5427 = vadd.f32 %v5161, %v5293
      %v5428 = vadd.f32 %v5162, %v5298
      %v5429 = vadd.f32 %v5163, %v5303
      %v5430 = vadd.f32 %v5164, %v5308
      %v5431 = vadd.f32 %v5165, %v5313
      %v5432 = vadd.f32 %v5166, %v5318
      %v5433 = vadd.f32 %v5167, %v5323
      %v5434 = vadd.f32 %v5168, %v5328
      %v5435 = vadd.f32 %v5169, %v5333
      %v5436 = vadd.f32 %v5170, %v5338
      %v5437 = vadd.f32 %v5171, %v5343
      %v5438 = vadd.f32 %v5172, %v5348
      %v5439 = vadd.f32 %v5173, %v5353
      %v5440 = vadd.f32 %v5174, %v5358
      %v5441 = vadd.f32 %v5175, %v5363
      %v5442 = vadd.f32 %v5176, %v5368
      %v5443 = vadd.f32 %v5177, %v5373
      %v5444 = vadd.f32 %v5178, %v5378
      %v5445 = vadd.f32 %v5179, %v5383
      %v5446 = vadd.f32 %v5180, %v5388
      %v5447 = vadd.f32 %v5181, %v5393
      %v5448 = vadd.f32 %v5182, %v5398
      %v5449 = vadd.f32 %v5183, %v5403
      %v5450 = vadd.f32 %v5184, %v5408
      %v5451 = vadd.f32 %v5185, %v5413
      %v5452 = vadd.f32 %v5186, %v5418
      %5453 = vmatprep.subr.mxu0 0.0
      %5454 = vmatpush1.msra.mxu0 %v218
      %5455 = vmatprep.subr.mxu0 0.0
      %5456 = vmatpush1.msra.mxu0 0.0
      %5457 = vmatprep.subr.mxu0 0.0
      %5458 = vmatpush1.msra.mxu0 0.0
      %5459 = vmatprep.subr.mxu0 0.0
      %5460 = vmatpush1.msra.mxu0 0.0
      %5461 = vmatprep.subr.mxu0 0.0
      %5462 = vmatpush1.msra.mxu0 0.0
      %5463 = vmatprep.subr.mxu0 0.0
      %5464 = vmatpush1.msra.mxu0 0.0
      %5465 = vmatprep.subr.mxu0 0.0
      %5466 = vmatpush1.msra.mxu0 0.0
      %5467 = vmatprep.subr.mxu0 0.0
      %5468 = vmatpush1.msra.mxu0 0.0
      %5469 = vmatprep.subr.mxu0 0.0
      %5470 = vmatpush1.msra.mxu0 0.0
      %5471 = vmatprep.subr.mxu0 0.0
      %5472 = vmatpush1.msra.mxu0 0.0
      %5473 = vmatprep.subr.mxu0 0.0
      %5474 = vmatpush1.msra.mxu0 0.0
      %5475 = vmatprep.subr.mxu0 0.0
      %5476 = vmatpush1.msra.mxu0 0.0
      %5477 = vmatprep.subr.mxu0 0.0
      %5478 = vmatpush1.msra.mxu0 0.0
      %5479 = vmatprep.subr.mxu0 0.0
      %5480 = vmatpush1.msra.mxu0 0.0
      %5481 = vmatprep.subr.mxu0 0.0
      %5482 = vmatpush1.msra.mxu0 0.0
      %5483 = vmatprep.subr.mxu0 0.0
      %5484 = vmatpush1.msra.mxu0 0.0
      %5485 = vmatprep.subr.mxu0 0.0
      %5486 = vmatpush1.msra.mxu0 0.0
      %5487 = vmatprep.subr.mxu0 0.0
      %5488 = vmatpush1.msra.mxu0 0.0
      %5489 = vmatprep.subr.mxu0 0.0
      %5490 = vmatpush1.msra.mxu0 0.0
      %5491 = vmatprep.subr.mxu0 0.0
      %5492 = vmatpush1.msra.mxu0 0.0
      %5493 = vmatprep.subr.mxu0 0.0
      %5494 = vmatpush1.msra.mxu0 0.0
      %5495 = vmatprep.subr.mxu0 0.0
      %5496 = vmatpush1.msra.mxu0 0.0
      %5497 = vmatprep.subr.mxu0 0.0
      %5498 = vmatpush1.msra.mxu0 0.0
      %5499 = vmatprep.subr.mxu0 0.0
      %5500 = vmatpush1.msra.mxu0 0.0
      %5501 = vmatprep.subr.mxu0 0.0
      %5502 = vmatpush1.msra.mxu0 0.0
      %5503 = vmatprep.subr.mxu0 0.0
      %5504 = vmatpush1.msra.mxu0 0.0
      %5505 = vmatprep.subr.mxu0 0.0
      %5506 = vmatpush1.msra.mxu0 0.0
      %5507 = vmatprep.subr.mxu0 0.0
      %5508 = vmatpush1.msra.mxu0 0.0
      %5509 = vmatprep.subr.mxu0 0.0
      %5510 = vmatpush1.msra.mxu0 0.0
      %5511 = vmatprep.subr.mxu0 0.0
      %5512 = vmatpush1.msra.mxu0 0.0
      %5513 = vmatprep.subr.mxu0 0.0
      %5514 = vmatpush1.msra.mxu0 0.0
      %5515 = vmatprep.subr.mxu0 0.0
      %5516 = vmatpush1.msra.mxu0 0.0
      %5517 = vmatprep.mubr.f32.mxu0 0.0
      %5518 = vmatmul.mubr.f32.gmra.mrb[0].mxu0 %v3983
      %v5519 = vpop.f32.mrb[0].mxu0
      %v5520 = vadd.f32 0.0, %v5519
      %v5521 = vpop.f32.mrb[0].mxu0
      %5522 = vmatprep.mubr.f32.mxu0 0.0
      %5523 = vmatmul.mubr.f32.gmra.mrb[0].mxu0 %v3985
      %v5524 = vpop.f32.mrb[0].mxu0
      %v5525 = vadd.f32 0.0, %v5524
      %v5526 = vpop.f32.mrb[0].mxu0
      %5527 = vmatprep.mubr.f32.mxu0 0.0
      %5528 = vmatmul.mubr.f32.gmra.mrb[0].mxu0 %v3987
      %v5529 = vpop.f32.mrb[0].mxu0
      %v5530 = vadd.f32 0.0, %v5529
      %v5531 = vpop.f32.mrb[0].mxu0
      %5532 = vmatprep.mubr.f32.mxu0 0.0
      %5533 = vmatmul.mubr.f32.gmra.mrb[0].mxu0 %v3989
      %v5534 = vpop.f32.mrb[0].mxu0
      %v5535 = vadd.f32 0.0, %v5534
      %v5536 = vpop.f32.mrb[0].mxu0
      %5537 = vmatprep.mubr.f32.mxu0 0.0
      %5538 = vmatmul.mubr.f32.gmra.mrb[0].mxu0 %v3991
      %v5539 = vpop.f32.mrb[0].mxu0
      %v5540 = vadd.f32 0.0, %v5539
      %v5541 = vpop.f32.mrb[0].mxu0
      %5542 = vmatprep.mubr.f32.mxu0 0.0
      %5543 = vmatmul.mubr.f32.gmra.mrb[0].mxu0 %v3993
      %v5544 = vpop.f32.mrb[0].mxu0
      %v5545 = vadd.f32 0.0, %v5544
      %v5546 = vpop.f32.mrb[0].mxu0
      %5547 = vmatprep.mubr.f32.mxu0 0.0
      %5548 = vmatmul.mubr.f32.gmra.mrb[0].mxu0 %v3995
      %v5549 = vpop.f32.mrb[0].mxu0
      %v5550 = vadd.f32 0.0, %v5549
      %v5551 = vpop.f32.mrb[0].mxu0
      %5552 = vmatprep.mubr.f32.mxu0 0.0
      %5553 = vmatmul.mubr.f32.gmra.mrb[0].mxu0 %v3997
      %v5554 = vpop.f32.mrb[0].mxu0
      %v5555 = vadd.f32 0.0, %v5554
      %v5556 = vpop.f32.mrb[0].mxu0
      %5557 = vmatprep.mubr.f32.mxu0 0.0
      %5558 = vmatmul.mubr.f32.gmra.mrb[0].mxu0 %v3999
      %v5559 = vpop.f32.mrb[0].mxu0
      %v5560 = vadd.f32 0.0, %v5559
      %v5561 = vpop.f32.mrb[0].mxu0
      %5562 = vmatprep.mubr.f32.mxu0 0.0
      %5563 = vmatmul.mubr.f32.gmra.mrb[0].mxu0 %v4001
      %v5564 = vpop.f32.mrb[0].mxu0
      %v5565 = vadd.f32 0.0, %v5564
      %v5566 = vpop.f32.mrb[0].mxu0
      %5567 = vmatprep.mubr.f32.mxu0 0.0
      %5568 = vmatmul.mubr.f32.gmra.mrb[0].mxu0 %v4003
      %v5569 = vpop.f32.mrb[0].mxu0
      %v5570 = vadd.f32 0.0, %v5569
      %v5571 = vpop.f32.mrb[0].mxu0
      %5572 = vmatprep.mubr.f32.mxu0 0.0
      %5573 = vmatmul.mubr.f32.gmra.mrb[0].mxu0 %v4005
      %v5574 = vpop.f32.mrb[0].mxu0
      %v5575 = vadd.f32 0.0, %v5574
      %v5576 = vpop.f32.mrb[0].mxu0
      %5577 = vmatprep.mubr.f32.mxu0 0.0
      %5578 = vmatmul.mubr.f32.gmra.mrb[0].mxu0 %v4007
      %v5579 = vpop.f32.mrb[0].mxu0
      %v5580 = vadd.f32 0.0, %v5579
      %v5581 = vpop.f32.mrb[0].mxu0
      %5582 = vmatprep.mubr.f32.mxu0 0.0
      %5583 = vmatmul.mubr.f32.gmra.mrb[0].mxu0 %v4009
      %v5584 = vpop.f32.mrb[0].mxu0
      %v5585 = vadd.f32 0.0, %v5584
      %v5586 = vpop.f32.mrb[0].mxu0
      %5587 = vmatprep.mubr.f32.mxu0 0.0
      %5588 = vmatmul.mubr.f32.gmra.mrb[0].mxu0 %v4011
      %v5589 = vpop.f32.mrb[0].mxu0
      %v5590 = vadd.f32 0.0, %v5589
      %v5591 = vpop.f32.mrb[0].mxu0
      %5592 = vmatprep.mubr.f32.mxu0 0.0
      %5593 = vmatmul.mubr.f32.gmra.mrb[0].mxu0 %v4013
      %v5594 = vpop.f32.mrb[0].mxu0
      %v5595 = vadd.f32 0.0, %v5594
      %v5596 = vpop.f32.mrb[0].mxu0
      %5597 = vmatprep.mubr.f32.mxu0 0.0
      %5598 = vmatmul.mubr.f32.gmra.mrb[0].mxu0 %v4015
      %v5599 = vpop.f32.mrb[0].mxu0
      %v5600 = vadd.f32 0.0, %v5599
      %v5601 = vpop.f32.mrb[0].mxu0
      %5602 = vmatprep.mubr.f32.mxu0 0.0
      %5603 = vmatmul.mubr.f32.gmra.mrb[0].mxu0 %v4017
      %v5604 = vpop.f32.mrb[0].mxu0
      %v5605 = vadd.f32 0.0, %v5604
      %v5606 = vpop.f32.mrb[0].mxu0
      %5607 = vmatprep.mubr.f32.mxu0 0.0
      %5608 = vmatmul.mubr.f32.gmra.mrb[0].mxu0 %v4019
      %v5609 = vpop.f32.mrb[0].mxu0
      %v5610 = vadd.f32 0.0, %v5609
      %v5611 = vpop.f32.mrb[0].mxu0
      %5612 = vmatprep.mubr.f32.mxu0 0.0
      %5613 = vmatmul.mubr.f32.gmra.mrb[0].mxu0 %v4021
      %v5614 = vpop.f32.mrb[0].mxu0
      %v5615 = vadd.f32 0.0, %v5614
      %v5616 = vpop.f32.mrb[0].mxu0
      %5617 = vmatprep.mubr.f32.mxu0 0.0
      %5618 = vmatmul.mubr.f32.gmra.mrb[0].mxu0 %v4023
      %v5619 = vpop.f32.mrb[0].mxu0
      %v5620 = vadd.f32 0.0, %v5619
      %v5621 = vpop.f32.mrb[0].mxu0
      %5622 = vmatprep.mubr.f32.mxu0 0.0
      %5623 = vmatmul.mubr.f32.gmra.mrb[0].mxu0 %v4025
      %v5624 = vpop.f32.mrb[0].mxu0
      %v5625 = vadd.f32 0.0, %v5624
      %v5626 = vpop.f32.mrb[0].mxu0
      %5627 = vmatprep.mubr.f32.mxu0 0.0
      %5628 = vmatmul.mubr.f32.gmra.mrb[0].mxu0 %v4027
      %v5629 = vpop.f32.mrb[0].mxu0
      %v5630 = vadd.f32 0.0, %v5629
      %v5631 = vpop.f32.mrb[0].mxu0
      %5632 = vmatprep.mubr.f32.mxu0 0.0
      %5633 = vmatmul.mubr.f32.gmra.mrb[0].mxu0 %v4029
      %v5634 = vpop.f32.mrb[0].mxu0
      %v5635 = vadd.f32 0.0, %v5634
      %v5636 = vpop.f32.mrb[0].mxu0
      %5637 = vmatprep.mubr.f32.mxu0 0.0
      %5638 = vmatmul.mubr.f32.gmra.mrb[0].mxu0 %v4031
      %v5639 = vpop.f32.mrb[0].mxu0
      %v5640 = vadd.f32 0.0, %v5639
      %v5641 = vpop.f32.mrb[0].mxu0
      %5642 = vmatprep.mubr.f32.mxu0 0.0
      %5643 = vmatmul.mubr.f32.gmra.mrb[0].mxu0 %v4033
      %v5644 = vpop.f32.mrb[0].mxu0
      %v5645 = vadd.f32 0.0, %v5644
      %v5646 = vpop.f32.mrb[0].mxu0
      %5647 = vmatprep.mubr.f32.mxu0 0.0
      %5648 = vmatmul.mubr.f32.gmra.mrb[0].mxu0 %v4035
      %v5649 = vpop.f32.mrb[0].mxu0
      %v5650 = vadd.f32 0.0, %v5649
      %v5651 = vpop.f32.mrb[0].mxu0
      %5652 = vmatprep.mubr.f32.mxu0 0.0
      %5653 = vmatmul.mubr.f32.gmra.mrb[0].mxu0 %v4037
      %v5654 = vpop.f32.mrb[0].mxu0
      %v5655 = vadd.f32 0.0, %v5654
      %v5656 = vpop.f32.mrb[0].mxu0
      %5657 = vmatprep.mubr.f32.mxu0 0.0
      %5658 = vmatmul.mubr.f32.gmra.mrb[0].mxu0 %v4659
      %v5659 = vpop.f32.mrb[0].mxu0
      %v5660 = vadd.f32 0.0, %v5659
      %v5661 = vpop.f32.mrb[0].mxu0
      %5662 = vmatprep.mubr.f32.mxu0 0.0
      %5663 = vmatmul.mubr.f32.gmra.mrb[0].mxu0 %v4661
      %v5664 = vpop.f32.mrb[0].mxu0
      %v5665 = vadd.f32 0.0, %v5664
      %v5666 = vpop.f32.mrb[0].mxu0
      %5667 = vmatprep.mubr.f32.mxu0 0.0
      %5668 = vmatmul.mubr.f32.gmra.mrb[0].mxu0 %v3977
      %v5669 = vpop.f32.mrb[0].mxu0
      %v5670 = vadd.f32 0.0, %v5669
      %v5671 = vpop.f32.mrb[0].mxu0
      %5672 = vmatprep.mubr.f32.mxu0 0.0
      %5673 = vmatmul.mubr.f32.gmra.mrb[0].mxu0 %v3977
      %v5674 = vpop.f32.mrb[0].mxu0
      %v5675 = vadd.f32 0.0, %v5674
      %v5676 = vpop.f32.mrb[0].mxu0
      %5677 = vdwg.mxu0
      %v5678 = vadd.f32 %v5421, %v5520
      %v5679 = vadd.f32 %v5422, %v5525
      %v5680 = vadd.f32 %v5423, %v5530
      %v5681 = vadd.f32 %v5424, %v5535
      %v5682 = vadd.f32 %v5425, %v5540
      %v5683 = vadd.f32 %v5426, %v5545
      %v5684 = vadd.f32 %v5427, %v5550
      %v5685 = vadd.f32 %v5428, %v5555
      %v5686 = vadd.f32 %v5429, %v5560
      %v5687 = vadd.f32 %v5430, %v5565
      %v5688 = vadd.f32 %v5431, %v5570
      %v5689 = vadd.f32 %v5432, %v5575
      %v5690 = vadd.f32 %v5433, %v5580
      %v5691 = vadd.f32 %v5434, %v5585
      %v5692 = vadd.f32 %v5435, %v5590
      %v5693 = vadd.f32 %v5436, %v5595
      %v5694 = vadd.f32 %v5437, %v5600
      %v5695 = vadd.f32 %v5438, %v5605
      %v5696 = vadd.f32 %v5439, %v5610
      %v5697 = vadd.f32 %v5440, %v5615
      %v5698 = vadd.f32 %v5441, %v5620
      %v5699 = vadd.f32 %v5442, %v5625
      %v5700 = vadd.f32 %v5443, %v5630
      %v5701 = vadd.f32 %v5444, %v5635
      %v5702 = vadd.f32 %v5445, %v5640
      %v5703 = vadd.f32 %v5446, %v5645
      %v5704 = vadd.f32 %v5447, %v5650
      %v5705 = vadd.f32 %v5448, %v5655
      %v5706 = vadd.f32 %v5449, %v5660
      %v5707 = vadd.f32 %v5450, %v5665
      %v5708 = vadd.f32 %v5451, %v5670
      %v5709 = vadd.f32 %v5452, %v5675
      %5710 = vmatprep.subr.mxu0 0.0
      %5711 = vmatpush1.msra.mxu0 %v219
      %5712 = vmatprep.subr.mxu0 0.0
      %5713 = vmatpush1.msra.mxu0 0.0
      %5714 = vmatprep.subr.mxu0 0.0
      %5715 = vmatpush1.msra.mxu0 0.0
      %5716 = vmatprep.subr.mxu0 0.0
      %5717 = vmatpush1.msra.mxu0 0.0
      %5718 = vmatprep.subr.mxu0 0.0
      %5719 = vmatpush1.msra.mxu0 0.0
      %5720 = vmatprep.subr.mxu0 0.0
      %5721 = vmatpush1.msra.mxu0 0.0
      %5722 = vmatprep.subr.mxu0 0.0
      %5723 = vmatpush1.msra.mxu0 0.0
      %5724 = vmatprep.subr.mxu0 0.0
      %5725 = vmatpush1.msra.mxu0 0.0
      %5726 = vmatprep.subr.mxu0 0.0
      %5727 = vmatpush1.msra.mxu0 0.0
      %5728 = vmatprep.subr.mxu0 0.0
      %5729 = vmatpush1.msra.mxu0 0.0
      %5730 = vmatprep.subr.mxu0 0.0
      %5731 = vmatpush1.msra.mxu0 0.0
      %5732 = vmatprep.subr.mxu0 0.0
      %5733 = vmatpush1.msra.mxu0 0.0
      %5734 = vmatprep.subr.mxu0 0.0
      %5735 = vmatpush1.msra.mxu0 0.0
      %5736 = vmatprep.subr.mxu0 0.0
      %5737 = vmatpush1.msra.mxu0 0.0
      %5738 = vmatprep.subr.mxu0 0.0
      %5739 = vmatpush1.msra.mxu0 0.0
      %5740 = vmatprep.subr.mxu0 0.0
      %5741 = vmatpush1.msra.mxu0 0.0
      %5742 = vmatprep.subr.mxu0 0.0
      %5743 = vmatpush1.msra.mxu0 0.0
      %5744 = vmatprep.subr.mxu0 0.0
      %5745 = vmatpush1.msra.mxu0 0.0
      %5746 = vmatprep.subr.mxu0 0.0
      %5747 = vmatpush1.msra.mxu0 0.0
      %5748 = vmatprep.subr.mxu0 0.0
      %5749 = vmatpush1.msra.mxu0 0.0
      %5750 = vmatprep.subr.mxu0 0.0
      %5751 = vmatpush1.msra.mxu0 0.0
      %5752 = vmatprep.subr.mxu0 0.0
      %5753 = vmatpush1.msra.mxu0 0.0
      %5754 = vmatprep.subr.mxu0 0.0
      %5755 = vmatpush1.msra.mxu0 0.0
      %5756 = vmatprep.subr.mxu0 0.0
      %5757 = vmatpush1.msra.mxu0 0.0
      %5758 = vmatprep.subr.mxu0 0.0
      %5759 = vmatpush1.msra.mxu0 0.0
      %5760 = vmatprep.subr.mxu0 0.0
      %5761 = vmatpush1.msra.mxu0 0.0
      %5762 = vmatprep.subr.mxu0 0.0
      %5763 = vmatpush1.msra.mxu0 0.0
      %5764 = vmatprep.subr.mxu0 0.0
      %5765 = vmatpush1.msra.mxu0 0.0
      %5766 = vmatprep.subr.mxu0 0.0
      %5767 = vmatpush1.msra.mxu0 0.0
      %5768 = vmatprep.subr.mxu0 0.0
      %5769 = vmatpush1.msra.mxu0 0.0
      %5770 = vmatprep.subr.mxu0 0.0
      %5771 = vmatpush1.msra.mxu0 0.0
      %5772 = vmatprep.subr.mxu0 0.0
      %5773 = vmatpush1.msra.mxu0 0.0
      %5774 = vmatprep.mubr.f32.mxu0 0.0
      %5775 = vmatmul.mubr.f32.gmra.mrb[0].mxu0 %v3696
      %v5776 = vpop.f32.mrb[0].mxu0
      %v5777 = vadd.f32 0.0, %v5776
      %v5778 = vpop.f32.mrb[0].mxu0
      %5779 = vmatprep.mubr.f32.mxu0 0.0
      %5780 = vmatmul.mubr.f32.gmra.mrb[0].mxu0 %v3698
      %v5781 = vpop.f32.mrb[0].mxu0
      %v5782 = vadd.f32 0.0, %v5781
      %v5783 = vpop.f32.mrb[0].mxu0
      %5784 = vmatprep.mubr.f32.mxu0 0.0
      %5785 = vmatmul.mubr.f32.gmra.mrb[0].mxu0 %v3700
      %v5786 = vpop.f32.mrb[0].mxu0
      %v5787 = vadd.f32 0.0, %v5786
      %v5788 = vpop.f32.mrb[0].mxu0
      %5789 = vmatprep.mubr.f32.mxu0 0.0
      %5790 = vmatmul.mubr.f32.gmra.mrb[0].mxu0 %v3702
      %v5791 = vpop.f32.mrb[0].mxu0
      %v5792 = vadd.f32 0.0, %v5791
      %v5793 = vpop.f32.mrb[0].mxu0
      %5794 = vmatprep.mubr.f32.mxu0 0.0
      %5795 = vmatmul.mubr.f32.gmra.mrb[0].mxu0 %v3704
      %v5796 = vpop.f32.mrb[0].mxu0
      %v5797 = vadd.f32 0.0, %v5796
      %v5798 = vpop.f32.mrb[0].mxu0
      %5799 = vmatprep.mubr.f32.mxu0 0.0
      %5800 = vmatmul.mubr.f32.gmra.mrb[0].mxu0 %v3706
      %v5801 = vpop.f32.mrb[0].mxu0
      %v5802 = vadd.f32 0.0, %v5801
      %v5803 = vpop.f32.mrb[0].mxu0
      %5804 = vmatprep.mubr.f32.mxu0 0.0
      %5805 = vmatmul.mubr.f32.gmra.mrb[0].mxu0 %v3708
      %v5806 = vpop.f32.mrb[0].mxu0
      %v5807 = vadd.f32 0.0, %v5806
      %v5808 = vpop.f32.mrb[0].mxu0
      %5809 = vmatprep.mubr.f32.mxu0 0.0
      %5810 = vmatmul.mubr.f32.gmra.mrb[0].mxu0 %v3710
      %v5811 = vpop.f32.mrb[0].mxu0
      %v5812 = vadd.f32 0.0, %v5811
      %v5813 = vpop.f32.mrb[0].mxu0
      %5814 = vmatprep.mubr.f32.mxu0 0.0
      %5815 = vmatmul.mubr.f32.gmra.mrb[0].mxu0 %v3712
      %v5816 = vpop.f32.mrb[0].mxu0
      %v5817 = vadd.f32 0.0, %v5816
      %v5818 = vpop.f32.mrb[0].mxu0
      %5819 = vmatprep.mubr.f32.mxu0 0.0
      %5820 = vmatmul.mubr.f32.gmra.mrb[0].mxu0 %v3714
      %v5821 = vpop.f32.mrb[0].mxu0
      %v5822 = vadd.f32 0.0, %v5821
      %v5823 = vpop.f32.mrb[0].mxu0
      %5824 = vmatprep.mubr.f32.mxu0 0.0
      %5825 = vmatmul.mubr.f32.gmra.mrb[0].mxu0 %v3716
      %v5826 = vpop.f32.mrb[0].mxu0
      %v5827 = vadd.f32 0.0, %v5826
      %v5828 = vpop.f32.mrb[0].mxu0
      %5829 = vmatprep.mubr.f32.mxu0 0.0
      %5830 = vmatmul.mubr.f32.gmra.mrb[0].mxu0 %v3718
      %v5831 = vpop.f32.mrb[0].mxu0
      %v5832 = vadd.f32 0.0, %v5831
      %v5833 = vpop.f32.mrb[0].mxu0
      %5834 = vmatprep.mubr.f32.mxu0 0.0
      %5835 = vmatmul.mubr.f32.gmra.mrb[0].mxu0 %v3720
      %v5836 = vpop.f32.mrb[0].mxu0
      %v5837 = vadd.f32 0.0, %v5836
      %v5838 = vpop.f32.mrb[0].mxu0
      %5839 = vmatprep.mubr.f32.mxu0 0.0
      %5840 = vmatmul.mubr.f32.gmra.mrb[0].mxu0 %v3722
      %v5841 = vpop.f32.mrb[0].mxu0
      %v5842 = vadd.f32 0.0, %v5841
      %v5843 = vpop.f32.mrb[0].mxu0
      %5844 = vmatprep.mubr.f32.mxu0 0.0
      %5845 = vmatmul.mubr.f32.gmra.mrb[0].mxu0 %v3724
      %v5846 = vpop.f32.mrb[0].mxu0
      %v5847 = vadd.f32 0.0, %v5846
      %v5848 = vpop.f32.mrb[0].mxu0
      %5849 = vmatprep.mubr.f32.mxu0 0.0
      %5850 = vmatmul.mubr.f32.gmra.mrb[0].mxu0 %v3726
      %v5851 = vpop.f32.mrb[0].mxu0
      %v5852 = vadd.f32 0.0, %v5851
      %v5853 = vpop.f32.mrb[0].mxu0
      %5854 = vmatprep.mubr.f32.mxu0 0.0
      %5855 = vmatmul.mubr.f32.gmra.mrb[0].mxu0 %v3728
      %v5856 = vpop.f32.mrb[0].mxu0
      %v5857 = vadd.f32 0.0, %v5856
      %v5858 = vpop.f32.mrb[0].mxu0
      %5859 = vmatprep.mubr.f32.mxu0 0.0
      %5860 = vmatmul.mubr.f32.gmra.mrb[0].mxu0 %v3730
      %v5861 = vpop.f32.mrb[0].mxu0
      %v5862 = vadd.f32 0.0, %v5861
      %v5863 = vpop.f32.mrb[0].mxu0
      %5864 = vmatprep.mubr.f32.mxu0 0.0
      %5865 = vmatmul.mubr.f32.gmra.mrb[0].mxu0 %v3732
      %v5866 = vpop.f32.mrb[0].mxu0
      %v5867 = vadd.f32 0.0, %v5866
      %v5868 = vpop.f32.mrb[0].mxu0
      %5869 = vmatprep.mubr.f32.mxu0 0.0
      %5870 = vmatmul.mubr.f32.gmra.mrb[0].mxu0 %v3734
      %v5871 = vpop.f32.mrb[0].mxu0
      %v5872 = vadd.f32 0.0, %v5871
      %v5873 = vpop.f32.mrb[0].mxu0
      %5874 = vmatprep.mubr.f32.mxu0 0.0
      %5875 = vmatmul.mubr.f32.gmra.mrb[0].mxu0 %v3736
      %v5876 = vpop.f32.mrb[0].mxu0
      %v5877 = vadd.f32 0.0, %v5876
      %v5878 = vpop.f32.mrb[0].mxu0
      %5879 = vmatprep.mubr.f32.mxu0 0.0
      %5880 = vmatmul.mubr.f32.gmra.mrb[0].mxu0 %v3738
      %v5881 = vpop.f32.mrb[0].mxu0
      %v5882 = vadd.f32 0.0, %v5881
      %v5883 = vpop.f32.mrb[0].mxu0
      %5884 = vmatprep.mubr.f32.mxu0 0.0
      %5885 = vmatmul.mubr.f32.gmra.mrb[0].mxu0 %v3740
      %v5886 = vpop.f32.mrb[0].mxu0
      %v5887 = vadd.f32 0.0, %v5886
      %v5888 = vpop.f32.mrb[0].mxu0
      %5889 = vmatprep.mubr.f32.mxu0 0.0
      %5890 = vmatmul.mubr.f32.gmra.mrb[0].mxu0 %v3742
      %v5891 = vpop.f32.mrb[0].mxu0
      %v5892 = vadd.f32 0.0, %v5891
      %v5893 = vpop.f32.mrb[0].mxu0
      %5894 = vmatprep.mubr.f32.mxu0 0.0
      %5895 = vmatmul.mubr.f32.gmra.mrb[0].mxu0 %v3744
      %v5896 = vpop.f32.mrb[0].mxu0
      %v5897 = vadd.f32 0.0, %v5896
      %v5898 = vpop.f32.mrb[0].mxu0
      %5899 = vmatprep.mubr.f32.mxu0 0.0
      %5900 = vmatmul.mubr.f32.gmra.mrb[0].mxu0 %v3746
      %v5901 = vpop.f32.mrb[0].mxu0
      %v5902 = vadd.f32 0.0, %v5901
      %v5903 = vpop.f32.mrb[0].mxu0
      %5904 = vmatprep.mubr.f32.mxu0 0.0
      %5905 = vmatmul.mubr.f32.gmra.mrb[0].mxu0 %v3748
      %v5906 = vpop.f32.mrb[0].mxu0
      %v5907 = vadd.f32 0.0, %v5906
      %v5908 = vpop.f32.mrb[0].mxu0
      %5909 = vmatprep.mubr.f32.mxu0 0.0
      %5910 = vmatmul.mubr.f32.gmra.mrb[0].mxu0 %v3750
      %v5911 = vpop.f32.mrb[0].mxu0
      %v5912 = vadd.f32 0.0, %v5911
      %v5913 = vpop.f32.mrb[0].mxu0
      %5914 = vmatprep.mubr.f32.mxu0 0.0
      %5915 = vmatmul.mubr.f32.gmra.mrb[0].mxu0 %v4926
      %v5916 = vpop.f32.mrb[0].mxu0
      %v5917 = vadd.f32 0.0, %v5916
      %v5918 = vpop.f32.mrb[0].mxu0
      %5919 = vmatprep.mubr.f32.mxu0 0.0
      %5920 = vmatmul.mubr.f32.gmra.mrb[0].mxu0 %v4928
      %v5921 = vpop.f32.mrb[0].mxu0
      %v5922 = vadd.f32 0.0, %v5921
      %v5923 = vpop.f32.mrb[0].mxu0
      %5924 = vmatprep.mubr.f32.mxu0 0.0
      %5925 = vmatmul.mubr.f32.gmra.mrb[0].mxu0 %v3690
      %v5926 = vpop.f32.mrb[0].mxu0
      %v5927 = vadd.f32 0.0, %v5926
      %v5928 = vpop.f32.mrb[0].mxu0
      %5929 = vmatprep.mubr.f32.mxu0 0.0
      %5930 = vmatmul.mubr.f32.gmra.mrb[0].mxu0 %v3690
      %v5931 = vpop.f32.mrb[0].mxu0
      %v5932 = vadd.f32 0.0, %v5931
      %v5933 = vpop.f32.mrb[0].mxu0
      %5934 = vdwg.mxu0
      %v5935 = vadd.f32 %v5678, %v5777
      %v5936 = vadd.f32 %v5679, %v5782
      %v5937 = vadd.f32 %v5680, %v5787
      %v5938 = vadd.f32 %v5681, %v5792
      %v5939 = vadd.f32 %v5682, %v5797
      %v5940 = vadd.f32 %v5683, %v5802
      %v5941 = vadd.f32 %v5684, %v5807
      %v5942 = vadd.f32 %v5685, %v5812
      %v5943 = vadd.f32 %v5686, %v5817
      %v5944 = vadd.f32 %v5687, %v5822
      %v5945 = vadd.f32 %v5688, %v5827
      %v5946 = vadd.f32 %v5689, %v5832
      %v5947 = vadd.f32 %v5690, %v5837
      %v5948 = vadd.f32 %v5691, %v5842
      %v5949 = vadd.f32 %v5692, %v5847
      %v5950 = vadd.f32 %v5693, %v5852
      %v5951 = vadd.f32 %v5694, %v5857
      %v5952 = vadd.f32 %v5695, %v5862
      %v5953 = vadd.f32 %v5696, %v5867
      %v5954 = vadd.f32 %v5697, %v5872
      %v5955 = vadd.f32 %v5698, %v5877
      %v5956 = vadd.f32 %v5699, %v5882
      %v5957 = vadd.f32 %v5700, %v5887
      %v5958 = vadd.f32 %v5701, %v5892
      %v5959 = vadd.f32 %v5702, %v5897
      %v5960 = vadd.f32 %v5703, %v5902
      %v5961 = vadd.f32 %v5704, %v5907
      %v5962 = vadd.f32 %v5705, %v5912
      %v5963 = vadd.f32 %v5706, %v5917
      %v5964 = vadd.f32 %v5707, %v5922
      %v5965 = vadd.f32 %v5708, %v5927
      %v5966 = vadd.f32 %v5709, %v5932
      %5967 = vmatprep.subr.mxu0 0.0
      %5968 = vmatpush1.msra.mxu0 %v220
      %5969 = vmatprep.subr.mxu0 0.0
      %5970 = vmatpush1.msra.mxu0 0.0
      %5971 = vmatprep.subr.mxu0 0.0
      %5972 = vmatpush1.msra.mxu0 0.0
      %5973 = vmatprep.subr.mxu0 0.0
      %5974 = vmatpush1.msra.mxu0 0.0
      %5975 = vmatprep.subr.mxu0 0.0
      %5976 = vmatpush1.msra.mxu0 0.0
      %5977 = vmatprep.subr.mxu0 0.0
      %5978 = vmatpush1.msra.mxu0 0.0
      %5979 = vmatprep.subr.mxu0 0.0
      %5980 = vmatpush1.msra.mxu0 0.0
      %5981 = vmatprep.subr.mxu0 0.0
      %5982 = vmatpush1.msra.mxu0 0.0
      %5983 = vmatprep.subr.mxu0 0.0
      %5984 = vmatpush1.msra.mxu0 0.0
      %5985 = vmatprep.subr.mxu0 0.0
      %5986 = vmatpush1.msra.mxu0 0.0
      %5987 = vmatprep.subr.mxu0 0.0
      %5988 = vmatpush1.msra.mxu0 0.0
      %5989 = vmatprep.subr.mxu0 0.0
      %5990 = vmatpush1.msra.mxu0 0.0
      %5991 = vmatprep.subr.mxu0 0.0
      %5992 = vmatpush1.msra.mxu0 0.0
      %5993 = vmatprep.subr.mxu0 0.0
      %5994 = vmatpush1.msra.mxu0 0.0
      %5995 = vmatprep.subr.mxu0 0.0
      %5996 = vmatpush1.msra.mxu0 0.0
      %5997 = vmatprep.subr.mxu0 0.0
      %5998 = vmatpush1.msra.mxu0 0.0
      %5999 = vmatprep.subr.mxu0 0.0
      %6000 = vmatpush1.msra.mxu0 0.0
      %6001 = vmatprep.subr.mxu0 0.0
      %6002 = vmatpush1.msra.mxu0 0.0
      %6003 = vmatprep.subr.mxu0 0.0
      %6004 = vmatpush1.msra.mxu0 0.0
      %6005 = vmatprep.subr.mxu0 0.0
      %6006 = vmatpush1.msra.mxu0 0.0
      %6007 = vmatprep.subr.mxu0 0.0
      %6008 = vmatpush1.msra.mxu0 0.0
      %6009 = vmatprep.subr.mxu0 0.0
      %6010 = vmatpush1.msra.mxu0 0.0
      %6011 = vmatprep.subr.mxu0 0.0
      %6012 = vmatpush1.msra.mxu0 0.0
      %6013 = vmatprep.subr.mxu0 0.0
      %6014 = vmatpush1.msra.mxu0 0.0
      %6015 = vmatprep.subr.mxu0 0.0
      %6016 = vmatpush1.msra.mxu0 0.0
      %6017 = vmatprep.subr.mxu0 0.0
      %6018 = vmatpush1.msra.mxu0 0.0
      %6019 = vmatprep.subr.mxu0 0.0
      %6020 = vmatpush1.msra.mxu0 0.0
      %6021 = vmatprep.subr.mxu0 0.0
      %6022 = vmatpush1.msra.mxu0 0.0
      %6023 = vmatprep.subr.mxu0 0.0
      %6024 = vmatpush1.msra.mxu0 0.0
      %6025 = vmatprep.subr.mxu0 0.0
      %6026 = vmatpush1.msra.mxu0 0.0
      %6027 = vmatprep.subr.mxu0 0.0
      %6028 = vmatpush1.msra.mxu0 0.0
      %6029 = vmatprep.subr.mxu0 0.0
      %6030 = vmatpush1.msra.mxu0 0.0
      %6031 = vmatprep.mubr.f32.mxu0 0.0
      %6032 = vmatmul.mubr.f32.gmra.mrb[0].mxu0 %v4345
      %v6033 = vpop.f32.mrb[0].mxu0
      %v6034 = vadd.f32 0.0, %v6033
      %v6035 = vpop.f32.mrb[0].mxu0
      %6036 = vmatprep.mubr.f32.mxu0 0.0
      %6037 = vmatmul.mubr.f32.gmra.mrb[0].mxu0 %v4347
      %v6038 = vpop.f32.mrb[0].mxu0
      %v6039 = vadd.f32 0.0, %v6038
      %v6040 = vpop.f32.mrb[0].mxu0
      %6041 = vmatprep.mubr.f32.mxu0 0.0
      %6042 = vmatmul.mubr.f32.gmra.mrb[0].mxu0 %v4349
      %v6043 = vpop.f32.mrb[0].mxu0
      %v6044 = vadd.f32 0.0, %v6043
      %v6045 = vpop.f32.mrb[0].mxu0
      %6046 = vmatprep.mubr.f32.mxu0 0.0
      %6047 = vmatmul.mubr.f32.gmra.mrb[0].mxu0 %v4351
      %v6048 = vpop.f32.mrb[0].mxu0
      %v6049 = vadd.f32 0.0, %v6048
      %v6050 = vpop.f32.mrb[0].mxu0
      %6051 = vmatprep.mubr.f32.mxu0 0.0
      %6052 = vmatmul.mubr.f32.gmra.mrb[0].mxu0 %v4353
      %v6053 = vpop.f32.mrb[0].mxu0
      %v6054 = vadd.f32 0.0, %v6053
      %v6055 = vpop.f32.mrb[0].mxu0
      %6056 = vmatprep.mubr.f32.mxu0 0.0
      %6057 = vmatmul.mubr.f32.gmra.mrb[0].mxu0 %v4355
      %v6058 = vpop.f32.mrb[0].mxu0
      %v6059 = vadd.f32 0.0, %v6058
      %v6060 = vpop.f32.mrb[0].mxu0
      %6061 = vmatprep.mubr.f32.mxu0 0.0
      %6062 = vmatmul.mubr.f32.gmra.mrb[0].mxu0 %v4357
      %v6063 = vpop.f32.mrb[0].mxu0
      %v6064 = vadd.f32 0.0, %v6063
      %v6065 = vpop.f32.mrb[0].mxu0
      %6066 = vmatprep.mubr.f32.mxu0 0.0
      %6067 = vmatmul.mubr.f32.gmra.mrb[0].mxu0 %v4359
      %v6068 = vpop.f32.mrb[0].mxu0
      %v6069 = vadd.f32 0.0, %v6068
      %v6070 = vpop.f32.mrb[0].mxu0
      %6071 = vmatprep.mubr.f32.mxu0 0.0
      %6072 = vmatmul.mubr.f32.gmra.mrb[0].mxu0 %v4361
      %v6073 = vpop.f32.mrb[0].mxu0
      %v6074 = vadd.f32 0.0, %v6073
      %v6075 = vpop.f32.mrb[0].mxu0
      %6076 = vmatprep.mubr.f32.mxu0 0.0
      %6077 = vmatmul.mubr.f32.gmra.mrb[0].mxu0 %v4363
      %v6078 = vpop.f32.mrb[0].mxu0
      %v6079 = vadd.f32 0.0, %v6078
      %v6080 = vpop.f32.mrb[0].mxu0
      %6081 = vmatprep.mubr.f32.mxu0 0.0
      %6082 = vmatmul.mubr.f32.gmra.mrb[0].mxu0 %v4365
      %v6083 = vpop.f32.mrb[0].mxu0
      %v6084 = vadd.f32 0.0, %v6083
      %v6085 = vpop.f32.mrb[0].mxu0
      %6086 = vmatprep.mubr.f32.mxu0 0.0
      %6087 = vmatmul.mubr.f32.gmra.mrb[0].mxu0 %v4367
      %v6088 = vpop.f32.mrb[0].mxu0
      %v6089 = vadd.f32 0.0, %v6088
      %v6090 = vpop.f32.mrb[0].mxu0
      %6091 = vmatprep.mubr.f32.mxu0 0.0
      %6092 = vmatmul.mubr.f32.gmra.mrb[0].mxu0 %v4369
      %v6093 = vpop.f32.mrb[0].mxu0
      %v6094 = vadd.f32 0.0, %v6093
      %v6095 = vpop.f32.mrb[0].mxu0
      %6096 = vmatprep.mubr.f32.mxu0 0.0
      %6097 = vmatmul.mubr.f32.gmra.mrb[0].mxu0 %v4371
      %v6098 = vpop.f32.mrb[0].mxu0
      %v6099 = vadd.f32 0.0, %v6098
      %v6100 = vpop.f32.mrb[0].mxu0
      %6101 = vmatprep.mubr.f32.mxu0 0.0
      %6102 = vmatmul.mubr.f32.gmra.mrb[0].mxu0 %v4373
      %v6103 = vpop.f32.mrb[0].mxu0
      %v6104 = vadd.f32 0.0, %v6103
      %v6105 = vpop.f32.mrb[0].mxu0
      %6106 = vmatprep.mubr.f32.mxu0 0.0
      %6107 = vmatmul.mubr.f32.gmra.mrb[0].mxu0 %v4375
      %v6108 = vpop.f32.mrb[0].mxu0
      %v6109 = vadd.f32 0.0, %v6108
      %v6110 = vpop.f32.mrb[0].mxu0
      %6111 = vmatprep.mubr.f32.mxu0 0.0
      %6112 = vmatmul.mubr.f32.gmra.mrb[0].mxu0 %v4377
      %v6113 = vpop.f32.mrb[0].mxu0
      %v6114 = vadd.f32 0.0, %v6113
      %v6115 = vpop.f32.mrb[0].mxu0
      %6116 = vmatprep.mubr.f32.mxu0 0.0
      %6117 = vmatmul.mubr.f32.gmra.mrb[0].mxu0 %v4379
      %v6118 = vpop.f32.mrb[0].mxu0
      %v6119 = vadd.f32 0.0, %v6118
      %v6120 = vpop.f32.mrb[0].mxu0
      %6121 = vmatprep.mubr.f32.mxu0 0.0
      %6122 = vmatmul.mubr.f32.gmra.mrb[0].mxu0 %v4381
      %v6123 = vpop.f32.mrb[0].mxu0
      %v6124 = vadd.f32 0.0, %v6123
      %v6125 = vpop.f32.mrb[0].mxu0
      %6126 = vmatprep.mubr.f32.mxu0 0.0
      %6127 = vmatmul.mubr.f32.gmra.mrb[0].mxu0 %v4383
      %v6128 = vpop.f32.mrb[0].mxu0
      %v6129 = vadd.f32 0.0, %v6128
      %v6130 = vpop.f32.mrb[0].mxu0
      %6131 = vmatprep.mubr.f32.mxu0 0.0
      %6132 = vmatmul.mubr.f32.gmra.mrb[0].mxu0 %v4385
      %v6133 = vpop.f32.mrb[0].mxu0
      %v6134 = vadd.f32 0.0, %v6133
      %v6135 = vpop.f32.mrb[0].mxu0
      %6136 = vmatprep.mubr.f32.mxu0 0.0
      %6137 = vmatmul.mubr.f32.gmra.mrb[0].mxu0 %v4387
      %v6138 = vpop.f32.mrb[0].mxu0
      %v6139 = vadd.f32 0.0, %v6138
      %v6140 = vpop.f32.mrb[0].mxu0
      %6141 = vmatprep.mubr.f32.mxu0 0.0
      %6142 = vmatmul.mubr.f32.gmra.mrb[0].mxu0 %v4389
      %v6143 = vpop.f32.mrb[0].mxu0
      %v6144 = vadd.f32 0.0, %v6143
      %v6145 = vpop.f32.mrb[0].mxu0
      %6146 = vmatprep.mubr.f32.mxu0 0.0
      %6147 = vmatmul.mubr.f32.gmra.mrb[0].mxu0 %v4391
      %v6148 = vpop.f32.mrb[0].mxu0
      %v6149 = vadd.f32 0.0, %v6148
      %v6150 = vpop.f32.mrb[0].mxu0
      %6151 = vmatprep.mubr.f32.mxu0 0.0
      %6152 = vmatmul.mubr.f32.gmra.mrb[0].mxu0 %v4393
      %v6153 = vpop.f32.mrb[0].mxu0
      %v6154 = vadd.f32 0.0, %v6153
      %v6155 = vpop.f32.mrb[0].mxu0
      %6156 = vmatprep.mubr.f32.mxu0 0.0
      %6157 = vmatmul.mubr.f32.gmra.mrb[0].mxu0 %v4395
      %v6158 = vpop.f32.mrb[0].mxu0
      %v6159 = vadd.f32 0.0, %v6158
      %v6160 = vpop.f32.mrb[0].mxu0
      %6161 = vmatprep.mubr.f32.mxu0 0.0
      %6162 = vmatmul.mubr.f32.gmra.mrb[0].mxu0 %v4397
      %v6163 = vpop.f32.mrb[0].mxu0
      %v6164 = vadd.f32 0.0, %v6163
      %v6165 = vpop.f32.mrb[0].mxu0
      %6166 = vmatprep.mubr.f32.mxu0 0.0
      %6167 = vmatmul.mubr.f32.gmra.mrb[0].mxu0 %v4399
      %v6168 = vpop.f32.mrb[0].mxu0
      %v6169 = vadd.f32 0.0, %v6168
      %v6170 = vpop.f32.mrb[0].mxu0
      %6171 = vmatprep.mubr.f32.mxu0 0.0
      %6172 = vmatmul.mubr.f32.gmra.mrb[0].mxu0 %v5192
      %v6173 = vpop.f32.mrb[0].mxu0
      %v6174 = vadd.f32 0.0, %v6173
      %v6175 = vpop.f32.mrb[0].mxu0
      %6176 = vmatprep.mubr.f32.mxu0 0.0
      %6177 = vmatmul.mubr.f32.gmra.mrb[0].mxu0 %v5194
      %v6178 = vpop.f32.mrb[0].mxu0
      %v6179 = vadd.f32 0.0, %v6178
      %v6180 = vpop.f32.mrb[0].mxu0
      %6181 = vmatprep.mubr.f32.mxu0 0.0
      %6182 = vmatmul.mubr.f32.gmra.mrb[0].mxu0 %v4339
      %v6183 = vpop.f32.mrb[0].mxu0
      %v6184 = vadd.f32 0.0, %v6183
      %v6185 = vpop.f32.mrb[0].mxu0
      %6186 = vmatprep.mubr.f32.mxu0 0.0
      %6187 = vmatmul.mubr.f32.gmra.mrb[0].mxu0 %v4339
      %v6188 = vpop.f32.mrb[0].mxu0
      %v6189 = vadd.f32 0.0, %v6188
      %v6190 = vpop.f32.mrb[0].mxu0
      %6191 = vdwg.mxu0
      %v6192 = vadd.f32 %v5935, %v6034
      %v6193 = vadd.f32 %v5936, %v6039
      %v6194 = vadd.f32 %v5937, %v6044
      %v6195 = vadd.f32 %v5938, %v6049
      %v6196 = vadd.f32 %v5939, %v6054
      %v6197 = vadd.f32 %v5940, %v6059
      %v6198 = vadd.f32 %v5941, %v6064
      %v6199 = vadd.f32 %v5942, %v6069
      %v6200 = vadd.f32 %v5943, %v6074
      %v6201 = vadd.f32 %v5944, %v6079
      %v6202 = vadd.f32 %v5945, %v6084
      %v6203 = vadd.f32 %v5946, %v6089
      %v6204 = vadd.f32 %v5947, %v6094
      %v6205 = vadd.f32 %v5948, %v6099
      %v6206 = vadd.f32 %v5949, %v6104
      %v6207 = vadd.f32 %v5950, %v6109
      %v6208 = vadd.f32 %v5951, %v6114
      %v6209 = vadd.f32 %v5952, %v6119
      %v6210 = vadd.f32 %v5953, %v6124
      %v6211 = vadd.f32 %v5954, %v6129
      %v6212 = vadd.f32 %v5955, %v6134
      %v6213 = vadd.f32 %v5956, %v6139
      %v6214 = vadd.f32 %v5957, %v6144
      %v6215 = vadd.f32 %v5958, %v6149
      %v6216 = vadd.f32 %v5959, %v6154
      %v6217 = vadd.f32 %v5960, %v6159
      %v6218 = vadd.f32 %v5961, %v6164
      %v6219 = vadd.f32 %v5962, %v6169
      %v6220 = vadd.f32 %v5963, %v6174
      %v6221 = vadd.f32 %v5964, %v6179
      %v6222 = vadd.f32 %v5965, %v6184
      %v6223 = vadd.f32 %v5966, %v6189
      %v6224 = vsel %vm3041, %v6192, 0.0
      %v6225 = vsel %vm3041, %v6193, 0.0
      %v6226 = vadd.f32 %v6224, %v6225
      %v6227 = vsel %vm3041, %v6194, 0.0
      %v6228 = vadd.f32 %v6226, %v6227
      %v6229 = vsel %vm3041, %v6195, 0.0
      %v6230 = vadd.f32 %v6228, %v6229
      %v6231 = vsel %vm3041, %v6196, 0.0
      %v6232 = vadd.f32 %v6230, %v6231
      %v6233 = vsel %vm3041, %v6197, 0.0
      %v6234 = vadd.f32 %v6232, %v6233
      %v6235 = vsel %vm3041, %v6198, 0.0
      %v6236 = vadd.f32 %v6234, %v6235
      %v6237 = vsel %vm3041, %v6199, 0.0
      %v6238 = vadd.f32 %v6236, %v6237
      %v6239 = vsel %vm3041, %v6200, 0.0
      %v6240 = vadd.f32 %v6238, %v6239
      %v6241 = vsel %vm3041, %v6201, 0.0
      %v6242 = vadd.f32 %v6240, %v6241
      %v6243 = vsel %vm3041, %v6202, 0.0
      %v6244 = vadd.f32 %v6242, %v6243
      %v6245 = vsel %vm3041, %v6203, 0.0
      %v6246 = vadd.f32 %v6244, %v6245
      %v6247 = vsel %vm3041, %v6204, 0.0
      %v6248 = vadd.f32 %v6246, %v6247
      %v6249 = vsel %vm3041, %v6205, 0.0
      %v6250 = vadd.f32 %v6248, %v6249
      %v6251 = vsel %vm3041, %v6206, 0.0
      %v6252 = vadd.f32 %v6250, %v6251
      %v6253 = vsel %vm3041, %v6207, 0.0
      %v6254 = vadd.f32 %v6252, %v6253
      %v6255 = vsel %vm3041, %v6208, 0.0
      %v6256 = vadd.f32 %v6254, %v6255
      %v6257 = vsel %vm3041, %v6209, 0.0
      %v6258 = vadd.f32 %v6256, %v6257
      %v6259 = vsel %vm3041, %v6210, 0.0
      %v6260 = vadd.f32 %v6258, %v6259
      %v6261 = vsel %vm3041, %v6211, 0.0
      %v6262 = vadd.f32 %v6260, %v6261
      %v6263 = vsel %vm3041, %v6212, 0.0
      %v6264 = vadd.f32 %v6262, %v6263
      %v6265 = vsel %vm3041, %v6213, 0.0
      %v6266 = vadd.f32 %v6264, %v6265
      %v6267 = vsel %vm3041, %v6214, 0.0
      %v6268 = vadd.f32 %v6266, %v6267
      %v6269 = vsel %vm3041, %v6215, 0.0
      %v6270 = vadd.f32 %v6268, %v6269
      %v6271 = vsel %vm3041, %v6216, 0.0
      %v6272 = vadd.f32 %v6270, %v6271
      %v6273 = vsel %vm3041, %v6217, 0.0
      %v6274 = vadd.f32 %v6272, %v6273
      %v6275 = vsel %vm3041, %v6218, 0.0
      %v6276 = vadd.f32 %v6274, %v6275
      %v6277 = vsel %vm3041, %v6219, 0.0
      %v6278 = vadd.f32 %v6276, %v6277
      %v6279 = vsel %vm3041, %v6220, 0.0
      %v6280 = vadd.f32 %v6278, %v6279
      %v6281 = vsel %vm3041, %v6221, 0.0
      %v6282 = vadd.f32 %v6280, %v6281
      %v6283 = vsel %vm3041, %v6222, 0.0
      %v6284 = vadd.f32 %v6282, %v6283
      %v6285 = vsel %vm3041, %v6223, 0.0
      %v6286 = vadd.f32 %v6284, %v6285
      %v6287 = vrot.slane %v6286, 4
      %v6288 = vadd.f32 %v6286, %v6287
      %v6289 = vrot.slane %v6288, 2
      %v6290 = vadd.f32 %v6288, %v6289
      %v6291 = vrot.slane %v6290, 1
      %v6292 = vadd.f32 %v6290, %v6291
      %v6293 = vmul.f32 %v6292, %v3111
      %v6294 = vsub.f32 %v6192, %v6293
      %v6295 = vsub.f32 %v6193, %v6293
      %v6296 = vsub.f32 %v6194, %v6293
      %v6297 = vsub.f32 %v6195, %v6293
      %v6298 = vsub.f32 %v6196, %v6293
      %v6299 = vsub.f32 %v6197, %v6293
      %v6300 = vsub.f32 %v6198, %v6293
      %v6301 = vsub.f32 %v6199, %v6293
      %v6302 = vsub.f32 %v6200, %v6293
      %v6303 = vsub.f32 %v6201, %v6293
      %v6304 = vsub.f32 %v6202, %v6293
      %v6305 = vsub.f32 %v6203, %v6293
      %v6306 = vsub.f32 %v6204, %v6293
      %v6307 = vsub.f32 %v6205, %v6293
      %v6308 = vsub.f32 %v6206, %v6293
      %v6309 = vsub.f32 %v6207, %v6293
      %v6310 = vsub.f32 %v6208, %v6293
      %v6311 = vsub.f32 %v6209, %v6293
      %v6312 = vsub.f32 %v6210, %v6293
      %v6313 = vsub.f32 %v6211, %v6293
      %v6314 = vsub.f32 %v6212, %v6293
      %v6315 = vsub.f32 %v6213, %v6293
      %v6316 = vsub.f32 %v6214, %v6293
      %v6317 = vsub.f32 %v6215, %v6293
      %v6318 = vsub.f32 %v6216, %v6293
      %v6319 = vsub.f32 %v6217, %v6293
      %v6320 = vsub.f32 %v6218, %v6293
      %v6321 = vsub.f32 %v6219, %v6293
      %v6322 = vsub.f32 %v6220, %v6293
      %v6323 = vsub.f32 %v6221, %v6293
      %v6324 = vsub.f32 %v6222, %v6293
      %v6325 = vsub.f32 %v6223, %v6293
      %v6326 = vmul.f32 %v6294, %v6294
      %v6327 = vmul.f32 %v6295, %v6295
      %v6328 = vmul.f32 %v6296, %v6296
      %v6329 = vmul.f32 %v6297, %v6297
      %v6330 = vmul.f32 %v6298, %v6298
      %v6331 = vmul.f32 %v6299, %v6299
      %v6332 = vmul.f32 %v6300, %v6300
      %v6333 = vmul.f32 %v6301, %v6301
      %v6334 = vmul.f32 %v6302, %v6302
      %v6335 = vmul.f32 %v6303, %v6303
      %v6336 = vmul.f32 %v6304, %v6304
      %v6337 = vmul.f32 %v6305, %v6305
      %v6338 = vmul.f32 %v6306, %v6306
      %v6339 = vmul.f32 %v6307, %v6307
      %v6340 = vmul.f32 %v6308, %v6308
      %v6341 = vmul.f32 %v6309, %v6309
      %v6342 = vmul.f32 %v6310, %v6310
      %v6343 = vmul.f32 %v6311, %v6311
      %v6344 = vmul.f32 %v6312, %v6312
      %v6345 = vmul.f32 %v6313, %v6313
      %v6346 = vmul.f32 %v6314, %v6314
      %v6347 = vmul.f32 %v6315, %v6315
      %v6348 = vmul.f32 %v6316, %v6316
      %v6349 = vmul.f32 %v6317, %v6317
      %v6350 = vmul.f32 %v6318, %v6318
      %v6351 = vmul.f32 %v6319, %v6319
      %v6352 = vmul.f32 %v6320, %v6320
      %v6353 = vmul.f32 %v6321, %v6321
      %v6354 = vmul.f32 %v6322, %v6322
      %v6355 = vmul.f32 %v6323, %v6323
      %v6356 = vmul.f32 %v6324, %v6324
      %v6357 = vmul.f32 %v6325, %v6325
      %v6358 = vsel %vm3041, %v6326, 0.0
      %v6359 = vsel %vm3041, %v6327, 0.0
      %v6360 = vadd.f32 %v6358, %v6359
      %v6361 = vsel %vm3041, %v6328, 0.0
      %v6362 = vadd.f32 %v6360, %v6361
      %v6363 = vsel %vm3041, %v6329, 0.0
      %v6364 = vadd.f32 %v6362, %v6363
      %v6365 = vsel %vm3041, %v6330, 0.0
      %v6366 = vadd.f32 %v6364, %v6365
      %v6367 = vsel %vm3041, %v6331, 0.0
      %v6368 = vadd.f32 %v6366, %v6367
      %v6369 = vsel %vm3041, %v6332, 0.0
      %v6370 = vadd.f32 %v6368, %v6369
      %v6371 = vsel %vm3041, %v6333, 0.0
      %v6372 = vadd.f32 %v6370, %v6371
      %v6373 = vsel %vm3041, %v6334, 0.0
      %v6374 = vadd.f32 %v6372, %v6373
      %v6375 = vsel %vm3041, %v6335, 0.0
      %v6376 = vadd.f32 %v6374, %v6375
      %v6377 = vsel %vm3041, %v6336, 0.0
      %v6378 = vadd.f32 %v6376, %v6377
      %v6379 = vsel %vm3041, %v6337, 0.0
      %v6380 = vadd.f32 %v6378, %v6379
      %v6381 = vsel %vm3041, %v6338, 0.0
      %v6382 = vadd.f32 %v6380, %v6381
      %v6383 = vsel %vm3041, %v6339, 0.0
      %v6384 = vadd.f32 %v6382, %v6383
      %v6385 = vsel %vm3041, %v6340, 0.0
      %v6386 = vadd.f32 %v6384, %v6385
      %v6387 = vsel %vm3041, %v6341, 0.0
      %v6388 = vadd.f32 %v6386, %v6387
      %v6389 = vsel %vm3041, %v6342, 0.0
      %v6390 = vadd.f32 %v6388, %v6389
      %v6391 = vsel %vm3041, %v6343, 0.0
      %v6392 = vadd.f32 %v6390, %v6391
      %v6393 = vsel %vm3041, %v6344, 0.0
      %v6394 = vadd.f32 %v6392, %v6393
      %v6395 = vsel %vm3041, %v6345, 0.0
      %v6396 = vadd.f32 %v6394, %v6395
      %v6397 = vsel %vm3041, %v6346, 0.0
      %v6398 = vadd.f32 %v6396, %v6397
      %v6399 = vsel %vm3041, %v6347, 0.0
      %v6400 = vadd.f32 %v6398, %v6399
      %v6401 = vsel %vm3041, %v6348, 0.0
      %v6402 = vadd.f32 %v6400, %v6401
      %v6403 = vsel %vm3041, %v6349, 0.0
      %v6404 = vadd.f32 %v6402, %v6403
      %v6405 = vsel %vm3041, %v6350, 0.0
      %v6406 = vadd.f32 %v6404, %v6405
      %v6407 = vsel %vm3041, %v6351, 0.0
      %v6408 = vadd.f32 %v6406, %v6407
      %v6409 = vsel %vm3041, %v6352, 0.0
      %v6410 = vadd.f32 %v6408, %v6409
      %v6411 = vsel %vm3041, %v6353, 0.0
      %v6412 = vadd.f32 %v6410, %v6411
      %v6413 = vsel %vm3041, %v6354, 0.0
      %v6414 = vadd.f32 %v6412, %v6413
      %v6415 = vsel %vm3041, %v6355, 0.0
      %v6416 = vadd.f32 %v6414, %v6415
      %v6417 = vsel %vm3041, %v6356, 0.0
      %v6418 = vadd.f32 %v6416, %v6417
      %v6419 = vsel %vm3041, %v6357, 0.0
      %v6420 = vadd.f32 %v6418, %v6419
      %v6421 = vrot.slane %v6420, 4
      %v6422 = vadd.f32 %v6420, %v6421
      %v6423 = vrot.slane %v6422, 2
      %v6424 = vadd.f32 %v6422, %v6423
      %v6425 = vrot.slane %v6424, 1
      %v6426 = vadd.f32 %v6424, %v6425
      %v6427 = vmul.f32 %v6426, %v3111
      %v6428 = vadd.f32 %v6427, 1e-05
      %v6429 = vrsqrt.pop %v6428
      %v6430 = vmul.f32 %v6294, %v6429
      %v6431 = vmul.f32 %v6295, %v6429
      %v6432 = vmul.f32 %v6296, %v6429
      %v6433 = vmul.f32 %v6297, %v6429
      %v6434 = vmul.f32 %v6298, %v6429
      %v6435 = vmul.f32 %v6299, %v6429
      %v6436 = vmul.f32 %v6300, %v6429
      %v6437 = vmul.f32 %v6301, %v6429
      %v6438 = vmul.f32 %v6302, %v6429
      %v6439 = vmul.f32 %v6303, %v6429
      %v6440 = vmul.f32 %v6304, %v6429
      %v6441 = vmul.f32 %v6305, %v6429
      %v6442 = vmul.f32 %v6306, %v6429
      %v6443 = vmul.f32 %v6307, %v6429
      %v6444 = vmul.f32 %v6308, %v6429
      %v6445 = vmul.f32 %v6309, %v6429
      %v6446 = vmul.f32 %v6310, %v6429
      %v6447 = vmul.f32 %v6311, %v6429
      %v6448 = vmul.f32 %v6312, %v6429
      %v6449 = vmul.f32 %v6313, %v6429
      %v6450 = vmul.f32 %v6314, %v6429
      %v6451 = vmul.f32 %v6315, %v6429
      %v6452 = vmul.f32 %v6316, %v6429
      %v6453 = vmul.f32 %v6317, %v6429
      %v6454 = vmul.f32 %v6318, %v6429
      %v6455 = vmul.f32 %v6319, %v6429
      %v6456 = vmul.f32 %v6320, %v6429
      %v6457 = vmul.f32 %v6321, %v6429
      %v6458 = vmul.f32 %v6322, %v6429
      %v6459 = vmul.f32 %v6323, %v6429
      %v6460 = vmul.f32 %v6324, %v6429
      %v6461 = vmul.f32 %v6325, %v6429
      %vm6462 = vcmp.ge.f32.partialorder %v6430, 0.0
      %vm6463 = vcmp.ge.f32.partialorder %v6431, 0.0
      %vm6464 = vcmp.ge.f32.partialorder %v6432, 0.0
      %vm6465 = vcmp.ge.f32.partialorder %v6433, 0.0
      %vm6466 = vcmp.ge.f32.partialorder %v6434, 0.0
      %vm6467 = vcmp.ge.f32.partialorder %v6435, 0.0
      %vm6468 = vcmp.ge.f32.partialorder %v6436, 0.0
      %vm6469 = vcmp.ge.f32.partialorder %v6437, 0.0
      %vm6470 = vcmp.ge.f32.partialorder %v6438, 0.0
      %vm6471 = vcmp.ge.f32.partialorder %v6439, 0.0
      %vm6472 = vcmp.ge.f32.partialorder %v6440, 0.0
      %vm6473 = vcmp.ge.f32.partialorder %v6441, 0.0
      %vm6474 = vcmp.ge.f32.partialorder %v6442, 0.0
      %vm6475 = vcmp.ge.f32.partialorder %v6443, 0.0
      %vm6476 = vcmp.ge.f32.partialorder %v6444, 0.0
      %vm6477 = vcmp.ge.f32.partialorder %v6445, 0.0
      %vm6478 = vcmp.ge.f32.partialorder %v6446, 0.0
      %vm6479 = vcmp.ge.f32.partialorder %v6447, 0.0
      %vm6480 = vcmp.ge.f32.partialorder %v6448, 0.0
      %vm6481 = vcmp.ge.f32.partialorder %v6449, 0.0
      %vm6482 = vcmp.ge.f32.partialorder %v6450, 0.0
      %vm6483 = vcmp.ge.f32.partialorder %v6451, 0.0
      %vm6484 = vcmp.ge.f32.partialorder %v6452, 0.0
      %vm6485 = vcmp.ge.f32.partialorder %v6453, 0.0
      %vm6486 = vcmp.ge.f32.partialorder %v6454, 0.0
      %vm6487 = vcmp.ge.f32.partialorder %v6455, 0.0
      %vm6488 = vcmp.ge.f32.partialorder %v6456, 0.0
      %vm6489 = vcmp.ge.f32.partialorder %v6457, 0.0
      %vm6490 = vcmp.ge.f32.partialorder %v6458, 0.0
      %vm6491 = vcmp.ge.f32.partialorder %v6459, 0.0
      %vm6492 = vcmp.ge.f32.partialorder %v6460, 0.0
      %vm6493 = vcmp.ge.f32.partialorder %v6461, 0.0
      %v6494 = vmul.f32 %v6430, 0.2
      %v6495 = vmul.f32 %v6431, 0.2
      %v6496 = vmul.f32 %v6432, 0.2
      %v6497 = vmul.f32 %v6433, 0.2
      %v6498 = vmul.f32 %v6434, 0.2
      %v6499 = vmul.f32 %v6435, 0.2
      %v6500 = vmul.f32 %v6436, 0.2
      %v6501 = vmul.f32 %v6437, 0.2
      %v6502 = vmul.f32 %v6438, 0.2
      %v6503 = vmul.f32 %v6439, 0.2
      %v6504 = vmul.f32 %v6440, 0.2
      %v6505 = vmul.f32 %v6441, 0.2
      %v6506 = vmul.f32 %v6442, 0.2
      %v6507 = vmul.f32 %v6443, 0.2
      %v6508 = vmul.f32 %v6444, 0.2
      %v6509 = vmul.f32 %v6445, 0.2
      %v6510 = vmul.f32 %v6446, 0.2
      %v6511 = vmul.f32 %v6447, 0.2
      %v6512 = vmul.f32 %v6448, 0.2
      %v6513 = vmul.f32 %v6449, 0.2
      %v6514 = vmul.f32 %v6450, 0.2
      %v6515 = vmul.f32 %v6451, 0.2
      %v6516 = vmul.f32 %v6452, 0.2
      %v6517 = vmul.f32 %v6453, 0.2
      %v6518 = vmul.f32 %v6454, 0.2
      %v6519 = vmul.f32 %v6455, 0.2
      %v6520 = vmul.f32 %v6456, 0.2
      %v6521 = vmul.f32 %v6457, 0.2
      %v6522 = vmul.f32 %v6458, 0.2
      %v6523 = vmul.f32 %v6459, 0.2
      %v6524 = vmul.f32 %v6460, 0.2
      %v6525 = vmul.f32 %v6461, 0.2
      %v6526 = vsel %vm6462, %v6430, %v6494
      %v6527 = vsel %vm6463, %v6431, %v6495
      %v6528 = vsel %vm6464, %v6432, %v6496
      %v6529 = vsel %vm6465, %v6433, %v6497
      %v6530 = vsel %vm6466, %v6434, %v6498
      %v6531 = vsel %vm6467, %v6435, %v6499
      %v6532 = vsel %vm6468, %v6436, %v6500
      %v6533 = vsel %vm6469, %v6437, %v6501
      %v6534 = vsel %vm6470, %v6438, %v6502
      %v6535 = vsel %vm6471, %v6439, %v6503
      %v6536 = vsel %vm6472, %v6440, %v6504
      %v6537 = vsel %vm6473, %v6441, %v6505
      %v6538 = vsel %vm6474, %v6442, %v6506
      %v6539 = vsel %vm6475, %v6443, %v6507
      %v6540 = vsel %vm6476, %v6444, %v6508
      %v6541 = vsel %vm6477, %v6445, %v6509
      %v6542 = vsel %vm6478, %v6446, %v6510
      %v6543 = vsel %vm6479, %v6447, %v6511
      %v6544 = vsel %vm6480, %v6448, %v6512
      %v6545 = vsel %vm6481, %v6449, %v6513
      %v6546 = vsel %vm6482, %v6450, %v6514
      %v6547 = vsel %vm6483, %v6451, %v6515
      %v6548 = vsel %vm6484, %v6452, %v6516
      %v6549 = vsel %vm6485, %v6453, %v6517
      %v6550 = vsel %vm6486, %v6454, %v6518
      %v6551 = vsel %vm6487, %v6455, %v6519
      %v6552 = vsel %vm6488, %v6456, %v6520
      %v6553 = vsel %vm6489, %v6457, %v6521
      %v6554 = vsel %vm6490, %v6458, %v6522
      %v6555 = vsel %vm6491, %v6459, %v6523
      %v6556 = vsel %vm6492, %v6460, %v6524
      %v6557 = vsel %vm6493, %v6461, %v6525
      %6558 = vst.msk [vmem:[%s170] sm:$0xff] %vm3041, %v6526
      %6559 = vst.msk [vmem:[%s170 + $0x8] sm:$0xff] %vm3041, %v6527
      %6560 = vst.msk [vmem:[%s170 + $0x10] sm:$0xff] %vm3041, %v6528
      %6561 = vst.msk [vmem:[%s170 + $0x18] sm:$0xff] %vm3041, %v6529
      %6562 = vst.msk [vmem:[%s170 + $0x20] sm:$0xff] %vm3041, %v6530
      %6563 = vst.msk [vmem:[%s170 + $0x28] sm:$0xff] %vm3041, %v6531
      %6564 = vst.msk [vmem:[%s170 + $0x30] sm:$0xff] %vm3041, %v6532
      %6565 = vst.msk [vmem:[%s170 + $0x38] sm:$0xff] %vm3041, %v6533
      %6566 = vst.msk [vmem:[%s170 + $0x40] sm:$0xff] %vm3041, %v6534
      %6567 = vst.msk [vmem:[%s170 + $0x48] sm:$0xff] %vm3041, %v6535
      %6568 = vst.msk [vmem:[%s170 + $0x50] sm:$0xff] %vm3041, %v6536
      %6569 = vst.msk [vmem:[%s170 + $0x58] sm:$0xff] %vm3041, %v6537
      %6570 = vst.msk [vmem:[%s170 + $0x60] sm:$0xff] %vm3041, %v6538
      %6571 = vst.msk [vmem:[%s170 + $0x68] sm:$0xff] %vm3041, %v6539
      %6572 = vst.msk [vmem:[%s170 + $0x70] sm:$0xff] %vm3041, %v6540
      %6573 = vst.msk [vmem:[%s170 + $0x78] sm:$0xff] %vm3041, %v6541
      %6574 = vst.msk [vmem:[%s170 + $0x80] sm:$0xff] %vm3041, %v6542
      %6575 = vst.msk [vmem:[%s170 + $0x88] sm:$0xff] %vm3041, %v6543
      %6576 = vst.msk [vmem:[%s170 + $0x90] sm:$0xff] %vm3041, %v6544
      %6577 = vst.msk [vmem:[%s170 + $0x98] sm:$0xff] %vm3041, %v6545
      %6578 = vst.msk [vmem:[%s170 + $0xa0] sm:$0xff] %vm3041, %v6546
      %6579 = vst.msk [vmem:[%s170 + $0xa8] sm:$0xff] %vm3041, %v6547
      %6580 = vst.msk [vmem:[%s170 + $0xb0] sm:$0xff] %vm3041, %v6548
      %6581 = vst.msk [vmem:[%s170 + $0xb8] sm:$0xff] %vm3041, %v6549
      %6582 = vst.msk [vmem:[%s170 + $0xc0] sm:$0xff] %vm3041, %v6550
      %6583 = vst.msk [vmem:[%s170 + $0xc8] sm:$0xff] %vm3041, %v6551
      %6584 = vst.msk [vmem:[%s170 + $0xd0] sm:$0xff] %vm3041, %v6552
      %6585 = vst.msk [vmem:[%s170 + $0xd8] sm:$0xff] %vm3041, %v6553
      %6586 = vst.msk [vmem:[%s170 + $0xe0] sm:$0xff] %vm3041, %v6554
      %6587 = vst.msk [vmem:[%s170 + $0xe8] sm:$0xff] %vm3041, %v6555
      %6588 = vst.msk [vmem:[%s170 + $0xf0] sm:$0xff] %vm3041, %v6556
      %6589 = vst.msk [vmem:[%s170 + $0xf8] sm:$0xff] %vm3041, %v6557
      %p6590 = scmp.lt.s32.totalorder %s14, 1
      %s6591 = scalar_select %p6590, %s14, 1
      %s6592 = smul.addr %s6591, 32
      %s6593 = smul.addr %s6592, 8
      %s6594 = scalar_lea.vmem %s3, %s6593
      // Predicated region
      $region33: #{tpu_custom_call.1} parent=31 // pred_check
        %p6595 = pneg %p100
      $region34: #{tpu_custom_call.1} parent=31 // pred_check_branch
        %6597 = sbr.rel (%p6595) target = $region36
      $region35: #{tpu_custom_call.1} parent=31 // pred_region
        _
      $region36: #{tpu_custom_call.1} parent=31 // pred_fallthru
        _
    $region32: #{tpu_custom_call.1} parent=5 // pred_fallthru
      _
    %p6598 = scmp.le.s32.totalorder 2, %s9
    // Predicated region
    $region37: #{tpu_custom_call.1} parent=5 // pred_check
      %p6599 = pneg %p6598
    $region38: #{tpu_custom_call.1} parent=5 // pred_check_branch
      %6601 = sbr.rel (%p6599) target = $region40
    $region39: #{tpu_custom_call.1} parent=5 // pred_region
      %s6602 = ssub.s32 %s9, 2
      // Predicated region
      $region41: #{tpu_custom_call.1} parent=39 // pred_check
        %p6603 = pneg %p106
      $region42: #{tpu_custom_call.1} parent=39 // pred_check_branch
        %6605 = sbr.rel (%p6603) target = $region44
      $region43: #{tpu_custom_call.1} parent=39 // pred_region
        %p6606 = scmp.lt.s32.totalorder %s15, 1
        %s6607 = scalar_select %p6606, %s15, 1
        %s6608 = smul.addr %s6607, 32
        %s6609 = smul.addr %s6608, 8
        %s6610 = scalar_lea.vmem %s3, %s6609
      $region44: #{tpu_custom_call.1} parent=39 // pred_fallthru
        _
    $region40: #{tpu_custom_call.1} parent=5 // pred_fallthru
      _
  $region6: #{tpu_custom_call.1} parent=0 // loop_footer
    %s13 = sadd.s32 1, %s9
  $region7: #{tpu_custom_call.1} parent=0 // loop_footer_branch
    %8 = sbr.rel target = $region3
  $region8: #{tpu_custom_call.1} parent=0 // loop_exit
    _

</llo_original>
